<compile_context>
chip_gen: v5e
topology: v5e:2x2
jax: 0.10.0
libtpu: 0.0.40
codegen_flags: <defaults>
</compile_context>

<pallas_src>
import math
from functools import partial

import jax
import jax.numpy as jnp
from jax.experimental import pallas as pl
from jax.experimental.pallas import tpu as pltpu

EPS = 1e-5


# ---------------------------------------------------------------------------
# static geometry helpers
# ---------------------------------------------------------------------------
def _log2(v):
    l = int(math.log2(v))
    assert (1 << l) == v, f"{v} must be a power of two"
    return l


def _stage_geoms(N, H, W):
    """Per-stage static geometry for the 4 encoder convs."""
    chans = [(3, 16), (16, 32), (32, 64), (64, 64)]
    geoms = []
    h, w = H, W
    for cin, cout in chans:
        ho = (h + 2 - 3) // 2 + 1
        wo = (w + 2 - 3) // 2 + 1
        geoms.append(dict(N=N, H=h, W=w, Ho=ho, Wo=wo, Cin=cin, Cout=cout))
        h, w = ho, wo
    return geoms


# ---------------------------------------------------------------------------
# in-kernel building blocks (traced inside the single fused kernel)
# ---------------------------------------------------------------------------
def _flat_output_coords(M, Ho, Wo):
    """(n, ho, wo) as (M,1) int32 for flat-NHWC output row index m."""
    m = jax.lax.broadcasted_iota(jnp.int32, (M, 1), 0)
    hw = Ho * Wo
    n = m >> _log2(hw)
    r = m & (hw - 1)
    ho = r >> _log2(Wo)
    wo = r & (Wo - 1)
    return n, ho, wo


def _conv3x3_s2(a_bf16, w_ref, g):
    """3x3 / stride-2 / pad-1 conv of a flat-NHWC activation.

    a_bf16: (P, Cin) bf16 activation, rows ordered n*(H*W) + h*W + w.
    w_ref : (9, Cin, Cout) bf16 Ref, tap index t = ky*3 + kx.
    Returns the f32 pre-BN conv output of shape (M, Cout), M = N*Ho*Wo.
    """
    N, H, W, Ho, Wo, Cout = g["N"], g["H"], g["W"], g["Ho"], g["Wo"], g["Cout"]
    M, P = N * Ho * Wo, N * H * W

    n, ho, wo = _flat_output_coords(M, Ho, Wo)                      # (M,1) each
    p = jax.lax.broadcasted_iota(jnp.int32, (M, P), 1)              # (M,P)

    acc = jnp.zeros((M, Cout), jnp.float32)
    for t in range(9):
        ky, kx = divmod(t, 3)
        hi = 2 * ho - 1 + ky
        wi = 2 * wo - 1 + kx
        valid = (hi >= 0) & (hi < H) & (wi >= 0) & (wi < W)         # (M,1) bool
        src = n * (H * W) + hi * W + wi                             # (M,1) int32
        # 0/1 tap-selection matrix; padding taps give all-zero rows.
        sel = jnp.where(valid & (p == src), 1.0, 0.0).astype(jnp.bfloat16)
        # Row gather on the MXU (exact: one 1 per row, f32 accumulation).
        tap = jnp.dot(sel, a_bf16, preferred_element_type=jnp.float32)       # (M,Cin)
        acc = acc + jnp.dot(tap.astype(jnp.bfloat16), w_ref[t],
                            preferred_element_type=jnp.float32)              # (M,Cout)
    return acc


def _bn_relu(y, gamma, beta):
    """Training-mode BatchNorm2d (biased batch stats, one-pass) + ReLU in f32."""
    M = y.shape[0]
    inv_m = 1.0 / M
    s1 = jnp.sum(y, axis=0, keepdims=True)
    s2 = jnp.sum(y * y, axis=0, keepdims=True)
    mean = s1 * inv_m
    var = s2 * inv_m - mean * mean          # one-pass biased variance
    scale = jax.lax.rsqrt(var + EPS) * gamma
    return jnp.maximum((y - mean) * scale + beta, 0.0)


def encoder_kernel(x_ref, w1_ref, w2_ref, w3_ref, w4_ref, bn_ref, o_ref, *, geoms):
    """Fully fused 4-stage encoder: conv -> BN(batch stats) -> ReLU, x4."""
    w_refs = (w1_ref, w2_ref, w3_ref, w4_ref)
    a = x_ref[...]                                   # (N*H*W, 3) bf16
    z = None
    for l, g in enumerate(geoms):
        C = g["Cout"]
        gamma = bn_ref[2 * l:2 * l + 1, 0:C]         # (1, C) f32
        beta = bn_ref[2 * l + 1:2 * l + 2, 0:C]      # (1, C) f32
        y = _conv3x3_s2(a, w_refs[l], g)             # (M, C) f32
        z = _bn_relu(y, gamma, beta)                 # (M, C) f32
        if l + 1 < len(geoms):
            a = z.astype(jnp.bfloat16)               # bf16 operand for next MXU gather
    o_ref[...] = z                                   # (N*Ho4*Wo4, 64) f32


# ---------------------------------------------------------------------------
# host-side wrappers
# ---------------------------------------------------------------------------
def init_encoder_params(key):
    """Matches the module's __init__: conv ~ N(0, sqrt(2/(3*3*Cout))), BN g=1, b=0."""
    layer_dims = [(3, 16), (16, 32), (32, 64), (64, 64)]
    params = []
    for cin, cout in layer_dims:
        key, sub = jax.random.split(key)
        std = math.sqrt(2.0 / (3 * 3 * cout))
        w = std * jax.random.normal(sub, (cout, cin, 3, 3), dtype=jnp.float32)
        params.append((w, jnp.ones((cout,), jnp.float32), jnp.zeros((cout,), jnp.float32)))
    return params


def prepare_params(params):
    """One-time (hoisted) preprocessing: weights (Cout,Cin,3,3) -> (9,Cin,Cout) bf16
    with tap order t = ky*3+kx; gamma/beta packed into one (8, 64) f32 tile."""
    cmax = max(w.shape[0] for (w, _, _) in params)
    ws, bn_rows = [], []
    for w, gamma, beta in params:
        cout, cin, _, _ = w.shape
        wt = jnp.transpose(w, (2, 3, 1, 0)).reshape(9, cin, cout).astype(jnp.bfloat16)
        ws.append(wt)
        bn_rows.append(jnp.pad(gamma, (0, cmax - cout)))
        bn_rows.append(jnp.pad(beta, (0, cmax - cout)))
    bn = jnp.stack(bn_rows, axis=0).astype(jnp.float32)      # (8, 64)
    return ws, bn


def encoder_forward(x_nchw, ws, bn):
    """x_nchw: (N, 3, H, W) f32 -> (N, 64, H/16, W/16) f32 (== Encoder.forward)."""
    N, Cin, H, W = x_nchw.shape
    _log2(H), _log2(W)                      # in-kernel index math uses shifts/masks
    geoms = _stage_geoms(N, H, W)

    a0 = (jnp.transpose(x_nchw, (0, 2, 3, 1))        # NCHW -> NHWC
          .reshape(N * H * W, Cin)
          .astype(jnp.bfloat16))                     # flat rows, bf16 MXU operand

    gl = geoms[-1]
    Mo, Co = N * gl["Ho"] * gl["Wo"], gl["Cout"]
    out = pl.pallas_call(
        partial(encoder_kernel, geoms=geoms),
        out_shape=jax.ShapeDtypeStruct((Mo, Co), jnp.float32),
        in_specs=[pl.BlockSpec(memory_space=pltpu.MemorySpace.VMEM)] * 6,
        out_specs=pl.BlockSpec(memory_space=pltpu.MemorySpace.VMEM),
    )(a0, ws[0], ws[1], ws[2], ws[3], bn)

    out = out.reshape(N, gl["Ho"], gl["Wo"], Co)
    return jnp.transpose(out, (0, 3, 1, 2))          # NHWC -> NCHW


def encoder_reference(x_nchw, params):
    """Pure-JAX/XLA reference with the same precision policy as the kernel
    (bf16 conv operands, f32 accumulation, training-mode biased-batch BN)."""
    x = x_nchw
    for w, gamma, beta in params:
        y = jax.lax.conv_general_dilated(
            x.astype(jnp.bfloat16), w.astype(jnp.bfloat16),
            window_strides=(2, 2), padding=((1, 1), (1, 1)),
            dimension_numbers=("NCHW", "OIHW", "NCHW"),
            preferred_element_type=jnp.float32)
        mean = jnp.mean(y, axis=(0, 2, 3), keepdims=True)
        var = jnp.mean(jnp.square(y - mean), axis=(0, 2, 3), keepdims=True)
        z = (y - mean) * jax.lax.rsqrt(var + EPS)
        z = z * gamma.reshape(1, -1, 1, 1) + beta.reshape(1, -1, 1, 1)
        x = jnp.maximum(z, 0.0)
    return x


if __name__ == "__main__":
    key = jax.random.PRNGKey(0)
    key, xkey = jax.random.split(key)
    # small shapes consistent with the module: RGB input, batch=2, 16x16 spatial
    x = jax.random.normal(xkey, (2, 3, 16, 16), dtype=jnp.float32)

    params = init_encoder_params(key)
    ws, bn = prepare_params(params)          # hoisted one-time preprocessing

    fwd = jax.jit(encoder_forward)
    out = jax.block_until_ready(fwd(x, ws, bn))

    assert out.shape == (2, 64, 1, 1), out.shape
    assert bool(jnp.all(jnp.isfinite(out)))

    ref = jax.block_until_ready(encoder_reference(x, params))
    assert jnp.allclose(out, ref, rtol=5e-2, atol=5e-2), \
        float(jnp.max(jnp.abs(out - ref)))

    print("KERNEL_OK")
</pallas_src>

<mosaic_0001>
module attributes {stable_mosaic.version = 11 : i64} {
  func.func @encoder_kernel(%arg0: memref<512x3xbf16, #tpu.memory_space<vmem>>, %arg1: memref<9x3x16xbf16, #tpu.memory_space<vmem>>, %arg2: memref<9x16x32xbf16, #tpu.memory_space<vmem>>, %arg3: memref<9x32x64xbf16, #tpu.memory_space<vmem>>, %arg4: memref<9x64x64xbf16, #tpu.memory_space<vmem>>, %arg5: memref<8x64xf32, #tpu.memory_space<vmem>>, %arg6: memref<2x64xf32, #tpu.memory_space<vmem>>) attributes {dimension_semantics = [], scalar_prefetch = 0 : i64, scratch_operands = 0 : i64, tpu.core_type = #tpu.core_type<tc>} {
    %c0 = arith.constant 0 : index
    %c0_0 = arith.constant 0 : index
    %0 = vector.load %arg0[%c0, %c0_0] : memref<512x3xbf16, #tpu.memory_space<vmem>>, vector<512x3xbf16>
    %c0_1 = arith.constant 0 : index
    %c0_2 = arith.constant 0 : index
    %1 = vector.load %arg5[%c0_1, %c0_2] : memref<8x64xf32, #tpu.memory_space<vmem>>, vector<1x16xf32>
    %c1 = arith.constant 1 : index
    %c0_3 = arith.constant 0 : index
    %2 = vector.load %arg5[%c1, %c0_3] : memref<8x64xf32, #tpu.memory_space<vmem>>, vector<1x16xf32>
    %3 = tpu.iota {dimensions = array<i32: 0>} : vector<128x1xi32>
    %c6_i32 = arith.constant 6 : i32
    %4 = vector.broadcast %c6_i32 : i32 to vector<128x1xi32>
    %5 = arith.shrsi %3, %4 : vector<128x1xi32>
    %c63_i32 = arith.constant 63 : i32
    %6 = vector.broadcast %c63_i32 : i32 to vector<128x1xi32>
    %7 = arith.andi %3, %6 : vector<128x1xi32>
    %c3_i32 = arith.constant 3 : i32
    %8 = vector.broadcast %c3_i32 : i32 to vector<128x1xi32>
    %9 = arith.shrsi %7, %8 : vector<128x1xi32>
    %c7_i32 = arith.constant 7 : i32
    %10 = vector.broadcast %c7_i32 : i32 to vector<128x1xi32>
    %11 = arith.andi %7, %10 : vector<128x1xi32>
    %12 = tpu.iota {dimensions = array<i32: 1>} : vector<128x512xi32>
    %cst = arith.constant 0.000000e+00 : f32
    %13 = vector.broadcast %cst : f32 to vector<128x16xf32>
    %c2_i32 = arith.constant 2 : i32
    %14 = vector.broadcast %c2_i32 : i32 to vector<128x1xi32>
    %15 = arith.muli %14, %9 : vector<128x1xi32>
    %c1_i32 = arith.constant 1 : i32
    %16 = vector.broadcast %c1_i32 : i32 to vector<128x1xi32>
    %17 = arith.subi %15, %16 : vector<128x1xi32>
    %c0_i32 = arith.constant 0 : i32
    %18 = vector.broadcast %c0_i32 : i32 to vector<128x1xi32>
    %19 = arith.addi %17, %18 : vector<128x1xi32>
    %c2_i32_4 = arith.constant 2 : i32
    %20 = vector.broadcast %c2_i32_4 : i32 to vector<128x1xi32>
    %21 = arith.muli %20, %11 : vector<128x1xi32>
    %c1_i32_5 = arith.constant 1 : i32
    %22 = vector.broadcast %c1_i32_5 : i32 to vector<128x1xi32>
    %23 = arith.subi %21, %22 : vector<128x1xi32>
    %c0_i32_6 = arith.constant 0 : i32
    %24 = vector.broadcast %c0_i32_6 : i32 to vector<128x1xi32>
    %25 = arith.addi %23, %24 : vector<128x1xi32>
    %c0_i32_7 = arith.constant 0 : i32
    %26 = vector.broadcast %c0_i32_7 : i32 to vector<128x1xi32>
    %27 = arith.cmpi sge, %19, %26 : vector<128x1xi32>
    %c16_i32 = arith.constant 16 : i32
    %28 = vector.broadcast %c16_i32 : i32 to vector<128x1xi32>
    %29 = arith.cmpi slt, %19, %28 : vector<128x1xi32>
    %30 = arith.andi %27, %29 : vector<128x1xi1>
    %c0_i32_8 = arith.constant 0 : i32
    %31 = vector.broadcast %c0_i32_8 : i32 to vector<128x1xi32>
    %32 = arith.cmpi sge, %25, %31 : vector<128x1xi32>
    %33 = arith.andi %30, %32 : vector<128x1xi1>
    %c16_i32_9 = arith.constant 16 : i32
    %34 = vector.broadcast %c16_i32_9 : i32 to vector<128x1xi32>
    %35 = arith.cmpi slt, %25, %34 : vector<128x1xi32>
    %36 = arith.andi %33, %35 : vector<128x1xi1>
    %c256_i32 = arith.constant 256 : i32
    %37 = vector.broadcast %c256_i32 : i32 to vector<128x1xi32>
    %38 = arith.muli %5, %37 : vector<128x1xi32>
    %c16_i32_10 = arith.constant 16 : i32
    %39 = vector.broadcast %c16_i32_10 : i32 to vector<128x1xi32>
    %40 = arith.muli %19, %39 : vector<128x1xi32>
    %41 = arith.addi %38, %40 : vector<128x1xi32>
    %42 = arith.addi %41, %25 : vector<128x1xi32>
    %43 = vector.broadcast %42 : vector<128x1xi32> to vector<128x512xi32>
    %44 = arith.cmpi eq, %12, %43 : vector<128x512xi32>
    %45 = vector.broadcast %36 : vector<128x1xi1> to vector<128x512xi1>
    %46 = arith.andi %45, %44 : vector<128x512xi1>
    %cst_11 = arith.constant 1.000000e+00 : f32
    %cst_12 = arith.constant 0.000000e+00 : f32
    %47 = vector.broadcast %cst_11 : f32 to vector<128x512xf32>
    %48 = vector.broadcast %cst_12 : f32 to vector<128x512xf32>
    %49 = arith.select %46, %47, %48 : vector<128x512xi1>, vector<128x512xf32>
    %50 = arith.truncf %49 : vector<128x512xf32> to vector<128x512xbf16>
    %cst_13 = arith.constant dense<0.000000e+00> : vector<128x3xf32>
    %51 = tpu.matmul %50, %0, %cst_13 {dimension_numbers = #tpu.dot_dimension_numbers<[1], [0], [0], [1], [0, 0, 1, 1], [], []>} : vector<128x512xbf16>, vector<512x3xbf16>, vector<128x3xf32> -> vector<128x3xf32>
    %52 = arith.truncf %51 : vector<128x3xf32> to vector<128x3xbf16>
    %c0_14 = arith.constant 0 : index
    %c0_15 = arith.constant 0 : index
    %c0_16 = arith.constant 0 : index
    %53 = vector.load %arg1[%c0_14, %c0_15, %c0_16] : memref<9x3x16xbf16, #tpu.memory_space<vmem>>, vector<1x3x16xbf16>
    %54 = vector.shape_cast %53 : vector<1x3x16xbf16> to vector<3x16xbf16>
    %cst_17 = arith.constant dense<0.000000e+00> : vector<128x16xf32>
    %55 = tpu.matmul %52, %54, %cst_17 {dimension_numbers = #tpu.dot_dimension_numbers<[1], [0], [0], [1], [0, 0, 1, 1], [], []>} : vector<128x3xbf16>, vector<3x16xbf16>, vector<128x16xf32> -> vector<128x16xf32>
    %56 = arith.addf %13, %55 : vector<128x16xf32>
    %c2_i32_18 = arith.constant 2 : i32
    %57 = vector.broadcast %c2_i32_18 : i32 to vector<128x1xi32>
    %58 = arith.muli %57, %9 : vector<128x1xi32>
    %c1_i32_19 = arith.constant 1 : i32
    %59 = vector.broadcast %c1_i32_19 : i32 to vector<128x1xi32>
    %60 = arith.subi %58, %59 : vector<128x1xi32>
    %c0_i32_20 = arith.constant 0 : i32
    %61 = vector.broadcast %c0_i32_20 : i32 to vector<128x1xi32>
    %62 = arith.addi %60, %61 : vector<128x1xi32>
    %c2_i32_21 = arith.constant 2 : i32
    %63 = vector.broadcast %c2_i32_21 : i32 to vector<128x1xi32>
    %64 = arith.muli %63, %11 : vector<128x1xi32>
    %c1_i32_22 = arith.constant 1 : i32
    %65 = vector.broadcast %c1_i32_22 : i32 to vector<128x1xi32>
    %66 = arith.subi %64, %65 : vector<128x1xi32>
    %c1_i32_23 = arith.constant 1 : i32
    %67 = vector.broadcast %c1_i32_23 : i32 to vector<128x1xi32>
    %68 = arith.addi %66, %67 : vector<128x1xi32>
    %c0_i32_24 = arith.constant 0 : i32
    %69 = vector.broadcast %c0_i32_24 : i32 to vector<128x1xi32>
    %70 = arith.cmpi sge, %62, %69 : vector<128x1xi32>
    %c16_i32_25 = arith.constant 16 : i32
    %71 = vector.broadcast %c16_i32_25 : i32 to vector<128x1xi32>
    %72 = arith.cmpi slt, %62, %71 : vector<128x1xi32>
    %73 = arith.andi %70, %72 : vector<128x1xi1>
    %c0_i32_26 = arith.constant 0 : i32
    %74 = vector.broadcast %c0_i32_26 : i32 to vector<128x1xi32>
    %75 = arith.cmpi sge, %68, %74 : vector<128x1xi32>
    %76 = arith.andi %73, %75 : vector<128x1xi1>
    %c16_i32_27 = arith.constant 16 : i32
    %77 = vector.broadcast %c16_i32_27 : i32 to vector<128x1xi32>
    %78 = arith.cmpi slt, %68, %77 : vector<128x1xi32>
    %79 = arith.andi %76, %78 : vector<128x1xi1>
    %c256_i32_28 = arith.constant 256 : i32
    %80 = vector.broadcast %c256_i32_28 : i32 to vector<128x1xi32>
    %81 = arith.muli %5, %80 : vector<128x1xi32>
    %c16_i32_29 = arith.constant 16 : i32
    %82 = vector.broadcast %c16_i32_29 : i32 to vector<128x1xi32>
    %83 = arith.muli %62, %82 : vector<128x1xi32>
    %84 = arith.addi %81, %83 : vector<128x1xi32>
    %85 = arith.addi %84, %68 : vector<128x1xi32>
    %86 = vector.broadcast %85 : vector<128x1xi32> to vector<128x512xi32>
    %87 = arith.cmpi eq, %12, %86 : vector<128x512xi32>
    %88 = vector.broadcast %79 : vector<128x1xi1> to vector<128x512xi1>
    %89 = arith.andi %88, %87 : vector<128x512xi1>
    %cst_30 = arith.constant 1.000000e+00 : f32
    %cst_31 = arith.constant 0.000000e+00 : f32
    %90 = vector.broadcast %cst_30 : f32 to vector<128x512xf32>
    %91 = vector.broadcast %cst_31 : f32 to vector<128x512xf32>
    %92 = arith.select %89, %90, %91 : vector<128x512xi1>, vector<128x512xf32>
    %93 = arith.truncf %92 : vector<128x512xf32> to vector<128x512xbf16>
    %cst_32 = arith.constant dense<0.000000e+00> : vector<128x3xf32>
    %94 = tpu.matmul %93, %0, %cst_32 {dimension_numbers = #tpu.dot_dimension_numbers<[1], [0], [0], [1], [0, 0, 1, 1], [], []>} : vector<128x512xbf16>, vector<512x3xbf16>, vector<128x3xf32> -> vector<128x3xf32>
    %95 = arith.truncf %94 : vector<128x3xf32> to vector<128x3xbf16>
    %c1_33 = arith.constant 1 : index
    %c0_34 = arith.constant 0 : index
    %c0_35 = arith.constant 0 : index
    %96 = vector.load %arg1[%c1_33, %c0_34, %c0_35] : memref<9x3x16xbf16, #tpu.memory_space<vmem>>, vector<1x3x16xbf16>
    %97 = vector.shape_cast %96 : vector<1x3x16xbf16> to vector<3x16xbf16>
    %cst_36 = arith.constant dense<0.000000e+00> : vector<128x16xf32>
    %98 = tpu.matmul %95, %97, %cst_36 {dimension_numbers = #tpu.dot_dimension_numbers<[1], [0], [0], [1], [0, 0, 1, 1], [], []>} : vector<128x3xbf16>, vector<3x16xbf16>, vector<128x16xf32> -> vector<128x16xf32>
    %99 = arith.addf %56, %98 : vector<128x16xf32>
    %c2_i32_37 = arith.constant 2 : i32
    %100 = vector.broadcast %c2_i32_37 : i32 to vector<128x1xi32>
    %101 = arith.muli %100, %9 : vector<128x1xi32>
    %c1_i32_38 = arith.constant 1 : i32
    %102 = vector.broadcast %c1_i32_38 : i32 to vector<128x1xi32>
    %103 = arith.subi %101, %102 : vector<128x1xi32>
    %c0_i32_39 = arith.constant 0 : i32
    %104 = vector.broadcast %c0_i32_39 : i32 to vector<128x1xi32>
    %105 = arith.addi %103, %104 : vector<128x1xi32>
    %c2_i32_40 = arith.constant 2 : i32
    %106 = vector.broadcast %c2_i32_40 : i32 to vector<128x1xi32>
    %107 = arith.muli %106, %11 : vector<128x1xi32>
    %c1_i32_41 = arith.constant 1 : i32
    %108 = vector.broadcast %c1_i32_41 : i32 to vector<128x1xi32>
    %109 = arith.subi %107, %108 : vector<128x1xi32>
    %c2_i32_42 = arith.constant 2 : i32
    %110 = vector.broadcast %c2_i32_42 : i32 to vector<128x1xi32>
    %111 = arith.addi %109, %110 : vector<128x1xi32>
    %c0_i32_43 = arith.constant 0 : i32
    %112 = vector.broadcast %c0_i32_43 : i32 to vector<128x1xi32>
    %113 = arith.cmpi sge, %105, %112 : vector<128x1xi32>
    %c16_i32_44 = arith.constant 16 : i32
    %114 = vector.broadcast %c16_i32_44 : i32 to vector<128x1xi32>
    %115 = arith.cmpi slt, %105, %114 : vector<128x1xi32>
    %116 = arith.andi %113, %115 : vector<128x1xi1>
    %c0_i32_45 = arith.constant 0 : i32
    %117 = vector.broadcast %c0_i32_45 : i32 to vector<128x1xi32>
    %118 = arith.cmpi sge, %111, %117 : vector<128x1xi32>
    %119 = arith.andi %116, %118 : vector<128x1xi1>
    %c16_i32_46 = arith.constant 16 : i32
    %120 = vector.broadcast %c16_i32_46 : i32 to vector<128x1xi32>
    %121 = arith.cmpi slt, %111, %120 : vector<128x1xi32>
    %122 = arith.andi %119, %121 : vector<128x1xi1>
    %c256_i32_47 = arith.constant 256 : i32
    %123 = vector.broadcast %c256_i32_47 : i32 to vector<128x1xi32>
    %124 = arith.muli %5, %123 : vector<128x1xi32>
    %c16_i32_48 = arith.constant 16 : i32
    %125 = vector.broadcast %c16_i32_48 : i32 to vector<128x1xi32>
    %126 = arith.muli %105, %125 : vector<128x1xi32>
    %127 = arith.addi %124, %126 : vector<128x1xi32>
    %128 = arith.addi %127, %111 : vector<128x1xi32>
    %129 = vector.broadcast %128 : vector<128x1xi32> to vector<128x512xi32>
    %130 = arith.cmpi eq, %12, %129 : vector<128x512xi32>
    %131 = vector.broadcast %122 : vector<128x1xi1> to vector<128x512xi1>
    %132 = arith.andi %131, %130 : vector<128x512xi1>
    %cst_49 = arith.constant 1.000000e+00 : f32
    %cst_50 = arith.constant 0.000000e+00 : f32
    %133 = vector.broadcast %cst_49 : f32 to vector<128x512xf32>
    %134 = vector.broadcast %cst_50 : f32 to vector<128x512xf32>
    %135 = arith.select %132, %133, %134 : vector<128x512xi1>, vector<128x512xf32>
    %136 = arith.truncf %135 : vector<128x512xf32> to vector<128x512xbf16>
    %cst_51 = arith.constant dense<0.000000e+00> : vector<128x3xf32>
    %137 = tpu.matmul %136, %0, %cst_51 {dimension_numbers = #tpu.dot_dimension_numbers<[1], [0], [0], [1], [0, 0, 1, 1], [], []>} : vector<128x512xbf16>, vector<512x3xbf16>, vector<128x3xf32> -> vector<128x3xf32>
    %138 = arith.truncf %137 : vector<128x3xf32> to vector<128x3xbf16>
    %c2 = arith.constant 2 : index
    %c0_52 = arith.constant 0 : index
    %c0_53 = arith.constant 0 : index
    %139 = vector.load %arg1[%c2, %c0_52, %c0_53] : memref<9x3x16xbf16, #tpu.memory_space<vmem>>, vector<1x3x16xbf16>
    %140 = vector.shape_cast %139 : vector<1x3x16xbf16> to vector<3x16xbf16>
    %cst_54 = arith.constant dense<0.000000e+00> : vector<128x16xf32>
    %141 = tpu.matmul %138, %140, %cst_54 {dimension_numbers = #tpu.dot_dimension_numbers<[1], [0], [0], [1], [0, 0, 1, 1], [], []>} : vector<128x3xbf16>, vector<3x16xbf16>, vector<128x16xf32> -> vector<128x16xf32>
    %142 = arith.addf %99, %141 : vector<128x16xf32>
    %c2_i32_55 = arith.constant 2 : i32
    %143 = vector.broadcast %c2_i32_55 : i32 to vector<128x1xi32>
    %144 = arith.muli %143, %9 : vector<128x1xi32>
    %c1_i32_56 = arith.constant 1 : i32
    %145 = vector.broadcast %c1_i32_56 : i32 to vector<128x1xi32>
    %146 = arith.subi %144, %145 : vector<128x1xi32>
    %c1_i32_57 = arith.constant 1 : i32
    %147 = vector.broadcast %c1_i32_57 : i32 to vector<128x1xi32>
    %148 = arith.addi %146, %147 : vector<128x1xi32>
    %c2_i32_58 = arith.constant 2 : i32
    %149 = vector.broadcast %c2_i32_58 : i32 to vector<128x1xi32>
    %150 = arith.muli %149, %11 : vector<128x1xi32>
    %c1_i32_59 = arith.constant 1 : i32
    %151 = vector.broadcast %c1_i32_59 : i32 to vector<128x1xi32>
    %152 = arith.subi %150, %151 : vector<128x1xi32>
    %c0_i32_60 = arith.constant 0 : i32
    %153 = vector.broadcast %c0_i32_60 : i32 to vector<128x1xi32>
    %154 = arith.addi %152, %153 : vector<128x1xi32>
    %c0_i32_61 = arith.constant 0 : i32
    %155 = vector.broadcast %c0_i32_61 : i32 to vector<128x1xi32>
    %156 = arith.cmpi sge, %148, %155 : vector<128x1xi32>
    %c16_i32_62 = arith.constant 16 : i32
    %157 = vector.broadcast %c16_i32_62 : i32 to vector<128x1xi32>
    %158 = arith.cmpi slt, %148, %157 : vector<128x1xi32>
    %159 = arith.andi %156, %158 : vector<128x1xi1>
    %c0_i32_63 = arith.constant 0 : i32
    %160 = vector.broadcast %c0_i32_63 : i32 to vector<128x1xi32>
    %161 = arith.cmpi sge, %154, %160 : vector<128x1xi32>
    %162 = arith.andi %159, %161 : vector<128x1xi1>
    %c16_i32_64 = arith.constant 16 : i32
    %163 = vector.broadcast %c16_i32_64 : i32 to vector<128x1xi32>
    %164 = arith.cmpi slt, %154, %163 : vector<128x1xi32>
    %165 = arith.andi %162, %164 : vector<128x1xi1>
    %c256_i32_65 = arith.constant 256 : i32
    %166 = vector.broadcast %c256_i32_65 : i32 to vector<128x1xi32>
    %167 = arith.muli %5, %166 : vector<128x1xi32>
    %c16_i32_66 = arith.constant 16 : i32
    %168 = vector.broadcast %c16_i32_66 : i32 to vector<128x1xi32>
    %169 = arith.muli %148, %168 : vector<128x1xi32>
    %170 = arith.addi %167, %169 : vector<128x1xi32>
    %171 = arith.addi %170, %154 : vector<128x1xi32>
    %172 = vector.broadcast %171 : vector<128x1xi32> to vector<128x512xi32>
    %173 = arith.cmpi eq, %12, %172 : vector<128x512xi32>
    %174 = vector.broadcast %165 : vector<128x1xi1> to vector<128x512xi1>
    %175 = arith.andi %174, %173 : vector<128x512xi1>
    %cst_67 = arith.constant 1.000000e+00 : f32
    %cst_68 = arith.constant 0.000000e+00 : f32
    %176 = vector.broadcast %cst_67 : f32 to vector<128x512xf32>
    %177 = vector.broadcast %cst_68 : f32 to vector<128x512xf32>
    %178 = arith.select %175, %176, %177 : vector<128x512xi1>, vector<128x512xf32>
    %179 = arith.truncf %178 : vector<128x512xf32> to vector<128x512xbf16>
    %cst_69 = arith.constant dense<0.000000e+00> : vector<128x3xf32>
    %180 = tpu.matmul %179, %0, %cst_69 {dimension_numbers = #tpu.dot_dimension_numbers<[1], [0], [0], [1], [0, 0, 1, 1], [], []>} : vector<128x512xbf16>, vector<512x3xbf16>, vector<128x3xf32> -> vector<128x3xf32>
    %181 = arith.truncf %180 : vector<128x3xf32> to vector<128x3xbf16>
    %c3 = arith.constant 3 : index
    %c0_70 = arith.constant 0 : index
    %c0_71 = arith.constant 0 : index
    %182 = vector.load %arg1[%c3, %c0_70, %c0_71] : memref<9x3x16xbf16, #tpu.memory_space<vmem>>, vector<1x3x16xbf16>
    %183 = vector.shape_cast %182 : vector<1x3x16xbf16> to vector<3x16xbf16>
    %cst_72 = arith.constant dense<0.000000e+00> : vector<128x16xf32>
    %184 = tpu.matmul %181, %183, %cst_72 {dimension_numbers = #tpu.dot_dimension_numbers<[1], [0], [0], [1], [0, 0, 1, 1], [], []>} : vector<128x3xbf16>, vector<3x16xbf16>, vector<128x16xf32> -> vector<128x16xf32>
    %185 = arith.addf %142, %184 : vector<128x16xf32>
    %c2_i32_73 = arith.constant 2 : i32
    %186 = vector.broadcast %c2_i32_73 : i32 to vector<128x1xi32>
    %187 = arith.muli %186, %9 : vector<128x1xi32>
    %c1_i32_74 = arith.constant 1 : i32
    %188 = vector.broadcast %c1_i32_74 : i32 to vector<128x1xi32>
    %189 = arith.subi %187, %188 : vector<128x1xi32>
    %c1_i32_75 = arith.constant 1 : i32
    %190 = vector.broadcast %c1_i32_75 : i32 to vector<128x1xi32>
    %191 = arith.addi %189, %190 : vector<128x1xi32>
    %c2_i32_76 = arith.constant 2 : i32
    %192 = vector.broadcast %c2_i32_76 : i32 to vector<128x1xi32>
    %193 = arith.muli %192, %11 : vector<128x1xi32>
    %c1_i32_77 = arith.constant 1 : i32
    %194 = vector.broadcast %c1_i32_77 : i32 to vector<128x1xi32>
    %195 = arith.subi %193, %194 : vector<128x1xi32>
    %c1_i32_78 = arith.constant 1 : i32
    %196 = vector.broadcast %c1_i32_78 : i32 to vector<128x1xi32>
    %197 = arith.addi %195, %196 : vector<128x1xi32>
    %c0_i32_79 = arith.constant 0 : i32
    %198 = vector.broadcast %c0_i32_79 : i32 to vector<128x1xi32>
    %199 = arith.cmpi sge, %191, %198 : vector<128x1xi32>
    %c16_i32_80 = arith.constant 16 : i32
    %200 = vector.broadcast %c16_i32_80 : i32 to vector<128x1xi32>
    %201 = arith.cmpi slt, %191, %200 : vector<128x1xi32>
    %202 = arith.andi %199, %201 : vector<128x1xi1>
    %c0_i32_81 = arith.constant 0 : i32
    %203 = vector.broadcast %c0_i32_81 : i32 to vector<128x1xi32>
    %204 = arith.cmpi sge, %197, %203 : vector<128x1xi32>
    %205 = arith.andi %202, %204 : vector<128x1xi1>
    %c16_i32_82 = arith.constant 16 : i32
    %206 = vector.broadcast %c16_i32_82 : i32 to vector<128x1xi32>
    %207 = arith.cmpi slt, %197, %206 : vector<128x1xi32>
    %208 = arith.andi %205, %207 : vector<128x1xi1>
    %c256_i32_83 = arith.constant 256 : i32
    %209 = vector.broadcast %c256_i32_83 : i32 to vector<128x1xi32>
    %210 = arith.muli %5, %209 : vector<128x1xi32>
    %c16_i32_84 = arith.constant 16 : i32
    %211 = vector.broadcast %c16_i32_84 : i32 to vector<128x1xi32>
    %212 = arith.muli %191, %211 : vector<128x1xi32>
    %213 = arith.addi %210, %212 : vector<128x1xi32>
    %214 = arith.addi %213, %197 : vector<128x1xi32>
    %215 = vector.broadcast %214 : vector<128x1xi32> to vector<128x512xi32>
    %216 = arith.cmpi eq, %12, %215 : vector<128x512xi32>
    %217 = vector.broadcast %208 : vector<128x1xi1> to vector<128x512xi1>
    %218 = arith.andi %217, %216 : vector<128x512xi1>
    %cst_85 = arith.constant 1.000000e+00 : f32
    %cst_86 = arith.constant 0.000000e+00 : f32
    %219 = vector.broadcast %cst_85 : f32 to vector<128x512xf32>
    %220 = vector.broadcast %cst_86 : f32 to vector<128x512xf32>
    %221 = arith.select %218, %219, %220 : vector<128x512xi1>, vector<128x512xf32>
    %222 = arith.truncf %221 : vector<128x512xf32> to vector<128x512xbf16>
    %cst_87 = arith.constant dense<0.000000e+00> : vector<128x3xf32>
    %223 = tpu.matmul %222, %0, %cst_87 {dimension_numbers = #tpu.dot_dimension_numbers<[1], [0], [0], [1], [0, 0, 1, 1], [], []>} : vector<128x512xbf16>, vector<512x3xbf16>, vector<128x3xf32> -> vector<128x3xf32>
    %224 = arith.truncf %223 : vector<128x3xf32> to vector<128x3xbf16>
    %c4 = arith.constant 4 : index
    %c0_88 = arith.constant 0 : index
    %c0_89 = arith.constant 0 : index
    %225 = vector.load %arg1[%c4, %c0_88, %c0_89] : memref<9x3x16xbf16, #tpu.memory_space<vmem>>, vector<1x3x16xbf16>
    %226 = vector.shape_cast %225 : vector<1x3x16xbf16> to vector<3x16xbf16>
    %cst_90 = arith.constant dense<0.000000e+00> : vector<128x16xf32>
    %227 = tpu.matmul %224, %226, %cst_90 {dimension_numbers = #tpu.dot_dimension_numbers<[1], [0], [0], [1], [0, 0, 1, 1], [], []>} : vector<128x3xbf16>, vector<3x16xbf16>, vector<128x16xf32> -> vector<128x16xf32>
    %228 = arith.addf %185, %227 : vector<128x16xf32>
    %c2_i32_91 = arith.constant 2 : i32
    %229 = vector.broadcast %c2_i32_91 : i32 to vector<128x1xi32>
    %230 = arith.muli %229, %9 : vector<128x1xi32>
    %c1_i32_92 = arith.constant 1 : i32
    %231 = vector.broadcast %c1_i32_92 : i32 to vector<128x1xi32>
    %232 = arith.subi %230, %231 : vector<128x1xi32>
    %c1_i32_93 = arith.constant 1 : i32
    %233 = vector.broadcast %c1_i32_93 : i32 to vector<128x1xi32>
    %234 = arith.addi %232, %233 : vector<128x1xi32>
    %c2_i32_94 = arith.constant 2 : i32
    %235 = vector.broadcast %c2_i32_94 : i32 to vector<128x1xi32>
    %236 = arith.muli %235, %11 : vector<128x1xi32>
    %c1_i32_95 = arith.constant 1 : i32
    %237 = vector.broadcast %c1_i32_95 : i32 to vector<128x1xi32>
    %238 = arith.subi %236, %237 : vector<128x1xi32>
    %c2_i32_96 = arith.constant 2 : i32
    %239 = vector.broadcast %c2_i32_96 : i32 to vector<128x1xi32>
    %240 = arith.addi %238, %239 : vector<128x1xi32>
    %c0_i32_97 = arith.constant 0 : i32
    %241 = vector.broadcast %c0_i32_97 : i32 to vector<128x1xi32>
    %242 = arith.cmpi sge, %234, %241 : vector<128x1xi32>
    %c16_i32_98 = arith.constant 16 : i32
    %243 = vector.broadcast %c16_i32_98 : i32 to vector<128x1xi32>
    %244 = arith.cmpi slt, %234, %243 : vector<128x1xi32>
    %245 = arith.andi %242, %244 : vector<128x1xi1>
    %c0_i32_99 = arith.constant 0 : i32
    %246 = vector.broadcast %c0_i32_99 : i32 to vector<128x1xi32>
    %247 = arith.cmpi sge, %240, %246 : vector<128x1xi32>
    %248 = arith.andi %245, %247 : vector<128x1xi1>
    %c16_i32_100 = arith.constant 16 : i32
    %249 = vector.broadcast %c16_i32_100 : i32 to vector<128x1xi32>
    %250 = arith.cmpi slt, %240, %249 : vector<128x1xi32>
    %251 = arith.andi %248, %250 : vector<128x1xi1>
    %c256_i32_101 = arith.constant 256 : i32
    %252 = vector.broadcast %c256_i32_101 : i32 to vector<128x1xi32>
    %253 = arith.muli %5, %252 : vector<128x1xi32>
    %c16_i32_102 = arith.constant 16 : i32
    %254 = vector.broadcast %c16_i32_102 : i32 to vector<128x1xi32>
    %255 = arith.muli %234, %254 : vector<128x1xi32>
    %256 = arith.addi %253, %255 : vector<128x1xi32>
    %257 = arith.addi %256, %240 : vector<128x1xi32>
    %258 = vector.broadcast %257 : vector<128x1xi32> to vector<128x512xi32>
    %259 = arith.cmpi eq, %12, %258 : vector<128x512xi32>
    %260 = vector.broadcast %251 : vector<128x1xi1> to vector<128x512xi1>
    %261 = arith.andi %260, %259 : vector<128x512xi1>
    %cst_103 = arith.constant 1.000000e+00 : f32
    %cst_104 = arith.constant 0.000000e+00 : f32
    %262 = vector.broadcast %cst_103 : f32 to vector<128x512xf32>
    %263 = vector.broadcast %cst_104 : f32 to vector<128x512xf32>
    %264 = arith.select %261, %262, %263 : vector<128x512xi1>, vector<128x512xf32>
    %265 = arith.truncf %264 : vector<128x512xf32> to vector<128x512xbf16>
    %cst_105 = arith.constant dense<0.000000e+00> : vector<128x3xf32>
    %266 = tpu.matmul %265, %0, %cst_105 {dimension_numbers = #tpu.dot_dimension_numbers<[1], [0], [0], [1], [0, 0, 1, 1], [], []>} : vector<128x512xbf16>, vector<512x3xbf16>, vector<128x3xf32> -> vector<128x3xf32>
    %267 = arith.truncf %266 : vector<128x3xf32> to vector<128x3xbf16>
    %c5 = arith.constant 5 : index
    %c0_106 = arith.constant 0 : index
    %c0_107 = arith.constant 0 : index
    %268 = vector.load %arg1[%c5, %c0_106, %c0_107] : memref<9x3x16xbf16, #tpu.memory_space<vmem>>, vector<1x3x16xbf16>
    %269 = vector.shape_cast %268 : vector<1x3x16xbf16> to vector<3x16xbf16>
    %cst_108 = arith.constant dense<0.000000e+00> : vector<128x16xf32>
    %270 = tpu.matmul %267, %269, %cst_108 {dimension_numbers = #tpu.dot_dimension_numbers<[1], [0], [0], [1], [0, 0, 1, 1], [], []>} : vector<128x3xbf16>, vector<3x16xbf16>, vector<128x16xf32> -> vector<128x16xf32>
    %271 = arith.addf %228, %270 : vector<128x16xf32>
    %c2_i32_109 = arith.constant 2 : i32
    %272 = vector.broadcast %c2_i32_109 : i32 to vector<128x1xi32>
    %273 = arith.muli %272, %9 : vector<128x1xi32>
    %c1_i32_110 = arith.constant 1 : i32
    %274 = vector.broadcast %c1_i32_110 : i32 to vector<128x1xi32>
    %275 = arith.subi %273, %274 : vector<128x1xi32>
    %c2_i32_111 = arith.constant 2 : i32
    %276 = vector.broadcast %c2_i32_111 : i32 to vector<128x1xi32>
    %277 = arith.addi %275, %276 : vector<128x1xi32>
    %c2_i32_112 = arith.constant 2 : i32
    %278 = vector.broadcast %c2_i32_112 : i32 to vector<128x1xi32>
    %279 = arith.muli %278, %11 : vector<128x1xi32>
    %c1_i32_113 = arith.constant 1 : i32
    %280 = vector.broadcast %c1_i32_113 : i32 to vector<128x1xi32>
    %281 = arith.subi %279, %280 : vector<128x1xi32>
    %c0_i32_114 = arith.constant 0 : i32
    %282 = vector.broadcast %c0_i32_114 : i32 to vector<128x1xi32>
    %283 = arith.addi %281, %282 : vector<128x1xi32>
    %c0_i32_115 = arith.constant 0 : i32
    %284 = vector.broadcast %c0_i32_115 : i32 to vector<128x1xi32>
    %285 = arith.cmpi sge, %277, %284 : vector<128x1xi32>
    %c16_i32_116 = arith.constant 16 : i32
    %286 = vector.broadcast %c16_i32_116 : i32 to vector<128x1xi32>
    %287 = arith.cmpi slt, %277, %286 : vector<128x1xi32>
    %288 = arith.andi %285, %287 : vector<128x1xi1>
    %c0_i32_117 = arith.constant 0 : i32
    %289 = vector.broadcast %c0_i32_117 : i32 to vector<128x1xi32>
    %290 = arith.cmpi sge, %283, %289 : vector<128x1xi32>
    %291 = arith.andi %288, %290 : vector<128x1xi1>
    %c16_i32_118 = arith.constant 16 : i32
    %292 = vector.broadcast %c16_i32_118 : i32 to vector<128x1xi32>
    %293 = arith.cmpi slt, %283, %292 : vector<128x1xi32>
    %294 = arith.andi %291, %293 : vector<128x1xi1>
    %c256_i32_119 = arith.constant 256 : i32
    %295 = vector.broadcast %c256_i32_119 : i32 to vector<128x1xi32>
    %296 = arith.muli %5, %295 : vector<128x1xi32>
    %c16_i32_120 = arith.constant 16 : i32
    %297 = vector.broadcast %c16_i32_120 : i32 to vector<128x1xi32>
    %298 = arith.muli %277, %297 : vector<128x1xi32>
    %299 = arith.addi %296, %298 : vector<128x1xi32>
    %300 = arith.addi %299, %283 : vector<128x1xi32>
    %301 = vector.broadcast %300 : vector<128x1xi32> to vector<128x512xi32>
    %302 = arith.cmpi eq, %12, %301 : vector<128x512xi32>
    %303 = vector.broadcast %294 : vector<128x1xi1> to vector<128x512xi1>
    %304 = arith.andi %303, %302 : vector<128x512xi1>
    %cst_121 = arith.constant 1.000000e+00 : f32
    %cst_122 = arith.constant 0.000000e+00 : f32
    %305 = vector.broadcast %cst_121 : f32 to vector<128x512xf32>
    %306 = vector.broadcast %cst_122 : f32 to vector<128x512xf32>
    %307 = arith.select %304, %305, %306 : vector<128x512xi1>, vector<128x512xf32>
    %308 = arith.truncf %307 : vector<128x512xf32> to vector<128x512xbf16>
    %cst_123 = arith.constant dense<0.000000e+00> : vector<128x3xf32>
    %309 = tpu.matmul %308, %0, %cst_123 {dimension_numbers = #tpu.dot_dimension_numbers<[1], [0], [0], [1], [0, 0, 1, 1], [], []>} : vector<128x512xbf16>, vector<512x3xbf16>, vector<128x3xf32> -> vector<128x3xf32>
    %310 = arith.truncf %309 : vector<128x3xf32> to vector<128x3xbf16>
    %c6 = arith.constant 6 : index
    %c0_124 = arith.constant 0 : index
    %c0_125 = arith.constant 0 : index
    %311 = vector.load %arg1[%c6, %c0_124, %c0_125] : memref<9x3x16xbf16, #tpu.memory_space<vmem>>, vector<1x3x16xbf16>
    %312 = vector.shape_cast %311 : vector<1x3x16xbf16> to vector<3x16xbf16>
    %cst_126 = arith.constant dense<0.000000e+00> : vector<128x16xf32>
    %313 = tpu.matmul %310, %312, %cst_126 {dimension_numbers = #tpu.dot_dimension_numbers<[1], [0], [0], [1], [0, 0, 1, 1], [], []>} : vector<128x3xbf16>, vector<3x16xbf16>, vector<128x16xf32> -> vector<128x16xf32>
    %314 = arith.addf %271, %313 : vector<128x16xf32>
    %c2_i32_127 = arith.constant 2 : i32
    %315 = vector.broadcast %c2_i32_127 : i32 to vector<128x1xi32>
    %316 = arith.muli %315, %9 : vector<128x1xi32>
    %c1_i32_128 = arith.constant 1 : i32
    %317 = vector.broadcast %c1_i32_128 : i32 to vector<128x1xi32>
    %318 = arith.subi %316, %317 : vector<128x1xi32>
    %c2_i32_129 = arith.constant 2 : i32
    %319 = vector.broadcast %c2_i32_129 : i32 to vector<128x1xi32>
    %320 = arith.addi %318, %319 : vector<128x1xi32>
    %c2_i32_130 = arith.constant 2 : i32
    %321 = vector.broadcast %c2_i32_130 : i32 to vector<128x1xi32>
    %322 = arith.muli %321, %11 : vector<128x1xi32>
    %c1_i32_131 = arith.constant 1 : i32
    %323 = vector.broadcast %c1_i32_131 : i32 to vector<128x1xi32>
    %324 = arith.subi %322, %323 : vector<128x1xi32>
    %c1_i32_132 = arith.constant 1 : i32
    %325 = vector.broadcast %c1_i32_132 : i32 to vector<128x1xi32>
    %326 = arith.addi %324, %325 : vector<128x1xi32>
    %c0_i32_133 = arith.constant 0 : i32
    %327 = vector.broadcast %c0_i32_133 : i32 to vector<128x1xi32>
    %328 = arith.cmpi sge, %320, %327 : vector<128x1xi32>
    %c16_i32_134 = arith.constant 16 : i32
    %329 = vector.broadcast %c16_i32_134 : i32 to vector<128x1xi32>
    %330 = arith.cmpi slt, %320, %329 : vector<128x1xi32>
    %331 = arith.andi %328, %330 : vector<128x1xi1>
    %c0_i32_135 = arith.constant 0 : i32
    %332 = vector.broadcast %c0_i32_135 : i32 to vector<128x1xi32>
    %333 = arith.cmpi sge, %326, %332 : vector<128x1xi32>
    %334 = arith.andi %331, %333 : vector<128x1xi1>
    %c16_i32_136 = arith.constant 16 : i32
    %335 = vector.broadcast %c16_i32_136 : i32 to vector<128x1xi32>
    %336 = arith.cmpi slt, %326, %335 : vector<128x1xi32>
    %337 = arith.andi %334, %336 : vector<128x1xi1>
    %c256_i32_137 = arith.constant 256 : i32
    %338 = vector.broadcast %c256_i32_137 : i32 to vector<128x1xi32>
    %339 = arith.muli %5, %338 : vector<128x1xi32>
    %c16_i32_138 = arith.constant 16 : i32
    %340 = vector.broadcast %c16_i32_138 : i32 to vector<128x1xi32>
    %341 = arith.muli %320, %340 : vector<128x1xi32>
    %342 = arith.addi %339, %341 : vector<128x1xi32>
    %343 = arith.addi %342, %326 : vector<128x1xi32>
    %344 = vector.broadcast %343 : vector<128x1xi32> to vector<128x512xi32>
    %345 = arith.cmpi eq, %12, %344 : vector<128x512xi32>
    %346 = vector.broadcast %337 : vector<128x1xi1> to vector<128x512xi1>
    %347 = arith.andi %346, %345 : vector<128x512xi1>
    %cst_139 = arith.constant 1.000000e+00 : f32
    %cst_140 = arith.constant 0.000000e+00 : f32
    %348 = vector.broadcast %cst_139 : f32 to vector<128x512xf32>
    %349 = vector.broadcast %cst_140 : f32 to vector<128x512xf32>
    %350 = arith.select %347, %348, %349 : vector<128x512xi1>, vector<128x512xf32>
    %351 = arith.truncf %350 : vector<128x512xf32> to vector<128x512xbf16>
    %cst_141 = arith.constant dense<0.000000e+00> : vector<128x3xf32>
    %352 = tpu.matmul %351, %0, %cst_141 {dimension_numbers = #tpu.dot_dimension_numbers<[1], [0], [0], [1], [0, 0, 1, 1], [], []>} : vector<128x512xbf16>, vector<512x3xbf16>, vector<128x3xf32> -> vector<128x3xf32>
    %353 = arith.truncf %352 : vector<128x3xf32> to vector<128x3xbf16>
    %c7 = arith.constant 7 : index
    %c0_142 = arith.constant 0 : index
    %c0_143 = arith.constant 0 : index
    %354 = vector.load %arg1[%c7, %c0_142, %c0_143] : memref<9x3x16xbf16, #tpu.memory_space<vmem>>, vector<1x3x16xbf16>
    %355 = vector.shape_cast %354 : vector<1x3x16xbf16> to vector<3x16xbf16>
    %cst_144 = arith.constant dense<0.000000e+00> : vector<128x16xf32>
    %356 = tpu.matmul %353, %355, %cst_144 {dimension_numbers = #tpu.dot_dimension_numbers<[1], [0], [0], [1], [0, 0, 1, 1], [], []>} : vector<128x3xbf16>, vector<3x16xbf16>, vector<128x16xf32> -> vector<128x16xf32>
    %357 = arith.addf %314, %356 : vector<128x16xf32>
    %c2_i32_145 = arith.constant 2 : i32
    %358 = vector.broadcast %c2_i32_145 : i32 to vector<128x1xi32>
    %359 = arith.muli %358, %9 : vector<128x1xi32>
    %c1_i32_146 = arith.constant 1 : i32
    %360 = vector.broadcast %c1_i32_146 : i32 to vector<128x1xi32>
    %361 = arith.subi %359, %360 : vector<128x1xi32>
    %c2_i32_147 = arith.constant 2 : i32
    %362 = vector.broadcast %c2_i32_147 : i32 to vector<128x1xi32>
    %363 = arith.addi %361, %362 : vector<128x1xi32>
    %c2_i32_148 = arith.constant 2 : i32
    %364 = vector.broadcast %c2_i32_148 : i32 to vector<128x1xi32>
    %365 = arith.muli %364, %11 : vector<128x1xi32>
    %c1_i32_149 = arith.constant 1 : i32
    %366 = vector.broadcast %c1_i32_149 : i32 to vector<128x1xi32>
    %367 = arith.subi %365, %366 : vector<128x1xi32>
    %c2_i32_150 = arith.constant 2 : i32
    %368 = vector.broadcast %c2_i32_150 : i32 to vector<128x1xi32>
    %369 = arith.addi %367, %368 : vector<128x1xi32>
    %c0_i32_151 = arith.constant 0 : i32
    %370 = vector.broadcast %c0_i32_151 : i32 to vector<128x1xi32>
    %371 = arith.cmpi sge, %363, %370 : vector<128x1xi32>
    %c16_i32_152 = arith.constant 16 : i32
    %372 = vector.broadcast %c16_i32_152 : i32 to vector<128x1xi32>
    %373 = arith.cmpi slt, %363, %372 : vector<128x1xi32>
    %374 = arith.andi %371, %373 : vector<128x1xi1>
    %c0_i32_153 = arith.constant 0 : i32
    %375 = vector.broadcast %c0_i32_153 : i32 to vector<128x1xi32>
    %376 = arith.cmpi sge, %369, %375 : vector<128x1xi32>
    %377 = arith.andi %374, %376 : vector<128x1xi1>
    %c16_i32_154 = arith.constant 16 : i32
    %378 = vector.broadcast %c16_i32_154 : i32 to vector<128x1xi32>
    %379 = arith.cmpi slt, %369, %378 : vector<128x1xi32>
    %380 = arith.andi %377, %379 : vector<128x1xi1>
    %c256_i32_155 = arith.constant 256 : i32
    %381 = vector.broadcast %c256_i32_155 : i32 to vector<128x1xi32>
    %382 = arith.muli %5, %381 : vector<128x1xi32>
    %c16_i32_156 = arith.constant 16 : i32
    %383 = vector.broadcast %c16_i32_156 : i32 to vector<128x1xi32>
    %384 = arith.muli %363, %383 : vector<128x1xi32>
    %385 = arith.addi %382, %384 : vector<128x1xi32>
    %386 = arith.addi %385, %369 : vector<128x1xi32>
    %387 = vector.broadcast %386 : vector<128x1xi32> to vector<128x512xi32>
    %388 = arith.cmpi eq, %12, %387 : vector<128x512xi32>
    %389 = vector.broadcast %380 : vector<128x1xi1> to vector<128x512xi1>
    %390 = arith.andi %389, %388 : vector<128x512xi1>
    %cst_157 = arith.constant 1.000000e+00 : f32
    %cst_158 = arith.constant 0.000000e+00 : f32
    %391 = vector.broadcast %cst_157 : f32 to vector<128x512xf32>
    %392 = vector.broadcast %cst_158 : f32 to vector<128x512xf32>
    %393 = arith.select %390, %391, %392 : vector<128x512xi1>, vector<128x512xf32>
    %394 = arith.truncf %393 : vector<128x512xf32> to vector<128x512xbf16>
    %cst_159 = arith.constant dense<0.000000e+00> : vector<128x3xf32>
    %395 = tpu.matmul %394, %0, %cst_159 {dimension_numbers = #tpu.dot_dimension_numbers<[1], [0], [0], [1], [0, 0, 1, 1], [], []>} : vector<128x512xbf16>, vector<512x3xbf16>, vector<128x3xf32> -> vector<128x3xf32>
    %396 = arith.truncf %395 : vector<128x3xf32> to vector<128x3xbf16>
    %c8 = arith.constant 8 : index
    %c0_160 = arith.constant 0 : index
    %c0_161 = arith.constant 0 : index
    %397 = vector.load %arg1[%c8, %c0_160, %c0_161] : memref<9x3x16xbf16, #tpu.memory_space<vmem>>, vector<1x3x16xbf16>
    %398 = vector.shape_cast %397 : vector<1x3x16xbf16> to vector<3x16xbf16>
    %cst_162 = arith.constant dense<0.000000e+00> : vector<128x16xf32>
    %399 = tpu.matmul %396, %398, %cst_162 {dimension_numbers = #tpu.dot_dimension_numbers<[1], [0], [0], [1], [0, 0, 1, 1], [], []>} : vector<128x3xbf16>, vector<3x16xbf16>, vector<128x16xf32> -> vector<128x16xf32>
    %400 = arith.addf %357, %399 : vector<128x16xf32>
    %cst_163 = arith.constant dense<0.000000e+00> : vector<16xf32>
    %401 = vector.multi_reduction <add>, %400, %cst_163 [0] : vector<128x16xf32> to vector<16xf32>
    %402 = vector.shape_cast %401 : vector<16xf32> to vector<1x16xf32>
    %403 = arith.mulf %400, %400 : vector<128x16xf32>
    %cst_164 = arith.constant dense<0.000000e+00> : vector<16xf32>
    %404 = vector.multi_reduction <add>, %403, %cst_164 [0] : vector<128x16xf32> to vector<16xf32>
    %405 = vector.shape_cast %404 : vector<16xf32> to vector<1x16xf32>
    %cst_165 = arith.constant 7.812500e-03 : f32
    %406 = vector.broadcast %cst_165 : f32 to vector<1x16xf32>
    %407 = arith.mulf %402, %406 : vector<1x16xf32>
    %cst_166 = arith.constant 7.812500e-03 : f32
    %408 = vector.broadcast %cst_166 : f32 to vector<1x16xf32>
    %409 = arith.mulf %405, %408 : vector<1x16xf32>
    %410 = arith.mulf %407, %407 : vector<1x16xf32>
    %411 = arith.subf %409, %410 : vector<1x16xf32>
    %cst_167 = arith.constant 9.99999974E-6 : f32
    %412 = vector.broadcast %cst_167 : f32 to vector<1x16xf32>
    %413 = arith.addf %411, %412 : vector<1x16xf32>
    %414 = math.rsqrt %413 : vector<1x16xf32>
    %415 = arith.mulf %414, %1 : vector<1x16xf32>
    %416 = vector.broadcast %407 : vector<1x16xf32> to vector<128x16xf32>
    %417 = arith.subf %400, %416 : vector<128x16xf32>
    %418 = vector.broadcast %415 : vector<1x16xf32> to vector<128x16xf32>
    %419 = arith.mulf %417, %418 : vector<128x16xf32>
    %420 = vector.broadcast %2 : vector<1x16xf32> to vector<128x16xf32>
    %421 = arith.addf %419, %420 : vector<128x16xf32>
    %cst_168 = arith.constant 0.000000e+00 : f32
    %422 = vector.broadcast %cst_168 : f32 to vector<128x16xf32>
    %423 = arith.maximumf %421, %422 : vector<128x16xf32>
    %424 = arith.truncf %423 : vector<128x16xf32> to vector<128x16xbf16>
    %c2_169 = arith.constant 2 : index
    %c0_170 = arith.constant 0 : index
    %425 = vector.load %arg5[%c2_169, %c0_170] : memref<8x64xf32, #tpu.memory_space<vmem>>, vector<1x32xf32>
    %c3_171 = arith.constant 3 : index
    %c0_172 = arith.constant 0 : index
    %426 = vector.load %arg5[%c3_171, %c0_172] : memref<8x64xf32, #tpu.memory_space<vmem>>, vector<1x32xf32>
    %427 = tpu.iota {dimensions = array<i32: 0>} : vector<32x1xi32>
    %c4_i32 = arith.constant 4 : i32
    %428 = vector.broadcast %c4_i32 : i32 to vector<32x1xi32>
    %429 = arith.shrsi %427, %428 : vector<32x1xi32>
    %c15_i32 = arith.constant 15 : i32
    %430 = vector.broadcast %c15_i32 : i32 to vector<32x1xi32>
    %431 = arith.andi %427, %430 : vector<32x1xi32>
    %c2_i32_173 = arith.constant 2 : i32
    %432 = vector.broadcast %c2_i32_173 : i32 to vector<32x1xi32>
    %433 = arith.shrsi %431, %432 : vector<32x1xi32>
    %c3_i32_174 = arith.constant 3 : i32
    %434 = vector.broadcast %c3_i32_174 : i32 to vector<32x1xi32>
    %435 = arith.andi %431, %434 : vector<32x1xi32>
    %436 = tpu.iota {dimensions = array<i32: 1>} : vector<32x128xi32>
    %cst_175 = arith.constant 0.000000e+00 : f32
    %437 = vector.broadcast %cst_175 : f32 to vector<32x32xf32>
    %c2_i32_176 = arith.constant 2 : i32
    %438 = vector.broadcast %c2_i32_176 : i32 to vector<32x1xi32>
    %439 = arith.muli %438, %433 : vector<32x1xi32>
    %c1_i32_177 = arith.constant 1 : i32
    %440 = vector.broadcast %c1_i32_177 : i32 to vector<32x1xi32>
    %441 = arith.subi %439, %440 : vector<32x1xi32>
    %c0_i32_178 = arith.constant 0 : i32
    %442 = vector.broadcast %c0_i32_178 : i32 to vector<32x1xi32>
    %443 = arith.addi %441, %442 : vector<32x1xi32>
    %c2_i32_179 = arith.constant 2 : i32
    %444 = vector.broadcast %c2_i32_179 : i32 to vector<32x1xi32>
    %445 = arith.muli %444, %435 : vector<32x1xi32>
    %c1_i32_180 = arith.constant 1 : i32
    %446 = vector.broadcast %c1_i32_180 : i32 to vector<32x1xi32>
    %447 = arith.subi %445, %446 : vector<32x1xi32>
    %c0_i32_181 = arith.constant 0 : i32
    %448 = vector.broadcast %c0_i32_181 : i32 to vector<32x1xi32>
    %449 = arith.addi %447, %448 : vector<32x1xi32>
    %c0_i32_182 = arith.constant 0 : i32
    %450 = vector.broadcast %c0_i32_182 : i32 to vector<32x1xi32>
    %451 = arith.cmpi sge, %443, %450 : vector<32x1xi32>
    %c8_i32 = arith.constant 8 : i32
    %452 = vector.broadcast %c8_i32 : i32 to vector<32x1xi32>
    %453 = arith.cmpi slt, %443, %452 : vector<32x1xi32>
    %454 = arith.andi %451, %453 : vector<32x1xi1>
    %c0_i32_183 = arith.constant 0 : i32
    %455 = vector.broadcast %c0_i32_183 : i32 to vector<32x1xi32>
    %456 = arith.cmpi sge, %449, %455 : vector<32x1xi32>
    %457 = arith.andi %454, %456 : vector<32x1xi1>
    %c8_i32_184 = arith.constant 8 : i32
    %458 = vector.broadcast %c8_i32_184 : i32 to vector<32x1xi32>
    %459 = arith.cmpi slt, %449, %458 : vector<32x1xi32>
    %460 = arith.andi %457, %459 : vector<32x1xi1>
    %c64_i32 = arith.constant 64 : i32
    %461 = vector.broadcast %c64_i32 : i32 to vector<32x1xi32>
    %462 = arith.muli %429, %461 : vector<32x1xi32>
    %c8_i32_185 = arith.constant 8 : i32
    %463 = vector.broadcast %c8_i32_185 : i32 to vector<32x1xi32>
    %464 = arith.muli %443, %463 : vector<32x1xi32>
    %465 = arith.addi %462, %464 : vector<32x1xi32>
    %466 = arith.addi %465, %449 : vector<32x1xi32>
    %467 = vector.broadcast %466 : vector<32x1xi32> to vector<32x128xi32>
    %468 = arith.cmpi eq, %436, %467 : vector<32x128xi32>
    %469 = vector.broadcast %460 : vector<32x1xi1> to vector<32x128xi1>
    %470 = arith.andi %469, %468 : vector<32x128xi1>
    %cst_186 = arith.constant 1.000000e+00 : f32
    %cst_187 = arith.constant 0.000000e+00 : f32
    %471 = vector.broadcast %cst_186 : f32 to vector<32x128xf32>
    %472 = vector.broadcast %cst_187 : f32 to vector<32x128xf32>
    %473 = arith.select %470, %471, %472 : vector<32x128xi1>, vector<32x128xf32>
    %474 = arith.truncf %473 : vector<32x128xf32> to vector<32x128xbf16>
    %cst_188 = arith.constant dense<0.000000e+00> : vector<32x16xf32>
    %475 = tpu.matmul %474, %424, %cst_188 {dimension_numbers = #tpu.dot_dimension_numbers<[1], [0], [0], [1], [0, 0, 1, 1], [], []>} : vector<32x128xbf16>, vector<128x16xbf16>, vector<32x16xf32> -> vector<32x16xf32>
    %476 = arith.truncf %475 : vector<32x16xf32> to vector<32x16xbf16>
    %c0_189 = arith.constant 0 : index
    %c0_190 = arith.constant 0 : index
    %c0_191 = arith.constant 0 : index
    %477 = vector.load %arg2[%c0_189, %c0_190, %c0_191] : memref<9x16x32xbf16, #tpu.memory_space<vmem>>, vector<1x16x32xbf16>
    %478 = vector.shape_cast %477 : vector<1x16x32xbf16> to vector<16x32xbf16>
    %cst_192 = arith.constant dense<0.000000e+00> : vector<32x32xf32>
    %479 = tpu.matmul %476, %478, %cst_192 {dimension_numbers = #tpu.dot_dimension_numbers<[1], [0], [0], [1], [0, 0, 1, 1], [], []>} : vector<32x16xbf16>, vector<16x32xbf16>, vector<32x32xf32> -> vector<32x32xf32>
    %480 = arith.addf %437, %479 : vector<32x32xf32>
    %c2_i32_193 = arith.constant 2 : i32
    %481 = vector.broadcast %c2_i32_193 : i32 to vector<32x1xi32>
    %482 = arith.muli %481, %433 : vector<32x1xi32>
    %c1_i32_194 = arith.constant 1 : i32
    %483 = vector.broadcast %c1_i32_194 : i32 to vector<32x1xi32>
    %484 = arith.subi %482, %483 : vector<32x1xi32>
    %c0_i32_195 = arith.constant 0 : i32
    %485 = vector.broadcast %c0_i32_195 : i32 to vector<32x1xi32>
    %486 = arith.addi %484, %485 : vector<32x1xi32>
    %c2_i32_196 = arith.constant 2 : i32
    %487 = vector.broadcast %c2_i32_196 : i32 to vector<32x1xi32>
    %488 = arith.muli %487, %435 : vector<32x1xi32>
    %c1_i32_197 = arith.constant 1 : i32
    %489 = vector.broadcast %c1_i32_197 : i32 to vector<32x1xi32>
    %490 = arith.subi %488, %489 : vector<32x1xi32>
    %c1_i32_198 = arith.constant 1 : i32
    %491 = vector.broadcast %c1_i32_198 : i32 to vector<32x1xi32>
    %492 = arith.addi %490, %491 : vector<32x1xi32>
    %c0_i32_199 = arith.constant 0 : i32
    %493 = vector.broadcast %c0_i32_199 : i32 to vector<32x1xi32>
    %494 = arith.cmpi sge, %486, %493 : vector<32x1xi32>
    %c8_i32_200 = arith.constant 8 : i32
    %495 = vector.broadcast %c8_i32_200 : i32 to vector<32x1xi32>
    %496 = arith.cmpi slt, %486, %495 : vector<32x1xi32>
    %497 = arith.andi %494, %496 : vector<32x1xi1>
    %c0_i32_201 = arith.constant 0 : i32
    %498 = vector.broadcast %c0_i32_201 : i32 to vector<32x1xi32>
    %499 = arith.cmpi sge, %492, %498 : vector<32x1xi32>
    %500 = arith.andi %497, %499 : vector<32x1xi1>
    %c8_i32_202 = arith.constant 8 : i32
    %501 = vector.broadcast %c8_i32_202 : i32 to vector<32x1xi32>
    %502 = arith.cmpi slt, %492, %501 : vector<32x1xi32>
    %503 = arith.andi %500, %502 : vector<32x1xi1>
    %c64_i32_203 = arith.constant 64 : i32
    %504 = vector.broadcast %c64_i32_203 : i32 to vector<32x1xi32>
    %505 = arith.muli %429, %504 : vector<32x1xi32>
    %c8_i32_204 = arith.constant 8 : i32
    %506 = vector.broadcast %c8_i32_204 : i32 to vector<32x1xi32>
    %507 = arith.muli %486, %506 : vector<32x1xi32>
    %508 = arith.addi %505, %507 : vector<32x1xi32>
    %509 = arith.addi %508, %492 : vector<32x1xi32>
    %510 = vector.broadcast %509 : vector<32x1xi32> to vector<32x128xi32>
    %511 = arith.cmpi eq, %436, %510 : vector<32x128xi32>
    %512 = vector.broadcast %503 : vector<32x1xi1> to vector<32x128xi1>
    %513 = arith.andi %512, %511 : vector<32x128xi1>
    %cst_205 = arith.constant 1.000000e+00 : f32
    %cst_206 = arith.constant 0.000000e+00 : f32
    %514 = vector.broadcast %cst_205 : f32 to vector<32x128xf32>
    %515 = vector.broadcast %cst_206 : f32 to vector<32x128xf32>
    %516 = arith.select %513, %514, %515 : vector<32x128xi1>, vector<32x128xf32>
    %517 = arith.truncf %516 : vector<32x128xf32> to vector<32x128xbf16>
    %cst_207 = arith.constant dense<0.000000e+00> : vector<32x16xf32>
    %518 = tpu.matmul %517, %424, %cst_207 {dimension_numbers = #tpu.dot_dimension_numbers<[1], [0], [0], [1], [0, 0, 1, 1], [], []>} : vector<32x128xbf16>, vector<128x16xbf16>, vector<32x16xf32> -> vector<32x16xf32>
    %519 = arith.truncf %518 : vector<32x16xf32> to vector<32x16xbf16>
    %c1_208 = arith.constant 1 : index
    %c0_209 = arith.constant 0 : index
    %c0_210 = arith.constant 0 : index
    %520 = vector.load %arg2[%c1_208, %c0_209, %c0_210] : memref<9x16x32xbf16, #tpu.memory_space<vmem>>, vector<1x16x32xbf16>
    %521 = vector.shape_cast %520 : vector<1x16x32xbf16> to vector<16x32xbf16>
    %cst_211 = arith.constant dense<0.000000e+00> : vector<32x32xf32>
    %522 = tpu.matmul %519, %521, %cst_211 {dimension_numbers = #tpu.dot_dimension_numbers<[1], [0], [0], [1], [0, 0, 1, 1], [], []>} : vector<32x16xbf16>, vector<16x32xbf16>, vector<32x32xf32> -> vector<32x32xf32>
    %523 = arith.addf %480, %522 : vector<32x32xf32>
    %c2_i32_212 = arith.constant 2 : i32
    %524 = vector.broadcast %c2_i32_212 : i32 to vector<32x1xi32>
    %525 = arith.muli %524, %433 : vector<32x1xi32>
    %c1_i32_213 = arith.constant 1 : i32
    %526 = vector.broadcast %c1_i32_213 : i32 to vector<32x1xi32>
    %527 = arith.subi %525, %526 : vector<32x1xi32>
    %c0_i32_214 = arith.constant 0 : i32
    %528 = vector.broadcast %c0_i32_214 : i32 to vector<32x1xi32>
    %529 = arith.addi %527, %528 : vector<32x1xi32>
    %c2_i32_215 = arith.constant 2 : i32
    %530 = vector.broadcast %c2_i32_215 : i32 to vector<32x1xi32>
    %531 = arith.muli %530, %435 : vector<32x1xi32>
    %c1_i32_216 = arith.constant 1 : i32
    %532 = vector.broadcast %c1_i32_216 : i32 to vector<32x1xi32>
    %533 = arith.subi %531, %532 : vector<32x1xi32>
    %c2_i32_217 = arith.constant 2 : i32
    %534 = vector.broadcast %c2_i32_217 : i32 to vector<32x1xi32>
    %535 = arith.addi %533, %534 : vector<32x1xi32>
    %c0_i32_218 = arith.constant 0 : i32
    %536 = vector.broadcast %c0_i32_218 : i32 to vector<32x1xi32>
    %537 = arith.cmpi sge, %529, %536 : vector<32x1xi32>
    %c8_i32_219 = arith.constant 8 : i32
    %538 = vector.broadcast %c8_i32_219 : i32 to vector<32x1xi32>
    %539 = arith.cmpi slt, %529, %538 : vector<32x1xi32>
    %540 = arith.andi %537, %539 : vector<32x1xi1>
    %c0_i32_220 = arith.constant 0 : i32
    %541 = vector.broadcast %c0_i32_220 : i32 to vector<32x1xi32>
    %542 = arith.cmpi sge, %535, %541 : vector<32x1xi32>
    %543 = arith.andi %540, %542 : vector<32x1xi1>
    %c8_i32_221 = arith.constant 8 : i32
    %544 = vector.broadcast %c8_i32_221 : i32 to vector<32x1xi32>
    %545 = arith.cmpi slt, %535, %544 : vector<32x1xi32>
    %546 = arith.andi %543, %545 : vector<32x1xi1>
    %c64_i32_222 = arith.constant 64 : i32
    %547 = vector.broadcast %c64_i32_222 : i32 to vector<32x1xi32>
    %548 = arith.muli %429, %547 : vector<32x1xi32>
    %c8_i32_223 = arith.constant 8 : i32
    %549 = vector.broadcast %c8_i32_223 : i32 to vector<32x1xi32>
    %550 = arith.muli %529, %549 : vector<32x1xi32>
    %551 = arith.addi %548, %550 : vector<32x1xi32>
    %552 = arith.addi %551, %535 : vector<32x1xi32>
    %553 = vector.broadcast %552 : vector<32x1xi32> to vector<32x128xi32>
    %554 = arith.cmpi eq, %436, %553 : vector<32x128xi32>
    %555 = vector.broadcast %546 : vector<32x1xi1> to vector<32x128xi1>
    %556 = arith.andi %555, %554 : vector<32x128xi1>
    %cst_224 = arith.constant 1.000000e+00 : f32
    %cst_225 = arith.constant 0.000000e+00 : f32
    %557 = vector.broadcast %cst_224 : f32 to vector<32x128xf32>
    %558 = vector.broadcast %cst_225 : f32 to vector<32x128xf32>
    %559 = arith.select %556, %557, %558 : vector<32x128xi1>, vector<32x128xf32>
    %560 = arith.truncf %559 : vector<32x128xf32> to vector<32x128xbf16>
    %cst_226 = arith.constant dense<0.000000e+00> : vector<32x16xf32>
    %561 = tpu.matmul %560, %424, %cst_226 {dimension_numbers = #tpu.dot_dimension_numbers<[1], [0], [0], [1], [0, 0, 1, 1], [], []>} : vector<32x128xbf16>, vector<128x16xbf16>, vector<32x16xf32> -> vector<32x16xf32>
    %562 = arith.truncf %561 : vector<32x16xf32> to vector<32x16xbf16>
    %c2_227 = arith.constant 2 : index
    %c0_228 = arith.constant 0 : index
    %c0_229 = arith.constant 0 : index
    %563 = vector.load %arg2[%c2_227, %c0_228, %c0_229] : memref<9x16x32xbf16, #tpu.memory_space<vmem>>, vector<1x16x32xbf16>
    %564 = vector.shape_cast %563 : vector<1x16x32xbf16> to vector<16x32xbf16>
    %cst_230 = arith.constant dense<0.000000e+00> : vector<32x32xf32>
    %565 = tpu.matmul %562, %564, %cst_230 {dimension_numbers = #tpu.dot_dimension_numbers<[1], [0], [0], [1], [0, 0, 1, 1], [], []>} : vector<32x16xbf16>, vector<16x32xbf16>, vector<32x32xf32> -> vector<32x32xf32>
    %566 = arith.addf %523, %565 : vector<32x32xf32>
    %c2_i32_231 = arith.constant 2 : i32
    %567 = vector.broadcast %c2_i32_231 : i32 to vector<32x1xi32>
    %568 = arith.muli %567, %433 : vector<32x1xi32>
    %c1_i32_232 = arith.constant 1 : i32
    %569 = vector.broadcast %c1_i32_232 : i32 to vector<32x1xi32>
    %570 = arith.subi %568, %569 : vector<32x1xi32>
    %c1_i32_233 = arith.constant 1 : i32
    %571 = vector.broadcast %c1_i32_233 : i32 to vector<32x1xi32>
    %572 = arith.addi %570, %571 : vector<32x1xi32>
    %c2_i32_234 = arith.constant 2 : i32
    %573 = vector.broadcast %c2_i32_234 : i32 to vector<32x1xi32>
    %574 = arith.muli %573, %435 : vector<32x1xi32>
    %c1_i32_235 = arith.constant 1 : i32
    %575 = vector.broadcast %c1_i32_235 : i32 to vector<32x1xi32>
    %576 = arith.subi %574, %575 : vector<32x1xi32>
    %c0_i32_236 = arith.constant 0 : i32
    %577 = vector.broadcast %c0_i32_236 : i32 to vector<32x1xi32>
    %578 = arith.addi %576, %577 : vector<32x1xi32>
    %c0_i32_237 = arith.constant 0 : i32
    %579 = vector.broadcast %c0_i32_237 : i32 to vector<32x1xi32>
    %580 = arith.cmpi sge, %572, %579 : vector<32x1xi32>
    %c8_i32_238 = arith.constant 8 : i32
    %581 = vector.broadcast %c8_i32_238 : i32 to vector<32x1xi32>
    %582 = arith.cmpi slt, %572, %581 : vector<32x1xi32>
    %583 = arith.andi %580, %582 : vector<32x1xi1>
    %c0_i32_239 = arith.constant 0 : i32
    %584 = vector.broadcast %c0_i32_239 : i32 to vector<32x1xi32>
    %585 = arith.cmpi sge, %578, %584 : vector<32x1xi32>
    %586 = arith.andi %583, %585 : vector<32x1xi1>
    %c8_i32_240 = arith.constant 8 : i32
    %587 = vector.broadcast %c8_i32_240 : i32 to vector<32x1xi32>
    %588 = arith.cmpi slt, %578, %587 : vector<32x1xi32>
    %589 = arith.andi %586, %588 : vector<32x1xi1>
    %c64_i32_241 = arith.constant 64 : i32
    %590 = vector.broadcast %c64_i32_241 : i32 to vector<32x1xi32>
    %591 = arith.muli %429, %590 : vector<32x1xi32>
    %c8_i32_242 = arith.constant 8 : i32
    %592 = vector.broadcast %c8_i32_242 : i32 to vector<32x1xi32>
    %593 = arith.muli %572, %592 : vector<32x1xi32>
    %594 = arith.addi %591, %593 : vector<32x1xi32>
    %595 = arith.addi %594, %578 : vector<32x1xi32>
    %596 = vector.broadcast %595 : vector<32x1xi32> to vector<32x128xi32>
    %597 = arith.cmpi eq, %436, %596 : vector<32x128xi32>
    %598 = vector.broadcast %589 : vector<32x1xi1> to vector<32x128xi1>
    %599 = arith.andi %598, %597 : vector<32x128xi1>
    %cst_243 = arith.constant 1.000000e+00 : f32
    %cst_244 = arith.constant 0.000000e+00 : f32
    %600 = vector.broadcast %cst_243 : f32 to vector<32x128xf32>
    %601 = vector.broadcast %cst_244 : f32 to vector<32x128xf32>
    %602 = arith.select %599, %600, %601 : vector<32x128xi1>, vector<32x128xf32>
    %603 = arith.truncf %602 : vector<32x128xf32> to vector<32x128xbf16>
    %cst_245 = arith.constant dense<0.000000e+00> : vector<32x16xf32>
    %604 = tpu.matmul %603, %424, %cst_245 {dimension_numbers = #tpu.dot_dimension_numbers<[1], [0], [0], [1], [0, 0, 1, 1], [], []>} : vector<32x128xbf16>, vector<128x16xbf16>, vector<32x16xf32> -> vector<32x16xf32>
    %605 = arith.truncf %604 : vector<32x16xf32> to vector<32x16xbf16>
    %c3_246 = arith.constant 3 : index
    %c0_247 = arith.constant 0 : index
    %c0_248 = arith.constant 0 : index
    %606 = vector.load %arg2[%c3_246, %c0_247, %c0_248] : memref<9x16x32xbf16, #tpu.memory_space<vmem>>, vector<1x16x32xbf16>
    %607 = vector.shape_cast %606 : vector<1x16x32xbf16> to vector<16x32xbf16>
    %cst_249 = arith.constant dense<0.000000e+00> : vector<32x32xf32>
    %608 = tpu.matmul %605, %607, %cst_249 {dimension_numbers = #tpu.dot_dimension_numbers<[1], [0], [0], [1], [0, 0, 1, 1], [], []>} : vector<32x16xbf16>, vector<16x32xbf16>, vector<32x32xf32> -> vector<32x32xf32>
    %609 = arith.addf %566, %608 : vector<32x32xf32>
    %c2_i32_250 = arith.constant 2 : i32
    %610 = vector.broadcast %c2_i32_250 : i32 to vector<32x1xi32>
    %611 = arith.muli %610, %433 : vector<32x1xi32>
    %c1_i32_251 = arith.constant 1 : i32
    %612 = vector.broadcast %c1_i32_251 : i32 to vector<32x1xi32>
    %613 = arith.subi %611, %612 : vector<32x1xi32>
    %c1_i32_252 = arith.constant 1 : i32
    %614 = vector.broadcast %c1_i32_252 : i32 to vector<32x1xi32>
    %615 = arith.addi %613, %614 : vector<32x1xi32>
    %c2_i32_253 = arith.constant 2 : i32
    %616 = vector.broadcast %c2_i32_253 : i32 to vector<32x1xi32>
    %617 = arith.muli %616, %435 : vector<32x1xi32>
    %c1_i32_254 = arith.constant 1 : i32
    %618 = vector.broadcast %c1_i32_254 : i32 to vector<32x1xi32>
    %619 = arith.subi %617, %618 : vector<32x1xi32>
    %c1_i32_255 = arith.constant 1 : i32
    %620 = vector.broadcast %c1_i32_255 : i32 to vector<32x1xi32>
    %621 = arith.addi %619, %620 : vector<32x1xi32>
    %c0_i32_256 = arith.constant 0 : i32
    %622 = vector.broadcast %c0_i32_256 : i32 to vector<32x1xi32>
    %623 = arith.cmpi sge, %615, %622 : vector<32x1xi32>
    %c8_i32_257 = arith.constant 8 : i32
    %624 = vector.broadcast %c8_i32_257 : i32 to vector<32x1xi32>
    %625 = arith.cmpi slt, %615, %624 : vector<32x1xi32>
    %626 = arith.andi %623, %625 : vector<32x1xi1>
    %c0_i32_258 = arith.constant 0 : i32
    %627 = vector.broadcast %c0_i32_258 : i32 to vector<32x1xi32>
    %628 = arith.cmpi sge, %621, %627 : vector<32x1xi32>
    %629 = arith.andi %626, %628 : vector<32x1xi1>
    %c8_i32_259 = arith.constant 8 : i32
    %630 = vector.broadcast %c8_i32_259 : i32 to vector<32x1xi32>
    %631 = arith.cmpi slt, %621, %630 : vector<32x1xi32>
    %632 = arith.andi %629, %631 : vector<32x1xi1>
    %c64_i32_260 = arith.constant 64 : i32
    %633 = vector.broadcast %c64_i32_260 : i32 to vector<32x1xi32>
    %634 = arith.muli %429, %633 : vector<32x1xi32>
    %c8_i32_261 = arith.constant 8 : i32
    %635 = vector.broadcast %c8_i32_261 : i32 to vector<32x1xi32>
    %636 = arith.muli %615, %635 : vector<32x1xi32>
    %637 = arith.addi %634, %636 : vector<32x1xi32>
    %638 = arith.addi %637, %621 : vector<32x1xi32>
    %639 = vector.broadcast %638 : vector<32x1xi32> to vector<32x128xi32>
    %640 = arith.cmpi eq, %436, %639 : vector<32x128xi32>
    %641 = vector.broadcast %632 : vector<32x1xi1> to vector<32x128xi1>
    %642 = arith.andi %641, %640 : vector<32x128xi1>
    %cst_262 = arith.constant 1.000000e+00 : f32
    %cst_263 = arith.constant 0.000000e+00 : f32
    %643 = vector.broadcast %cst_262 : f32 to vector<32x128xf32>
    %644 = vector.broadcast %cst_263 : f32 to vector<32x128xf32>
    %645 = arith.select %642, %643, %644 : vector<32x128xi1>, vector<32x128xf32>
    %646 = arith.truncf %645 : vector<32x128xf32> to vector<32x128xbf16>
    %cst_264 = arith.constant dense<0.000000e+00> : vector<32x16xf32>
    %647 = tpu.matmul %646, %424, %cst_264 {dimension_numbers = #tpu.dot_dimension_numbers<[1], [0], [0], [1], [0, 0, 1, 1], [], []>} : vector<32x128xbf16>, vector<128x16xbf16>, vector<32x16xf32> -> vector<32x16xf32>
    %648 = arith.truncf %647 : vector<32x16xf32> to vector<32x16xbf16>
    %c4_265 = arith.constant 4 : index
    %c0_266 = arith.constant 0 : index
    %c0_267 = arith.constant 0 : index
    %649 = vector.load %arg2[%c4_265, %c0_266, %c0_267] : memref<9x16x32xbf16, #tpu.memory_space<vmem>>, vector<1x16x32xbf16>
    %650 = vector.shape_cast %649 : vector<1x16x32xbf16> to vector<16x32xbf16>
    %cst_268 = arith.constant dense<0.000000e+00> : vector<32x32xf32>
    %651 = tpu.matmul %648, %650, %cst_268 {dimension_numbers = #tpu.dot_dimension_numbers<[1], [0], [0], [1], [0, 0, 1, 1], [], []>} : vector<32x16xbf16>, vector<16x32xbf16>, vector<32x32xf32> -> vector<32x32xf32>
    %652 = arith.addf %609, %651 : vector<32x32xf32>
    %c2_i32_269 = arith.constant 2 : i32
    %653 = vector.broadcast %c2_i32_269 : i32 to vector<32x1xi32>
    %654 = arith.muli %653, %433 : vector<32x1xi32>
    %c1_i32_270 = arith.constant 1 : i32
    %655 = vector.broadcast %c1_i32_270 : i32 to vector<32x1xi32>
    %656 = arith.subi %654, %655 : vector<32x1xi32>
    %c1_i32_271 = arith.constant 1 : i32
    %657 = vector.broadcast %c1_i32_271 : i32 to vector<32x1xi32>
    %658 = arith.addi %656, %657 : vector<32x1xi32>
    %c2_i32_272 = arith.constant 2 : i32
    %659 = vector.broadcast %c2_i32_272 : i32 to vector<32x1xi32>
    %660 = arith.muli %659, %435 : vector<32x1xi32>
    %c1_i32_273 = arith.constant 1 : i32
    %661 = vector.broadcast %c1_i32_273 : i32 to vector<32x1xi32>
    %662 = arith.subi %660, %661 : vector<32x1xi32>
    %c2_i32_274 = arith.constant 2 : i32
    %663 = vector.broadcast %c2_i32_274 : i32 to vector<32x1xi32>
    %664 = arith.addi %662, %663 : vector<32x1xi32>
    %c0_i32_275 = arith.constant 0 : i32
    %665 = vector.broadcast %c0_i32_275 : i32 to vector<32x1xi32>
    %666 = arith.cmpi sge, %658, %665 : vector<32x1xi32>
    %c8_i32_276 = arith.constant 8 : i32
    %667 = vector.broadcast %c8_i32_276 : i32 to vector<32x1xi32>
    %668 = arith.cmpi slt, %658, %667 : vector<32x1xi32>
    %669 = arith.andi %666, %668 : vector<32x1xi1>
    %c0_i32_277 = arith.constant 0 : i32
    %670 = vector.broadcast %c0_i32_277 : i32 to vector<32x1xi32>
    %671 = arith.cmpi sge, %664, %670 : vector<32x1xi32>
    %672 = arith.andi %669, %671 : vector<32x1xi1>
    %c8_i32_278 = arith.constant 8 : i32
    %673 = vector.broadcast %c8_i32_278 : i32 to vector<32x1xi32>
    %674 = arith.cmpi slt, %664, %673 : vector<32x1xi32>
    %675 = arith.andi %672, %674 : vector<32x1xi1>
    %c64_i32_279 = arith.constant 64 : i32
    %676 = vector.broadcast %c64_i32_279 : i32 to vector<32x1xi32>
    %677 = arith.muli %429, %676 : vector<32x1xi32>
    %c8_i32_280 = arith.constant 8 : i32
    %678 = vector.broadcast %c8_i32_280 : i32 to vector<32x1xi32>
    %679 = arith.muli %658, %678 : vector<32x1xi32>
    %680 = arith.addi %677, %679 : vector<32x1xi32>
    %681 = arith.addi %680, %664 : vector<32x1xi32>
    %682 = vector.broadcast %681 : vector<32x1xi32> to vector<32x128xi32>
    %683 = arith.cmpi eq, %436, %682 : vector<32x128xi32>
    %684 = vector.broadcast %675 : vector<32x1xi1> to vector<32x128xi1>
    %685 = arith.andi %684, %683 : vector<32x128xi1>
    %cst_281 = arith.constant 1.000000e+00 : f32
    %cst_282 = arith.constant 0.000000e+00 : f32
    %686 = vector.broadcast %cst_281 : f32 to vector<32x128xf32>
    %687 = vector.broadcast %cst_282 : f32 to vector<32x128xf32>
    %688 = arith.select %685, %686, %687 : vector<32x128xi1>, vector<32x128xf32>
    %689 = arith.truncf %688 : vector<32x128xf32> to vector<32x128xbf16>
    %cst_283 = arith.constant dense<0.000000e+00> : vector<32x16xf32>
    %690 = tpu.matmul %689, %424, %cst_283 {dimension_numbers = #tpu.dot_dimension_numbers<[1], [0], [0], [1], [0, 0, 1, 1], [], []>} : vector<32x128xbf16>, vector<128x16xbf16>, vector<32x16xf32> -> vector<32x16xf32>
    %691 = arith.truncf %690 : vector<32x16xf32> to vector<32x16xbf16>
    %c5_284 = arith.constant 5 : index
    %c0_285 = arith.constant 0 : index
    %c0_286 = arith.constant 0 : index
    %692 = vector.load %arg2[%c5_284, %c0_285, %c0_286] : memref<9x16x32xbf16, #tpu.memory_space<vmem>>, vector<1x16x32xbf16>
    %693 = vector.shape_cast %692 : vector<1x16x32xbf16> to vector<16x32xbf16>
    %cst_287 = arith.constant dense<0.000000e+00> : vector<32x32xf32>
    %694 = tpu.matmul %691, %693, %cst_287 {dimension_numbers = #tpu.dot_dimension_numbers<[1], [0], [0], [1], [0, 0, 1, 1], [], []>} : vector<32x16xbf16>, vector<16x32xbf16>, vector<32x32xf32> -> vector<32x32xf32>
    %695 = arith.addf %652, %694 : vector<32x32xf32>
    %c2_i32_288 = arith.constant 2 : i32
    %696 = vector.broadcast %c2_i32_288 : i32 to vector<32x1xi32>
    %697 = arith.muli %696, %433 : vector<32x1xi32>
    %c1_i32_289 = arith.constant 1 : i32
    %698 = vector.broadcast %c1_i32_289 : i32 to vector<32x1xi32>
    %699 = arith.subi %697, %698 : vector<32x1xi32>
    %c2_i32_290 = arith.constant 2 : i32
    %700 = vector.broadcast %c2_i32_290 : i32 to vector<32x1xi32>
    %701 = arith.addi %699, %700 : vector<32x1xi32>
    %c2_i32_291 = arith.constant 2 : i32
    %702 = vector.broadcast %c2_i32_291 : i32 to vector<32x1xi32>
    %703 = arith.muli %702, %435 : vector<32x1xi32>
    %c1_i32_292 = arith.constant 1 : i32
    %704 = vector.broadcast %c1_i32_292 : i32 to vector<32x1xi32>
    %705 = arith.subi %703, %704 : vector<32x1xi32>
    %c0_i32_293 = arith.constant 0 : i32
    %706 = vector.broadcast %c0_i32_293 : i32 to vector<32x1xi32>
    %707 = arith.addi %705, %706 : vector<32x1xi32>
    %c0_i32_294 = arith.constant 0 : i32
    %708 = vector.broadcast %c0_i32_294 : i32 to vector<32x1xi32>
    %709 = arith.cmpi sge, %701, %708 : vector<32x1xi32>
    %c8_i32_295 = arith.constant 8 : i32
    %710 = vector.broadcast %c8_i32_295 : i32 to vector<32x1xi32>
    %711 = arith.cmpi slt, %701, %710 : vector<32x1xi32>
    %712 = arith.andi %709, %711 : vector<32x1xi1>
    %c0_i32_296 = arith.constant 0 : i32
    %713 = vector.broadcast %c0_i32_296 : i32 to vector<32x1xi32>
    %714 = arith.cmpi sge, %707, %713 : vector<32x1xi32>
    %715 = arith.andi %712, %714 : vector<32x1xi1>
    %c8_i32_297 = arith.constant 8 : i32
    %716 = vector.broadcast %c8_i32_297 : i32 to vector<32x1xi32>
    %717 = arith.cmpi slt, %707, %716 : vector<32x1xi32>
    %718 = arith.andi %715, %717 : vector<32x1xi1>
    %c64_i32_298 = arith.constant 64 : i32
    %719 = vector.broadcast %c64_i32_298 : i32 to vector<32x1xi32>
    %720 = arith.muli %429, %719 : vector<32x1xi32>
    %c8_i32_299 = arith.constant 8 : i32
    %721 = vector.broadcast %c8_i32_299 : i32 to vector<32x1xi32>
    %722 = arith.muli %701, %721 : vector<32x1xi32>
    %723 = arith.addi %720, %722 : vector<32x1xi32>
    %724 = arith.addi %723, %707 : vector<32x1xi32>
    %725 = vector.broadcast %724 : vector<32x1xi32> to vector<32x128xi32>
    %726 = arith.cmpi eq, %436, %725 : vector<32x128xi32>
    %727 = vector.broadcast %718 : vector<32x1xi1> to vector<32x128xi1>
    %728 = arith.andi %727, %726 : vector<32x128xi1>
    %cst_300 = arith.constant 1.000000e+00 : f32
    %cst_301 = arith.constant 0.000000e+00 : f32
    %729 = vector.broadcast %cst_300 : f32 to vector<32x128xf32>
    %730 = vector.broadcast %cst_301 : f32 to vector<32x128xf32>
    %731 = arith.select %728, %729, %730 : vector<32x128xi1>, vector<32x128xf32>
    %732 = arith.truncf %731 : vector<32x128xf32> to vector<32x128xbf16>
    %cst_302 = arith.constant dense<0.000000e+00> : vector<32x16xf32>
    %733 = tpu.matmul %732, %424, %cst_302 {dimension_numbers = #tpu.dot_dimension_numbers<[1], [0], [0], [1], [0, 0, 1, 1], [], []>} : vector<32x128xbf16>, vector<128x16xbf16>, vector<32x16xf32> -> vector<32x16xf32>
    %734 = arith.truncf %733 : vector<32x16xf32> to vector<32x16xbf16>
    %c6_303 = arith.constant 6 : index
    %c0_304 = arith.constant 0 : index
    %c0_305 = arith.constant 0 : index
    %735 = vector.load %arg2[%c6_303, %c0_304, %c0_305] : memref<9x16x32xbf16, #tpu.memory_space<vmem>>, vector<1x16x32xbf16>
    %736 = vector.shape_cast %735 : vector<1x16x32xbf16> to vector<16x32xbf16>
    %cst_306 = arith.constant dense<0.000000e+00> : vector<32x32xf32>
    %737 = tpu.matmul %734, %736, %cst_306 {dimension_numbers = #tpu.dot_dimension_numbers<[1], [0], [0], [1], [0, 0, 1, 1], [], []>} : vector<32x16xbf16>, vector<16x32xbf16>, vector<32x32xf32> -> vector<32x32xf32>
    %738 = arith.addf %695, %737 : vector<32x32xf32>
    %c2_i32_307 = arith.constant 2 : i32
    %739 = vector.broadcast %c2_i32_307 : i32 to vector<32x1xi32>
    %740 = arith.muli %739, %433 : vector<32x1xi32>
    %c1_i32_308 = arith.constant 1 : i32
    %741 = vector.broadcast %c1_i32_308 : i32 to vector<32x1xi32>
    %742 = arith.subi %740, %741 : vector<32x1xi32>
    %c2_i32_309 = arith.constant 2 : i32
    %743 = vector.broadcast %c2_i32_309 : i32 to vector<32x1xi32>
    %744 = arith.addi %742, %743 : vector<32x1xi32>
    %c2_i32_310 = arith.constant 2 : i32
    %745 = vector.broadcast %c2_i32_310 : i32 to vector<32x1xi32>
    %746 = arith.muli %745, %435 : vector<32x1xi32>
    %c1_i32_311 = arith.constant 1 : i32
    %747 = vector.broadcast %c1_i32_311 : i32 to vector<32x1xi32>
    %748 = arith.subi %746, %747 : vector<32x1xi32>
    %c1_i32_312 = arith.constant 1 : i32
    %749 = vector.broadcast %c1_i32_312 : i32 to vector<32x1xi32>
    %750 = arith.addi %748, %749 : vector<32x1xi32>
    %c0_i32_313 = arith.constant 0 : i32
    %751 = vector.broadcast %c0_i32_313 : i32 to vector<32x1xi32>
    %752 = arith.cmpi sge, %744, %751 : vector<32x1xi32>
    %c8_i32_314 = arith.constant 8 : i32
    %753 = vector.broadcast %c8_i32_314 : i32 to vector<32x1xi32>
    %754 = arith.cmpi slt, %744, %753 : vector<32x1xi32>
    %755 = arith.andi %752, %754 : vector<32x1xi1>
    %c0_i32_315 = arith.constant 0 : i32
    %756 = vector.broadcast %c0_i32_315 : i32 to vector<32x1xi32>
    %757 = arith.cmpi sge, %750, %756 : vector<32x1xi32>
    %758 = arith.andi %755, %757 : vector<32x1xi1>
    %c8_i32_316 = arith.constant 8 : i32
    %759 = vector.broadcast %c8_i32_316 : i32 to vector<32x1xi32>
    %760 = arith.cmpi slt, %750, %759 : vector<32x1xi32>
    %761 = arith.andi %758, %760 : vector<32x1xi1>
    %c64_i32_317 = arith.constant 64 : i32
    %762 = vector.broadcast %c64_i32_317 : i32 to vector<32x1xi32>
    %763 = arith.muli %429, %762 : vector<32x1xi32>
    %c8_i32_318 = arith.constant 8 : i32
    %764 = vector.broadcast %c8_i32_318 : i32 to vector<32x1xi32>
    %765 = arith.muli %744, %764 : vector<32x1xi32>
    %766 = arith.addi %763, %765 : vector<32x1xi32>
    %767 = arith.addi %766, %750 : vector<32x1xi32>
    %768 = vector.broadcast %767 : vector<32x1xi32> to vector<32x128xi32>
    %769 = arith.cmpi eq, %436, %768 : vector<32x128xi32>
    %770 = vector.broadcast %761 : vector<32x1xi1> to vector<32x128xi1>
    %771 = arith.andi %770, %769 : vector<32x128xi1>
    %cst_319 = arith.constant 1.000000e+00 : f32
    %cst_320 = arith.constant 0.000000e+00 : f32
    %772 = vector.broadcast %cst_319 : f32 to vector<32x128xf32>
    %773 = vector.broadcast %cst_320 : f32 to vector<32x128xf32>
    %774 = arith.select %771, %772, %773 : vector<32x128xi1>, vector<32x128xf32>
    %775 = arith.truncf %774 : vector<32x128xf32> to vector<32x128xbf16>
    %cst_321 = arith.constant dense<0.000000e+00> : vector<32x16xf32>
    %776 = tpu.matmul %775, %424, %cst_321 {dimension_numbers = #tpu.dot_dimension_numbers<[1], [0], [0], [1], [0, 0, 1, 1], [], []>} : vector<32x128xbf16>, vector<128x16xbf16>, vector<32x16xf32> -> vector<32x16xf32>
    %777 = arith.truncf %776 : vector<32x16xf32> to vector<32x16xbf16>
    %c7_322 = arith.constant 7 : index
    %c0_323 = arith.constant 0 : index
    %c0_324 = arith.constant 0 : index
    %778 = vector.load %arg2[%c7_322, %c0_323, %c0_324] : memref<9x16x32xbf16, #tpu.memory_space<vmem>>, vector<1x16x32xbf16>
    %779 = vector.shape_cast %778 : vector<1x16x32xbf16> to vector<16x32xbf16>
    %cst_325 = arith.constant dense<0.000000e+00> : vector<32x32xf32>
    %780 = tpu.matmul %777, %779, %cst_325 {dimension_numbers = #tpu.dot_dimension_numbers<[1], [0], [0], [1], [0, 0, 1, 1], [], []>} : vector<32x16xbf16>, vector<16x32xbf16>, vector<32x32xf32> -> vector<32x32xf32>
    %781 = arith.addf %738, %780 : vector<32x32xf32>
    %c2_i32_326 = arith.constant 2 : i32
    %782 = vector.broadcast %c2_i32_326 : i32 to vector<32x1xi32>
    %783 = arith.muli %782, %433 : vector<32x1xi32>
    %c1_i32_327 = arith.constant 1 : i32
    %784 = vector.broadcast %c1_i32_327 : i32 to vector<32x1xi32>
    %785 = arith.subi %783, %784 : vector<32x1xi32>
    %c2_i32_328 = arith.constant 2 : i32
    %786 = vector.broadcast %c2_i32_328 : i32 to vector<32x1xi32>
    %787 = arith.addi %785, %786 : vector<32x1xi32>
    %c2_i32_329 = arith.constant 2 : i32
    %788 = vector.broadcast %c2_i32_329 : i32 to vector<32x1xi32>
    %789 = arith.muli %788, %435 : vector<32x1xi32>
    %c1_i32_330 = arith.constant 1 : i32
    %790 = vector.broadcast %c1_i32_330 : i32 to vector<32x1xi32>
    %791 = arith.subi %789, %790 : vector<32x1xi32>
    %c2_i32_331 = arith.constant 2 : i32
    %792 = vector.broadcast %c2_i32_331 : i32 to vector<32x1xi32>
    %793 = arith.addi %791, %792 : vector<32x1xi32>
    %c0_i32_332 = arith.constant 0 : i32
    %794 = vector.broadcast %c0_i32_332 : i32 to vector<32x1xi32>
    %795 = arith.cmpi sge, %787, %794 : vector<32x1xi32>
    %c8_i32_333 = arith.constant 8 : i32
    %796 = vector.broadcast %c8_i32_333 : i32 to vector<32x1xi32>
    %797 = arith.cmpi slt, %787, %796 : vector<32x1xi32>
    %798 = arith.andi %795, %797 : vector<32x1xi1>
    %c0_i32_334 = arith.constant 0 : i32
    %799 = vector.broadcast %c0_i32_334 : i32 to vector<32x1xi32>
    %800 = arith.cmpi sge, %793, %799 : vector<32x1xi32>
    %801 = arith.andi %798, %800 : vector<32x1xi1>
    %c8_i32_335 = arith.constant 8 : i32
    %802 = vector.broadcast %c8_i32_335 : i32 to vector<32x1xi32>
    %803 = arith.cmpi slt, %793, %802 : vector<32x1xi32>
    %804 = arith.andi %801, %803 : vector<32x1xi1>
    %c64_i32_336 = arith.constant 64 : i32
    %805 = vector.broadcast %c64_i32_336 : i32 to vector<32x1xi32>
    %806 = arith.muli %429, %805 : vector<32x1xi32>
    %c8_i32_337 = arith.constant 8 : i32
    %807 = vector.broadcast %c8_i32_337 : i32 to vector<32x1xi32>
    %808 = arith.muli %787, %807 : vector<32x1xi32>
    %809 = arith.addi %806, %808 : vector<32x1xi32>
    %810 = arith.addi %809, %793 : vector<32x1xi32>
    %811 = vector.broadcast %810 : vector<32x1xi32> to vector<32x128xi32>
    %812 = arith.cmpi eq, %436, %811 : vector<32x128xi32>
    %813 = vector.broadcast %804 : vector<32x1xi1> to vector<32x128xi1>
    %814 = arith.andi %813, %812 : vector<32x128xi1>
    %cst_338 = arith.constant 1.000000e+00 : f32
    %cst_339 = arith.constant 0.000000e+00 : f32
    %815 = vector.broadcast %cst_338 : f32 to vector<32x128xf32>
    %816 = vector.broadcast %cst_339 : f32 to vector<32x128xf32>
    %817 = arith.select %814, %815, %816 : vector<32x128xi1>, vector<32x128xf32>
    %818 = arith.truncf %817 : vector<32x128xf32> to vector<32x128xbf16>
    %cst_340 = arith.constant dense<0.000000e+00> : vector<32x16xf32>
    %819 = tpu.matmul %818, %424, %cst_340 {dimension_numbers = #tpu.dot_dimension_numbers<[1], [0], [0], [1], [0, 0, 1, 1], [], []>} : vector<32x128xbf16>, vector<128x16xbf16>, vector<32x16xf32> -> vector<32x16xf32>
    %820 = arith.truncf %819 : vector<32x16xf32> to vector<32x16xbf16>
    %c8_341 = arith.constant 8 : index
    %c0_342 = arith.constant 0 : index
    %c0_343 = arith.constant 0 : index
    %821 = vector.load %arg2[%c8_341, %c0_342, %c0_343] : memref<9x16x32xbf16, #tpu.memory_space<vmem>>, vector<1x16x32xbf16>
    %822 = vector.shape_cast %821 : vector<1x16x32xbf16> to vector<16x32xbf16>
    %cst_344 = arith.constant dense<0.000000e+00> : vector<32x32xf32>
    %823 = tpu.matmul %820, %822, %cst_344 {dimension_numbers = #tpu.dot_dimension_numbers<[1], [0], [0], [1], [0, 0, 1, 1], [], []>} : vector<32x16xbf16>, vector<16x32xbf16>, vector<32x32xf32> -> vector<32x32xf32>
    %824 = arith.addf %781, %823 : vector<32x32xf32>
    %cst_345 = arith.constant dense<0.000000e+00> : vector<32xf32>
    %825 = vector.multi_reduction <add>, %824, %cst_345 [0] : vector<32x32xf32> to vector<32xf32>
    %826 = vector.shape_cast %825 : vector<32xf32> to vector<1x32xf32>
    %827 = arith.mulf %824, %824 : vector<32x32xf32>
    %cst_346 = arith.constant dense<0.000000e+00> : vector<32xf32>
    %828 = vector.multi_reduction <add>, %827, %cst_346 [0] : vector<32x32xf32> to vector<32xf32>
    %829 = vector.shape_cast %828 : vector<32xf32> to vector<1x32xf32>
    %cst_347 = arith.constant 3.125000e-02 : f32
    %830 = vector.broadcast %cst_347 : f32 to vector<1x32xf32>
    %831 = arith.mulf %826, %830 : vector<1x32xf32>
    %cst_348 = arith.constant 3.125000e-02 : f32
    %832 = vector.broadcast %cst_348 : f32 to vector<1x32xf32>
    %833 = arith.mulf %829, %832 : vector<1x32xf32>
    %834 = arith.mulf %831, %831 : vector<1x32xf32>
    %835 = arith.subf %833, %834 : vector<1x32xf32>
    %cst_349 = arith.constant 9.99999974E-6 : f32
    %836 = vector.broadcast %cst_349 : f32 to vector<1x32xf32>
    %837 = arith.addf %835, %836 : vector<1x32xf32>
    %838 = math.rsqrt %837 : vector<1x32xf32>
    %839 = arith.mulf %838, %425 : vector<1x32xf32>
    %840 = vector.broadcast %831 : vector<1x32xf32> to vector<32x32xf32>
    %841 = arith.subf %824, %840 : vector<32x32xf32>
    %842 = vector.broadcast %839 : vector<1x32xf32> to vector<32x32xf32>
    %843 = arith.mulf %841, %842 : vector<32x32xf32>
    %844 = vector.broadcast %426 : vector<1x32xf32> to vector<32x32xf32>
    %845 = arith.addf %843, %844 : vector<32x32xf32>
    %cst_350 = arith.constant 0.000000e+00 : f32
    %846 = vector.broadcast %cst_350 : f32 to vector<32x32xf32>
    %847 = arith.maximumf %845, %846 : vector<32x32xf32>
    %848 = arith.truncf %847 : vector<32x32xf32> to vector<32x32xbf16>
    %c4_351 = arith.constant 4 : index
    %c0_352 = arith.constant 0 : index
    %849 = vector.load %arg5[%c4_351, %c0_352] : memref<8x64xf32, #tpu.memory_space<vmem>>, vector<1x64xf32>
    %c5_353 = arith.constant 5 : index
    %c0_354 = arith.constant 0 : index
    %850 = vector.load %arg5[%c5_353, %c0_354] : memref<8x64xf32, #tpu.memory_space<vmem>>, vector<1x64xf32>
    %851 = tpu.iota {dimensions = array<i32: 0>} : vector<8x1xi32>
    %c2_i32_355 = arith.constant 2 : i32
    %852 = vector.broadcast %c2_i32_355 : i32 to vector<8x1xi32>
    %853 = arith.shrsi %851, %852 : vector<8x1xi32>
    %c3_i32_356 = arith.constant 3 : i32
    %854 = vector.broadcast %c3_i32_356 : i32 to vector<8x1xi32>
    %855 = arith.andi %851, %854 : vector<8x1xi32>
    %c1_i32_357 = arith.constant 1 : i32
    %856 = vector.broadcast %c1_i32_357 : i32 to vector<8x1xi32>
    %857 = arith.shrsi %855, %856 : vector<8x1xi32>
    %c1_i32_358 = arith.constant 1 : i32
    %858 = vector.broadcast %c1_i32_358 : i32 to vector<8x1xi32>
    %859 = arith.andi %855, %858 : vector<8x1xi32>
    %860 = tpu.iota {dimensions = array<i32: 1>} : vector<8x32xi32>
    %cst_359 = arith.constant 0.000000e+00 : f32
    %861 = vector.broadcast %cst_359 : f32 to vector<8x64xf32>
    %c2_i32_360 = arith.constant 2 : i32
    %862 = vector.broadcast %c2_i32_360 : i32 to vector<8x1xi32>
    %863 = arith.muli %862, %857 : vector<8x1xi32>
    %c1_i32_361 = arith.constant 1 : i32
    %864 = vector.broadcast %c1_i32_361 : i32 to vector<8x1xi32>
    %865 = arith.subi %863, %864 : vector<8x1xi32>
    %c0_i32_362 = arith.constant 0 : i32
    %866 = vector.broadcast %c0_i32_362 : i32 to vector<8x1xi32>
    %867 = arith.addi %865, %866 : vector<8x1xi32>
    %c2_i32_363 = arith.constant 2 : i32
    %868 = vector.broadcast %c2_i32_363 : i32 to vector<8x1xi32>
    %869 = arith.muli %868, %859 : vector<8x1xi32>
    %c1_i32_364 = arith.constant 1 : i32
    %870 = vector.broadcast %c1_i32_364 : i32 to vector<8x1xi32>
    %871 = arith.subi %869, %870 : vector<8x1xi32>
    %c0_i32_365 = arith.constant 0 : i32
    %872 = vector.broadcast %c0_i32_365 : i32 to vector<8x1xi32>
    %873 = arith.addi %871, %872 : vector<8x1xi32>
    %c0_i32_366 = arith.constant 0 : i32
    %874 = vector.broadcast %c0_i32_366 : i32 to vector<8x1xi32>
    %875 = arith.cmpi sge, %867, %874 : vector<8x1xi32>
    %c4_i32_367 = arith.constant 4 : i32
    %876 = vector.broadcast %c4_i32_367 : i32 to vector<8x1xi32>
    %877 = arith.cmpi slt, %867, %876 : vector<8x1xi32>
    %878 = arith.andi %875, %877 : vector<8x1xi1>
    %c0_i32_368 = arith.constant 0 : i32
    %879 = vector.broadcast %c0_i32_368 : i32 to vector<8x1xi32>
    %880 = arith.cmpi sge, %873, %879 : vector<8x1xi32>
    %881 = arith.andi %878, %880 : vector<8x1xi1>
    %c4_i32_369 = arith.constant 4 : i32
    %882 = vector.broadcast %c4_i32_369 : i32 to vector<8x1xi32>
    %883 = arith.cmpi slt, %873, %882 : vector<8x1xi32>
    %884 = arith.andi %881, %883 : vector<8x1xi1>
    %c16_i32_370 = arith.constant 16 : i32
    %885 = vector.broadcast %c16_i32_370 : i32 to vector<8x1xi32>
    %886 = arith.muli %853, %885 : vector<8x1xi32>
    %c4_i32_371 = arith.constant 4 : i32
    %887 = vector.broadcast %c4_i32_371 : i32 to vector<8x1xi32>
    %888 = arith.muli %867, %887 : vector<8x1xi32>
    %889 = arith.addi %886, %888 : vector<8x1xi32>
    %890 = arith.addi %889, %873 : vector<8x1xi32>
    %891 = vector.broadcast %890 : vector<8x1xi32> to vector<8x32xi32>
    %892 = arith.cmpi eq, %860, %891 : vector<8x32xi32>
    %893 = vector.broadcast %884 : vector<8x1xi1> to vector<8x32xi1>
    %894 = arith.andi %893, %892 : vector<8x32xi1>
    %cst_372 = arith.constant 1.000000e+00 : f32
    %cst_373 = arith.constant 0.000000e+00 : f32
    %895 = vector.broadcast %cst_372 : f32 to vector<8x32xf32>
    %896 = vector.broadcast %cst_373 : f32 to vector<8x32xf32>
    %897 = arith.select %894, %895, %896 : vector<8x32xi1>, vector<8x32xf32>
    %898 = arith.truncf %897 : vector<8x32xf32> to vector<8x32xbf16>
    %cst_374 = arith.constant dense<0.000000e+00> : vector<8x32xf32>
    %899 = tpu.matmul %898, %848, %cst_374 {dimension_numbers = #tpu.dot_dimension_numbers<[1], [0], [0], [1], [0, 0, 1, 1], [], []>} : vector<8x32xbf16>, vector<32x32xbf16>, vector<8x32xf32> -> vector<8x32xf32>
    %900 = arith.truncf %899 : vector<8x32xf32> to vector<8x32xbf16>
    %c0_375 = arith.constant 0 : index
    %c0_376 = arith.constant 0 : index
    %c0_377 = arith.constant 0 : index
    %901 = vector.load %arg3[%c0_375, %c0_376, %c0_377] : memref<9x32x64xbf16, #tpu.memory_space<vmem>>, vector<1x32x64xbf16>
    %902 = vector.shape_cast %901 : vector<1x32x64xbf16> to vector<32x64xbf16>
    %cst_378 = arith.constant dense<0.000000e+00> : vector<8x64xf32>
    %903 = tpu.matmul %900, %902, %cst_378 {dimension_numbers = #tpu.dot_dimension_numbers<[1], [0], [0], [1], [0, 0, 1, 1], [], []>} : vector<8x32xbf16>, vector<32x64xbf16>, vector<8x64xf32> -> vector<8x64xf32>
    %904 = arith.addf %861, %903 : vector<8x64xf32>
    %c2_i32_379 = arith.constant 2 : i32
    %905 = vector.broadcast %c2_i32_379 : i32 to vector<8x1xi32>
    %906 = arith.muli %905, %857 : vector<8x1xi32>
    %c1_i32_380 = arith.constant 1 : i32
    %907 = vector.broadcast %c1_i32_380 : i32 to vector<8x1xi32>
    %908 = arith.subi %906, %907 : vector<8x1xi32>
    %c0_i32_381 = arith.constant 0 : i32
    %909 = vector.broadcast %c0_i32_381 : i32 to vector<8x1xi32>
    %910 = arith.addi %908, %909 : vector<8x1xi32>
    %c2_i32_382 = arith.constant 2 : i32
    %911 = vector.broadcast %c2_i32_382 : i32 to vector<8x1xi32>
    %912 = arith.muli %911, %859 : vector<8x1xi32>
    %c1_i32_383 = arith.constant 1 : i32
    %913 = vector.broadcast %c1_i32_383 : i32 to vector<8x1xi32>
    %914 = arith.subi %912, %913 : vector<8x1xi32>
    %c1_i32_384 = arith.constant 1 : i32
    %915 = vector.broadcast %c1_i32_384 : i32 to vector<8x1xi32>
    %916 = arith.addi %914, %915 : vector<8x1xi32>
    %c0_i32_385 = arith.constant 0 : i32
    %917 = vector.broadcast %c0_i32_385 : i32 to vector<8x1xi32>
    %918 = arith.cmpi sge, %910, %917 : vector<8x1xi32>
    %c4_i32_386 = arith.constant 4 : i32
    %919 = vector.broadcast %c4_i32_386 : i32 to vector<8x1xi32>
    %920 = arith.cmpi slt, %910, %919 : vector<8x1xi32>
    %921 = arith.andi %918, %920 : vector<8x1xi1>
    %c0_i32_387 = arith.constant 0 : i32
    %922 = vector.broadcast %c0_i32_387 : i32 to vector<8x1xi32>
    %923 = arith.cmpi sge, %916, %922 : vector<8x1xi32>
    %924 = arith.andi %921, %923 : vector<8x1xi1>
    %c4_i32_388 = arith.constant 4 : i32
    %925 = vector.broadcast %c4_i32_388 : i32 to vector<8x1xi32>
    %926 = arith.cmpi slt, %916, %925 : vector<8x1xi32>
    %927 = arith.andi %924, %926 : vector<8x1xi1>
    %c16_i32_389 = arith.constant 16 : i32
    %928 = vector.broadcast %c16_i32_389 : i32 to vector<8x1xi32>
    %929 = arith.muli %853, %928 : vector<8x1xi32>
    %c4_i32_390 = arith.constant 4 : i32
    %930 = vector.broadcast %c4_i32_390 : i32 to vector<8x1xi32>
    %931 = arith.muli %910, %930 : vector<8x1xi32>
    %932 = arith.addi %929, %931 : vector<8x1xi32>
    %933 = arith.addi %932, %916 : vector<8x1xi32>
    %934 = vector.broadcast %933 : vector<8x1xi32> to vector<8x32xi32>
    %935 = arith.cmpi eq, %860, %934 : vector<8x32xi32>
    %936 = vector.broadcast %927 : vector<8x1xi1> to vector<8x32xi1>
    %937 = arith.andi %936, %935 : vector<8x32xi1>
    %cst_391 = arith.constant 1.000000e+00 : f32
    %cst_392 = arith.constant 0.000000e+00 : f32
    %938 = vector.broadcast %cst_391 : f32 to vector<8x32xf32>
    %939 = vector.broadcast %cst_392 : f32 to vector<8x32xf32>
    %940 = arith.select %937, %938, %939 : vector<8x32xi1>, vector<8x32xf32>
    %941 = arith.truncf %940 : vector<8x32xf32> to vector<8x32xbf16>
    %cst_393 = arith.constant dense<0.000000e+00> : vector<8x32xf32>
    %942 = tpu.matmul %941, %848, %cst_393 {dimension_numbers = #tpu.dot_dimension_numbers<[1], [0], [0], [1], [0, 0, 1, 1], [], []>} : vector<8x32xbf16>, vector<32x32xbf16>, vector<8x32xf32> -> vector<8x32xf32>
    %943 = arith.truncf %942 : vector<8x32xf32> to vector<8x32xbf16>
    %c1_394 = arith.constant 1 : index
    %c0_395 = arith.constant 0 : index
    %c0_396 = arith.constant 0 : index
    %944 = vector.load %arg3[%c1_394, %c0_395, %c0_396] : memref<9x32x64xbf16, #tpu.memory_space<vmem>>, vector<1x32x64xbf16>
    %945 = vector.shape_cast %944 : vector<1x32x64xbf16> to vector<32x64xbf16>
    %cst_397 = arith.constant dense<0.000000e+00> : vector<8x64xf32>
    %946 = tpu.matmul %943, %945, %cst_397 {dimension_numbers = #tpu.dot_dimension_numbers<[1], [0], [0], [1], [0, 0, 1, 1], [], []>} : vector<8x32xbf16>, vector<32x64xbf16>, vector<8x64xf32> -> vector<8x64xf32>
    %947 = arith.addf %904, %946 : vector<8x64xf32>
    %c2_i32_398 = arith.constant 2 : i32
    %948 = vector.broadcast %c2_i32_398 : i32 to vector<8x1xi32>
    %949 = arith.muli %948, %857 : vector<8x1xi32>
    %c1_i32_399 = arith.constant 1 : i32
    %950 = vector.broadcast %c1_i32_399 : i32 to vector<8x1xi32>
    %951 = arith.subi %949, %950 : vector<8x1xi32>
    %c0_i32_400 = arith.constant 0 : i32
    %952 = vector.broadcast %c0_i32_400 : i32 to vector<8x1xi32>
    %953 = arith.addi %951, %952 : vector<8x1xi32>
    %c2_i32_401 = arith.constant 2 : i32
    %954 = vector.broadcast %c2_i32_401 : i32 to vector<8x1xi32>
    %955 = arith.muli %954, %859 : vector<8x1xi32>
    %c1_i32_402 = arith.constant 1 : i32
    %956 = vector.broadcast %c1_i32_402 : i32 to vector<8x1xi32>
    %957 = arith.subi %955, %956 : vector<8x1xi32>
    %c2_i32_403 = arith.constant 2 : i32
    %958 = vector.broadcast %c2_i32_403 : i32 to vector<8x1xi32>
    %959 = arith.addi %957, %958 : vector<8x1xi32>
    %c0_i32_404 = arith.constant 0 : i32
    %960 = vector.broadcast %c0_i32_404 : i32 to vector<8x1xi32>
    %961 = arith.cmpi sge, %953, %960 : vector<8x1xi32>
    %c4_i32_405 = arith.constant 4 : i32
    %962 = vector.broadcast %c4_i32_405 : i32 to vector<8x1xi32>
    %963 = arith.cmpi slt, %953, %962 : vector<8x1xi32>
    %964 = arith.andi %961, %963 : vector<8x1xi1>
    %c0_i32_406 = arith.constant 0 : i32
    %965 = vector.broadcast %c0_i32_406 : i32 to vector<8x1xi32>
    %966 = arith.cmpi sge, %959, %965 : vector<8x1xi32>
    %967 = arith.andi %964, %966 : vector<8x1xi1>
    %c4_i32_407 = arith.constant 4 : i32
    %968 = vector.broadcast %c4_i32_407 : i32 to vector<8x1xi32>
    %969 = arith.cmpi slt, %959, %968 : vector<8x1xi32>
    %970 = arith.andi %967, %969 : vector<8x1xi1>
    %c16_i32_408 = arith.constant 16 : i32
    %971 = vector.broadcast %c16_i32_408 : i32 to vector<8x1xi32>
    %972 = arith.muli %853, %971 : vector<8x1xi32>
    %c4_i32_409 = arith.constant 4 : i32
    %973 = vector.broadcast %c4_i32_409 : i32 to vector<8x1xi32>
    %974 = arith.muli %953, %973 : vector<8x1xi32>
    %975 = arith.addi %972, %974 : vector<8x1xi32>
    %976 = arith.addi %975, %959 : vector<8x1xi32>
    %977 = vector.broadcast %976 : vector<8x1xi32> to vector<8x32xi32>
    %978 = arith.cmpi eq, %860, %977 : vector<8x32xi32>
    %979 = vector.broadcast %970 : vector<8x1xi1> to vector<8x32xi1>
    %980 = arith.andi %979, %978 : vector<8x32xi1>
    %cst_410 = arith.constant 1.000000e+00 : f32
    %cst_411 = arith.constant 0.000000e+00 : f32
    %981 = vector.broadcast %cst_410 : f32 to vector<8x32xf32>
    %982 = vector.broadcast %cst_411 : f32 to vector<8x32xf32>
    %983 = arith.select %980, %981, %982 : vector<8x32xi1>, vector<8x32xf32>
    %984 = arith.truncf %983 : vector<8x32xf32> to vector<8x32xbf16>
    %cst_412 = arith.constant dense<0.000000e+00> : vector<8x32xf32>
    %985 = tpu.matmul %984, %848, %cst_412 {dimension_numbers = #tpu.dot_dimension_numbers<[1], [0], [0], [1], [0, 0, 1, 1], [], []>} : vector<8x32xbf16>, vector<32x32xbf16>, vector<8x32xf32> -> vector<8x32xf32>
    %986 = arith.truncf %985 : vector<8x32xf32> to vector<8x32xbf16>
    %c2_413 = arith.constant 2 : index
    %c0_414 = arith.constant 0 : index
    %c0_415 = arith.constant 0 : index
    %987 = vector.load %arg3[%c2_413, %c0_414, %c0_415] : memref<9x32x64xbf16, #tpu.memory_space<vmem>>, vector<1x32x64xbf16>
    %988 = vector.shape_cast %987 : vector<1x32x64xbf16> to vector<32x64xbf16>
    %cst_416 = arith.constant dense<0.000000e+00> : vector<8x64xf32>
    %989 = tpu.matmul %986, %988, %cst_416 {dimension_numbers = #tpu.dot_dimension_numbers<[1], [0], [0], [1], [0, 0, 1, 1], [], []>} : vector<8x32xbf16>, vector<32x64xbf16>, vector<8x64xf32> -> vector<8x64xf32>
    %990 = arith.addf %947, %989 : vector<8x64xf32>
    %c2_i32_417 = arith.constant 2 : i32
    %991 = vector.broadcast %c2_i32_417 : i32 to vector<8x1xi32>
    %992 = arith.muli %991, %857 : vector<8x1xi32>
    %c1_i32_418 = arith.constant 1 : i32
    %993 = vector.broadcast %c1_i32_418 : i32 to vector<8x1xi32>
    %994 = arith.subi %992, %993 : vector<8x1xi32>
    %c1_i32_419 = arith.constant 1 : i32
    %995 = vector.broadcast %c1_i32_419 : i32 to vector<8x1xi32>
    %996 = arith.addi %994, %995 : vector<8x1xi32>
    %c2_i32_420 = arith.constant 2 : i32
    %997 = vector.broadcast %c2_i32_420 : i32 to vector<8x1xi32>
    %998 = arith.muli %997, %859 : vector<8x1xi32>
    %c1_i32_421 = arith.constant 1 : i32
    %999 = vector.broadcast %c1_i32_421 : i32 to vector<8x1xi32>
    %1000 = arith.subi %998, %999 : vector<8x1xi32>
    %c0_i32_422 = arith.constant 0 : i32
    %1001 = vector.broadcast %c0_i32_422 : i32 to vector<8x1xi32>
    %1002 = arith.addi %1000, %1001 : vector<8x1xi32>
    %c0_i32_423 = arith.constant 0 : i32
    %1003 = vector.broadcast %c0_i32_423 : i32 to vector<8x1xi32>
    %1004 = arith.cmpi sge, %996, %1003 : vector<8x1xi32>
    %c4_i32_424 = arith.constant 4 : i32
    %1005 = vector.broadcast %c4_i32_424 : i32 to vector<8x1xi32>
    %1006 = arith.cmpi slt, %996, %1005 : vector<8x1xi32>
    %1007 = arith.andi %1004, %1006 : vector<8x1xi1>
    %c0_i32_425 = arith.constant 0 : i32
    %1008 = vector.broadcast %c0_i32_425 : i32 to vector<8x1xi32>
    %1009 = arith.cmpi sge, %1002, %1008 : vector<8x1xi32>
    %1010 = arith.andi %1007, %1009 : vector<8x1xi1>
    %c4_i32_426 = arith.constant 4 : i32
    %1011 = vector.broadcast %c4_i32_426 : i32 to vector<8x1xi32>
    %1012 = arith.cmpi slt, %1002, %1011 : vector<8x1xi32>
    %1013 = arith.andi %1010, %1012 : vector<8x1xi1>
    %c16_i32_427 = arith.constant 16 : i32
    %1014 = vector.broadcast %c16_i32_427 : i32 to vector<8x1xi32>
    %1015 = arith.muli %853, %1014 : vector<8x1xi32>
    %c4_i32_428 = arith.constant 4 : i32
    %1016 = vector.broadcast %c4_i32_428 : i32 to vector<8x1xi32>
    %1017 = arith.muli %996, %1016 : vector<8x1xi32>
    %1018 = arith.addi %1015, %1017 : vector<8x1xi32>
    %1019 = arith.addi %1018, %1002 : vector<8x1xi32>
    %1020 = vector.broadcast %1019 : vector<8x1xi32> to vector<8x32xi32>
    %1021 = arith.cmpi eq, %860, %1020 : vector<8x32xi32>
    %1022 = vector.broadcast %1013 : vector<8x1xi1> to vector<8x32xi1>
    %1023 = arith.andi %1022, %1021 : vector<8x32xi1>
    %cst_429 = arith.constant 1.000000e+00 : f32
    %cst_430 = arith.constant 0.000000e+00 : f32
    %1024 = vector.broadcast %cst_429 : f32 to vector<8x32xf32>
    %1025 = vector.broadcast %cst_430 : f32 to vector<8x32xf32>
    %1026 = arith.select %1023, %1024, %1025 : vector<8x32xi1>, vector<8x32xf32>
    %1027 = arith.truncf %1026 : vector<8x32xf32> to vector<8x32xbf16>
    %cst_431 = arith.constant dense<0.000000e+00> : vector<8x32xf32>
    %1028 = tpu.matmul %1027, %848, %cst_431 {dimension_numbers = #tpu.dot_dimension_numbers<[1], [0], [0], [1], [0, 0, 1, 1], [], []>} : vector<8x32xbf16>, vector<32x32xbf16>, vector<8x32xf32> -> vector<8x32xf32>
    %1029 = arith.truncf %1028 : vector<8x32xf32> to vector<8x32xbf16>
    %c3_432 = arith.constant 3 : index
    %c0_433 = arith.constant 0 : index
    %c0_434 = arith.constant 0 : index
    %1030 = vector.load %arg3[%c3_432, %c0_433, %c0_434] : memref<9x32x64xbf16, #tpu.memory_space<vmem>>, vector<1x32x64xbf16>
    %1031 = vector.shape_cast %1030 : vector<1x32x64xbf16> to vector<32x64xbf16>
    %cst_435 = arith.constant dense<0.000000e+00> : vector<8x64xf32>
    %1032 = tpu.matmul %1029, %1031, %cst_435 {dimension_numbers = #tpu.dot_dimension_numbers<[1], [0], [0], [1], [0, 0, 1, 1], [], []>} : vector<8x32xbf16>, vector<32x64xbf16>, vector<8x64xf32> -> vector<8x64xf32>
    %1033 = arith.addf %990, %1032 : vector<8x64xf32>
    %c2_i32_436 = arith.constant 2 : i32
    %1034 = vector.broadcast %c2_i32_436 : i32 to vector<8x1xi32>
    %1035 = arith.muli %1034, %857 : vector<8x1xi32>
    %c1_i32_437 = arith.constant 1 : i32
    %1036 = vector.broadcast %c1_i32_437 : i32 to vector<8x1xi32>
    %1037 = arith.subi %1035, %1036 : vector<8x1xi32>
    %c1_i32_438 = arith.constant 1 : i32
    %1038 = vector.broadcast %c1_i32_438 : i32 to vector<8x1xi32>
    %1039 = arith.addi %1037, %1038 : vector<8x1xi32>
    %c2_i32_439 = arith.constant 2 : i32
    %1040 = vector.broadcast %c2_i32_439 : i32 to vector<8x1xi32>
    %1041 = arith.muli %1040, %859 : vector<8x1xi32>
    %c1_i32_440 = arith.constant 1 : i32
    %1042 = vector.broadcast %c1_i32_440 : i32 to vector<8x1xi32>
    %1043 = arith.subi %1041, %1042 : vector<8x1xi32>
    %c1_i32_441 = arith.constant 1 : i32
    %1044 = vector.broadcast %c1_i32_441 : i32 to vector<8x1xi32>
    %1045 = arith.addi %1043, %1044 : vector<8x1xi32>
    %c0_i32_442 = arith.constant 0 : i32
    %1046 = vector.broadcast %c0_i32_442 : i32 to vector<8x1xi32>
    %1047 = arith.cmpi sge, %1039, %1046 : vector<8x1xi32>
    %c4_i32_443 = arith.constant 4 : i32
    %1048 = vector.broadcast %c4_i32_443 : i32 to vector<8x1xi32>
    %1049 = arith.cmpi slt, %1039, %1048 : vector<8x1xi32>
    %1050 = arith.andi %1047, %1049 : vector<8x1xi1>
    %c0_i32_444 = arith.constant 0 : i32
    %1051 = vector.broadcast %c0_i32_444 : i32 to vector<8x1xi32>
    %1052 = arith.cmpi sge, %1045, %1051 : vector<8x1xi32>
    %1053 = arith.andi %1050, %1052 : vector<8x1xi1>
    %c4_i32_445 = arith.constant 4 : i32
    %1054 = vector.broadcast %c4_i32_445 : i32 to vector<8x1xi32>
    %1055 = arith.cmpi slt, %1045, %1054 : vector<8x1xi32>
    %1056 = arith.andi %1053, %1055 : vector<8x1xi1>
    %c16_i32_446 = arith.constant 16 : i32
    %1057 = vector.broadcast %c16_i32_446 : i32 to vector<8x1xi32>
    %1058 = arith.muli %853, %1057 : vector<8x1xi32>
    %c4_i32_447 = arith.constant 4 : i32
    %1059 = vector.broadcast %c4_i32_447 : i32 to vector<8x1xi32>
    %1060 = arith.muli %1039, %1059 : vector<8x1xi32>
    %1061 = arith.addi %1058, %1060 : vector<8x1xi32>
    %1062 = arith.addi %1061, %1045 : vector<8x1xi32>
    %1063 = vector.broadcast %1062 : vector<8x1xi32> to vector<8x32xi32>
    %1064 = arith.cmpi eq, %860, %1063 : vector<8x32xi32>
    %1065 = vector.broadcast %1056 : vector<8x1xi1> to vector<8x32xi1>
    %1066 = arith.andi %1065, %1064 : vector<8x32xi1>
    %cst_448 = arith.constant 1.000000e+00 : f32
    %cst_449 = arith.constant 0.000000e+00 : f32
    %1067 = vector.broadcast %cst_448 : f32 to vector<8x32xf32>
    %1068 = vector.broadcast %cst_449 : f32 to vector<8x32xf32>
    %1069 = arith.select %1066, %1067, %1068 : vector<8x32xi1>, vector<8x32xf32>
    %1070 = arith.truncf %1069 : vector<8x32xf32> to vector<8x32xbf16>
    %cst_450 = arith.constant dense<0.000000e+00> : vector<8x32xf32>
    %1071 = tpu.matmul %1070, %848, %cst_450 {dimension_numbers = #tpu.dot_dimension_numbers<[1], [0], [0], [1], [0, 0, 1, 1], [], []>} : vector<8x32xbf16>, vector<32x32xbf16>, vector<8x32xf32> -> vector<8x32xf32>
    %1072 = arith.truncf %1071 : vector<8x32xf32> to vector<8x32xbf16>
    %c4_451 = arith.constant 4 : index
    %c0_452 = arith.constant 0 : index
    %c0_453 = arith.constant 0 : index
    %1073 = vector.load %arg3[%c4_451, %c0_452, %c0_453] : memref<9x32x64xbf16, #tpu.memory_space<vmem>>, vector<1x32x64xbf16>
    %1074 = vector.shape_cast %1073 : vector<1x32x64xbf16> to vector<32x64xbf16>
    %cst_454 = arith.constant dense<0.000000e+00> : vector<8x64xf32>
    %1075 = tpu.matmul %1072, %1074, %cst_454 {dimension_numbers = #tpu.dot_dimension_numbers<[1], [0], [0], [1], [0, 0, 1, 1], [], []>} : vector<8x32xbf16>, vector<32x64xbf16>, vector<8x64xf32> -> vector<8x64xf32>
    %1076 = arith.addf %1033, %1075 : vector<8x64xf32>
    %c2_i32_455 = arith.constant 2 : i32
    %1077 = vector.broadcast %c2_i32_455 : i32 to vector<8x1xi32>
    %1078 = arith.muli %1077, %857 : vector<8x1xi32>
    %c1_i32_456 = arith.constant 1 : i32
    %1079 = vector.broadcast %c1_i32_456 : i32 to vector<8x1xi32>
    %1080 = arith.subi %1078, %1079 : vector<8x1xi32>
    %c1_i32_457 = arith.constant 1 : i32
    %1081 = vector.broadcast %c1_i32_457 : i32 to vector<8x1xi32>
    %1082 = arith.addi %1080, %1081 : vector<8x1xi32>
    %c2_i32_458 = arith.constant 2 : i32
    %1083 = vector.broadcast %c2_i32_458 : i32 to vector<8x1xi32>
    %1084 = arith.muli %1083, %859 : vector<8x1xi32>
    %c1_i32_459 = arith.constant 1 : i32
    %1085 = vector.broadcast %c1_i32_459 : i32 to vector<8x1xi32>
    %1086 = arith.subi %1084, %1085 : vector<8x1xi32>
    %c2_i32_460 = arith.constant 2 : i32
    %1087 = vector.broadcast %c2_i32_460 : i32 to vector<8x1xi32>
    %1088 = arith.addi %1086, %1087 : vector<8x1xi32>
    %c0_i32_461 = arith.constant 0 : i32
    %1089 = vector.broadcast %c0_i32_461 : i32 to vector<8x1xi32>
    %1090 = arith.cmpi sge, %1082, %1089 : vector<8x1xi32>
    %c4_i32_462 = arith.constant 4 : i32
    %1091 = vector.broadcast %c4_i32_462 : i32 to vector<8x1xi32>
    %1092 = arith.cmpi slt, %1082, %1091 : vector<8x1xi32>
    %1093 = arith.andi %1090, %1092 : vector<8x1xi1>
    %c0_i32_463 = arith.constant 0 : i32
    %1094 = vector.broadcast %c0_i32_463 : i32 to vector<8x1xi32>
    %1095 = arith.cmpi sge, %1088, %1094 : vector<8x1xi32>
    %1096 = arith.andi %1093, %1095 : vector<8x1xi1>
    %c4_i32_464 = arith.constant 4 : i32
    %1097 = vector.broadcast %c4_i32_464 : i32 to vector<8x1xi32>
    %1098 = arith.cmpi slt, %1088, %1097 : vector<8x1xi32>
    %1099 = arith.andi %1096, %1098 : vector<8x1xi1>
    %c16_i32_465 = arith.constant 16 : i32
    %1100 = vector.broadcast %c16_i32_465 : i32 to vector<8x1xi32>
    %1101 = arith.muli %853, %1100 : vector<8x1xi32>
    %c4_i32_466 = arith.constant 4 : i32
    %1102 = vector.broadcast %c4_i32_466 : i32 to vector<8x1xi32>
    %1103 = arith.muli %1082, %1102 : vector<8x1xi32>
    %1104 = arith.addi %1101, %1103 : vector<8x1xi32>
    %1105 = arith.addi %1104, %1088 : vector<8x1xi32>
    %1106 = vector.broadcast %1105 : vector<8x1xi32> to vector<8x32xi32>
    %1107 = arith.cmpi eq, %860, %1106 : vector<8x32xi32>
    %1108 = vector.broadcast %1099 : vector<8x1xi1> to vector<8x32xi1>
    %1109 = arith.andi %1108, %1107 : vector<8x32xi1>
    %cst_467 = arith.constant 1.000000e+00 : f32
    %cst_468 = arith.constant 0.000000e+00 : f32
    %1110 = vector.broadcast %cst_467 : f32 to vector<8x32xf32>
    %1111 = vector.broadcast %cst_468 : f32 to vector<8x32xf32>
    %1112 = arith.select %1109, %1110, %1111 : vector<8x32xi1>, vector<8x32xf32>
    %1113 = arith.truncf %1112 : vector<8x32xf32> to vector<8x32xbf16>
    %cst_469 = arith.constant dense<0.000000e+00> : vector<8x32xf32>
    %1114 = tpu.matmul %1113, %848, %cst_469 {dimension_numbers = #tpu.dot_dimension_numbers<[1], [0], [0], [1], [0, 0, 1, 1], [], []>} : vector<8x32xbf16>, vector<32x32xbf16>, vector<8x32xf32> -> vector<8x32xf32>
    %1115 = arith.truncf %1114 : vector<8x32xf32> to vector<8x32xbf16>
    %c5_470 = arith.constant 5 : index
    %c0_471 = arith.constant 0 : index
    %c0_472 = arith.constant 0 : index
    %1116 = vector.load %arg3[%c5_470, %c0_471, %c0_472] : memref<9x32x64xbf16, #tpu.memory_space<vmem>>, vector<1x32x64xbf16>
    %1117 = vector.shape_cast %1116 : vector<1x32x64xbf16> to vector<32x64xbf16>
    %cst_473 = arith.constant dense<0.000000e+00> : vector<8x64xf32>
    %1118 = tpu.matmul %1115, %1117, %cst_473 {dimension_numbers = #tpu.dot_dimension_numbers<[1], [0], [0], [1], [0, 0, 1, 1], [], []>} : vector<8x32xbf16>, vector<32x64xbf16>, vector<8x64xf32> -> vector<8x64xf32>
    %1119 = arith.addf %1076, %1118 : vector<8x64xf32>
    %c2_i32_474 = arith.constant 2 : i32
    %1120 = vector.broadcast %c2_i32_474 : i32 to vector<8x1xi32>
    %1121 = arith.muli %1120, %857 : vector<8x1xi32>
    %c1_i32_475 = arith.constant 1 : i32
    %1122 = vector.broadcast %c1_i32_475 : i32 to vector<8x1xi32>
    %1123 = arith.subi %1121, %1122 : vector<8x1xi32>
    %c2_i32_476 = arith.constant 2 : i32
    %1124 = vector.broadcast %c2_i32_476 : i32 to vector<8x1xi32>
    %1125 = arith.addi %1123, %1124 : vector<8x1xi32>
    %c2_i32_477 = arith.constant 2 : i32
    %1126 = vector.broadcast %c2_i32_477 : i32 to vector<8x1xi32>
    %1127 = arith.muli %1126, %859 : vector<8x1xi32>
    %c1_i32_478 = arith.constant 1 : i32
    %1128 = vector.broadcast %c1_i32_478 : i32 to vector<8x1xi32>
    %1129 = arith.subi %1127, %1128 : vector<8x1xi32>
    %c0_i32_479 = arith.constant 0 : i32
    %1130 = vector.broadcast %c0_i32_479 : i32 to vector<8x1xi32>
    %1131 = arith.addi %1129, %1130 : vector<8x1xi32>
    %c0_i32_480 = arith.constant 0 : i32
    %1132 = vector.broadcast %c0_i32_480 : i32 to vector<8x1xi32>
    %1133 = arith.cmpi sge, %1125, %1132 : vector<8x1xi32>
    %c4_i32_481 = arith.constant 4 : i32
    %1134 = vector.broadcast %c4_i32_481 : i32 to vector<8x1xi32>
    %1135 = arith.cmpi slt, %1125, %1134 : vector<8x1xi32>
    %1136 = arith.andi %1133, %1135 : vector<8x1xi1>
    %c0_i32_482 = arith.constant 0 : i32
    %1137 = vector.broadcast %c0_i32_482 : i32 to vector<8x1xi32>
    %1138 = arith.cmpi sge, %1131, %1137 : vector<8x1xi32>
    %1139 = arith.andi %1136, %1138 : vector<8x1xi1>
    %c4_i32_483 = arith.constant 4 : i32
    %1140 = vector.broadcast %c4_i32_483 : i32 to vector<8x1xi32>
    %1141 = arith.cmpi slt, %1131, %1140 : vector<8x1xi32>
    %1142 = arith.andi %1139, %1141 : vector<8x1xi1>
    %c16_i32_484 = arith.constant 16 : i32
    %1143 = vector.broadcast %c16_i32_484 : i32 to vector<8x1xi32>
    %1144 = arith.muli %853, %1143 : vector<8x1xi32>
    %c4_i32_485 = arith.constant 4 : i32
    %1145 = vector.broadcast %c4_i32_485 : i32 to vector<8x1xi32>
    %1146 = arith.muli %1125, %1145 : vector<8x1xi32>
    %1147 = arith.addi %1144, %1146 : vector<8x1xi32>
    %1148 = arith.addi %1147, %1131 : vector<8x1xi32>
    %1149 = vector.broadcast %1148 : vector<8x1xi32> to vector<8x32xi32>
    %1150 = arith.cmpi eq, %860, %1149 : vector<8x32xi32>
    %1151 = vector.broadcast %1142 : vector<8x1xi1> to vector<8x32xi1>
    %1152 = arith.andi %1151, %1150 : vector<8x32xi1>
    %cst_486 = arith.constant 1.000000e+00 : f32
    %cst_487 = arith.constant 0.000000e+00 : f32
    %1153 = vector.broadcast %cst_486 : f32 to vector<8x32xf32>
    %1154 = vector.broadcast %cst_487 : f32 to vector<8x32xf32>
    %1155 = arith.select %1152, %1153, %1154 : vector<8x32xi1>, vector<8x32xf32>
    %1156 = arith.truncf %1155 : vector<8x32xf32> to vector<8x32xbf16>
    %cst_488 = arith.constant dense<0.000000e+00> : vector<8x32xf32>
    %1157 = tpu.matmul %1156, %848, %cst_488 {dimension_numbers = #tpu.dot_dimension_numbers<[1], [0], [0], [1], [0, 0, 1, 1], [], []>} : vector<8x32xbf16>, vector<32x32xbf16>, vector<8x32xf32> -> vector<8x32xf32>
    %1158 = arith.truncf %1157 : vector<8x32xf32> to vector<8x32xbf16>
    %c6_489 = arith.constant 6 : index
    %c0_490 = arith.constant 0 : index
    %c0_491 = arith.constant 0 : index
    %1159 = vector.load %arg3[%c6_489, %c0_490, %c0_491] : memref<9x32x64xbf16, #tpu.memory_space<vmem>>, vector<1x32x64xbf16>
    %1160 = vector.shape_cast %1159 : vector<1x32x64xbf16> to vector<32x64xbf16>
    %cst_492 = arith.constant dense<0.000000e+00> : vector<8x64xf32>
    %1161 = tpu.matmul %1158, %1160, %cst_492 {dimension_numbers = #tpu.dot_dimension_numbers<[1], [0], [0], [1], [0, 0, 1, 1], [], []>} : vector<8x32xbf16>, vector<32x64xbf16>, vector<8x64xf32> -> vector<8x64xf32>
    %1162 = arith.addf %1119, %1161 : vector<8x64xf32>
    %c2_i32_493 = arith.constant 2 : i32
    %1163 = vector.broadcast %c2_i32_493 : i32 to vector<8x1xi32>
    %1164 = arith.muli %1163, %857 : vector<8x1xi32>
    %c1_i32_494 = arith.constant 1 : i32
    %1165 = vector.broadcast %c1_i32_494 : i32 to vector<8x1xi32>
    %1166 = arith.subi %1164, %1165 : vector<8x1xi32>
    %c2_i32_495 = arith.constant 2 : i32
    %1167 = vector.broadcast %c2_i32_495 : i32 to vector<8x1xi32>
    %1168 = arith.addi %1166, %1167 : vector<8x1xi32>
    %c2_i32_496 = arith.constant 2 : i32
    %1169 = vector.broadcast %c2_i32_496 : i32 to vector<8x1xi32>
    %1170 = arith.muli %1169, %859 : vector<8x1xi32>
    %c1_i32_497 = arith.constant 1 : i32
    %1171 = vector.broadcast %c1_i32_497 : i32 to vector<8x1xi32>
    %1172 = arith.subi %1170, %1171 : vector<8x1xi32>
    %c1_i32_498 = arith.constant 1 : i32
    %1173 = vector.broadcast %c1_i32_498 : i32 to vector<8x1xi32>
    %1174 = arith.addi %1172, %1173 : vector<8x1xi32>
    %c0_i32_499 = arith.constant 0 : i32
    %1175 = vector.broadcast %c0_i32_499 : i32 to vector<8x1xi32>
    %1176 = arith.cmpi sge, %1168, %1175 : vector<8x1xi32>
    %c4_i32_500 = arith.constant 4 : i32
    %1177 = vector.broadcast %c4_i32_500 : i32 to vector<8x1xi32>
    %1178 = arith.cmpi slt, %1168, %1177 : vector<8x1xi32>
    %1179 = arith.andi %1176, %1178 : vector<8x1xi1>
    %c0_i32_501 = arith.constant 0 : i32
    %1180 = vector.broadcast %c0_i32_501 : i32 to vector<8x1xi32>
    %1181 = arith.cmpi sge, %1174, %1180 : vector<8x1xi32>
    %1182 = arith.andi %1179, %1181 : vector<8x1xi1>
    %c4_i32_502 = arith.constant 4 : i32
    %1183 = vector.broadcast %c4_i32_502 : i32 to vector<8x1xi32>
    %1184 = arith.cmpi slt, %1174, %1183 : vector<8x1xi32>
    %1185 = arith.andi %1182, %1184 : vector<8x1xi1>
    %c16_i32_503 = arith.constant 16 : i32
    %1186 = vector.broadcast %c16_i32_503 : i32 to vector<8x1xi32>
    %1187 = arith.muli %853, %1186 : vector<8x1xi32>
    %c4_i32_504 = arith.constant 4 : i32
    %1188 = vector.broadcast %c4_i32_504 : i32 to vector<8x1xi32>
    %1189 = arith.muli %1168, %1188 : vector<8x1xi32>
    %1190 = arith.addi %1187, %1189 : vector<8x1xi32>
    %1191 = arith.addi %1190, %1174 : vector<8x1xi32>
    %1192 = vector.broadcast %1191 : vector<8x1xi32> to vector<8x32xi32>
    %1193 = arith.cmpi eq, %860, %1192 : vector<8x32xi32>
    %1194 = vector.broadcast %1185 : vector<8x1xi1> to vector<8x32xi1>
    %1195 = arith.andi %1194, %1193 : vector<8x32xi1>
    %cst_505 = arith.constant 1.000000e+00 : f32
    %cst_506 = arith.constant 0.000000e+00 : f32
    %1196 = vector.broadcast %cst_505 : f32 to vector<8x32xf32>
    %1197 = vector.broadcast %cst_506 : f32 to vector<8x32xf32>
    %1198 = arith.select %1195, %1196, %1197 : vector<8x32xi1>, vector<8x32xf32>
    %1199 = arith.truncf %1198 : vector<8x32xf32> to vector<8x32xbf16>
    %cst_507 = arith.constant dense<0.000000e+00> : vector<8x32xf32>
    %1200 = tpu.matmul %1199, %848, %cst_507 {dimension_numbers = #tpu.dot_dimension_numbers<[1], [0], [0], [1], [0, 0, 1, 1], [], []>} : vector<8x32xbf16>, vector<32x32xbf16>, vector<8x32xf32> -> vector<8x32xf32>
    %1201 = arith.truncf %1200 : vector<8x32xf32> to vector<8x32xbf16>
    %c7_508 = arith.constant 7 : index
    %c0_509 = arith.constant 0 : index
    %c0_510 = arith.constant 0 : index
    %1202 = vector.load %arg3[%c7_508, %c0_509, %c0_510] : memref<9x32x64xbf16, #tpu.memory_space<vmem>>, vector<1x32x64xbf16>
    %1203 = vector.shape_cast %1202 : vector<1x32x64xbf16> to vector<32x64xbf16>
    %cst_511 = arith.constant dense<0.000000e+00> : vector<8x64xf32>
    %1204 = tpu.matmul %1201, %1203, %cst_511 {dimension_numbers = #tpu.dot_dimension_numbers<[1], [0], [0], [1], [0, 0, 1, 1], [], []>} : vector<8x32xbf16>, vector<32x64xbf16>, vector<8x64xf32> -> vector<8x64xf32>
    %1205 = arith.addf %1162, %1204 : vector<8x64xf32>
    %c2_i32_512 = arith.constant 2 : i32
    %1206 = vector.broadcast %c2_i32_512 : i32 to vector<8x1xi32>
    %1207 = arith.muli %1206, %857 : vector<8x1xi32>
    %c1_i32_513 = arith.constant 1 : i32
    %1208 = vector.broadcast %c1_i32_513 : i32 to vector<8x1xi32>
    %1209 = arith.subi %1207, %1208 : vector<8x1xi32>
    %c2_i32_514 = arith.constant 2 : i32
    %1210 = vector.broadcast %c2_i32_514 : i32 to vector<8x1xi32>
    %1211 = arith.addi %1209, %1210 : vector<8x1xi32>
    %c2_i32_515 = arith.constant 2 : i32
    %1212 = vector.broadcast %c2_i32_515 : i32 to vector<8x1xi32>
    %1213 = arith.muli %1212, %859 : vector<8x1xi32>
    %c1_i32_516 = arith.constant 1 : i32
    %1214 = vector.broadcast %c1_i32_516 : i32 to vector<8x1xi32>
    %1215 = arith.subi %1213, %1214 : vector<8x1xi32>
    %c2_i32_517 = arith.constant 2 : i32
    %1216 = vector.broadcast %c2_i32_517 : i32 to vector<8x1xi32>
    %1217 = arith.addi %1215, %1216 : vector<8x1xi32>
    %c0_i32_518 = arith.constant 0 : i32
    %1218 = vector.broadcast %c0_i32_518 : i32 to vector<8x1xi32>
    %1219 = arith.cmpi sge, %1211, %1218 : vector<8x1xi32>
    %c4_i32_519 = arith.constant 4 : i32
    %1220 = vector.broadcast %c4_i32_519 : i32 to vector<8x1xi32>
    %1221 = arith.cmpi slt, %1211, %1220 : vector<8x1xi32>
    %1222 = arith.andi %1219, %1221 : vector<8x1xi1>
    %c0_i32_520 = arith.constant 0 : i32
    %1223 = vector.broadcast %c0_i32_520 : i32 to vector<8x1xi32>
    %1224 = arith.cmpi sge, %1217, %1223 : vector<8x1xi32>
    %1225 = arith.andi %1222, %1224 : vector<8x1xi1>
    %c4_i32_521 = arith.constant 4 : i32
    %1226 = vector.broadcast %c4_i32_521 : i32 to vector<8x1xi32>
    %1227 = arith.cmpi slt, %1217, %1226 : vector<8x1xi32>
    %1228 = arith.andi %1225, %1227 : vector<8x1xi1>
    %c16_i32_522 = arith.constant 16 : i32
    %1229 = vector.broadcast %c16_i32_522 : i32 to vector<8x1xi32>
    %1230 = arith.muli %853, %1229 : vector<8x1xi32>
    %c4_i32_523 = arith.constant 4 : i32
    %1231 = vector.broadcast %c4_i32_523 : i32 to vector<8x1xi32>
    %1232 = arith.muli %1211, %1231 : vector<8x1xi32>
    %1233 = arith.addi %1230, %1232 : vector<8x1xi32>
    %1234 = arith.addi %1233, %1217 : vector<8x1xi32>
    %1235 = vector.broadcast %1234 : vector<8x1xi32> to vector<8x32xi32>
    %1236 = arith.cmpi eq, %860, %1235 : vector<8x32xi32>
    %1237 = vector.broadcast %1228 : vector<8x1xi1> to vector<8x32xi1>
    %1238 = arith.andi %1237, %1236 : vector<8x32xi1>
    %cst_524 = arith.constant 1.000000e+00 : f32
    %cst_525 = arith.constant 0.000000e+00 : f32
    %1239 = vector.broadcast %cst_524 : f32 to vector<8x32xf32>
    %1240 = vector.broadcast %cst_525 : f32 to vector<8x32xf32>
    %1241 = arith.select %1238, %1239, %1240 : vector<8x32xi1>, vector<8x32xf32>
    %1242 = arith.truncf %1241 : vector<8x32xf32> to vector<8x32xbf16>
    %cst_526 = arith.constant dense<0.000000e+00> : vector<8x32xf32>
    %1243 = tpu.matmul %1242, %848, %cst_526 {dimension_numbers = #tpu.dot_dimension_numbers<[1], [0], [0], [1], [0, 0, 1, 1], [], []>} : vector<8x32xbf16>, vector<32x32xbf16>, vector<8x32xf32> -> vector<8x32xf32>
    %1244 = arith.truncf %1243 : vector<8x32xf32> to vector<8x32xbf16>
    %c8_527 = arith.constant 8 : index
    %c0_528 = arith.constant 0 : index
    %c0_529 = arith.constant 0 : index
    %1245 = vector.load %arg3[%c8_527, %c0_528, %c0_529] : memref<9x32x64xbf16, #tpu.memory_space<vmem>>, vector<1x32x64xbf16>
    %1246 = vector.shape_cast %1245 : vector<1x32x64xbf16> to vector<32x64xbf16>
    %cst_530 = arith.constant dense<0.000000e+00> : vector<8x64xf32>
    %1247 = tpu.matmul %1244, %1246, %cst_530 {dimension_numbers = #tpu.dot_dimension_numbers<[1], [0], [0], [1], [0, 0, 1, 1], [], []>} : vector<8x32xbf16>, vector<32x64xbf16>, vector<8x64xf32> -> vector<8x64xf32>
    %1248 = arith.addf %1205, %1247 : vector<8x64xf32>
    %cst_531 = arith.constant dense<0.000000e+00> : vector<64xf32>
    %1249 = vector.multi_reduction <add>, %1248, %cst_531 [0] : vector<8x64xf32> to vector<64xf32>
    %1250 = vector.shape_cast %1249 : vector<64xf32> to vector<1x64xf32>
    %1251 = arith.mulf %1248, %1248 : vector<8x64xf32>
    %cst_532 = arith.constant dense<0.000000e+00> : vector<64xf32>
    %1252 = vector.multi_reduction <add>, %1251, %cst_532 [0] : vector<8x64xf32> to vector<64xf32>
    %1253 = vector.shape_cast %1252 : vector<64xf32> to vector<1x64xf32>
    %cst_533 = arith.constant 1.250000e-01 : f32
    %1254 = vector.broadcast %cst_533 : f32 to vector<1x64xf32>
    %1255 = arith.mulf %1250, %1254 : vector<1x64xf32>
    %cst_534 = arith.constant 1.250000e-01 : f32
    %1256 = vector.broadcast %cst_534 : f32 to vector<1x64xf32>
    %1257 = arith.mulf %1253, %1256 : vector<1x64xf32>
    %1258 = arith.mulf %1255, %1255 : vector<1x64xf32>
    %1259 = arith.subf %1257, %1258 : vector<1x64xf32>
    %cst_535 = arith.constant 9.99999974E-6 : f32
    %1260 = vector.broadcast %cst_535 : f32 to vector<1x64xf32>
    %1261 = arith.addf %1259, %1260 : vector<1x64xf32>
    %1262 = math.rsqrt %1261 : vector<1x64xf32>
    %1263 = arith.mulf %1262, %849 : vector<1x64xf32>
    %1264 = vector.broadcast %1255 : vector<1x64xf32> to vector<8x64xf32>
    %1265 = arith.subf %1248, %1264 : vector<8x64xf32>
    %1266 = vector.broadcast %1263 : vector<1x64xf32> to vector<8x64xf32>
    %1267 = arith.mulf %1265, %1266 : vector<8x64xf32>
    %1268 = vector.broadcast %850 : vector<1x64xf32> to vector<8x64xf32>
    %1269 = arith.addf %1267, %1268 : vector<8x64xf32>
    %cst_536 = arith.constant 0.000000e+00 : f32
    %1270 = vector.broadcast %cst_536 : f32 to vector<8x64xf32>
    %1271 = arith.maximumf %1269, %1270 : vector<8x64xf32>
    %1272 = arith.truncf %1271 : vector<8x64xf32> to vector<8x64xbf16>
    %c6_537 = arith.constant 6 : index
    %c0_538 = arith.constant 0 : index
    %1273 = vector.load %arg5[%c6_537, %c0_538] : memref<8x64xf32, #tpu.memory_space<vmem>>, vector<1x64xf32>
    %c7_539 = arith.constant 7 : index
    %c0_540 = arith.constant 0 : index
    %1274 = vector.load %arg5[%c7_539, %c0_540] : memref<8x64xf32, #tpu.memory_space<vmem>>, vector<1x64xf32>
    %1275 = tpu.iota {dimensions = array<i32: 0>} : vector<2x1xi32>
    %c0_i32_541 = arith.constant 0 : i32
    %1276 = vector.broadcast %c0_i32_541 : i32 to vector<2x1xi32>
    %1277 = arith.shrsi %1275, %1276 : vector<2x1xi32>
    %c0_i32_542 = arith.constant 0 : i32
    %1278 = vector.broadcast %c0_i32_542 : i32 to vector<2x1xi32>
    %1279 = arith.andi %1275, %1278 : vector<2x1xi32>
    %c0_i32_543 = arith.constant 0 : i32
    %1280 = vector.broadcast %c0_i32_543 : i32 to vector<2x1xi32>
    %1281 = arith.shrsi %1279, %1280 : vector<2x1xi32>
    %c0_i32_544 = arith.constant 0 : i32
    %1282 = vector.broadcast %c0_i32_544 : i32 to vector<2x1xi32>
    %1283 = arith.andi %1279, %1282 : vector<2x1xi32>
    %1284 = tpu.iota {dimensions = array<i32: 1>} : vector<2x8xi32>
    %cst_545 = arith.constant 0.000000e+00 : f32
    %1285 = vector.broadcast %cst_545 : f32 to vector<2x64xf32>
    %c2_i32_546 = arith.constant 2 : i32
    %1286 = vector.broadcast %c2_i32_546 : i32 to vector<2x1xi32>
    %1287 = arith.muli %1286, %1281 : vector<2x1xi32>
    %c1_i32_547 = arith.constant 1 : i32
    %1288 = vector.broadcast %c1_i32_547 : i32 to vector<2x1xi32>
    %1289 = arith.subi %1287, %1288 : vector<2x1xi32>
    %c0_i32_548 = arith.constant 0 : i32
    %1290 = vector.broadcast %c0_i32_548 : i32 to vector<2x1xi32>
    %1291 = arith.addi %1289, %1290 : vector<2x1xi32>
    %c2_i32_549 = arith.constant 2 : i32
    %1292 = vector.broadcast %c2_i32_549 : i32 to vector<2x1xi32>
    %1293 = arith.muli %1292, %1283 : vector<2x1xi32>
    %c1_i32_550 = arith.constant 1 : i32
    %1294 = vector.broadcast %c1_i32_550 : i32 to vector<2x1xi32>
    %1295 = arith.subi %1293, %1294 : vector<2x1xi32>
    %c0_i32_551 = arith.constant 0 : i32
    %1296 = vector.broadcast %c0_i32_551 : i32 to vector<2x1xi32>
    %1297 = arith.addi %1295, %1296 : vector<2x1xi32>
    %c0_i32_552 = arith.constant 0 : i32
    %1298 = vector.broadcast %c0_i32_552 : i32 to vector<2x1xi32>
    %1299 = arith.cmpi sge, %1291, %1298 : vector<2x1xi32>
    %c2_i32_553 = arith.constant 2 : i32
    %1300 = vector.broadcast %c2_i32_553 : i32 to vector<2x1xi32>
    %1301 = arith.cmpi slt, %1291, %1300 : vector<2x1xi32>
    %1302 = arith.andi %1299, %1301 : vector<2x1xi1>
    %c0_i32_554 = arith.constant 0 : i32
    %1303 = vector.broadcast %c0_i32_554 : i32 to vector<2x1xi32>
    %1304 = arith.cmpi sge, %1297, %1303 : vector<2x1xi32>
    %1305 = arith.andi %1302, %1304 : vector<2x1xi1>
    %c2_i32_555 = arith.constant 2 : i32
    %1306 = vector.broadcast %c2_i32_555 : i32 to vector<2x1xi32>
    %1307 = arith.cmpi slt, %1297, %1306 : vector<2x1xi32>
    %1308 = arith.andi %1305, %1307 : vector<2x1xi1>
    %c4_i32_556 = arith.constant 4 : i32
    %1309 = vector.broadcast %c4_i32_556 : i32 to vector<2x1xi32>
    %1310 = arith.muli %1277, %1309 : vector<2x1xi32>
    %c2_i32_557 = arith.constant 2 : i32
    %1311 = vector.broadcast %c2_i32_557 : i32 to vector<2x1xi32>
    %1312 = arith.muli %1291, %1311 : vector<2x1xi32>
    %1313 = arith.addi %1310, %1312 : vector<2x1xi32>
    %1314 = arith.addi %1313, %1297 : vector<2x1xi32>
    %1315 = vector.broadcast %1314 : vector<2x1xi32> to vector<2x8xi32>
    %1316 = arith.cmpi eq, %1284, %1315 : vector<2x8xi32>
    %1317 = vector.broadcast %1308 : vector<2x1xi1> to vector<2x8xi1>
    %1318 = arith.andi %1317, %1316 : vector<2x8xi1>
    %cst_558 = arith.constant 1.000000e+00 : f32
    %cst_559 = arith.constant 0.000000e+00 : f32
    %1319 = vector.broadcast %cst_558 : f32 to vector<2x8xf32>
    %1320 = vector.broadcast %cst_559 : f32 to vector<2x8xf32>
    %1321 = arith.select %1318, %1319, %1320 : vector<2x8xi1>, vector<2x8xf32>
    %1322 = arith.truncf %1321 : vector<2x8xf32> to vector<2x8xbf16>
    %cst_560 = arith.constant dense<0.000000e+00> : vector<2x64xf32>
    %1323 = tpu.matmul %1322, %1272, %cst_560 {dimension_numbers = #tpu.dot_dimension_numbers<[1], [0], [0], [1], [0, 0, 1, 1], [], []>} : vector<2x8xbf16>, vector<8x64xbf16>, vector<2x64xf32> -> vector<2x64xf32>
    %1324 = arith.truncf %1323 : vector<2x64xf32> to vector<2x64xbf16>
    %c0_561 = arith.constant 0 : index
    %c0_562 = arith.constant 0 : index
    %c0_563 = arith.constant 0 : index
    %1325 = vector.load %arg4[%c0_561, %c0_562, %c0_563] : memref<9x64x64xbf16, #tpu.memory_space<vmem>>, vector<1x64x64xbf16>
    %1326 = vector.shape_cast %1325 : vector<1x64x64xbf16> to vector<64x64xbf16>
    %cst_564 = arith.constant dense<0.000000e+00> : vector<2x64xf32>
    %1327 = tpu.matmul %1324, %1326, %cst_564 {dimension_numbers = #tpu.dot_dimension_numbers<[1], [0], [0], [1], [0, 0, 1, 1], [], []>} : vector<2x64xbf16>, vector<64x64xbf16>, vector<2x64xf32> -> vector<2x64xf32>
    %1328 = arith.addf %1285, %1327 : vector<2x64xf32>
    %c2_i32_565 = arith.constant 2 : i32
    %1329 = vector.broadcast %c2_i32_565 : i32 to vector<2x1xi32>
    %1330 = arith.muli %1329, %1281 : vector<2x1xi32>
    %c1_i32_566 = arith.constant 1 : i32
    %1331 = vector.broadcast %c1_i32_566 : i32 to vector<2x1xi32>
    %1332 = arith.subi %1330, %1331 : vector<2x1xi32>
    %c0_i32_567 = arith.constant 0 : i32
    %1333 = vector.broadcast %c0_i32_567 : i32 to vector<2x1xi32>
    %1334 = arith.addi %1332, %1333 : vector<2x1xi32>
    %c2_i32_568 = arith.constant 2 : i32
    %1335 = vector.broadcast %c2_i32_568 : i32 to vector<2x1xi32>
    %1336 = arith.muli %1335, %1283 : vector<2x1xi32>
    %c1_i32_569 = arith.constant 1 : i32
    %1337 = vector.broadcast %c1_i32_569 : i32 to vector<2x1xi32>
    %1338 = arith.subi %1336, %1337 : vector<2x1xi32>
    %c1_i32_570 = arith.constant 1 : i32
    %1339 = vector.broadcast %c1_i32_570 : i32 to vector<2x1xi32>
    %1340 = arith.addi %1338, %1339 : vector<2x1xi32>
    %c0_i32_571 = arith.constant 0 : i32
    %1341 = vector.broadcast %c0_i32_571 : i32 to vector<2x1xi32>
    %1342 = arith.cmpi sge, %1334, %1341 : vector<2x1xi32>
    %c2_i32_572 = arith.constant 2 : i32
    %1343 = vector.broadcast %c2_i32_572 : i32 to vector<2x1xi32>
    %1344 = arith.cmpi slt, %1334, %1343 : vector<2x1xi32>
    %1345 = arith.andi %1342, %1344 : vector<2x1xi1>
    %c0_i32_573 = arith.constant 0 : i32
    %1346 = vector.broadcast %c0_i32_573 : i32 to vector<2x1xi32>
    %1347 = arith.cmpi sge, %1340, %1346 : vector<2x1xi32>
    %1348 = arith.andi %1345, %1347 : vector<2x1xi1>
    %c2_i32_574 = arith.constant 2 : i32
    %1349 = vector.broadcast %c2_i32_574 : i32 to vector<2x1xi32>
    %1350 = arith.cmpi slt, %1340, %1349 : vector<2x1xi32>
    %1351 = arith.andi %1348, %1350 : vector<2x1xi1>
    %c4_i32_575 = arith.constant 4 : i32
    %1352 = vector.broadcast %c4_i32_575 : i32 to vector<2x1xi32>
    %1353 = arith.muli %1277, %1352 : vector<2x1xi32>
    %c2_i32_576 = arith.constant 2 : i32
    %1354 = vector.broadcast %c2_i32_576 : i32 to vector<2x1xi32>
    %1355 = arith.muli %1334, %1354 : vector<2x1xi32>
    %1356 = arith.addi %1353, %1355 : vector<2x1xi32>
    %1357 = arith.addi %1356, %1340 : vector<2x1xi32>
    %1358 = vector.broadcast %1357 : vector<2x1xi32> to vector<2x8xi32>
    %1359 = arith.cmpi eq, %1284, %1358 : vector<2x8xi32>
    %1360 = vector.broadcast %1351 : vector<2x1xi1> to vector<2x8xi1>
    %1361 = arith.andi %1360, %1359 : vector<2x8xi1>
    %cst_577 = arith.constant 1.000000e+00 : f32
    %cst_578 = arith.constant 0.000000e+00 : f32
    %1362 = vector.broadcast %cst_577 : f32 to vector<2x8xf32>
    %1363 = vector.broadcast %cst_578 : f32 to vector<2x8xf32>
    %1364 = arith.select %1361, %1362, %1363 : vector<2x8xi1>, vector<2x8xf32>
    %1365 = arith.truncf %1364 : vector<2x8xf32> to vector<2x8xbf16>
    %cst_579 = arith.constant dense<0.000000e+00> : vector<2x64xf32>
    %1366 = tpu.matmul %1365, %1272, %cst_579 {dimension_numbers = #tpu.dot_dimension_numbers<[1], [0], [0], [1], [0, 0, 1, 1], [], []>} : vector<2x8xbf16>, vector<8x64xbf16>, vector<2x64xf32> -> vector<2x64xf32>
    %1367 = arith.truncf %1366 : vector<2x64xf32> to vector<2x64xbf16>
    %c1_580 = arith.constant 1 : index
    %c0_581 = arith.constant 0 : index
    %c0_582 = arith.constant 0 : index
    %1368 = vector.load %arg4[%c1_580, %c0_581, %c0_582] : memref<9x64x64xbf16, #tpu.memory_space<vmem>>, vector<1x64x64xbf16>
    %1369 = vector.shape_cast %1368 : vector<1x64x64xbf16> to vector<64x64xbf16>
    %cst_583 = arith.constant dense<0.000000e+00> : vector<2x64xf32>
    %1370 = tpu.matmul %1367, %1369, %cst_583 {dimension_numbers = #tpu.dot_dimension_numbers<[1], [0], [0], [1], [0, 0, 1, 1], [], []>} : vector<2x64xbf16>, vector<64x64xbf16>, vector<2x64xf32> -> vector<2x64xf32>
    %1371 = arith.addf %1328, %1370 : vector<2x64xf32>
    %c2_i32_584 = arith.constant 2 : i32
    %1372 = vector.broadcast %c2_i32_584 : i32 to vector<2x1xi32>
    %1373 = arith.muli %1372, %1281 : vector<2x1xi32>
    %c1_i32_585 = arith.constant 1 : i32
    %1374 = vector.broadcast %c1_i32_585 : i32 to vector<2x1xi32>
    %1375 = arith.subi %1373, %1374 : vector<2x1xi32>
    %c0_i32_586 = arith.constant 0 : i32
    %1376 = vector.broadcast %c0_i32_586 : i32 to vector<2x1xi32>
    %1377 = arith.addi %1375, %1376 : vector<2x1xi32>
    %c2_i32_587 = arith.constant 2 : i32
    %1378 = vector.broadcast %c2_i32_587 : i32 to vector<2x1xi32>
    %1379 = arith.muli %1378, %1283 : vector<2x1xi32>
    %c1_i32_588 = arith.constant 1 : i32
    %1380 = vector.broadcast %c1_i32_588 : i32 to vector<2x1xi32>
    %1381 = arith.subi %1379, %1380 : vector<2x1xi32>
    %c2_i32_589 = arith.constant 2 : i32
    %1382 = vector.broadcast %c2_i32_589 : i32 to vector<2x1xi32>
    %1383 = arith.addi %1381, %1382 : vector<2x1xi32>
    %c0_i32_590 = arith.constant 0 : i32
    %1384 = vector.broadcast %c0_i32_590 : i32 to vector<2x1xi32>
    %1385 = arith.cmpi sge, %1377, %1384 : vector<2x1xi32>
    %c2_i32_591 = arith.constant 2 : i32
    %1386 = vector.broadcast %c2_i32_591 : i32 to vector<2x1xi32>
    %1387 = arith.cmpi slt, %1377, %1386 : vector<2x1xi32>
    %1388 = arith.andi %1385, %1387 : vector<2x1xi1>
    %c0_i32_592 = arith.constant 0 : i32
    %1389 = vector.broadcast %c0_i32_592 : i32 to vector<2x1xi32>
    %1390 = arith.cmpi sge, %1383, %1389 : vector<2x1xi32>
    %1391 = arith.andi %1388, %1390 : vector<2x1xi1>
    %c2_i32_593 = arith.constant 2 : i32
    %1392 = vector.broadcast %c2_i32_593 : i32 to vector<2x1xi32>
    %1393 = arith.cmpi slt, %1383, %1392 : vector<2x1xi32>
    %1394 = arith.andi %1391, %1393 : vector<2x1xi1>
    %c4_i32_594 = arith.constant 4 : i32
    %1395 = vector.broadcast %c4_i32_594 : i32 to vector<2x1xi32>
    %1396 = arith.muli %1277, %1395 : vector<2x1xi32>
    %c2_i32_595 = arith.constant 2 : i32
    %1397 = vector.broadcast %c2_i32_595 : i32 to vector<2x1xi32>
    %1398 = arith.muli %1377, %1397 : vector<2x1xi32>
    %1399 = arith.addi %1396, %1398 : vector<2x1xi32>
    %1400 = arith.addi %1399, %1383 : vector<2x1xi32>
    %1401 = vector.broadcast %1400 : vector<2x1xi32> to vector<2x8xi32>
    %1402 = arith.cmpi eq, %1284, %1401 : vector<2x8xi32>
    %1403 = vector.broadcast %1394 : vector<2x1xi1> to vector<2x8xi1>
    %1404 = arith.andi %1403, %1402 : vector<2x8xi1>
    %cst_596 = arith.constant 1.000000e+00 : f32
    %cst_597 = arith.constant 0.000000e+00 : f32
    %1405 = vector.broadcast %cst_596 : f32 to vector<2x8xf32>
    %1406 = vector.broadcast %cst_597 : f32 to vector<2x8xf32>
    %1407 = arith.select %1404, %1405, %1406 : vector<2x8xi1>, vector<2x8xf32>
    %1408 = arith.truncf %1407 : vector<2x8xf32> to vector<2x8xbf16>
    %cst_598 = arith.constant dense<0.000000e+00> : vector<2x64xf32>
    %1409 = tpu.matmul %1408, %1272, %cst_598 {dimension_numbers = #tpu.dot_dimension_numbers<[1], [0], [0], [1], [0, 0, 1, 1], [], []>} : vector<2x8xbf16>, vector<8x64xbf16>, vector<2x64xf32> -> vector<2x64xf32>
    %1410 = arith.truncf %1409 : vector<2x64xf32> to vector<2x64xbf16>
    %c2_599 = arith.constant 2 : index
    %c0_600 = arith.constant 0 : index
    %c0_601 = arith.constant 0 : index
    %1411 = vector.load %arg4[%c2_599, %c0_600, %c0_601] : memref<9x64x64xbf16, #tpu.memory_space<vmem>>, vector<1x64x64xbf16>
    %1412 = vector.shape_cast %1411 : vector<1x64x64xbf16> to vector<64x64xbf16>
    %cst_602 = arith.constant dense<0.000000e+00> : vector<2x64xf32>
    %1413 = tpu.matmul %1410, %1412, %cst_602 {dimension_numbers = #tpu.dot_dimension_numbers<[1], [0], [0], [1], [0, 0, 1, 1], [], []>} : vector<2x64xbf16>, vector<64x64xbf16>, vector<2x64xf32> -> vector<2x64xf32>
    %1414 = arith.addf %1371, %1413 : vector<2x64xf32>
    %c2_i32_603 = arith.constant 2 : i32
    %1415 = vector.broadcast %c2_i32_603 : i32 to vector<2x1xi32>
    %1416 = arith.muli %1415, %1281 : vector<2x1xi32>
    %c1_i32_604 = arith.constant 1 : i32
    %1417 = vector.broadcast %c1_i32_604 : i32 to vector<2x1xi32>
    %1418 = arith.subi %1416, %1417 : vector<2x1xi32>
    %c1_i32_605 = arith.constant 1 : i32
    %1419 = vector.broadcast %c1_i32_605 : i32 to vector<2x1xi32>
    %1420 = arith.addi %1418, %1419 : vector<2x1xi32>
    %c2_i32_606 = arith.constant 2 : i32
    %1421 = vector.broadcast %c2_i32_606 : i32 to vector<2x1xi32>
    %1422 = arith.muli %1421, %1283 : vector<2x1xi32>
    %c1_i32_607 = arith.constant 1 : i32
    %1423 = vector.broadcast %c1_i32_607 : i32 to vector<2x1xi32>
    %1424 = arith.subi %1422, %1423 : vector<2x1xi32>
    %c0_i32_608 = arith.constant 0 : i32
    %1425 = vector.broadcast %c0_i32_608 : i32 to vector<2x1xi32>
    %1426 = arith.addi %1424, %1425 : vector<2x1xi32>
    %c0_i32_609 = arith.constant 0 : i32
    %1427 = vector.broadcast %c0_i32_609 : i32 to vector<2x1xi32>
    %1428 = arith.cmpi sge, %1420, %1427 : vector<2x1xi32>
    %c2_i32_610 = arith.constant 2 : i32
    %1429 = vector.broadcast %c2_i32_610 : i32 to vector<2x1xi32>
    %1430 = arith.cmpi slt, %1420, %1429 : vector<2x1xi32>
    %1431 = arith.andi %1428, %1430 : vector<2x1xi1>
    %c0_i32_611 = arith.constant 0 : i32
    %1432 = vector.broadcast %c0_i32_611 : i32 to vector<2x1xi32>
    %1433 = arith.cmpi sge, %1426, %1432 : vector<2x1xi32>
    %1434 = arith.andi %1431, %1433 : vector<2x1xi1>
    %c2_i32_612 = arith.constant 2 : i32
    %1435 = vector.broadcast %c2_i32_612 : i32 to vector<2x1xi32>
    %1436 = arith.cmpi slt, %1426, %1435 : vector<2x1xi32>
    %1437 = arith.andi %1434, %1436 : vector<2x1xi1>
    %c4_i32_613 = arith.constant 4 : i32
    %1438 = vector.broadcast %c4_i32_613 : i32 to vector<2x1xi32>
    %1439 = arith.muli %1277, %1438 : vector<2x1xi32>
    %c2_i32_614 = arith.constant 2 : i32
    %1440 = vector.broadcast %c2_i32_614 : i32 to vector<2x1xi32>
    %1441 = arith.muli %1420, %1440 : vector<2x1xi32>
    %1442 = arith.addi %1439, %1441 : vector<2x1xi32>
    %1443 = arith.addi %1442, %1426 : vector<2x1xi32>
    %1444 = vector.broadcast %1443 : vector<2x1xi32> to vector<2x8xi32>
    %1445 = arith.cmpi eq, %1284, %1444 : vector<2x8xi32>
    %1446 = vector.broadcast %1437 : vector<2x1xi1> to vector<2x8xi1>
    %1447 = arith.andi %1446, %1445 : vector<2x8xi1>
    %cst_615 = arith.constant 1.000000e+00 : f32
    %cst_616 = arith.constant 0.000000e+00 : f32
    %1448 = vector.broadcast %cst_615 : f32 to vector<2x8xf32>
    %1449 = vector.broadcast %cst_616 : f32 to vector<2x8xf32>
    %1450 = arith.select %1447, %1448, %1449 : vector<2x8xi1>, vector<2x8xf32>
    %1451 = arith.truncf %1450 : vector<2x8xf32> to vector<2x8xbf16>
    %cst_617 = arith.constant dense<0.000000e+00> : vector<2x64xf32>
    %1452 = tpu.matmul %1451, %1272, %cst_617 {dimension_numbers = #tpu.dot_dimension_numbers<[1], [0], [0], [1], [0, 0, 1, 1], [], []>} : vector<2x8xbf16>, vector<8x64xbf16>, vector<2x64xf32> -> vector<2x64xf32>
    %1453 = arith.truncf %1452 : vector<2x64xf32> to vector<2x64xbf16>
    %c3_618 = arith.constant 3 : index
    %c0_619 = arith.constant 0 : index
    %c0_620 = arith.constant 0 : index
    %1454 = vector.load %arg4[%c3_618, %c0_619, %c0_620] : memref<9x64x64xbf16, #tpu.memory_space<vmem>>, vector<1x64x64xbf16>
    %1455 = vector.shape_cast %1454 : vector<1x64x64xbf16> to vector<64x64xbf16>
    %cst_621 = arith.constant dense<0.000000e+00> : vector<2x64xf32>
    %1456 = tpu.matmul %1453, %1455, %cst_621 {dimension_numbers = #tpu.dot_dimension_numbers<[1], [0], [0], [1], [0, 0, 1, 1], [], []>} : vector<2x64xbf16>, vector<64x64xbf16>, vector<2x64xf32> -> vector<2x64xf32>
    %1457 = arith.addf %1414, %1456 : vector<2x64xf32>
    %c2_i32_622 = arith.constant 2 : i32
    %1458 = vector.broadcast %c2_i32_622 : i32 to vector<2x1xi32>
    %1459 = arith.muli %1458, %1281 : vector<2x1xi32>
    %c1_i32_623 = arith.constant 1 : i32
    %1460 = vector.broadcast %c1_i32_623 : i32 to vector<2x1xi32>
    %1461 = arith.subi %1459, %1460 : vector<2x1xi32>
    %c1_i32_624 = arith.constant 1 : i32
    %1462 = vector.broadcast %c1_i32_624 : i32 to vector<2x1xi32>
    %1463 = arith.addi %1461, %1462 : vector<2x1xi32>
    %c2_i32_625 = arith.constant 2 : i32
    %1464 = vector.broadcast %c2_i32_625 : i32 to vector<2x1xi32>
    %1465 = arith.muli %1464, %1283 : vector<2x1xi32>
    %c1_i32_626 = arith.constant 1 : i32
    %1466 = vector.broadcast %c1_i32_626 : i32 to vector<2x1xi32>
    %1467 = arith.subi %1465, %1466 : vector<2x1xi32>
    %c1_i32_627 = arith.constant 1 : i32
    %1468 = vector.broadcast %c1_i32_627 : i32 to vector<2x1xi32>
    %1469 = arith.addi %1467, %1468 : vector<2x1xi32>
    %c0_i32_628 = arith.constant 0 : i32
    %1470 = vector.broadcast %c0_i32_628 : i32 to vector<2x1xi32>
    %1471 = arith.cmpi sge, %1463, %1470 : vector<2x1xi32>
    %c2_i32_629 = arith.constant 2 : i32
    %1472 = vector.broadcast %c2_i32_629 : i32 to vector<2x1xi32>
    %1473 = arith.cmpi slt, %1463, %1472 : vector<2x1xi32>
    %1474 = arith.andi %1471, %1473 : vector<2x1xi1>
    %c0_i32_630 = arith.constant 0 : i32
    %1475 = vector.broadcast %c0_i32_630 : i32 to vector<2x1xi32>
    %1476 = arith.cmpi sge, %1469, %1475 : vector<2x1xi32>
    %1477 = arith.andi %1474, %1476 : vector<2x1xi1>
    %c2_i32_631 = arith.constant 2 : i32
    %1478 = vector.broadcast %c2_i32_631 : i32 to vector<2x1xi32>
    %1479 = arith.cmpi slt, %1469, %1478 : vector<2x1xi32>
    %1480 = arith.andi %1477, %1479 : vector<2x1xi1>
    %c4_i32_632 = arith.constant 4 : i32
    %1481 = vector.broadcast %c4_i32_632 : i32 to vector<2x1xi32>
    %1482 = arith.muli %1277, %1481 : vector<2x1xi32>
    %c2_i32_633 = arith.constant 2 : i32
    %1483 = vector.broadcast %c2_i32_633 : i32 to vector<2x1xi32>
    %1484 = arith.muli %1463, %1483 : vector<2x1xi32>
    %1485 = arith.addi %1482, %1484 : vector<2x1xi32>
    %1486 = arith.addi %1485, %1469 : vector<2x1xi32>
    %1487 = vector.broadcast %1486 : vector<2x1xi32> to vector<2x8xi32>
    %1488 = arith.cmpi eq, %1284, %1487 : vector<2x8xi32>
    %1489 = vector.broadcast %1480 : vector<2x1xi1> to vector<2x8xi1>
    %1490 = arith.andi %1489, %1488 : vector<2x8xi1>
    %cst_634 = arith.constant 1.000000e+00 : f32
    %cst_635 = arith.constant 0.000000e+00 : f32
    %1491 = vector.broadcast %cst_634 : f32 to vector<2x8xf32>
    %1492 = vector.broadcast %cst_635 : f32 to vector<2x8xf32>
    %1493 = arith.select %1490, %1491, %1492 : vector<2x8xi1>, vector<2x8xf32>
    %1494 = arith.truncf %1493 : vector<2x8xf32> to vector<2x8xbf16>
    %cst_636 = arith.constant dense<0.000000e+00> : vector<2x64xf32>
    %1495 = tpu.matmul %1494, %1272, %cst_636 {dimension_numbers = #tpu.dot_dimension_numbers<[1], [0], [0], [1], [0, 0, 1, 1], [], []>} : vector<2x8xbf16>, vector<8x64xbf16>, vector<2x64xf32> -> vector<2x64xf32>
    %1496 = arith.truncf %1495 : vector<2x64xf32> to vector<2x64xbf16>
    %c4_637 = arith.constant 4 : index
    %c0_638 = arith.constant 0 : index
    %c0_639 = arith.constant 0 : index
    %1497 = vector.load %arg4[%c4_637, %c0_638, %c0_639] : memref<9x64x64xbf16, #tpu.memory_space<vmem>>, vector<1x64x64xbf16>
    %1498 = vector.shape_cast %1497 : vector<1x64x64xbf16> to vector<64x64xbf16>
    %cst_640 = arith.constant dense<0.000000e+00> : vector<2x64xf32>
    %1499 = tpu.matmul %1496, %1498, %cst_640 {dimension_numbers = #tpu.dot_dimension_numbers<[1], [0], [0], [1], [0, 0, 1, 1], [], []>} : vector<2x64xbf16>, vector<64x64xbf16>, vector<2x64xf32> -> vector<2x64xf32>
    %1500 = arith.addf %1457, %1499 : vector<2x64xf32>
    %c2_i32_641 = arith.constant 2 : i32
    %1501 = vector.broadcast %c2_i32_641 : i32 to vector<2x1xi32>
    %1502 = arith.muli %1501, %1281 : vector<2x1xi32>
    %c1_i32_642 = arith.constant 1 : i32
    %1503 = vector.broadcast %c1_i32_642 : i32 to vector<2x1xi32>
    %1504 = arith.subi %1502, %1503 : vector<2x1xi32>
    %c1_i32_643 = arith.constant 1 : i32
    %1505 = vector.broadcast %c1_i32_643 : i32 to vector<2x1xi32>
    %1506 = arith.addi %1504, %1505 : vector<2x1xi32>
    %c2_i32_644 = arith.constant 2 : i32
    %1507 = vector.broadcast %c2_i32_644 : i32 to vector<2x1xi32>
    %1508 = arith.muli %1507, %1283 : vector<2x1xi32>
    %c1_i32_645 = arith.constant 1 : i32
    %1509 = vector.broadcast %c1_i32_645 : i32 to vector<2x1xi32>
    %1510 = arith.subi %1508, %1509 : vector<2x1xi32>
    %c2_i32_646 = arith.constant 2 : i32
    %1511 = vector.broadcast %c2_i32_646 : i32 to vector<2x1xi32>
    %1512 = arith.addi %1510, %1511 : vector<2x1xi32>
    %c0_i32_647 = arith.constant 0 : i32
    %1513 = vector.broadcast %c0_i32_647 : i32 to vector<2x1xi32>
    %1514 = arith.cmpi sge, %1506, %1513 : vector<2x1xi32>
    %c2_i32_648 = arith.constant 2 : i32
    %1515 = vector.broadcast %c2_i32_648 : i32 to vector<2x1xi32>
    %1516 = arith.cmpi slt, %1506, %1515 : vector<2x1xi32>
    %1517 = arith.andi %1514, %1516 : vector<2x1xi1>
    %c0_i32_649 = arith.constant 0 : i32
    %1518 = vector.broadcast %c0_i32_649 : i32 to vector<2x1xi32>
    %1519 = arith.cmpi sge, %1512, %1518 : vector<2x1xi32>
    %1520 = arith.andi %1517, %1519 : vector<2x1xi1>
    %c2_i32_650 = arith.constant 2 : i32
    %1521 = vector.broadcast %c2_i32_650 : i32 to vector<2x1xi32>
    %1522 = arith.cmpi slt, %1512, %1521 : vector<2x1xi32>
    %1523 = arith.andi %1520, %1522 : vector<2x1xi1>
    %c4_i32_651 = arith.constant 4 : i32
    %1524 = vector.broadcast %c4_i32_651 : i32 to vector<2x1xi32>
    %1525 = arith.muli %1277, %1524 : vector<2x1xi32>
    %c2_i32_652 = arith.constant 2 : i32
    %1526 = vector.broadcast %c2_i32_652 : i32 to vector<2x1xi32>
    %1527 = arith.muli %1506, %1526 : vector<2x1xi32>
    %1528 = arith.addi %1525, %1527 : vector<2x1xi32>
    %1529 = arith.addi %1528, %1512 : vector<2x1xi32>
    %1530 = vector.broadcast %1529 : vector<2x1xi32> to vector<2x8xi32>
    %1531 = arith.cmpi eq, %1284, %1530 : vector<2x8xi32>
    %1532 = vector.broadcast %1523 : vector<2x1xi1> to vector<2x8xi1>
    %1533 = arith.andi %1532, %1531 : vector<2x8xi1>
    %cst_653 = arith.constant 1.000000e+00 : f32
    %cst_654 = arith.constant 0.000000e+00 : f32
    %1534 = vector.broadcast %cst_653 : f32 to vector<2x8xf32>
    %1535 = vector.broadcast %cst_654 : f32 to vector<2x8xf32>
    %1536 = arith.select %1533, %1534, %1535 : vector<2x8xi1>, vector<2x8xf32>
    %1537 = arith.truncf %1536 : vector<2x8xf32> to vector<2x8xbf16>
    %cst_655 = arith.constant dense<0.000000e+00> : vector<2x64xf32>
    %1538 = tpu.matmul %1537, %1272, %cst_655 {dimension_numbers = #tpu.dot_dimension_numbers<[1], [0], [0], [1], [0, 0, 1, 1], [], []>} : vector<2x8xbf16>, vector<8x64xbf16>, vector<2x64xf32> -> vector<2x64xf32>
    %1539 = arith.truncf %1538 : vector<2x64xf32> to vector<2x64xbf16>
    %c5_656 = arith.constant 5 : index
    %c0_657 = arith.constant 0 : index
    %c0_658 = arith.constant 0 : index
    %1540 = vector.load %arg4[%c5_656, %c0_657, %c0_658] : memref<9x64x64xbf16, #tpu.memory_space<vmem>>, vector<1x64x64xbf16>
    %1541 = vector.shape_cast %1540 : vector<1x64x64xbf16> to vector<64x64xbf16>
    %cst_659 = arith.constant dense<0.000000e+00> : vector<2x64xf32>
    %1542 = tpu.matmul %1539, %1541, %cst_659 {dimension_numbers = #tpu.dot_dimension_numbers<[1], [0], [0], [1], [0, 0, 1, 1], [], []>} : vector<2x64xbf16>, vector<64x64xbf16>, vector<2x64xf32> -> vector<2x64xf32>
    %1543 = arith.addf %1500, %1542 : vector<2x64xf32>
    %c2_i32_660 = arith.constant 2 : i32
    %1544 = vector.broadcast %c2_i32_660 : i32 to vector<2x1xi32>
    %1545 = arith.muli %1544, %1281 : vector<2x1xi32>
    %c1_i32_661 = arith.constant 1 : i32
    %1546 = vector.broadcast %c1_i32_661 : i32 to vector<2x1xi32>
    %1547 = arith.subi %1545, %1546 : vector<2x1xi32>
    %c2_i32_662 = arith.constant 2 : i32
    %1548 = vector.broadcast %c2_i32_662 : i32 to vector<2x1xi32>
    %1549 = arith.addi %1547, %1548 : vector<2x1xi32>
    %c2_i32_663 = arith.constant 2 : i32
    %1550 = vector.broadcast %c2_i32_663 : i32 to vector<2x1xi32>
    %1551 = arith.muli %1550, %1283 : vector<2x1xi32>
    %c1_i32_664 = arith.constant 1 : i32
    %1552 = vector.broadcast %c1_i32_664 : i32 to vector<2x1xi32>
    %1553 = arith.subi %1551, %1552 : vector<2x1xi32>
    %c0_i32_665 = arith.constant 0 : i32
    %1554 = vector.broadcast %c0_i32_665 : i32 to vector<2x1xi32>
    %1555 = arith.addi %1553, %1554 : vector<2x1xi32>
    %c0_i32_666 = arith.constant 0 : i32
    %1556 = vector.broadcast %c0_i32_666 : i32 to vector<2x1xi32>
    %1557 = arith.cmpi sge, %1549, %1556 : vector<2x1xi32>
    %c2_i32_667 = arith.constant 2 : i32
    %1558 = vector.broadcast %c2_i32_667 : i32 to vector<2x1xi32>
    %1559 = arith.cmpi slt, %1549, %1558 : vector<2x1xi32>
    %1560 = arith.andi %1557, %1559 : vector<2x1xi1>
    %c0_i32_668 = arith.constant 0 : i32
    %1561 = vector.broadcast %c0_i32_668 : i32 to vector<2x1xi32>
    %1562 = arith.cmpi sge, %1555, %1561 : vector<2x1xi32>
    %1563 = arith.andi %1560, %1562 : vector<2x1xi1>
    %c2_i32_669 = arith.constant 2 : i32
    %1564 = vector.broadcast %c2_i32_669 : i32 to vector<2x1xi32>
    %1565 = arith.cmpi slt, %1555, %1564 : vector<2x1xi32>
    %1566 = arith.andi %1563, %1565 : vector<2x1xi1>
    %c4_i32_670 = arith.constant 4 : i32
    %1567 = vector.broadcast %c4_i32_670 : i32 to vector<2x1xi32>
    %1568 = arith.muli %1277, %1567 : vector<2x1xi32>
    %c2_i32_671 = arith.constant 2 : i32
    %1569 = vector.broadcast %c2_i32_671 : i32 to vector<2x1xi32>
    %1570 = arith.muli %1549, %1569 : vector<2x1xi32>
    %1571 = arith.addi %1568, %1570 : vector<2x1xi32>
    %1572 = arith.addi %1571, %1555 : vector<2x1xi32>
    %1573 = vector.broadcast %1572 : vector<2x1xi32> to vector<2x8xi32>
    %1574 = arith.cmpi eq, %1284, %1573 : vector<2x8xi32>
    %1575 = vector.broadcast %1566 : vector<2x1xi1> to vector<2x8xi1>
    %1576 = arith.andi %1575, %1574 : vector<2x8xi1>
    %cst_672 = arith.constant 1.000000e+00 : f32
    %cst_673 = arith.constant 0.000000e+00 : f32
    %1577 = vector.broadcast %cst_672 : f32 to vector<2x8xf32>
    %1578 = vector.broadcast %cst_673 : f32 to vector<2x8xf32>
    %1579 = arith.select %1576, %1577, %1578 : vector<2x8xi1>, vector<2x8xf32>
    %1580 = arith.truncf %1579 : vector<2x8xf32> to vector<2x8xbf16>
    %cst_674 = arith.constant dense<0.000000e+00> : vector<2x64xf32>
    %1581 = tpu.matmul %1580, %1272, %cst_674 {dimension_numbers = #tpu.dot_dimension_numbers<[1], [0], [0], [1], [0, 0, 1, 1], [], []>} : vector<2x8xbf16>, vector<8x64xbf16>, vector<2x64xf32> -> vector<2x64xf32>
    %1582 = arith.truncf %1581 : vector<2x64xf32> to vector<2x64xbf16>
    %c6_675 = arith.constant 6 : index
    %c0_676 = arith.constant 0 : index
    %c0_677 = arith.constant 0 : index
    %1583 = vector.load %arg4[%c6_675, %c0_676, %c0_677] : memref<9x64x64xbf16, #tpu.memory_space<vmem>>, vector<1x64x64xbf16>
    %1584 = vector.shape_cast %1583 : vector<1x64x64xbf16> to vector<64x64xbf16>
    %cst_678 = arith.constant dense<0.000000e+00> : vector<2x64xf32>
    %1585 = tpu.matmul %1582, %1584, %cst_678 {dimension_numbers = #tpu.dot_dimension_numbers<[1], [0], [0], [1], [0, 0, 1, 1], [], []>} : vector<2x64xbf16>, vector<64x64xbf16>, vector<2x64xf32> -> vector<2x64xf32>
    %1586 = arith.addf %1543, %1585 : vector<2x64xf32>
    %c2_i32_679 = arith.constant 2 : i32
    %1587 = vector.broadcast %c2_i32_679 : i32 to vector<2x1xi32>
    %1588 = arith.muli %1587, %1281 : vector<2x1xi32>
    %c1_i32_680 = arith.constant 1 : i32
    %1589 = vector.broadcast %c1_i32_680 : i32 to vector<2x1xi32>
    %1590 = arith.subi %1588, %1589 : vector<2x1xi32>
    %c2_i32_681 = arith.constant 2 : i32
    %1591 = vector.broadcast %c2_i32_681 : i32 to vector<2x1xi32>
    %1592 = arith.addi %1590, %1591 : vector<2x1xi32>
    %c2_i32_682 = arith.constant 2 : i32
    %1593 = vector.broadcast %c2_i32_682 : i32 to vector<2x1xi32>
    %1594 = arith.muli %1593, %1283 : vector<2x1xi32>
    %c1_i32_683 = arith.constant 1 : i32
    %1595 = vector.broadcast %c1_i32_683 : i32 to vector<2x1xi32>
    %1596 = arith.subi %1594, %1595 : vector<2x1xi32>
    %c1_i32_684 = arith.constant 1 : i32
    %1597 = vector.broadcast %c1_i32_684 : i32 to vector<2x1xi32>
    %1598 = arith.addi %1596, %1597 : vector<2x1xi32>
    %c0_i32_685 = arith.constant 0 : i32
    %1599 = vector.broadcast %c0_i32_685 : i32 to vector<2x1xi32>
    %1600 = arith.cmpi sge, %1592, %1599 : vector<2x1xi32>
    %c2_i32_686 = arith.constant 2 : i32
    %1601 = vector.broadcast %c2_i32_686 : i32 to vector<2x1xi32>
    %1602 = arith.cmpi slt, %1592, %1601 : vector<2x1xi32>
    %1603 = arith.andi %1600, %1602 : vector<2x1xi1>
    %c0_i32_687 = arith.constant 0 : i32
    %1604 = vector.broadcast %c0_i32_687 : i32 to vector<2x1xi32>
    %1605 = arith.cmpi sge, %1598, %1604 : vector<2x1xi32>
    %1606 = arith.andi %1603, %1605 : vector<2x1xi1>
    %c2_i32_688 = arith.constant 2 : i32
    %1607 = vector.broadcast %c2_i32_688 : i32 to vector<2x1xi32>
    %1608 = arith.cmpi slt, %1598, %1607 : vector<2x1xi32>
    %1609 = arith.andi %1606, %1608 : vector<2x1xi1>
    %c4_i32_689 = arith.constant 4 : i32
    %1610 = vector.broadcast %c4_i32_689 : i32 to vector<2x1xi32>
    %1611 = arith.muli %1277, %1610 : vector<2x1xi32>
    %c2_i32_690 = arith.constant 2 : i32
    %1612 = vector.broadcast %c2_i32_690 : i32 to vector<2x1xi32>
    %1613 = arith.muli %1592, %1612 : vector<2x1xi32>
    %1614 = arith.addi %1611, %1613 : vector<2x1xi32>
    %1615 = arith.addi %1614, %1598 : vector<2x1xi32>
    %1616 = vector.broadcast %1615 : vector<2x1xi32> to vector<2x8xi32>
    %1617 = arith.cmpi eq, %1284, %1616 : vector<2x8xi32>
    %1618 = vector.broadcast %1609 : vector<2x1xi1> to vector<2x8xi1>
    %1619 = arith.andi %1618, %1617 : vector<2x8xi1>
    %cst_691 = arith.constant 1.000000e+00 : f32
    %cst_692 = arith.constant 0.000000e+00 : f32
    %1620 = vector.broadcast %cst_691 : f32 to vector<2x8xf32>
    %1621 = vector.broadcast %cst_692 : f32 to vector<2x8xf32>
    %1622 = arith.select %1619, %1620, %1621 : vector<2x8xi1>, vector<2x8xf32>
    %1623 = arith.truncf %1622 : vector<2x8xf32> to vector<2x8xbf16>
    %cst_693 = arith.constant dense<0.000000e+00> : vector<2x64xf32>
    %1624 = tpu.matmul %1623, %1272, %cst_693 {dimension_numbers = #tpu.dot_dimension_numbers<[1], [0], [0], [1], [0, 0, 1, 1], [], []>} : vector<2x8xbf16>, vector<8x64xbf16>, vector<2x64xf32> -> vector<2x64xf32>
    %1625 = arith.truncf %1624 : vector<2x64xf32> to vector<2x64xbf16>
    %c7_694 = arith.constant 7 : index
    %c0_695 = arith.constant 0 : index
    %c0_696 = arith.constant 0 : index
    %1626 = vector.load %arg4[%c7_694, %c0_695, %c0_696] : memref<9x64x64xbf16, #tpu.memory_space<vmem>>, vector<1x64x64xbf16>
    %1627 = vector.shape_cast %1626 : vector<1x64x64xbf16> to vector<64x64xbf16>
    %cst_697 = arith.constant dense<0.000000e+00> : vector<2x64xf32>
    %1628 = tpu.matmul %1625, %1627, %cst_697 {dimension_numbers = #tpu.dot_dimension_numbers<[1], [0], [0], [1], [0, 0, 1, 1], [], []>} : vector<2x64xbf16>, vector<64x64xbf16>, vector<2x64xf32> -> vector<2x64xf32>
    %1629 = arith.addf %1586, %1628 : vector<2x64xf32>
    %c2_i32_698 = arith.constant 2 : i32
    %1630 = vector.broadcast %c2_i32_698 : i32 to vector<2x1xi32>
    %1631 = arith.muli %1630, %1281 : vector<2x1xi32>
    %c1_i32_699 = arith.constant 1 : i32
    %1632 = vector.broadcast %c1_i32_699 : i32 to vector<2x1xi32>
    %1633 = arith.subi %1631, %1632 : vector<2x1xi32>
    %c2_i32_700 = arith.constant 2 : i32
    %1634 = vector.broadcast %c2_i32_700 : i32 to vector<2x1xi32>
    %1635 = arith.addi %1633, %1634 : vector<2x1xi32>
    %c2_i32_701 = arith.constant 2 : i32
    %1636 = vector.broadcast %c2_i32_701 : i32 to vector<2x1xi32>
    %1637 = arith.muli %1636, %1283 : vector<2x1xi32>
    %c1_i32_702 = arith.constant 1 : i32
    %1638 = vector.broadcast %c1_i32_702 : i32 to vector<2x1xi32>
    %1639 = arith.subi %1637, %1638 : vector<2x1xi32>
    %c2_i32_703 = arith.constant 2 : i32
    %1640 = vector.broadcast %c2_i32_703 : i32 to vector<2x1xi32>
    %1641 = arith.addi %1639, %1640 : vector<2x1xi32>
    %c0_i32_704 = arith.constant 0 : i32
    %1642 = vector.broadcast %c0_i32_704 : i32 to vector<2x1xi32>
    %1643 = arith.cmpi sge, %1635, %1642 : vector<2x1xi32>
    %c2_i32_705 = arith.constant 2 : i32
    %1644 = vector.broadcast %c2_i32_705 : i32 to vector<2x1xi32>
    %1645 = arith.cmpi slt, %1635, %1644 : vector<2x1xi32>
    %1646 = arith.andi %1643, %1645 : vector<2x1xi1>
    %c0_i32_706 = arith.constant 0 : i32
    %1647 = vector.broadcast %c0_i32_706 : i32 to vector<2x1xi32>
    %1648 = arith.cmpi sge, %1641, %1647 : vector<2x1xi32>
    %1649 = arith.andi %1646, %1648 : vector<2x1xi1>
    %c2_i32_707 = arith.constant 2 : i32
    %1650 = vector.broadcast %c2_i32_707 : i32 to vector<2x1xi32>
    %1651 = arith.cmpi slt, %1641, %1650 : vector<2x1xi32>
    %1652 = arith.andi %1649, %1651 : vector<2x1xi1>
    %c4_i32_708 = arith.constant 4 : i32
    %1653 = vector.broadcast %c4_i32_708 : i32 to vector<2x1xi32>
    %1654 = arith.muli %1277, %1653 : vector<2x1xi32>
    %c2_i32_709 = arith.constant 2 : i32
    %1655 = vector.broadcast %c2_i32_709 : i32 to vector<2x1xi32>
    %1656 = arith.muli %1635, %1655 : vector<2x1xi32>
    %1657 = arith.addi %1654, %1656 : vector<2x1xi32>
    %1658 = arith.addi %1657, %1641 : vector<2x1xi32>
    %1659 = vector.broadcast %1658 : vector<2x1xi32> to vector<2x8xi32>
    %1660 = arith.cmpi eq, %1284, %1659 : vector<2x8xi32>
    %1661 = vector.broadcast %1652 : vector<2x1xi1> to vector<2x8xi1>
    %1662 = arith.andi %1661, %1660 : vector<2x8xi1>
    %cst_710 = arith.constant 1.000000e+00 : f32
    %cst_711 = arith.constant 0.000000e+00 : f32
    %1663 = vector.broadcast %cst_710 : f32 to vector<2x8xf32>
    %1664 = vector.broadcast %cst_711 : f32 to vector<2x8xf32>
    %1665 = arith.select %1662, %1663, %1664 : vector<2x8xi1>, vector<2x8xf32>
    %1666 = arith.truncf %1665 : vector<2x8xf32> to vector<2x8xbf16>
    %cst_712 = arith.constant dense<0.000000e+00> : vector<2x64xf32>
    %1667 = tpu.matmul %1666, %1272, %cst_712 {dimension_numbers = #tpu.dot_dimension_numbers<[1], [0], [0], [1], [0, 0, 1, 1], [], []>} : vector<2x8xbf16>, vector<8x64xbf16>, vector<2x64xf32> -> vector<2x64xf32>
    %1668 = arith.truncf %1667 : vector<2x64xf32> to vector<2x64xbf16>
    %c8_713 = arith.constant 8 : index
    %c0_714 = arith.constant 0 : index
    %c0_715 = arith.constant 0 : index
    %1669 = vector.load %arg4[%c8_713, %c0_714, %c0_715] : memref<9x64x64xbf16, #tpu.memory_space<vmem>>, vector<1x64x64xbf16>
    %1670 = vector.shape_cast %1669 : vector<1x64x64xbf16> to vector<64x64xbf16>
    %cst_716 = arith.constant dense<0.000000e+00> : vector<2x64xf32>
    %1671 = tpu.matmul %1668, %1670, %cst_716 {dimension_numbers = #tpu.dot_dimension_numbers<[1], [0], [0], [1], [0, 0, 1, 1], [], []>} : vector<2x64xbf16>, vector<64x64xbf16>, vector<2x64xf32> -> vector<2x64xf32>
    %1672 = arith.addf %1629, %1671 : vector<2x64xf32>
    %cst_717 = arith.constant dense<0.000000e+00> : vector<64xf32>
    %1673 = vector.multi_reduction <add>, %1672, %cst_717 [0] : vector<2x64xf32> to vector<64xf32>
    %1674 = vector.shape_cast %1673 : vector<64xf32> to vector<1x64xf32>
    %1675 = arith.mulf %1672, %1672 : vector<2x64xf32>
    %cst_718 = arith.constant dense<0.000000e+00> : vector<64xf32>
    %1676 = vector.multi_reduction <add>, %1675, %cst_718 [0] : vector<2x64xf32> to vector<64xf32>
    %1677 = vector.shape_cast %1676 : vector<64xf32> to vector<1x64xf32>
    %cst_719 = arith.constant 5.000000e-01 : f32
    %1678 = vector.broadcast %cst_719 : f32 to vector<1x64xf32>
    %1679 = arith.mulf %1674, %1678 : vector<1x64xf32>
    %cst_720 = arith.constant 5.000000e-01 : f32
    %1680 = vector.broadcast %cst_720 : f32 to vector<1x64xf32>
    %1681 = arith.mulf %1677, %1680 : vector<1x64xf32>
    %1682 = arith.mulf %1679, %1679 : vector<1x64xf32>
    %1683 = arith.subf %1681, %1682 : vector<1x64xf32>
    %cst_721 = arith.constant 9.99999974E-6 : f32
    %1684 = vector.broadcast %cst_721 : f32 to vector<1x64xf32>
    %1685 = arith.addf %1683, %1684 : vector<1x64xf32>
    %1686 = math.rsqrt %1685 : vector<1x64xf32>
    %1687 = arith.mulf %1686, %1273 : vector<1x64xf32>
    %1688 = vector.broadcast %1679 : vector<1x64xf32> to vector<2x64xf32>
    %1689 = arith.subf %1672, %1688 : vector<2x64xf32>
    %1690 = vector.broadcast %1687 : vector<1x64xf32> to vector<2x64xf32>
    %1691 = arith.mulf %1689, %1690 : vector<2x64xf32>
    %1692 = vector.broadcast %1274 : vector<1x64xf32> to vector<2x64xf32>
    %1693 = arith.addf %1691, %1692 : vector<2x64xf32>
    %cst_722 = arith.constant 0.000000e+00 : f32
    %1694 = vector.broadcast %cst_722 : f32 to vector<2x64xf32>
    %1695 = arith.maximumf %1693, %1694 : vector<2x64xf32>
    %c0_723 = arith.constant 0 : index
    %c0_724 = arith.constant 0 : index
    %1696 = vector.load %arg6[%c0_723, %c0_724] : memref<2x64xf32, #tpu.memory_space<vmem>>, vector<2x64xf32>
    tpu.vector_store %arg6[%c0_723, %c0_724], %1695 {strides = array<i32>} : memref<2x64xf32, #tpu.memory_space<vmem>>, vector<2x64xf32>,
    return
  }
}

</mosaic_0001>

<llo_original>
// kernel: encoder_forward.1
$region0: #{encoder_forward.1}
  #allocation0 [shape = 'u32[]', space=smem, size = 0x4, offset = 0x4, fixed_abs, tag = 'smem constant byte address 0x4 - core index']
  #allocation1 [shape = 'u32[72,128]{1,0:T(1,128)}', space=vmem, size = 0x9000, scoped, tag = 'internal scratch']
  %s0 = inlined_call_operand.vmem [shape: bf16[512,3], index: 0, kind: input, shape index: {}]
  %s1 = inlined_call_operand.vmem [shape: bf16[9,3,16], index: 1, kind: input, shape index: {}]
  %s2 = inlined_call_operand.hbm [shape: bf16[9,16,32], index: 2, kind: input, shape index: {}]
  %s3 = inlined_call_operand.vmem [shape: bf16[9,32,64], index: 3, kind: input, shape index: {}]
  %s4 = inlined_call_operand.vmem [shape: bf16[9,64,64], index: 4, kind: input, shape index: {}]
  %s5 = inlined_call_operand.hbm [shape: f32[8,64], index: 5, kind: input, shape index: {}]
  %s6 = inlined_call_operand.hbm [shape: f32[2,64], index: 6, kind: output, shape index: {}]
  %s7 = sld [smem:[#allocation0]]
  $region42: #{encoder_forward.1} parent=0
    _
  %s9 = ssub.s32 1, %s7
  %s10 = scalar_select 0, %s9, %s7
  $region1: #{encoder_forward.1} parent=0
    #allocation2 [shape = 'u8[36864]{0}', space=vmem, size = 0x9000, scoped, tag = 'input window, operand 2, single buffered']
    #allocation3 [shape = 's32[1]{0}', space=sflag, size = 0x4, scoped, tag = 'scoped memory for encoder_forward.1']
    #allocation4 [shape = 's32[1]{0}', space=sflag, size = 0x4, scoped, tag = 'scoped memory for encoder_forward.1']
    #allocation5 [shape = 'u8[4096]{0}', space=vmem, size = 0x1000, scoped, tag = 'input window, operand 5, single buffered']
    #allocation6 [shape = 's32[1]{0}', space=sflag, size = 0x4, scoped, tag = 'scoped memory for encoder_forward.1']
    #allocation7 [shape = 'u8[1024]{0}', space=vmem, size = 0x400, scoped, tag = 'output window, operand 0, single buffered']
    %11 = vsyncpa [#allocation3], 0
    %12 = vsyncpa [#allocation6], 0
    %13 = vsyncpa [#allocation4], 0
    // Predicated region
    $region2: #{encoder_forward.1} parent=1 // pred_check
      _
    $region3: #{encoder_forward.1} parent=1 // pred_check_branch
      %15 = sbr.rel (0) target = $region5
    $region4: #{encoder_forward.1} parent=1 // pred_region
      _
    $region5: #{encoder_forward.1} parent=1 // pred_fallthru
      _
    // Predicated region
    $region6: #{encoder_forward.1} parent=1 // pred_check
      _
    $region7: #{encoder_forward.1} parent=1 // pred_check_branch
      %17 = sbr.rel (0) target = $region9
    $region8: #{encoder_forward.1} parent=1 // pred_region
      _
    $region9: #{encoder_forward.1} parent=1 // pred_fallthru
      _
    // Predicated region
    $region10: #{encoder_forward.1} parent=1 // pred_check
      _
    $region11: #{encoder_forward.1} parent=1 // pred_check_branch
      %19 = sbr.rel (0) target = $region13
    $region12: #{encoder_forward.1} parent=1 // pred_region
      %21 = vsyncadd [#allocation3], 0
      %s22 = sshll.u32 %s2, 4
      %s23 = int_to_ptr.hbm [resolvable:$true] %s22
      %s24 = sshll.u32 [#allocation2], 4
      %s25 = int_to_ptr.vmem [resolvable:$true] %s24
      %30 = dma.hbm_to_vmem [thread:$0]  %s23, 1152, %s25, [#allocation3], 64, 64, 4
    $region13: #{encoder_forward.1} parent=1 // pred_fallthru
      _
    // Predicated region
    $region14: #{encoder_forward.1} parent=1 // pred_check
      _
    $region15: #{encoder_forward.1} parent=1 // pred_check_branch
      %32 = sbr.rel (0) target = $region17
    $region16: #{encoder_forward.1} parent=1 // pred_region
      _
    $region17: #{encoder_forward.1} parent=1 // pred_fallthru
      _
    // Predicated region
    $region18: #{encoder_forward.1} parent=1 // pred_check
      _
    $region19: #{encoder_forward.1} parent=1 // pred_check_branch
      %34 = sbr.rel (0) target = $region21
    $region20: #{encoder_forward.1} parent=1 // pred_region
      _
    $region21: #{encoder_forward.1} parent=1 // pred_fallthru
      _
    // Predicated region
    $region22: #{encoder_forward.1} parent=1 // pred_check
      _
    $region23: #{encoder_forward.1} parent=1 // pred_check_branch
      %36 = sbr.rel (0) target = $region25
    $region24: #{encoder_forward.1} parent=1 // pred_region
      %38 = vsyncadd [#allocation6], 0
      %s40 = sshll.u32 %s5, 4
      %s41 = int_to_ptr.hbm [resolvable:$true] %s40
      %s42 = sshll.u32 [#allocation5], 4
      %s43 = int_to_ptr.vmem [resolvable:$true] %s42
      %45 = dma.hbm_to_vmem [thread:$0]  %s41, 128, %s43, [#allocation6]
    $region25: #{encoder_forward.1} parent=1 // pred_fallthru
      _
    // Predicated region
    $region26: #{encoder_forward.1} parent=1 // pred_check
      _
    $region27: #{encoder_forward.1} parent=1 // pred_check_branch
      %47 = sbr.rel (0) target = $region29
    $region28: #{encoder_forward.1} parent=1 // pred_region
      %49 = dma.done [#allocation3], 1152
    $region29: #{encoder_forward.1} parent=1 // pred_fallthru
      _
    // Predicated region
    $region30: #{encoder_forward.1} parent=1 // pred_check
      _
    $region31: #{encoder_forward.1} parent=1 // pred_check_branch
      %51 = sbr.rel (0) target = $region33
    $region32: #{encoder_forward.1} parent=1 // pred_region
      %53 = dma.done [#allocation6], 128
    $region33: #{encoder_forward.1} parent=1 // pred_fallthru
      _
    %v55 = vld [vmem:[%s0] sm:$0xf]
    %v56 = vld [vmem:[%s0 + $0x4] sm:$0xf]
    %v57 = vld [vmem:[%s0 + $0x8] sm:$0xf]
    %v58 = vld [vmem:[%s0 + $0xc] sm:$0xf]
    %v59 = vld [vmem:[%s0 + $0x10] sm:$0xf]
    %v60 = vld [vmem:[%s0 + $0x14] sm:$0xf]
    %v61 = vld [vmem:[%s0 + $0x18] sm:$0xf]
    %v62 = vld [vmem:[%s0 + $0x1c] sm:$0xf]
    %v63 = vld [vmem:[%s0 + $0x20] sm:$0xf]
    %v64 = vld [vmem:[%s0 + $0x24] sm:$0xf]
    %v65 = vld [vmem:[%s0 + $0x28] sm:$0xf]
    %v66 = vld [vmem:[%s0 + $0x2c] sm:$0xf]
    %v67 = vld [vmem:[%s0 + $0x30] sm:$0xf]
    %v68 = vld [vmem:[%s0 + $0x34] sm:$0xf]
    %v69 = vld [vmem:[%s0 + $0x38] sm:$0xf]
    %v70 = vld [vmem:[%s0 + $0x3c] sm:$0xf]
    %v71 = vld [vmem:[%s0 + $0x40] sm:$0xf]
    %v72 = vld [vmem:[%s0 + $0x44] sm:$0xf]
    %v73 = vld [vmem:[%s0 + $0x48] sm:$0xf]
    %v74 = vld [vmem:[%s0 + $0x4c] sm:$0xf]
    %v75 = vld [vmem:[%s0 + $0x50] sm:$0xf]
    %v76 = vld [vmem:[%s0 + $0x54] sm:$0xf]
    %v77 = vld [vmem:[%s0 + $0x58] sm:$0xf]
    %v78 = vld [vmem:[%s0 + $0x5c] sm:$0xf]
    %v79 = vld [vmem:[%s0 + $0x60] sm:$0xf]
    %v80 = vld [vmem:[%s0 + $0x64] sm:$0xf]
    %v81 = vld [vmem:[%s0 + $0x68] sm:$0xf]
    %v82 = vld [vmem:[%s0 + $0x6c] sm:$0xf]
    %v83 = vld [vmem:[%s0 + $0x70] sm:$0xf]
    %v84 = vld [vmem:[%s0 + $0x74] sm:$0xf]
    %v85 = vld [vmem:[%s0 + $0x78] sm:$0xf]
    %v86 = vld [vmem:[%s0 + $0x7c] sm:$0xf]
    %v87 = vld [vmem:[%s0 + $0x80] sm:$0xf]
    %v88 = vld [vmem:[%s0 + $0x84] sm:$0xf]
    %v89 = vld [vmem:[%s0 + $0x88] sm:$0xf]
    %v90 = vld [vmem:[%s0 + $0x8c] sm:$0xf]
    %v91 = vld [vmem:[%s0 + $0x90] sm:$0xf]
    %v92 = vld [vmem:[%s0 + $0x94] sm:$0xf]
    %v93 = vld [vmem:[%s0 + $0x98] sm:$0xf]
    %v94 = vld [vmem:[%s0 + $0x9c] sm:$0xf]
    %v95 = vld [vmem:[%s0 + $0xa0] sm:$0xf]
    %v96 = vld [vmem:[%s0 + $0xa4] sm:$0xf]
    %v97 = vld [vmem:[%s0 + $0xa8] sm:$0xf]
    %v98 = vld [vmem:[%s0 + $0xac] sm:$0xf]
    %v99 = vld [vmem:[%s0 + $0xb0] sm:$0xf]
    %v100 = vld [vmem:[%s0 + $0xb4] sm:$0xf]
    %v101 = vld [vmem:[%s0 + $0xb8] sm:$0xf]
    %v102 = vld [vmem:[%s0 + $0xbc] sm:$0xf]
    %v103 = vld [vmem:[%s0 + $0xc0] sm:$0xf]
    %v104 = vld [vmem:[%s0 + $0xc4] sm:$0xf]
    %v105 = vld [vmem:[%s0 + $0xc8] sm:$0xf]
    %v106 = vld [vmem:[%s0 + $0xcc] sm:$0xf]
    %v107 = vld [vmem:[%s0 + $0xd0] sm:$0xf]
    %v108 = vld [vmem:[%s0 + $0xd4] sm:$0xf]
    %v109 = vld [vmem:[%s0 + $0xd8] sm:$0xf]
    %v110 = vld [vmem:[%s0 + $0xdc] sm:$0xf]
    %v111 = vld [vmem:[%s0 + $0xe0] sm:$0xf]
    %v112 = vld [vmem:[%s0 + $0xe4] sm:$0xf]
    %v113 = vld [vmem:[%s0 + $0xe8] sm:$0xf]
    %v114 = vld [vmem:[%s0 + $0xec] sm:$0xf]
    %v115 = vld [vmem:[%s0 + $0xf0] sm:$0xf]
    %v116 = vld [vmem:[%s0 + $0xf4] sm:$0xf]
    %v117 = vld [vmem:[%s0 + $0xf8] sm:$0xf]
    %v118 = vld [vmem:[%s0 + $0xfc] sm:$0xf]
    %v119 = vld [vmem:[#allocation5] sm:$0x1]
    %v120 = vld [vmem:[#allocation5 + $0x1] sm:$0x1]
    %v121 = vlaneseq
    %v122 = vshrl.u32 %v121, 7
    %v123 = vadd.s32 %v122, 8
    %v124 = vadd.s32 %v122, 16
    %v125 = vadd.s32 %v122, 24
    %v126 = vadd.s32 %v122, 32
    %v127 = vadd.s32 %v122, 40
    %v128 = vadd.s32 %v122, 48
    %v129 = vadd.s32 %v122, 56
    %v130 = vadd.s32 %v122, 64
    %v131 = vadd.s32 %v122, 72
    %v132 = vadd.s32 %v122, 80
    %v133 = vadd.s32 %v122, 88
    %v134 = vadd.s32 %v122, 96
    %v135 = vadd.s32 %v122, 104
    %v136 = vadd.s32 %v122, 112
    %v137 = vadd.s32 %v122, 120
    %v138 = vshra.s32 %v122, 6
    %v139 = vshra.s32 %v123, 6
    %v140 = vshra.s32 %v124, 6
    %v141 = vshra.s32 %v125, 6
    %v142 = vshra.s32 %v126, 6
    %v143 = vshra.s32 %v127, 6
    %v144 = vshra.s32 %v128, 6
    %v145 = vshra.s32 %v129, 6
    %v146 = vshra.s32 %v130, 6
    %v147 = vshra.s32 %v131, 6
    %v148 = vshra.s32 %v132, 6
    %v149 = vshra.s32 %v133, 6
    %v150 = vshra.s32 %v134, 6
    %v151 = vshra.s32 %v135, 6
    %v152 = vshra.s32 %v136, 6
    %v153 = vshra.s32 %v137, 6
    %v154 = vand.u32 %v122, 63
    %v155 = vand.u32 %v123, 63
    %v156 = vand.u32 %v124, 63
    %v157 = vand.u32 %v125, 63
    %v158 = vand.u32 %v126, 63
    %v159 = vand.u32 %v127, 63
    %v160 = vand.u32 %v128, 63
    %v161 = vand.u32 %v129, 63
    %v162 = vand.u32 %v130, 63
    %v163 = vand.u32 %v131, 63
    %v164 = vand.u32 %v132, 63
    %v165 = vand.u32 %v133, 63
    %v166 = vand.u32 %v134, 63
    %v167 = vand.u32 %v135, 63
    %v168 = vand.u32 %v136, 63
    %v169 = vand.u32 %v137, 63
    %v170 = vshra.s32 %v154, 3
    %v171 = vshra.s32 %v155, 3
    %v172 = vshra.s32 %v156, 3
    %v173 = vshra.s32 %v157, 3
    %v174 = vshra.s32 %v158, 3
    %v175 = vshra.s32 %v159, 3
    %v176 = vshra.s32 %v160, 3
    %v177 = vshra.s32 %v161, 3
    %v178 = vshra.s32 %v162, 3
    %v179 = vshra.s32 %v163, 3
    %v180 = vshra.s32 %v164, 3
    %v181 = vshra.s32 %v165, 3
    %v182 = vshra.s32 %v166, 3
    %v183 = vshra.s32 %v167, 3
    %v184 = vshra.s32 %v168, 3
    %v185 = vshra.s32 %v169, 3
    %v186 = vand.u32 %v154, 7
    %v187 = vand.u32 %v155, 7
    %v188 = vand.u32 %v156, 7
    %v189 = vand.u32 %v157, 7
    %v190 = vand.u32 %v158, 7
    %v191 = vand.u32 %v159, 7
    %v192 = vand.u32 %v160, 7
    %v193 = vand.u32 %v161, 7
    %v194 = vand.u32 %v162, 7
    %v195 = vand.u32 %v163, 7
    %v196 = vand.u32 %v164, 7
    %v197 = vand.u32 %v165, 7
    %v198 = vand.u32 %v166, 7
    %v199 = vand.u32 %v167, 7
    %v200 = vand.u32 %v168, 7
    %v201 = vand.u32 %v169, 7
    %v202 = vlaneseq
    %v203 = vand.u32 %v202, 127
    %v204 = vadd.s32 %v203, 128
    %v205 = vadd.s32 %v203, 256
    %v206 = vadd.s32 %v203, 384
    %v207 = vmul.u32 %v170, 2
    %v208 = vmul.u32 %v171, 2
    %v209 = vmul.u32 %v172, 2
    %v210 = vmul.u32 %v173, 2
    %v211 = vmul.u32 %v174, 2
    %v212 = vmul.u32 %v175, 2
    %v213 = vmul.u32 %v176, 2
    %v214 = vmul.u32 %v177, 2
    %v215 = vmul.u32 %v178, 2
    %v216 = vmul.u32 %v179, 2
    %v217 = vmul.u32 %v180, 2
    %v218 = vmul.u32 %v181, 2
    %v219 = vmul.u32 %v182, 2
    %v220 = vmul.u32 %v183, 2
    %v221 = vmul.u32 %v184, 2
    %v222 = vmul.u32 %v185, 2
    %v223 = vsub.s32 %v207, 1
    %v224 = vsub.s32 %v208, 1
    %v225 = vsub.s32 %v209, 1
    %v226 = vsub.s32 %v210, 1
    %v227 = vsub.s32 %v211, 1
    %v228 = vsub.s32 %v212, 1
    %v229 = vsub.s32 %v213, 1
    %v230 = vsub.s32 %v214, 1
    %v231 = vsub.s32 %v215, 1
    %v232 = vsub.s32 %v216, 1
    %v233 = vsub.s32 %v217, 1
    %v234 = vsub.s32 %v218, 1
    %v235 = vsub.s32 %v219, 1
    %v236 = vsub.s32 %v220, 1
    %v237 = vsub.s32 %v221, 1
    %v238 = vsub.s32 %v222, 1
    %v239 = vmul.u32 %v186, 2
    %v240 = vmul.u32 %v187, 2
    %v241 = vmul.u32 %v188, 2
    %v242 = vmul.u32 %v189, 2
    %v243 = vmul.u32 %v190, 2
    %v244 = vmul.u32 %v191, 2
    %v245 = vmul.u32 %v192, 2
    %v246 = vmul.u32 %v193, 2
    %v247 = vmul.u32 %v194, 2
    %v248 = vmul.u32 %v195, 2
    %v249 = vmul.u32 %v196, 2
    %v250 = vmul.u32 %v197, 2
    %v251 = vmul.u32 %v198, 2
    %v252 = vmul.u32 %v199, 2
    %v253 = vmul.u32 %v200, 2
    %v254 = vmul.u32 %v201, 2
    %v255 = vsub.s32 %v239, 1
    %v256 = vsub.s32 %v240, 1
    %v257 = vsub.s32 %v241, 1
    %v258 = vsub.s32 %v242, 1
    %v259 = vsub.s32 %v243, 1
    %v260 = vsub.s32 %v244, 1
    %v261 = vsub.s32 %v245, 1
    %v262 = vsub.s32 %v246, 1
    %v263 = vsub.s32 %v247, 1
    %v264 = vsub.s32 %v248, 1
    %v265 = vsub.s32 %v249, 1
    %v266 = vsub.s32 %v250, 1
    %v267 = vsub.s32 %v251, 1
    %v268 = vsub.s32 %v252, 1
    %v269 = vsub.s32 %v253, 1
    %v270 = vsub.s32 %v254, 1
    %vm271 = vcmp.ge.s32.totalorder %v223, 0
    %vm272 = vcmp.ge.s32.totalorder %v224, 0
    %vm273 = vcmp.ge.s32.totalorder %v225, 0
    %vm274 = vcmp.ge.s32.totalorder %v226, 0
    %vm275 = vcmp.ge.s32.totalorder %v227, 0
    %vm276 = vcmp.ge.s32.totalorder %v228, 0
    %vm277 = vcmp.ge.s32.totalorder %v229, 0
    %vm278 = vcmp.ge.s32.totalorder %v230, 0
    %vm279 = vcmp.ge.s32.totalorder %v231, 0
    %vm280 = vcmp.ge.s32.totalorder %v232, 0
    %vm281 = vcmp.ge.s32.totalorder %v233, 0
    %vm282 = vcmp.ge.s32.totalorder %v234, 0
    %vm283 = vcmp.ge.s32.totalorder %v235, 0
    %vm284 = vcmp.ge.s32.totalorder %v236, 0
    %vm285 = vcmp.ge.s32.totalorder %v237, 0
    %vm286 = vcmp.ge.s32.totalorder %v238, 0
    %vm287 = vcmp.lt.s32.totalorder %v223, 16
    %vm288 = vcmp.lt.s32.totalorder %v224, 16
    %vm289 = vcmp.lt.s32.totalorder %v225, 16
    %vm290 = vcmp.lt.s32.totalorder %v226, 16
    %vm291 = vcmp.lt.s32.totalorder %v227, 16
    %vm292 = vcmp.lt.s32.totalorder %v228, 16
    %vm293 = vcmp.lt.s32.totalorder %v229, 16
    %vm294 = vcmp.lt.s32.totalorder %v230, 16
    %vm295 = vcmp.lt.s32.totalorder %v231, 16
    %vm296 = vcmp.lt.s32.totalorder %v232, 16
    %vm297 = vcmp.lt.s32.totalorder %v233, 16
    %vm298 = vcmp.lt.s32.totalorder %v234, 16
    %vm299 = vcmp.lt.s32.totalorder %v235, 16
    %vm300 = vcmp.lt.s32.totalorder %v236, 16
    %vm301 = vcmp.lt.s32.totalorder %v237, 16
    %vm302 = vcmp.lt.s32.totalorder %v238, 16
    %vm303 = vmand %vm271, %vm287
    %vm304 = vmand %vm272, %vm288
    %vm305 = vmand %vm273, %vm289
    %vm306 = vmand %vm274, %vm290
    %vm307 = vmand %vm275, %vm291
    %vm308 = vmand %vm276, %vm292
    %vm309 = vmand %vm277, %vm293
    %vm310 = vmand %vm278, %vm294
    %vm311 = vmand %vm279, %vm295
    %vm312 = vmand %vm280, %vm296
    %vm313 = vmand %vm281, %vm297
    %vm314 = vmand %vm282, %vm298
    %vm315 = vmand %vm283, %vm299
    %vm316 = vmand %vm284, %vm300
    %vm317 = vmand %vm285, %vm301
    %vm318 = vmand %vm286, %vm302
    %vm319 = vcmp.ge.s32.totalorder %v255, 0
    %vm320 = vcmp.ge.s32.totalorder %v256, 0
    %vm321 = vcmp.ge.s32.totalorder %v257, 0
    %vm322 = vcmp.ge.s32.totalorder %v258, 0
    %vm323 = vcmp.ge.s32.totalorder %v259, 0
    %vm324 = vcmp.ge.s32.totalorder %v260, 0
    %vm325 = vcmp.ge.s32.totalorder %v261, 0
    %vm326 = vcmp.ge.s32.totalorder %v262, 0
    %vm327 = vcmp.ge.s32.totalorder %v263, 0
    %vm328 = vcmp.ge.s32.totalorder %v264, 0
    %vm329 = vcmp.ge.s32.totalorder %v265, 0
    %vm330 = vcmp.ge.s32.totalorder %v266, 0
    %vm331 = vcmp.ge.s32.totalorder %v267, 0
    %vm332 = vcmp.ge.s32.totalorder %v268, 0
    %vm333 = vcmp.ge.s32.totalorder %v269, 0
    %vm334 = vcmp.ge.s32.totalorder %v270, 0
    %vm335 = vmand %vm303, %vm319
    %vm336 = vmand %vm304, %vm320
    %vm337 = vmand %vm305, %vm321
    %vm338 = vmand %vm306, %vm322
    %vm339 = vmand %vm307, %vm323
    %vm340 = vmand %vm308, %vm324
    %vm341 = vmand %vm309, %vm325
    %vm342 = vmand %vm310, %vm326
    %vm343 = vmand %vm311, %vm327
    %vm344 = vmand %vm312, %vm328
    %vm345 = vmand %vm313, %vm329
    %vm346 = vmand %vm314, %vm330
    %vm347 = vmand %vm315, %vm331
    %vm348 = vmand %vm316, %vm332
    %vm349 = vmand %vm317, %vm333
    %vm350 = vmand %vm318, %vm334
    %vm351 = vcmp.lt.s32.totalorder %v255, 16
    %vm352 = vcmp.lt.s32.totalorder %v256, 16
    %vm353 = vcmp.lt.s32.totalorder %v257, 16
    %vm354 = vcmp.lt.s32.totalorder %v258, 16
    %vm355 = vcmp.lt.s32.totalorder %v259, 16
    %vm356 = vcmp.lt.s32.totalorder %v260, 16
    %vm357 = vcmp.lt.s32.totalorder %v261, 16
    %vm358 = vcmp.lt.s32.totalorder %v262, 16
    %vm359 = vcmp.lt.s32.totalorder %v263, 16
    %vm360 = vcmp.lt.s32.totalorder %v264, 16
    %vm361 = vcmp.lt.s32.totalorder %v265, 16
    %vm362 = vcmp.lt.s32.totalorder %v266, 16
    %vm363 = vcmp.lt.s32.totalorder %v267, 16
    %vm364 = vcmp.lt.s32.totalorder %v268, 16
    %vm365 = vcmp.lt.s32.totalorder %v269, 16
    %vm366 = vcmp.lt.s32.totalorder %v270, 16
    %vm367 = vmand %vm335, %vm351
    %vm368 = vmand %vm336, %vm352
    %vm369 = vmand %vm337, %vm353
    %vm370 = vmand %vm338, %vm354
    %vm371 = vmand %vm339, %vm355
    %vm372 = vmand %vm340, %vm356
    %vm373 = vmand %vm341, %vm357
    %vm374 = vmand %vm342, %vm358
    %vm375 = vmand %vm343, %vm359
    %vm376 = vmand %vm344, %vm360
    %vm377 = vmand %vm345, %vm361
    %vm378 = vmand %vm346, %vm362
    %vm379 = vmand %vm347, %vm363
    %vm380 = vmand %vm348, %vm364
    %vm381 = vmand %vm349, %vm365
    %vm382 = vmand %vm350, %vm366
    %v383 = vmul.u32 %v138, 256
    %v384 = vmul.u32 %v139, 256
    %v385 = vmul.u32 %v140, 256
    %v386 = vmul.u32 %v141, 256
    %v387 = vmul.u32 %v142, 256
    %v388 = vmul.u32 %v143, 256
    %v389 = vmul.u32 %v144, 256
    %v390 = vmul.u32 %v145, 256
    %v391 = vmul.u32 %v146, 256
    %v392 = vmul.u32 %v147, 256
    %v393 = vmul.u32 %v148, 256
    %v394 = vmul.u32 %v149, 256
    %v395 = vmul.u32 %v150, 256
    %v396 = vmul.u32 %v151, 256
    %v397 = vmul.u32 %v152, 256
    %v398 = vmul.u32 %v153, 256
    %v399 = vmul.u32 %v223, 16
    %v400 = vmul.u32 %v224, 16
    %v401 = vmul.u32 %v225, 16
    %v402 = vmul.u32 %v226, 16
    %v403 = vmul.u32 %v227, 16
    %v404 = vmul.u32 %v228, 16
    %v405 = vmul.u32 %v229, 16
    %v406 = vmul.u32 %v230, 16
    %v407 = vmul.u32 %v231, 16
    %v408 = vmul.u32 %v232, 16
    %v409 = vmul.u32 %v233, 16
    %v410 = vmul.u32 %v234, 16
    %v411 = vmul.u32 %v235, 16
    %v412 = vmul.u32 %v236, 16
    %v413 = vmul.u32 %v237, 16
    %v414 = vmul.u32 %v238, 16
    %v415 = vadd.s32 %v383, %v399
    %v416 = vadd.s32 %v384, %v400
    %v417 = vadd.s32 %v385, %v401
    %v418 = vadd.s32 %v386, %v402
    %v419 = vadd.s32 %v387, %v403
    %v420 = vadd.s32 %v388, %v404
    %v421 = vadd.s32 %v389, %v405
    %v422 = vadd.s32 %v390, %v406
    %v423 = vadd.s32 %v391, %v407
    %v424 = vadd.s32 %v392, %v408
    %v425 = vadd.s32 %v393, %v409
    %v426 = vadd.s32 %v394, %v410
    %v427 = vadd.s32 %v395, %v411
    %v428 = vadd.s32 %v396, %v412
    %v429 = vadd.s32 %v397, %v413
    %v430 = vadd.s32 %v398, %v414
    %v431 = vadd.s32 %v415, %v255
    %v432 = vadd.s32 %v416, %v256
    %v433 = vadd.s32 %v417, %v257
    %v434 = vadd.s32 %v418, %v258
    %v435 = vadd.s32 %v419, %v259
    %v436 = vadd.s32 %v420, %v260
    %v437 = vadd.s32 %v421, %v261
    %v438 = vadd.s32 %v422, %v262
    %v439 = vadd.s32 %v423, %v263
    %v440 = vadd.s32 %v424, %v264
    %v441 = vadd.s32 %v425, %v265
    %v442 = vadd.s32 %v426, %v266
    %v443 = vadd.s32 %v427, %v267
    %v444 = vadd.s32 %v428, %v268
    %v445 = vadd.s32 %v429, %v269
    %v446 = vadd.s32 %v430, %v270
    %vm447 = vcmp.eq.s32.totalorder %v203, %v431
    %vm448 = vcmp.eq.s32.totalorder %v204, %v431
    %vm449 = vcmp.eq.s32.totalorder %v205, %v431
    %vm450 = vcmp.eq.s32.totalorder %v206, %v431
    %vm451 = vcmp.eq.s32.totalorder %v203, %v432
    %vm452 = vcmp.eq.s32.totalorder %v204, %v432
    %vm453 = vcmp.eq.s32.totalorder %v205, %v432
    %vm454 = vcmp.eq.s32.totalorder %v206, %v432
    %vm455 = vcmp.eq.s32.totalorder %v203, %v433
    %vm456 = vcmp.eq.s32.totalorder %v204, %v433
    %vm457 = vcmp.eq.s32.totalorder %v205, %v433
    %vm458 = vcmp.eq.s32.totalorder %v206, %v433
    %vm459 = vcmp.eq.s32.totalorder %v203, %v434
    %vm460 = vcmp.eq.s32.totalorder %v204, %v434
    %vm461 = vcmp.eq.s32.totalorder %v205, %v434
    %vm462 = vcmp.eq.s32.totalorder %v206, %v434
    %vm463 = vcmp.eq.s32.totalorder %v203, %v435
    %vm464 = vcmp.eq.s32.totalorder %v204, %v435
    %vm465 = vcmp.eq.s32.totalorder %v205, %v435
    %vm466 = vcmp.eq.s32.totalorder %v206, %v435
    %vm467 = vcmp.eq.s32.totalorder %v203, %v436
    %vm468 = vcmp.eq.s32.totalorder %v204, %v436
    %vm469 = vcmp.eq.s32.totalorder %v205, %v436
    %vm470 = vcmp.eq.s32.totalorder %v206, %v436
    %vm471 = vcmp.eq.s32.totalorder %v203, %v437
    %vm472 = vcmp.eq.s32.totalorder %v204, %v437
    %vm473 = vcmp.eq.s32.totalorder %v205, %v437
    %vm474 = vcmp.eq.s32.totalorder %v206, %v437
    %vm475 = vcmp.eq.s32.totalorder %v203, %v438
    %vm476 = vcmp.eq.s32.totalorder %v204, %v438
    %vm477 = vcmp.eq.s32.totalorder %v205, %v438
    %vm478 = vcmp.eq.s32.totalorder %v206, %v438
    %vm479 = vcmp.eq.s32.totalorder %v203, %v439
    %vm480 = vcmp.eq.s32.totalorder %v204, %v439
    %vm481 = vcmp.eq.s32.totalorder %v205, %v439
    %vm482 = vcmp.eq.s32.totalorder %v206, %v439
    %vm483 = vcmp.eq.s32.totalorder %v203, %v440
    %vm484 = vcmp.eq.s32.totalorder %v204, %v440
    %vm485 = vcmp.eq.s32.totalorder %v205, %v440
    %vm486 = vcmp.eq.s32.totalorder %v206, %v440
    %vm487 = vcmp.eq.s32.totalorder %v203, %v441
    %vm488 = vcmp.eq.s32.totalorder %v204, %v441
    %vm489 = vcmp.eq.s32.totalorder %v205, %v441
    %vm490 = vcmp.eq.s32.totalorder %v206, %v441
    %vm491 = vcmp.eq.s32.totalorder %v203, %v442
    %vm492 = vcmp.eq.s32.totalorder %v204, %v442
    %vm493 = vcmp.eq.s32.totalorder %v205, %v442
    %vm494 = vcmp.eq.s32.totalorder %v206, %v442
    %vm495 = vcmp.eq.s32.totalorder %v203, %v443
    %vm496 = vcmp.eq.s32.totalorder %v204, %v443
    %vm497 = vcmp.eq.s32.totalorder %v205, %v443
    %vm498 = vcmp.eq.s32.totalorder %v206, %v443
    %vm499 = vcmp.eq.s32.totalorder %v203, %v444
    %vm500 = vcmp.eq.s32.totalorder %v204, %v444
    %vm501 = vcmp.eq.s32.totalorder %v205, %v444
    %vm502 = vcmp.eq.s32.totalorder %v206, %v444
    %vm503 = vcmp.eq.s32.totalorder %v203, %v445
    %vm504 = vcmp.eq.s32.totalorder %v204, %v445
    %vm505 = vcmp.eq.s32.totalorder %v205, %v445
    %vm506 = vcmp.eq.s32.totalorder %v206, %v445
    %vm507 = vcmp.eq.s32.totalorder %v203, %v446
    %vm508 = vcmp.eq.s32.totalorder %v204, %v446
    %vm509 = vcmp.eq.s32.totalorder %v205, %v446
    %vm510 = vcmp.eq.s32.totalorder %v206, %v446
    %v511 = vsel %vm367, 1, 0
    %v512 = vsel %vm368, 1, 0
    %v513 = vsel %vm369, 1, 0
    %v514 = vsel %vm370, 1, 0
    %v515 = vsel %vm371, 1, 0
    %v516 = vsel %vm372, 1, 0
    %v517 = vsel %vm373, 1, 0
    %v518 = vsel %vm374, 1, 0
    %v519 = vsel %vm375, 1, 0
    %v520 = vsel %vm376, 1, 0
    %v521 = vsel %vm377, 1, 0
    %v522 = vsel %vm378, 1, 0
    %v523 = vsel %vm379, 1, 0
    %v524 = vsel %vm380, 1, 0
    %v525 = vsel %vm381, 1, 0
    %v526 = vsel %vm382, 1, 0
    %vm527 = vcmp.eq.s32.totalorder %v511, 1
    %vm528 = vcmp.eq.s32.totalorder %v512, 1
    %vm529 = vcmp.eq.s32.totalorder %v513, 1
    %vm530 = vcmp.eq.s32.totalorder %v514, 1
    %vm531 = vcmp.eq.s32.totalorder %v515, 1
    %vm532 = vcmp.eq.s32.totalorder %v516, 1
    %vm533 = vcmp.eq.s32.totalorder %v517, 1
    %vm534 = vcmp.eq.s32.totalorder %v518, 1
    %vm535 = vcmp.eq.s32.totalorder %v519, 1
    %vm536 = vcmp.eq.s32.totalorder %v520, 1
    %vm537 = vcmp.eq.s32.totalorder %v521, 1
    %vm538 = vcmp.eq.s32.totalorder %v522, 1
    %vm539 = vcmp.eq.s32.totalorder %v523, 1
    %vm540 = vcmp.eq.s32.totalorder %v524, 1
    %vm541 = vcmp.eq.s32.totalorder %v525, 1
    %vm542 = vcmp.eq.s32.totalorder %v526, 1
    %vm543 = vmand %vm527, %vm447
    %vm544 = vmand %vm527, %vm448
    %vm545 = vmand %vm527, %vm449
    %vm546 = vmand %vm527, %vm450
    %vm547 = vmand %vm528, %vm451
    %vm548 = vmand %vm528, %vm452
    %vm549 = vmand %vm528, %vm453
    %vm550 = vmand %vm528, %vm454
    %vm551 = vmand %vm529, %vm455
    %vm552 = vmand %vm529, %vm456
    %vm553 = vmand %vm529, %vm457
    %vm554 = vmand %vm529, %vm458
    %vm555 = vmand %vm530, %vm459
    %vm556 = vmand %vm530, %vm460
    %vm557 = vmand %vm530, %vm461
    %vm558 = vmand %vm530, %vm462
    %vm559 = vmand %vm531, %vm463
    %vm560 = vmand %vm531, %vm464
    %vm561 = vmand %vm531, %vm465
    %vm562 = vmand %vm531, %vm466
    %vm563 = vmand %vm532, %vm467
    %vm564 = vmand %vm532, %vm468
    %vm565 = vmand %vm532, %vm469
    %vm566 = vmand %vm532, %vm470
    %vm567 = vmand %vm533, %vm471
    %vm568 = vmand %vm533, %vm472
    %vm569 = vmand %vm533, %vm473
    %vm570 = vmand %vm533, %vm474
    %vm571 = vmand %vm534, %vm475
    %vm572 = vmand %vm534, %vm476
    %vm573 = vmand %vm534, %vm477
    %vm574 = vmand %vm534, %vm478
    %vm575 = vmand %vm535, %vm479
    %vm576 = vmand %vm535, %vm480
    %vm577 = vmand %vm535, %vm481
    %vm578 = vmand %vm535, %vm482
    %vm579 = vmand %vm536, %vm483
    %vm580 = vmand %vm536, %vm484
    %vm581 = vmand %vm536, %vm485
    %vm582 = vmand %vm536, %vm486
    %vm583 = vmand %vm537, %vm487
    %vm584 = vmand %vm537, %vm488
    %vm585 = vmand %vm537, %vm489
    %vm586 = vmand %vm537, %vm490
    %vm587 = vmand %vm538, %vm491
    %vm588 = vmand %vm538, %vm492
    %vm589 = vmand %vm538, %vm493
    %vm590 = vmand %vm538, %vm494
    %vm591 = vmand %vm539, %vm495
    %vm592 = vmand %vm539, %vm496
    %vm593 = vmand %vm539, %vm497
    %vm594 = vmand %vm539, %vm498
    %vm595 = vmand %vm540, %vm499
    %vm596 = vmand %vm540, %vm500
    %vm597 = vmand %vm540, %vm501
    %vm598 = vmand %vm540, %vm502
    %vm599 = vmand %vm541, %vm503
    %vm600 = vmand %vm541, %vm504
    %vm601 = vmand %vm541, %vm505
    %vm602 = vmand %vm541, %vm506
    %vm603 = vmand %vm542, %vm507
    %vm604 = vmand %vm542, %vm508
    %vm605 = vmand %vm542, %vm509
    %vm606 = vmand %vm542, %vm510
    %v607 = vsel %vm543, 1.0, 0.0
    %v608 = vsel %vm544, 1.0, 0.0
    %v609 = vsel %vm545, 1.0, 0.0
    %v610 = vsel %vm546, 1.0, 0.0
    %v611 = vsel %vm547, 1.0, 0.0
    %v612 = vsel %vm548, 1.0, 0.0
    %v613 = vsel %vm549, 1.0, 0.0
    %v614 = vsel %vm550, 1.0, 0.0
    %v615 = vsel %vm551, 1.0, 0.0
    %v616 = vsel %vm552, 1.0, 0.0
    %v617 = vsel %vm553, 1.0, 0.0
    %v618 = vsel %vm554, 1.0, 0.0
    %v619 = vsel %vm555, 1.0, 0.0
    %v620 = vsel %vm556, 1.0, 0.0
    %v621 = vsel %vm557, 1.0, 0.0
    %v622 = vsel %vm558, 1.0, 0.0
    %v623 = vsel %vm559, 1.0, 0.0
    %v624 = vsel %vm560, 1.0, 0.0
    %v625 = vsel %vm561, 1.0, 0.0
    %v626 = vsel %vm562, 1.0, 0.0
    %v627 = vsel %vm563, 1.0, 0.0
    %v628 = vsel %vm564, 1.0, 0.0
    %v629 = vsel %vm565, 1.0, 0.0
    %v630 = vsel %vm566, 1.0, 0.0
    %v631 = vsel %vm567, 1.0, 0.0
    %v632 = vsel %vm568, 1.0, 0.0
    %v633 = vsel %vm569, 1.0, 0.0
    %v634 = vsel %vm570, 1.0, 0.0
    %v635 = vsel %vm571, 1.0, 0.0
    %v636 = vsel %vm572, 1.0, 0.0
    %v637 = vsel %vm573, 1.0, 0.0
    %v638 = vsel %vm574, 1.0, 0.0
    %v639 = vsel %vm575, 1.0, 0.0
    %v640 = vsel %vm576, 1.0, 0.0
    %v641 = vsel %vm577, 1.0, 0.0
    %v642 = vsel %vm578, 1.0, 0.0
    %v643 = vsel %vm579, 1.0, 0.0
    %v644 = vsel %vm580, 1.0, 0.0
    %v645 = vsel %vm581, 1.0, 0.0
    %v646 = vsel %vm582, 1.0, 0.0
    %v647 = vsel %vm583, 1.0, 0.0
    %v648 = vsel %vm584, 1.0, 0.0
    %v649 = vsel %vm585, 1.0, 0.0
    %v650 = vsel %vm586, 1.0, 0.0
    %v651 = vsel %vm587, 1.0, 0.0
    %v652 = vsel %vm588, 1.0, 0.0
    %v653 = vsel %vm589, 1.0, 0.0
    %v654 = vsel %vm590, 1.0, 0.0
    %v655 = vsel %vm591, 1.0, 0.0
    %v656 = vsel %vm592, 1.0, 0.0
    %v657 = vsel %vm593, 1.0, 0.0
    %v658 = vsel %vm594, 1.0, 0.0
    %v659 = vsel %vm595, 1.0, 0.0
    %v660 = vsel %vm596, 1.0, 0.0
    %v661 = vsel %vm597, 1.0, 0.0
    %v662 = vsel %vm598, 1.0, 0.0
    %v663 = vsel %vm599, 1.0, 0.0
    %v664 = vsel %vm600, 1.0, 0.0
    %v665 = vsel %vm601, 1.0, 0.0
    %v666 = vsel %vm602, 1.0, 0.0
    %v667 = vsel %vm603, 1.0, 0.0
    %v668 = vsel %vm604, 1.0, 0.0
    %v669 = vsel %vm605, 1.0, 0.0
    %v670 = vsel %vm606, 1.0, 0.0
    %v671 = vpack.c.bf16 %v611, %v607
    %v672 = vpack.c.bf16 %v612, %v608
    %v673 = vpack.c.bf16 %v613, %v609
    %v674 = vpack.c.bf16 %v614, %v610
    %v675 = vpack.c.bf16 %v619, %v615
    %v676 = vpack.c.bf16 %v620, %v616
    %v677 = vpack.c.bf16 %v621, %v617
    %v678 = vpack.c.bf16 %v622, %v618
    %v679 = vpack.c.bf16 %v627, %v623
    %v680 = vpack.c.bf16 %v628, %v624
    %v681 = vpack.c.bf16 %v629, %v625
    %v682 = vpack.c.bf16 %v630, %v626
    %v683 = vpack.c.bf16 %v635, %v631
    %v684 = vpack.c.bf16 %v636, %v632
    %v685 = vpack.c.bf16 %v637, %v633
    %v686 = vpack.c.bf16 %v638, %v634
    %v687 = vpack.c.bf16 %v643, %v639
    %v688 = vpack.c.bf16 %v644, %v640
    %v689 = vpack.c.bf16 %v645, %v641
    %v690 = vpack.c.bf16 %v646, %v642
    %v691 = vpack.c.bf16 %v651, %v647
    %v692 = vpack.c.bf16 %v652, %v648
    %v693 = vpack.c.bf16 %v653, %v649
    %v694 = vpack.c.bf16 %v654, %v650
    %v695 = vpack.c.bf16 %v659, %v655
    %v696 = vpack.c.bf16 %v660, %v656
    %v697 = vpack.c.bf16 %v661, %v657
    %v698 = vpack.c.bf16 %v662, %v658
    %v699 = vpack.c.bf16 %v667, %v663
    %v700 = vpack.c.bf16 %v668, %v664
    %v701 = vpack.c.bf16 %v669, %v665
    %v702 = vpack.c.bf16 %v670, %v666
    %v767 = vunpack.c.l.b16 %v55
    %v768 = vunpack.c.l.b16 %v56
    %v769 = vunpack.c.l.b16 %v57
    %v770 = vunpack.c.l.b16 %v58
    %v771 = vunpack.c.l.b16 %v59
    %v772 = vunpack.c.l.b16 %v60
    %v773 = vunpack.c.l.b16 %v61
    %v774 = vunpack.c.l.b16 %v62
    %v775 = vunpack.c.l.b16 %v63
    %v776 = vunpack.c.l.b16 %v64
    %v777 = vunpack.c.l.b16 %v65
    %v778 = vunpack.c.l.b16 %v66
    %v779 = vunpack.c.l.b16 %v67
    %v780 = vunpack.c.l.b16 %v68
    %v781 = vunpack.c.l.b16 %v69
    %v782 = vunpack.c.l.b16 %v70
    %v783 = vunpack.c.l.b16 %v71
    %v784 = vunpack.c.l.b16 %v72
    %v785 = vunpack.c.l.b16 %v73
    %v786 = vunpack.c.l.b16 %v74
    %v787 = vunpack.c.l.b16 %v75
    %v788 = vunpack.c.l.b16 %v76
    %v789 = vunpack.c.l.b16 %v77
    %v790 = vunpack.c.l.b16 %v78
    %v791 = vunpack.c.l.b16 %v79
    %v792 = vunpack.c.l.b16 %v80
    %v793 = vunpack.c.l.b16 %v81
    %v794 = vunpack.c.l.b16 %v82
    %v795 = vunpack.c.l.b16 %v83
    %v796 = vunpack.c.l.b16 %v84
    %v797 = vunpack.c.l.b16 %v85
    %v798 = vunpack.c.l.b16 %v86
    %v799 = vunpack.c.l.b16 %v87
    %v800 = vunpack.c.l.b16 %v88
    %v801 = vunpack.c.l.b16 %v89
    %v802 = vunpack.c.l.b16 %v90
    %v803 = vunpack.c.l.b16 %v91
    %v804 = vunpack.c.l.b16 %v92
    %v805 = vunpack.c.l.b16 %v93
    %v806 = vunpack.c.l.b16 %v94
    %v807 = vunpack.c.l.b16 %v95
    %v808 = vunpack.c.l.b16 %v96
    %v809 = vunpack.c.l.b16 %v97
    %v810 = vunpack.c.l.b16 %v98
    %v811 = vunpack.c.l.b16 %v99
    %v812 = vunpack.c.l.b16 %v100
    %v813 = vunpack.c.l.b16 %v101
    %v814 = vunpack.c.l.b16 %v102
    %v815 = vunpack.c.l.b16 %v103
    %v816 = vunpack.c.l.b16 %v104
    %v817 = vunpack.c.l.b16 %v105
    %v818 = vunpack.c.l.b16 %v106
    %v819 = vunpack.c.l.b16 %v107
    %v820 = vunpack.c.l.b16 %v108
    %v821 = vunpack.c.l.b16 %v109
    %v822 = vunpack.c.l.b16 %v110
    %v823 = vunpack.c.l.b16 %v111
    %v824 = vunpack.c.l.b16 %v112
    %v825 = vunpack.c.l.b16 %v113
    %v826 = vunpack.c.l.b16 %v114
    %v827 = vunpack.c.l.b16 %v115
    %v828 = vunpack.c.l.b16 %v116
    %v829 = vunpack.c.l.b16 %v117
    %v830 = vunpack.c.l.b16 %v118
    %v831 = vpack.c.b16 %v768, %v767
    %v832 = vpack.c.b16 %v770, %v769
    %v833 = vpack.c.b16 %v772, %v771
    %v834 = vpack.c.b16 %v774, %v773
    %v835 = vpack.c.b16 %v776, %v775
    %v836 = vpack.c.b16 %v778, %v777
    %v837 = vpack.c.b16 %v780, %v779
    %v838 = vpack.c.b16 %v782, %v781
    %v839 = vpack.c.b16 %v784, %v783
    %v840 = vpack.c.b16 %v786, %v785
    %v841 = vpack.c.b16 %v788, %v787
    %v842 = vpack.c.b16 %v790, %v789
    %v843 = vpack.c.b16 %v792, %v791
    %v844 = vpack.c.b16 %v794, %v793
    %v845 = vpack.c.b16 %v796, %v795
    %v846 = vpack.c.b16 %v798, %v797
    %v847 = vpack.c.b16 %v800, %v799
    %v848 = vpack.c.b16 %v802, %v801
    %v849 = vpack.c.b16 %v804, %v803
    %v850 = vpack.c.b16 %v806, %v805
    %v851 = vpack.c.b16 %v808, %v807
    %v852 = vpack.c.b16 %v810, %v809
    %v853 = vpack.c.b16 %v812, %v811
    %v854 = vpack.c.b16 %v814, %v813
    %v855 = vpack.c.b16 %v816, %v815
    %v856 = vpack.c.b16 %v818, %v817
    %v857 = vpack.c.b16 %v820, %v819
    %v858 = vpack.c.b16 %v822, %v821
    %v859 = vpack.c.b16 %v824, %v823
    %v860 = vpack.c.b16 %v826, %v825
    %v861 = vpack.c.b16 %v828, %v827
    %v862 = vpack.c.b16 %v830, %v829
    %895 = vmatpush.bf16.msra.mxu0 %v838
    %896 = vmatpush.bf16.msra.mxu0 %v837
    %897 = vmatpush.bf16.msra.mxu0 %v836
    %898 = vmatpush.bf16.msra.mxu0 %v835
    %899 = vmatpush.bf16.msra.mxu0 %v834
    %900 = vmatpush.bf16.msra.mxu0 %v833
    %901 = vmatpush.bf16.msra.mxu0 %v832
    %902 = vmatpush.bf16.msra.mxu0 %v831
    %903 = vmatmul.bf16.gmra.mxu0 %v671
    %v904 = vpop.f32.mrf.mxu0
    %v905 = vadd.f32 0.0, %v904
    %v906 = vpop.f32.mrf.mxu0
    %v907 = vadd.f32 0.0, %v906
    %908 = vmatmul.bf16.gmra.mxu0 %v675
    %v909 = vpop.f32.mrf.mxu0
    %v910 = vadd.f32 0.0, %v909
    %v911 = vpop.f32.mrf.mxu0
    %v912 = vadd.f32 0.0, %v911
    %913 = vmatmul.bf16.gmra.mxu0 %v679
    %v914 = vpop.f32.mrf.mxu0
    %v915 = vadd.f32 0.0, %v914
    %v916 = vpop.f32.mrf.mxu0
    %v917 = vadd.f32 0.0, %v916
    %918 = vmatmul.bf16.gmra.mxu0 %v683
    %v919 = vpop.f32.mrf.mxu0
    %v920 = vadd.f32 0.0, %v919
    %v921 = vpop.f32.mrf.mxu0
    %v922 = vadd.f32 0.0, %v921
    %923 = vmatmul.bf16.gmra.mxu0 %v687
    %v924 = vpop.f32.mrf.mxu0
    %v925 = vadd.f32 0.0, %v924
    %v926 = vpop.f32.mrf.mxu0
    %v927 = vadd.f32 0.0, %v926
    %928 = vmatmul.bf16.gmra.mxu0 %v691
    %v929 = vpop.f32.mrf.mxu0
    %v930 = vadd.f32 0.0, %v929
    %v931 = vpop.f32.mrf.mxu0
    %v932 = vadd.f32 0.0, %v931
    %933 = vmatmul.bf16.gmra.mxu0 %v695
    %v934 = vpop.f32.mrf.mxu0
    %v935 = vadd.f32 0.0, %v934
    %v936 = vpop.f32.mrf.mxu0
    %v937 = vadd.f32 0.0, %v936
    %938 = vmatmul.bf16.gmra.mxu0 %v699
    %v939 = vpop.f32.mrf.mxu0
    %v940 = vadd.f32 0.0, %v939
    %v941 = vpop.f32.mrf.mxu0
    %v942 = vadd.f32 0.0, %v941
    %943 = vdwg.mxu0
    %944 = vmatpush.bf16.msra.mxu0 %v846
    %945 = vmatpush.bf16.msra.mxu0 %v845
    %946 = vmatpush.bf16.msra.mxu0 %v844
    %947 = vmatpush.bf16.msra.mxu0 %v843
    %948 = vmatpush.bf16.msra.mxu0 %v842
    %949 = vmatpush.bf16.msra.mxu0 %v841
    %950 = vmatpush.bf16.msra.mxu0 %v840
    %951 = vmatpush.bf16.msra.mxu0 %v839
    %952 = vmatmul.bf16.gmra.mxu0 %v672
    %v953 = vpop.f32.mrf.mxu0
    %v954 = vadd.f32 %v905, %v953
    %v955 = vpop.f32.mrf.mxu0
    %v956 = vadd.f32 %v907, %v955
    %957 = vmatmul.bf16.gmra.mxu0 %v676
    %v958 = vpop.f32.mrf.mxu0
    %v959 = vadd.f32 %v910, %v958
    %v960 = vpop.f32.mrf.mxu0
    %v961 = vadd.f32 %v912, %v960
    %962 = vmatmul.bf16.gmra.mxu0 %v680
    %v963 = vpop.f32.mrf.mxu0
    %v964 = vadd.f32 %v915, %v963
    %v965 = vpop.f32.mrf.mxu0
    %v966 = vadd.f32 %v917, %v965
    %967 = vmatmul.bf16.gmra.mxu0 %v684
    %v968 = vpop.f32.mrf.mxu0
    %v969 = vadd.f32 %v920, %v968
    %v970 = vpop.f32.mrf.mxu0
    %v971 = vadd.f32 %v922, %v970
    %972 = vmatmul.bf16.gmra.mxu0 %v688
    %v973 = vpop.f32.mrf.mxu0
    %v974 = vadd.f32 %v925, %v973
    %v975 = vpop.f32.mrf.mxu0
    %v976 = vadd.f32 %v927, %v975
    %977 = vmatmul.bf16.gmra.mxu0 %v692
    %v978 = vpop.f32.mrf.mxu0
    %v979 = vadd.f32 %v930, %v978
    %v980 = vpop.f32.mrf.mxu0
    %v981 = vadd.f32 %v932, %v980
    %982 = vmatmul.bf16.gmra.mxu0 %v696
    %v983 = vpop.f32.mrf.mxu0
    %v984 = vadd.f32 %v935, %v983
    %v985 = vpop.f32.mrf.mxu0
    %v986 = vadd.f32 %v937, %v985
    %987 = vmatmul.bf16.gmra.mxu0 %v700
    %v988 = vpop.f32.mrf.mxu0
    %v989 = vadd.f32 %v940, %v988
    %v990 = vpop.f32.mrf.mxu0
    %v991 = vadd.f32 %v942, %v990
    %992 = vdwg.mxu0
    %993 = vmatpush.bf16.msra.mxu0 %v854
    %994 = vmatpush.bf16.msra.mxu0 %v853
    %995 = vmatpush.bf16.msra.mxu0 %v852
    %996 = vmatpush.bf16.msra.mxu0 %v851
    %997 = vmatpush.bf16.msra.mxu0 %v850
    %998 = vmatpush.bf16.msra.mxu0 %v849
    %999 = vmatpush.bf16.msra.mxu0 %v848
    %1000 = vmatpush.bf16.msra.mxu0 %v847
    %1001 = vmatmul.bf16.gmra.mxu0 %v673
    %v1002 = vpop.f32.mrf.mxu0
    %v1003 = vadd.f32 %v954, %v1002
    %v1004 = vpop.f32.mrf.mxu0
    %v1005 = vadd.f32 %v956, %v1004
    %1006 = vmatmul.bf16.gmra.mxu0 %v677
    %v1007 = vpop.f32.mrf.mxu0
    %v1008 = vadd.f32 %v959, %v1007
    %v1009 = vpop.f32.mrf.mxu0
    %v1010 = vadd.f32 %v961, %v1009
    %1011 = vmatmul.bf16.gmra.mxu0 %v681
    %v1012 = vpop.f32.mrf.mxu0
    %v1013 = vadd.f32 %v964, %v1012
    %v1014 = vpop.f32.mrf.mxu0
    %v1015 = vadd.f32 %v966, %v1014
    %1016 = vmatmul.bf16.gmra.mxu0 %v685
    %v1017 = vpop.f32.mrf.mxu0
    %v1018 = vadd.f32 %v969, %v1017
    %v1019 = vpop.f32.mrf.mxu0
    %v1020 = vadd.f32 %v971, %v1019
    %1021 = vmatmul.bf16.gmra.mxu0 %v689
    %v1022 = vpop.f32.mrf.mxu0
    %v1023 = vadd.f32 %v974, %v1022
    %v1024 = vpop.f32.mrf.mxu0
    %v1025 = vadd.f32 %v976, %v1024
    %1026 = vmatmul.bf16.gmra.mxu0 %v693
    %v1027 = vpop.f32.mrf.mxu0
    %v1028 = vadd.f32 %v979, %v1027
    %v1029 = vpop.f32.mrf.mxu0
    %v1030 = vadd.f32 %v981, %v1029
    %1031 = vmatmul.bf16.gmra.mxu0 %v697
    %v1032 = vpop.f32.mrf.mxu0
    %v1033 = vadd.f32 %v984, %v1032
    %v1034 = vpop.f32.mrf.mxu0
    %v1035 = vadd.f32 %v986, %v1034
    %1036 = vmatmul.bf16.gmra.mxu0 %v701
    %v1037 = vpop.f32.mrf.mxu0
    %v1038 = vadd.f32 %v989, %v1037
    %v1039 = vpop.f32.mrf.mxu0
    %v1040 = vadd.f32 %v991, %v1039
    %1041 = vdwg.mxu0
    %1042 = vmatpush.bf16.msra.mxu0 %v862
    %1043 = vmatpush.bf16.msra.mxu0 %v861
    %1044 = vmatpush.bf16.msra.mxu0 %v860
    %1045 = vmatpush.bf16.msra.mxu0 %v859
    %1046 = vmatpush.bf16.msra.mxu0 %v858
    %1047 = vmatpush.bf16.msra.mxu0 %v857
    %1048 = vmatpush.bf16.msra.mxu0 %v856
    %1049 = vmatpush.bf16.msra.mxu0 %v855
    %1050 = vmatmul.bf16.gmra.mxu0 %v674
    %v1051 = vpop.f32.mrf.mxu0
    %v1052 = vadd.f32 %v1003, %v1051
    %v1053 = vpop.f32.mrf.mxu0
    %v1054 = vadd.f32 %v1005, %v1053
    %1055 = vmatmul.bf16.gmra.mxu0 %v678
    %v1056 = vpop.f32.mrf.mxu0
    %v1057 = vadd.f32 %v1008, %v1056
    %v1058 = vpop.f32.mrf.mxu0
    %v1059 = vadd.f32 %v1010, %v1058
    %1060 = vmatmul.bf16.gmra.mxu0 %v682
    %v1061 = vpop.f32.mrf.mxu0
    %v1062 = vadd.f32 %v1013, %v1061
    %v1063 = vpop.f32.mrf.mxu0
    %v1064 = vadd.f32 %v1015, %v1063
    %1065 = vmatmul.bf16.gmra.mxu0 %v686
    %v1066 = vpop.f32.mrf.mxu0
    %v1067 = vadd.f32 %v1018, %v1066
    %v1068 = vpop.f32.mrf.mxu0
    %v1069 = vadd.f32 %v1020, %v1068
    %1070 = vmatmul.bf16.gmra.mxu0 %v690
    %v1071 = vpop.f32.mrf.mxu0
    %v1072 = vadd.f32 %v1023, %v1071
    %v1073 = vpop.f32.mrf.mxu0
    %v1074 = vadd.f32 %v1025, %v1073
    %1075 = vmatmul.bf16.gmra.mxu0 %v694
    %v1076 = vpop.f32.mrf.mxu0
    %v1077 = vadd.f32 %v1028, %v1076
    %v1078 = vpop.f32.mrf.mxu0
    %v1079 = vadd.f32 %v1030, %v1078
    %1080 = vmatmul.bf16.gmra.mxu0 %v698
    %v1081 = vpop.f32.mrf.mxu0
    %v1082 = vadd.f32 %v1033, %v1081
    %v1083 = vpop.f32.mrf.mxu0
    %v1084 = vadd.f32 %v1035, %v1083
    %1085 = vmatmul.bf16.gmra.mxu0 %v702
    %v1086 = vpop.f32.mrf.mxu0
    %v1087 = vadd.f32 %v1038, %v1086
    %v1088 = vpop.f32.mrf.mxu0
    %v1089 = vadd.f32 %v1040, %v1088
    %1090 = vdwg.mxu0
    %v1091 = vpack.c.bf16 %v1054, %v1052
    %v1092 = vpack.c.bf16 %v1059, %v1057
    %v1093 = vpack.c.bf16 %v1064, %v1062
    %v1094 = vpack.c.bf16 %v1069, %v1067
    %v1095 = vpack.c.bf16 %v1074, %v1072
    %v1096 = vpack.c.bf16 %v1079, %v1077
    %v1097 = vpack.c.bf16 %v1084, %v1082
    %v1098 = vpack.c.bf16 %v1089, %v1087
    %v1099 = vld [vmem:[%s1] sm:$0x3]
    %vm1100 = vcmp.ge.s32.totalorder %v239, 0
    %vm1101 = vcmp.ge.s32.totalorder %v240, 0
    %vm1102 = vcmp.ge.s32.totalorder %v241, 0
    %vm1103 = vcmp.ge.s32.totalorder %v242, 0
    %vm1104 = vcmp.ge.s32.totalorder %v243, 0
    %vm1105 = vcmp.ge.s32.totalorder %v244, 0
    %vm1106 = vcmp.ge.s32.totalorder %v245, 0
    %vm1107 = vcmp.ge.s32.totalorder %v246, 0
    %vm1108 = vcmp.ge.s32.totalorder %v247, 0
    %vm1109 = vcmp.ge.s32.totalorder %v248, 0
    %vm1110 = vcmp.ge.s32.totalorder %v249, 0
    %vm1111 = vcmp.ge.s32.totalorder %v250, 0
    %vm1112 = vcmp.ge.s32.totalorder %v251, 0
    %vm1113 = vcmp.ge.s32.totalorder %v252, 0
    %vm1114 = vcmp.ge.s32.totalorder %v253, 0
    %vm1115 = vcmp.ge.s32.totalorder %v254, 0
    %vm1116 = vmand %vm303, %vm1100
    %vm1117 = vmand %vm304, %vm1101
    %vm1118 = vmand %vm305, %vm1102
    %vm1119 = vmand %vm306, %vm1103
    %vm1120 = vmand %vm307, %vm1104
    %vm1121 = vmand %vm308, %vm1105
    %vm1122 = vmand %vm309, %vm1106
    %vm1123 = vmand %vm310, %vm1107
    %vm1124 = vmand %vm311, %vm1108
    %vm1125 = vmand %vm312, %vm1109
    %vm1126 = vmand %vm313, %vm1110
    %vm1127 = vmand %vm314, %vm1111
    %vm1128 = vmand %vm315, %vm1112
    %vm1129 = vmand %vm316, %vm1113
    %vm1130 = vmand %vm317, %vm1114
    %vm1131 = vmand %vm318, %vm1115
    %vm1132 = vcmp.lt.s32.totalorder %v239, 16
    %vm1133 = vcmp.lt.s32.totalorder %v240, 16
    %vm1134 = vcmp.lt.s32.totalorder %v241, 16
    %vm1135 = vcmp.lt.s32.totalorder %v242, 16
    %vm1136 = vcmp.lt.s32.totalorder %v243, 16
    %vm1137 = vcmp.lt.s32.totalorder %v244, 16
    %vm1138 = vcmp.lt.s32.totalorder %v245, 16
    %vm1139 = vcmp.lt.s32.totalorder %v246, 16
    %vm1140 = vcmp.lt.s32.totalorder %v247, 16
    %vm1141 = vcmp.lt.s32.totalorder %v248, 16
    %vm1142 = vcmp.lt.s32.totalorder %v249, 16
    %vm1143 = vcmp.lt.s32.totalorder %v250, 16
    %vm1144 = vcmp.lt.s32.totalorder %v251, 16
    %vm1145 = vcmp.lt.s32.totalorder %v252, 16
    %vm1146 = vcmp.lt.s32.totalorder %v253, 16
    %vm1147 = vcmp.lt.s32.totalorder %v254, 16
    %vm1148 = vmand %vm1116, %vm1132
    %vm1149 = vmand %vm1117, %vm1133
    %vm1150 = vmand %vm1118, %vm1134
    %vm1151 = vmand %vm1119, %vm1135
    %vm1152 = vmand %vm1120, %vm1136
    %vm1153 = vmand %vm1121, %vm1137
    %vm1154 = vmand %vm1122, %vm1138
    %vm1155 = vmand %vm1123, %vm1139
    %vm1156 = vmand %vm1124, %vm1140
    %vm1157 = vmand %vm1125, %vm1141
    %vm1158 = vmand %vm1126, %vm1142
    %vm1159 = vmand %vm1127, %vm1143
    %vm1160 = vmand %vm1128, %vm1144
    %vm1161 = vmand %vm1129, %vm1145
    %vm1162 = vmand %vm1130, %vm1146
    %vm1163 = vmand %vm1131, %vm1147
    %v1164 = vadd.s32 %v415, %v239
    %v1165 = vadd.s32 %v416, %v240
    %v1166 = vadd.s32 %v417, %v241
    %v1167 = vadd.s32 %v418, %v242
    %v1168 = vadd.s32 %v419, %v243
    %v1169 = vadd.s32 %v420, %v244
    %v1170 = vadd.s32 %v421, %v245
    %v1171 = vadd.s32 %v422, %v246
    %v1172 = vadd.s32 %v423, %v247
    %v1173 = vadd.s32 %v424, %v248
    %v1174 = vadd.s32 %v425, %v249
    %v1175 = vadd.s32 %v426, %v250
    %v1176 = vadd.s32 %v427, %v251
    %v1177 = vadd.s32 %v428, %v252
    %v1178 = vadd.s32 %v429, %v253
    %v1179 = vadd.s32 %v430, %v254
    %vm1180 = vcmp.eq.s32.totalorder %v203, %v1164
    %vm1181 = vcmp.eq.s32.totalorder %v204, %v1164
    %vm1182 = vcmp.eq.s32.totalorder %v205, %v1164
    %vm1183 = vcmp.eq.s32.totalorder %v206, %v1164
    %vm1184 = vcmp.eq.s32.totalorder %v203, %v1165
    %vm1185 = vcmp.eq.s32.totalorder %v204, %v1165
    %vm1186 = vcmp.eq.s32.totalorder %v205, %v1165
    %vm1187 = vcmp.eq.s32.totalorder %v206, %v1165
    %vm1188 = vcmp.eq.s32.totalorder %v203, %v1166
    %vm1189 = vcmp.eq.s32.totalorder %v204, %v1166
    %vm1190 = vcmp.eq.s32.totalorder %v205, %v1166
    %vm1191 = vcmp.eq.s32.totalorder %v206, %v1166
    %vm1192 = vcmp.eq.s32.totalorder %v203, %v1167
    %vm1193 = vcmp.eq.s32.totalorder %v204, %v1167
    %vm1194 = vcmp.eq.s32.totalorder %v205, %v1167
    %vm1195 = vcmp.eq.s32.totalorder %v206, %v1167
    %vm1196 = vcmp.eq.s32.totalorder %v203, %v1168
    %vm1197 = vcmp.eq.s32.totalorder %v204, %v1168
    %vm1198 = vcmp.eq.s32.totalorder %v205, %v1168
    %vm1199 = vcmp.eq.s32.totalorder %v206, %v1168
    %vm1200 = vcmp.eq.s32.totalorder %v203, %v1169
    %vm1201 = vcmp.eq.s32.totalorder %v204, %v1169
    %vm1202 = vcmp.eq.s32.totalorder %v205, %v1169
    %vm1203 = vcmp.eq.s32.totalorder %v206, %v1169
    %vm1204 = vcmp.eq.s32.totalorder %v203, %v1170
    %vm1205 = vcmp.eq.s32.totalorder %v204, %v1170
    %vm1206 = vcmp.eq.s32.totalorder %v205, %v1170
    %vm1207 = vcmp.eq.s32.totalorder %v206, %v1170
    %vm1208 = vcmp.eq.s32.totalorder %v203, %v1171
    %vm1209 = vcmp.eq.s32.totalorder %v204, %v1171
    %vm1210 = vcmp.eq.s32.totalorder %v205, %v1171
    %vm1211 = vcmp.eq.s32.totalorder %v206, %v1171
    %vm1212 = vcmp.eq.s32.totalorder %v203, %v1172
    %vm1213 = vcmp.eq.s32.totalorder %v204, %v1172
    %vm1214 = vcmp.eq.s32.totalorder %v205, %v1172
    %vm1215 = vcmp.eq.s32.totalorder %v206, %v1172
    %vm1216 = vcmp.eq.s32.totalorder %v203, %v1173
    %vm1217 = vcmp.eq.s32.totalorder %v204, %v1173
    %vm1218 = vcmp.eq.s32.totalorder %v205, %v1173
    %vm1219 = vcmp.eq.s32.totalorder %v206, %v1173
    %vm1220 = vcmp.eq.s32.totalorder %v203, %v1174
    %vm1221 = vcmp.eq.s32.totalorder %v204, %v1174
    %vm1222 = vcmp.eq.s32.totalorder %v205, %v1174
    %vm1223 = vcmp.eq.s32.totalorder %v206, %v1174
    %vm1224 = vcmp.eq.s32.totalorder %v203, %v1175
    %vm1225 = vcmp.eq.s32.totalorder %v204, %v1175
    %vm1226 = vcmp.eq.s32.totalorder %v205, %v1175
    %vm1227 = vcmp.eq.s32.totalorder %v206, %v1175
    %vm1228 = vcmp.eq.s32.totalorder %v203, %v1176
    %vm1229 = vcmp.eq.s32.totalorder %v204, %v1176
    %vm1230 = vcmp.eq.s32.totalorder %v205, %v1176
    %vm1231 = vcmp.eq.s32.totalorder %v206, %v1176
    %vm1232 = vcmp.eq.s32.totalorder %v203, %v1177
    %vm1233 = vcmp.eq.s32.totalorder %v204, %v1177
    %vm1234 = vcmp.eq.s32.totalorder %v205, %v1177
    %vm1235 = vcmp.eq.s32.totalorder %v206, %v1177
    %vm1236 = vcmp.eq.s32.totalorder %v203, %v1178
    %vm1237 = vcmp.eq.s32.totalorder %v204, %v1178
    %vm1238 = vcmp.eq.s32.totalorder %v205, %v1178
    %vm1239 = vcmp.eq.s32.totalorder %v206, %v1178
    %vm1240 = vcmp.eq.s32.totalorder %v203, %v1179
    %vm1241 = vcmp.eq.s32.totalorder %v204, %v1179
    %vm1242 = vcmp.eq.s32.totalorder %v205, %v1179
    %vm1243 = vcmp.eq.s32.totalorder %v206, %v1179
    %v1244 = vsel %vm1148, 1, 0
    %v1245 = vsel %vm1149, 1, 0
    %v1246 = vsel %vm1150, 1, 0
    %v1247 = vsel %vm1151, 1, 0
    %v1248 = vsel %vm1152, 1, 0
    %v1249 = vsel %vm1153, 1, 0
    %v1250 = vsel %vm1154, 1, 0
    %v1251 = vsel %vm1155, 1, 0
    %v1252 = vsel %vm1156, 1, 0
    %v1253 = vsel %vm1157, 1, 0
    %v1254 = vsel %vm1158, 1, 0
    %v1255 = vsel %vm1159, 1, 0
    %v1256 = vsel %vm1160, 1, 0
    %v1257 = vsel %vm1161, 1, 0
    %v1258 = vsel %vm1162, 1, 0
    %v1259 = vsel %vm1163, 1, 0
    %vm1260 = vcmp.eq.s32.totalorder %v1244, 1
    %vm1261 = vcmp.eq.s32.totalorder %v1245, 1
    %vm1262 = vcmp.eq.s32.totalorder %v1246, 1
    %vm1263 = vcmp.eq.s32.totalorder %v1247, 1
    %vm1264 = vcmp.eq.s32.totalorder %v1248, 1
    %vm1265 = vcmp.eq.s32.totalorder %v1249, 1
    %vm1266 = vcmp.eq.s32.totalorder %v1250, 1
    %vm1267 = vcmp.eq.s32.totalorder %v1251, 1
    %vm1268 = vcmp.eq.s32.totalorder %v1252, 1
    %vm1269 = vcmp.eq.s32.totalorder %v1253, 1
    %vm1270 = vcmp.eq.s32.totalorder %v1254, 1
    %vm1271 = vcmp.eq.s32.totalorder %v1255, 1
    %vm1272 = vcmp.eq.s32.totalorder %v1256, 1
    %vm1273 = vcmp.eq.s32.totalorder %v1257, 1
    %vm1274 = vcmp.eq.s32.totalorder %v1258, 1
    %vm1275 = vcmp.eq.s32.totalorder %v1259, 1
    %vm1276 = vmand %vm1260, %vm1180
    %vm1277 = vmand %vm1260, %vm1181
    %vm1278 = vmand %vm1260, %vm1182
    %vm1279 = vmand %vm1260, %vm1183
    %vm1280 = vmand %vm1261, %vm1184
    %vm1281 = vmand %vm1261, %vm1185
    %vm1282 = vmand %vm1261, %vm1186
    %vm1283 = vmand %vm1261, %vm1187
    %vm1284 = vmand %vm1262, %vm1188
    %vm1285 = vmand %vm1262, %vm1189
    %vm1286 = vmand %vm1262, %vm1190
    %vm1287 = vmand %vm1262, %vm1191
    %vm1288 = vmand %vm1263, %vm1192
    %vm1289 = vmand %vm1263, %vm1193
    %vm1290 = vmand %vm1263, %vm1194
    %vm1291 = vmand %vm1263, %vm1195
    %vm1292 = vmand %vm1264, %vm1196
    %vm1293 = vmand %vm1264, %vm1197
    %vm1294 = vmand %vm1264, %vm1198
    %vm1295 = vmand %vm1264, %vm1199
    %vm1296 = vmand %vm1265, %vm1200
    %vm1297 = vmand %vm1265, %vm1201
    %vm1298 = vmand %vm1265, %vm1202
    %vm1299 = vmand %vm1265, %vm1203
    %vm1300 = vmand %vm1266, %vm1204
    %vm1301 = vmand %vm1266, %vm1205
    %vm1302 = vmand %vm1266, %vm1206
    %vm1303 = vmand %vm1266, %vm1207
    %vm1304 = vmand %vm1267, %vm1208
    %vm1305 = vmand %vm1267, %vm1209
    %vm1306 = vmand %vm1267, %vm1210
    %vm1307 = vmand %vm1267, %vm1211
    %vm1308 = vmand %vm1268, %vm1212
    %vm1309 = vmand %vm1268, %vm1213
    %vm1310 = vmand %vm1268, %vm1214
    %vm1311 = vmand %vm1268, %vm1215
    %vm1312 = vmand %vm1269, %vm1216
    %vm1313 = vmand %vm1269, %vm1217
    %vm1314 = vmand %vm1269, %vm1218
    %vm1315 = vmand %vm1269, %vm1219
    %vm1316 = vmand %vm1270, %vm1220
    %vm1317 = vmand %vm1270, %vm1221
    %vm1318 = vmand %vm1270, %vm1222
    %vm1319 = vmand %vm1270, %vm1223
    %vm1320 = vmand %vm1271, %vm1224
    %vm1321 = vmand %vm1271, %vm1225
    %vm1322 = vmand %vm1271, %vm1226
    %vm1323 = vmand %vm1271, %vm1227
    %vm1324 = vmand %vm1272, %vm1228
    %vm1325 = vmand %vm1272, %vm1229
    %vm1326 = vmand %vm1272, %vm1230
    %vm1327 = vmand %vm1272, %vm1231
    %vm1328 = vmand %vm1273, %vm1232
    %vm1329 = vmand %vm1273, %vm1233
    %vm1330 = vmand %vm1273, %vm1234
    %vm1331 = vmand %vm1273, %vm1235
    %vm1332 = vmand %vm1274, %vm1236
    %vm1333 = vmand %vm1274, %vm1237
    %vm1334 = vmand %vm1274, %vm1238
    %vm1335 = vmand %vm1274, %vm1239
    %vm1336 = vmand %vm1275, %vm1240
    %vm1337 = vmand %vm1275, %vm1241
    %vm1338 = vmand %vm1275, %vm1242
    %vm1339 = vmand %vm1275, %vm1243
    %v1340 = vsel %vm1276, 1.0, 0.0
    %v1341 = vsel %vm1277, 1.0, 0.0
    %v1342 = vsel %vm1278, 1.0, 0.0
    %v1343 = vsel %vm1279, 1.0, 0.0
    %v1344 = vsel %vm1280, 1.0, 0.0
    %v1345 = vsel %vm1281, 1.0, 0.0
    %v1346 = vsel %vm1282, 1.0, 0.0
    %v1347 = vsel %vm1283, 1.0, 0.0
    %v1348 = vsel %vm1284, 1.0, 0.0
    %v1349 = vsel %vm1285, 1.0, 0.0
    %v1350 = vsel %vm1286, 1.0, 0.0
    %v1351 = vsel %vm1287, 1.0, 0.0
    %v1352 = vsel %vm1288, 1.0, 0.0
    %v1353 = vsel %vm1289, 1.0, 0.0
    %v1354 = vsel %vm1290, 1.0, 0.0
    %v1355 = vsel %vm1291, 1.0, 0.0
    %v1356 = vsel %vm1292, 1.0, 0.0
    %v1357 = vsel %vm1293, 1.0, 0.0
    %v1358 = vsel %vm1294, 1.0, 0.0
    %v1359 = vsel %vm1295, 1.0, 0.0
    %v1360 = vsel %vm1296, 1.0, 0.0
    %v1361 = vsel %vm1297, 1.0, 0.0
    %v1362 = vsel %vm1298, 1.0, 0.0
    %v1363 = vsel %vm1299, 1.0, 0.0
    %v1364 = vsel %vm1300, 1.0, 0.0
    %v1365 = vsel %vm1301, 1.0, 0.0
    %v1366 = vsel %vm1302, 1.0, 0.0
    %v1367 = vsel %vm1303, 1.0, 0.0
    %v1368 = vsel %vm1304, 1.0, 0.0
    %v1369 = vsel %vm1305, 1.0, 0.0
    %v1370 = vsel %vm1306, 1.0, 0.0
    %v1371 = vsel %vm1307, 1.0, 0.0
    %v1372 = vsel %vm1308, 1.0, 0.0
    %v1373 = vsel %vm1309, 1.0, 0.0
    %v1374 = vsel %vm1310, 1.0, 0.0
    %v1375 = vsel %vm1311, 1.0, 0.0
    %v1376 = vsel %vm1312, 1.0, 0.0
    %v1377 = vsel %vm1313, 1.0, 0.0
    %v1378 = vsel %vm1314, 1.0, 0.0
    %v1379 = vsel %vm1315, 1.0, 0.0
    %v1380 = vsel %vm1316, 1.0, 0.0
    %v1381 = vsel %vm1317, 1.0, 0.0
    %v1382 = vsel %vm1318, 1.0, 0.0
    %v1383 = vsel %vm1319, 1.0, 0.0
    %v1384 = vsel %vm1320, 1.0, 0.0
    %v1385 = vsel %vm1321, 1.0, 0.0
    %v1386 = vsel %vm1322, 1.0, 0.0
    %v1387 = vsel %vm1323, 1.0, 0.0
    %v1388 = vsel %vm1324, 1.0, 0.0
    %v1389 = vsel %vm1325, 1.0, 0.0
    %v1390 = vsel %vm1326, 1.0, 0.0
    %v1391 = vsel %vm1327, 1.0, 0.0
    %v1392 = vsel %vm1328, 1.0, 0.0
    %v1393 = vsel %vm1329, 1.0, 0.0
    %v1394 = vsel %vm1330, 1.0, 0.0
    %v1395 = vsel %vm1331, 1.0, 0.0
    %v1396 = vsel %vm1332, 1.0, 0.0
    %v1397 = vsel %vm1333, 1.0, 0.0
    %v1398 = vsel %vm1334, 1.0, 0.0
    %v1399 = vsel %vm1335, 1.0, 0.0
    %v1400 = vsel %vm1336, 1.0, 0.0
    %v1401 = vsel %vm1337, 1.0, 0.0
    %v1402 = vsel %vm1338, 1.0, 0.0
    %v1403 = vsel %vm1339, 1.0, 0.0
    %v1404 = vpack.c.bf16 %v1344, %v1340
    %v1405 = vpack.c.bf16 %v1345, %v1341
    %v1406 = vpack.c.bf16 %v1346, %v1342
    %v1407 = vpack.c.bf16 %v1347, %v1343
    %v1408 = vpack.c.bf16 %v1352, %v1348
    %v1409 = vpack.c.bf16 %v1353, %v1349
    %v1410 = vpack.c.bf16 %v1354, %v1350
    %v1411 = vpack.c.bf16 %v1355, %v1351
    %v1412 = vpack.c.bf16 %v1360, %v1356
    %v1413 = vpack.c.bf16 %v1361, %v1357
    %v1414 = vpack.c.bf16 %v1362, %v1358
    %v1415 = vpack.c.bf16 %v1363, %v1359
    %v1416 = vpack.c.bf16 %v1368, %v1364
    %v1417 = vpack.c.bf16 %v1369, %v1365
    %v1418 = vpack.c.bf16 %v1370, %v1366
    %v1419 = vpack.c.bf16 %v1371, %v1367
    %v1420 = vpack.c.bf16 %v1376, %v1372
    %v1421 = vpack.c.bf16 %v1377, %v1373
    %v1422 = vpack.c.bf16 %v1378, %v1374
    %v1423 = vpack.c.bf16 %v1379, %v1375
    %v1424 = vpack.c.bf16 %v1384, %v1380
    %v1425 = vpack.c.bf16 %v1385, %v1381
    %v1426 = vpack.c.bf16 %v1386, %v1382
    %v1427 = vpack.c.bf16 %v1387, %v1383
    %v1428 = vpack.c.bf16 %v1392, %v1388
    %v1429 = vpack.c.bf16 %v1393, %v1389
    %v1430 = vpack.c.bf16 %v1394, %v1390
    %v1431 = vpack.c.bf16 %v1395, %v1391
    %v1432 = vpack.c.bf16 %v1400, %v1396
    %v1433 = vpack.c.bf16 %v1401, %v1397
    %v1434 = vpack.c.bf16 %v1402, %v1398
    %v1435 = vpack.c.bf16 %v1403, %v1399
    %1436 = vmatpush.bf16.msra.mxu0 %v838
    %1437 = vmatpush.bf16.msra.mxu0 %v837
    %1438 = vmatpush.bf16.msra.mxu0 %v836
    %1439 = vmatpush.bf16.msra.mxu0 %v835
    %1440 = vmatpush.bf16.msra.mxu0 %v834
    %1441 = vmatpush.bf16.msra.mxu0 %v833
    %1442 = vmatpush.bf16.msra.mxu0 %v832
    %1443 = vmatpush.bf16.msra.mxu0 %v831
    %1444 = vmatmul.bf16.gmra.mxu0 %v1404
    %v1445 = vpop.f32.mrf.mxu0
    %v1446 = vadd.f32 0.0, %v1445
    %v1447 = vpop.f32.mrf.mxu0
    %v1448 = vadd.f32 0.0, %v1447
    %1449 = vmatmul.bf16.gmra.mxu0 %v1408
    %v1450 = vpop.f32.mrf.mxu0
    %v1451 = vadd.f32 0.0, %v1450
    %v1452 = vpop.f32.mrf.mxu0
    %v1453 = vadd.f32 0.0, %v1452
    %1454 = vmatmul.bf16.gmra.mxu0 %v1412
    %v1455 = vpop.f32.mrf.mxu0
    %v1456 = vadd.f32 0.0, %v1455
    %v1457 = vpop.f32.mrf.mxu0
    %v1458 = vadd.f32 0.0, %v1457
    %1459 = vmatmul.bf16.gmra.mxu0 %v1416
    %v1460 = vpop.f32.mrf.mxu0
    %v1461 = vadd.f32 0.0, %v1460
    %v1462 = vpop.f32.mrf.mxu0
    %v1463 = vadd.f32 0.0, %v1462
    %1464 = vmatmul.bf16.gmra.mxu0 %v1420
    %v1465 = vpop.f32.mrf.mxu0
    %v1466 = vadd.f32 0.0, %v1465
    %v1467 = vpop.f32.mrf.mxu0
    %v1468 = vadd.f32 0.0, %v1467
    %1469 = vmatmul.bf16.gmra.mxu0 %v1424
    %v1470 = vpop.f32.mrf.mxu0
    %v1471 = vadd.f32 0.0, %v1470
    %v1472 = vpop.f32.mrf.mxu0
    %v1473 = vadd.f32 0.0, %v1472
    %1474 = vmatmul.bf16.gmra.mxu0 %v1428
    %v1475 = vpop.f32.mrf.mxu0
    %v1476 = vadd.f32 0.0, %v1475
    %v1477 = vpop.f32.mrf.mxu0
    %v1478 = vadd.f32 0.0, %v1477
    %1479 = vmatmul.bf16.gmra.mxu0 %v1432
    %v1480 = vpop.f32.mrf.mxu0
    %v1481 = vadd.f32 0.0, %v1480
    %v1482 = vpop.f32.mrf.mxu0
    %v1483 = vadd.f32 0.0, %v1482
    %1484 = vdwg.mxu0
    %1485 = vmatpush.bf16.msra.mxu0 %v846
    %1486 = vmatpush.bf16.msra.mxu0 %v845
    %1487 = vmatpush.bf16.msra.mxu0 %v844
    %1488 = vmatpush.bf16.msra.mxu0 %v843
    %1489 = vmatpush.bf16.msra.mxu0 %v842
    %1490 = vmatpush.bf16.msra.mxu0 %v841
    %1491 = vmatpush.bf16.msra.mxu0 %v840
    %1492 = vmatpush.bf16.msra.mxu0 %v839
    %1493 = vmatmul.bf16.gmra.mxu0 %v1405
    %v1494 = vpop.f32.mrf.mxu0
    %v1495 = vadd.f32 %v1446, %v1494
    %v1496 = vpop.f32.mrf.mxu0
    %v1497 = vadd.f32 %v1448, %v1496
    %1498 = vmatmul.bf16.gmra.mxu0 %v1409
    %v1499 = vpop.f32.mrf.mxu0
    %v1500 = vadd.f32 %v1451, %v1499
    %v1501 = vpop.f32.mrf.mxu0
    %v1502 = vadd.f32 %v1453, %v1501
    %1503 = vmatmul.bf16.gmra.mxu0 %v1413
    %v1504 = vpop.f32.mrf.mxu0
    %v1505 = vadd.f32 %v1456, %v1504
    %v1506 = vpop.f32.mrf.mxu0
    %v1507 = vadd.f32 %v1458, %v1506
    %1508 = vmatmul.bf16.gmra.mxu0 %v1417
    %v1509 = vpop.f32.mrf.mxu0
    %v1510 = vadd.f32 %v1461, %v1509
    %v1511 = vpop.f32.mrf.mxu0
    %v1512 = vadd.f32 %v1463, %v1511
    %1513 = vmatmul.bf16.gmra.mxu0 %v1421
    %v1514 = vpop.f32.mrf.mxu0
    %v1515 = vadd.f32 %v1466, %v1514
    %v1516 = vpop.f32.mrf.mxu0
    %v1517 = vadd.f32 %v1468, %v1516
    %1518 = vmatmul.bf16.gmra.mxu0 %v1425
    %v1519 = vpop.f32.mrf.mxu0
    %v1520 = vadd.f32 %v1471, %v1519
    %v1521 = vpop.f32.mrf.mxu0
    %v1522 = vadd.f32 %v1473, %v1521
    %1523 = vmatmul.bf16.gmra.mxu0 %v1429
    %v1524 = vpop.f32.mrf.mxu0
    %v1525 = vadd.f32 %v1476, %v1524
    %v1526 = vpop.f32.mrf.mxu0
    %v1527 = vadd.f32 %v1478, %v1526
    %1528 = vmatmul.bf16.gmra.mxu0 %v1433
    %v1529 = vpop.f32.mrf.mxu0
    %v1530 = vadd.f32 %v1481, %v1529
    %v1531 = vpop.f32.mrf.mxu0
    %v1532 = vadd.f32 %v1483, %v1531
    %1533 = vdwg.mxu0
    %1534 = vmatpush.bf16.msra.mxu0 %v854
    %1535 = vmatpush.bf16.msra.mxu0 %v853
    %1536 = vmatpush.bf16.msra.mxu0 %v852
    %1537 = vmatpush.bf16.msra.mxu0 %v851
    %1538 = vmatpush.bf16.msra.mxu0 %v850
    %1539 = vmatpush.bf16.msra.mxu0 %v849
    %1540 = vmatpush.bf16.msra.mxu0 %v848
    %1541 = vmatpush.bf16.msra.mxu0 %v847
    %1542 = vmatmul.bf16.gmra.mxu0 %v1406
    %v1543 = vpop.f32.mrf.mxu0
    %v1544 = vadd.f32 %v1495, %v1543
    %v1545 = vpop.f32.mrf.mxu0
    %v1546 = vadd.f32 %v1497, %v1545
    %1547 = vmatmul.bf16.gmra.mxu0 %v1410
    %v1548 = vpop.f32.mrf.mxu0
    %v1549 = vadd.f32 %v1500, %v1548
    %v1550 = vpop.f32.mrf.mxu0
    %v1551 = vadd.f32 %v1502, %v1550
    %1552 = vmatmul.bf16.gmra.mxu0 %v1414
    %v1553 = vpop.f32.mrf.mxu0
    %v1554 = vadd.f32 %v1505, %v1553
    %v1555 = vpop.f32.mrf.mxu0
    %v1556 = vadd.f32 %v1507, %v1555
    %1557 = vmatmul.bf16.gmra.mxu0 %v1418
    %v1558 = vpop.f32.mrf.mxu0
    %v1559 = vadd.f32 %v1510, %v1558
    %v1560 = vpop.f32.mrf.mxu0
    %v1561 = vadd.f32 %v1512, %v1560
    %1562 = vmatmul.bf16.gmra.mxu0 %v1422
    %v1563 = vpop.f32.mrf.mxu0
    %v1564 = vadd.f32 %v1515, %v1563
    %v1565 = vpop.f32.mrf.mxu0
    %v1566 = vadd.f32 %v1517, %v1565
    %1567 = vmatmul.bf16.gmra.mxu0 %v1426
    %v1568 = vpop.f32.mrf.mxu0
    %v1569 = vadd.f32 %v1520, %v1568
    %v1570 = vpop.f32.mrf.mxu0
    %v1571 = vadd.f32 %v1522, %v1570
    %1572 = vmatmul.bf16.gmra.mxu0 %v1430
    %v1573 = vpop.f32.mrf.mxu0
    %v1574 = vadd.f32 %v1525, %v1573
    %v1575 = vpop.f32.mrf.mxu0
    %v1576 = vadd.f32 %v1527, %v1575
    %1577 = vmatmul.bf16.gmra.mxu0 %v1434
    %v1578 = vpop.f32.mrf.mxu0
    %v1579 = vadd.f32 %v1530, %v1578
    %v1580 = vpop.f32.mrf.mxu0
    %v1581 = vadd.f32 %v1532, %v1580
    %1582 = vdwg.mxu0
    %1583 = vmatpush.bf16.msra.mxu0 %v862
    %1584 = vmatpush.bf16.msra.mxu0 %v861
    %1585 = vmatpush.bf16.msra.mxu0 %v860
    %1586 = vmatpush.bf16.msra.mxu0 %v859
    %1587 = vmatpush.bf16.msra.mxu0 %v858
    %1588 = vmatpush.bf16.msra.mxu0 %v857
    %1589 = vmatpush.bf16.msra.mxu0 %v856
    %1590 = vmatpush.bf16.msra.mxu0 %v855
    %1591 = vmatmul.bf16.gmra.mxu0 %v1407
    %v1592 = vpop.f32.mrf.mxu0
    %v1593 = vadd.f32 %v1544, %v1592
    %v1594 = vpop.f32.mrf.mxu0
    %v1595 = vadd.f32 %v1546, %v1594
    %1596 = vmatmul.bf16.gmra.mxu0 %v1411
    %v1597 = vpop.f32.mrf.mxu0
    %v1598 = vadd.f32 %v1549, %v1597
    %v1599 = vpop.f32.mrf.mxu0
    %v1600 = vadd.f32 %v1551, %v1599
    %1601 = vmatmul.bf16.gmra.mxu0 %v1415
    %v1602 = vpop.f32.mrf.mxu0
    %v1603 = vadd.f32 %v1554, %v1602
    %v1604 = vpop.f32.mrf.mxu0
    %v1605 = vadd.f32 %v1556, %v1604
    %1606 = vmatmul.bf16.gmra.mxu0 %v1419
    %v1607 = vpop.f32.mrf.mxu0
    %v1608 = vadd.f32 %v1559, %v1607
    %v1609 = vpop.f32.mrf.mxu0
    %v1610 = vadd.f32 %v1561, %v1609
    %1611 = vmatmul.bf16.gmra.mxu0 %v1423
    %v1612 = vpop.f32.mrf.mxu0
    %v1613 = vadd.f32 %v1564, %v1612
    %v1614 = vpop.f32.mrf.mxu0
    %v1615 = vadd.f32 %v1566, %v1614
    %1616 = vmatmul.bf16.gmra.mxu0 %v1427
    %v1617 = vpop.f32.mrf.mxu0
    %v1618 = vadd.f32 %v1569, %v1617
    %v1619 = vpop.f32.mrf.mxu0
    %v1620 = vadd.f32 %v1571, %v1619
    %1621 = vmatmul.bf16.gmra.mxu0 %v1431
    %v1622 = vpop.f32.mrf.mxu0
    %v1623 = vadd.f32 %v1574, %v1622
    %v1624 = vpop.f32.mrf.mxu0
    %v1625 = vadd.f32 %v1576, %v1624
    %1626 = vmatmul.bf16.gmra.mxu0 %v1435
    %v1627 = vpop.f32.mrf.mxu0
    %v1628 = vadd.f32 %v1579, %v1627
    %v1629 = vpop.f32.mrf.mxu0
    %v1630 = vadd.f32 %v1581, %v1629
    %1631 = vdwg.mxu0
    %v1632 = vpack.c.bf16 %v1595, %v1593
    %v1633 = vpack.c.bf16 %v1600, %v1598
    %v1634 = vpack.c.bf16 %v1605, %v1603
    %v1635 = vpack.c.bf16 %v1610, %v1608
    %v1636 = vpack.c.bf16 %v1615, %v1613
    %v1637 = vpack.c.bf16 %v1620, %v1618
    %v1638 = vpack.c.bf16 %v1625, %v1623
    %v1639 = vpack.c.bf16 %v1630, %v1628
    %s1640 = scalar_lea.vmem %s1, 2
    %v1641 = vld [vmem:[%s1640] sm:$0x3]
    %vm1642 = vcmask 23552
    %v1644 = vsel %vm1642, %v1632, 0
    %v1647 = vsel %vm1642, %v1633, 0
    %v1650 = vsel %vm1642, %v1634, 0
    %v1653 = vsel %vm1642, %v1635, 0
    %v1656 = vsel %vm1642, %v1636, 0
    %v1659 = vsel %vm1642, %v1637, 0
    %v1662 = vsel %vm1642, %v1638, 0
    %v1665 = vsel %vm1642, %v1639, 0
    %vm1667 = vcmask 1040384
    %vm1668 = vcmask 1041408
    %v1669 = vsel %vm1667, 4294967295, 65535
    %v1670 = vsel %vm1668, %v1669, 0
    %v1672 = vand.u32 %v1641, %v1670
    %1674 = vmatpush.bf16.msra.mxu0 0
    %1675 = vmatpush.bf16.msra.mxu0 0
    %1676 = vmatpush.bf16.msra.mxu0 0
    %1677 = vmatpush.bf16.msra.mxu0 0
    %1678 = vmatpush.bf16.msra.mxu0 0
    %1679 = vmatpush.bf16.msra.mxu0 0
    %1680 = vmatpush.bf16.msra.mxu0 0
    %1681 = vmatpush.bf16.msra.mxu0 %v1672
    %1682 = vmatmul.bf16.gmra.mxu0 %v1644
    %v1683 = vpop.f32.mrf.mxu0
    %v1684 = vadd.f32 0.0, %v1683
    %v1685 = vpop.f32.mrf.mxu0
    %v1686 = vadd.f32 0.0, %v1685
    %1687 = vmatmul.bf16.gmra.mxu0 %v1647
    %v1688 = vpop.f32.mrf.mxu0
    %v1689 = vadd.f32 0.0, %v1688
    %v1690 = vpop.f32.mrf.mxu0
    %v1691 = vadd.f32 0.0, %v1690
    %1692 = vmatmul.bf16.gmra.mxu0 %v1650
    %v1693 = vpop.f32.mrf.mxu0
    %v1694 = vadd.f32 0.0, %v1693
    %v1695 = vpop.f32.mrf.mxu0
    %v1696 = vadd.f32 0.0, %v1695
    %1697 = vmatmul.bf16.gmra.mxu0 %v1653
    %v1698 = vpop.f32.mrf.mxu0
    %v1699 = vadd.f32 0.0, %v1698
    %v1700 = vpop.f32.mrf.mxu0
    %v1701 = vadd.f32 0.0, %v1700
    %1702 = vmatmul.bf16.gmra.mxu0 %v1656
    %v1703 = vpop.f32.mrf.mxu0
    %v1704 = vadd.f32 0.0, %v1703
    %v1705 = vpop.f32.mrf.mxu0
    %v1706 = vadd.f32 0.0, %v1705
    %1707 = vmatmul.bf16.gmra.mxu0 %v1659
    %v1708 = vpop.f32.mrf.mxu0
    %v1709 = vadd.f32 0.0, %v1708
    %v1710 = vpop.f32.mrf.mxu0
    %v1711 = vadd.f32 0.0, %v1710
    %1712 = vmatmul.bf16.gmra.mxu0 %v1662
    %v1713 = vpop.f32.mrf.mxu0
    %v1714 = vadd.f32 0.0, %v1713
    %v1715 = vpop.f32.mrf.mxu0
    %v1716 = vadd.f32 0.0, %v1715
    %1717 = vmatmul.bf16.gmra.mxu0 %v1665
    %v1718 = vpop.f32.mrf.mxu0
    %v1719 = vadd.f32 0.0, %v1718
    %v1720 = vpop.f32.mrf.mxu0
    %v1721 = vadd.f32 0.0, %v1720
    %1722 = vdwg.mxu0
    %v1724 = vsel %vm1642, %v1091, 0
    %v1727 = vsel %vm1642, %v1092, 0
    %v1730 = vsel %vm1642, %v1093, 0
    %v1733 = vsel %vm1642, %v1094, 0
    %v1736 = vsel %vm1642, %v1095, 0
    %v1739 = vsel %vm1642, %v1096, 0
    %v1742 = vsel %vm1642, %v1097, 0
    %v1745 = vsel %vm1642, %v1098, 0
    %v1748 = vand.u32 %v1099, %v1670
    %1750 = vmatpush.bf16.msra.mxu0 0
    %1751 = vmatpush.bf16.msra.mxu0 0
    %1752 = vmatpush.bf16.msra.mxu0 0
    %1753 = vmatpush.bf16.msra.mxu0 0
    %1754 = vmatpush.bf16.msra.mxu0 0
    %1755 = vmatpush.bf16.msra.mxu0 0
    %1756 = vmatpush.bf16.msra.mxu0 0
    %1757 = vmatpush.bf16.msra.mxu0 %v1748
    %1758 = vmatmul.bf16.gmra.mxu0 %v1724
    %v1759 = vpop.f32.mrf.mxu0
    %v1760 = vadd.f32 %v1684, %v1759
    %v1761 = vpop.f32.mrf.mxu0
    %v1762 = vadd.f32 %v1686, %v1761
    %1763 = vmatmul.bf16.gmra.mxu0 %v1727
    %v1764 = vpop.f32.mrf.mxu0
    %v1765 = vadd.f32 %v1689, %v1764
    %v1766 = vpop.f32.mrf.mxu0
    %v1767 = vadd.f32 %v1691, %v1766
    %1768 = vmatmul.bf16.gmra.mxu0 %v1730
    %v1769 = vpop.f32.mrf.mxu0
    %v1770 = vadd.f32 %v1694, %v1769
    %v1771 = vpop.f32.mrf.mxu0
    %v1772 = vadd.f32 %v1696, %v1771
    %1773 = vmatmul.bf16.gmra.mxu0 %v1733
    %v1774 = vpop.f32.mrf.mxu0
    %v1775 = vadd.f32 %v1699, %v1774
    %v1776 = vpop.f32.mrf.mxu0
    %v1777 = vadd.f32 %v1701, %v1776
    %1778 = vmatmul.bf16.gmra.mxu0 %v1736
    %v1779 = vpop.f32.mrf.mxu0
    %v1780 = vadd.f32 %v1704, %v1779
    %v1781 = vpop.f32.mrf.mxu0
    %v1782 = vadd.f32 %v1706, %v1781
    %1783 = vmatmul.bf16.gmra.mxu0 %v1739
    %v1784 = vpop.f32.mrf.mxu0
    %v1785 = vadd.f32 %v1709, %v1784
    %v1786 = vpop.f32.mrf.mxu0
    %v1787 = vadd.f32 %v1711, %v1786
    %1788 = vmatmul.bf16.gmra.mxu0 %v1742
    %v1789 = vpop.f32.mrf.mxu0
    %v1790 = vadd.f32 %v1714, %v1789
    %v1791 = vpop.f32.mrf.mxu0
    %v1792 = vadd.f32 %v1716, %v1791
    %1793 = vmatmul.bf16.gmra.mxu0 %v1745
    %v1794 = vpop.f32.mrf.mxu0
    %v1795 = vadd.f32 %v1719, %v1794
    %v1796 = vpop.f32.mrf.mxu0
    %v1797 = vadd.f32 %v1721, %v1796
    %1798 = vdwg.mxu0
    %v1799 = vadd.s32 %v255, 2
    %v1800 = vadd.s32 %v256, 2
    %v1801 = vadd.s32 %v257, 2
    %v1802 = vadd.s32 %v258, 2
    %v1803 = vadd.s32 %v259, 2
    %v1804 = vadd.s32 %v260, 2
    %v1805 = vadd.s32 %v261, 2
    %v1806 = vadd.s32 %v262, 2
    %v1807 = vadd.s32 %v263, 2
    %v1808 = vadd.s32 %v264, 2
    %v1809 = vadd.s32 %v265, 2
    %v1810 = vadd.s32 %v266, 2
    %v1811 = vadd.s32 %v267, 2
    %v1812 = vadd.s32 %v268, 2
    %v1813 = vadd.s32 %v269, 2
    %v1814 = vadd.s32 %v270, 2
    %vm1815 = vcmp.ge.s32.totalorder %v1799, 0
    %vm1816 = vcmp.ge.s32.totalorder %v1800, 0
    %vm1817 = vcmp.ge.s32.totalorder %v1801, 0
    %vm1818 = vcmp.ge.s32.totalorder %v1802, 0
    %vm1819 = vcmp.ge.s32.totalorder %v1803, 0
    %vm1820 = vcmp.ge.s32.totalorder %v1804, 0
    %vm1821 = vcmp.ge.s32.totalorder %v1805, 0
    %vm1822 = vcmp.ge.s32.totalorder %v1806, 0
    %vm1823 = vcmp.ge.s32.totalorder %v1807, 0
    %vm1824 = vcmp.ge.s32.totalorder %v1808, 0
    %vm1825 = vcmp.ge.s32.totalorder %v1809, 0
    %vm1826 = vcmp.ge.s32.totalorder %v1810, 0
    %vm1827 = vcmp.ge.s32.totalorder %v1811, 0
    %vm1828 = vcmp.ge.s32.totalorder %v1812, 0
    %vm1829 = vcmp.ge.s32.totalorder %v1813, 0
    %vm1830 = vcmp.ge.s32.totalorder %v1814, 0
    %vm1831 = vmand %vm303, %vm1815
    %vm1832 = vmand %vm304, %vm1816
    %vm1833 = vmand %vm305, %vm1817
    %vm1834 = vmand %vm306, %vm1818
    %vm1835 = vmand %vm307, %vm1819
    %vm1836 = vmand %vm308, %vm1820
    %vm1837 = vmand %vm309, %vm1821
    %vm1838 = vmand %vm310, %vm1822
    %vm1839 = vmand %vm311, %vm1823
    %vm1840 = vmand %vm312, %vm1824
    %vm1841 = vmand %vm313, %vm1825
    %vm1842 = vmand %vm314, %vm1826
    %vm1843 = vmand %vm315, %vm1827
    %vm1844 = vmand %vm316, %vm1828
    %vm1845 = vmand %vm317, %vm1829
    %vm1846 = vmand %vm318, %vm1830
    %vm1847 = vcmp.lt.s32.totalorder %v1799, 16
    %vm1848 = vcmp.lt.s32.totalorder %v1800, 16
    %vm1849 = vcmp.lt.s32.totalorder %v1801, 16
    %vm1850 = vcmp.lt.s32.totalorder %v1802, 16
    %vm1851 = vcmp.lt.s32.totalorder %v1803, 16
    %vm1852 = vcmp.lt.s32.totalorder %v1804, 16
    %vm1853 = vcmp.lt.s32.totalorder %v1805, 16
    %vm1854 = vcmp.lt.s32.totalorder %v1806, 16
    %vm1855 = vcmp.lt.s32.totalorder %v1807, 16
    %vm1856 = vcmp.lt.s32.totalorder %v1808, 16
    %vm1857 = vcmp.lt.s32.totalorder %v1809, 16
    %vm1858 = vcmp.lt.s32.totalorder %v1810, 16
    %vm1859 = vcmp.lt.s32.totalorder %v1811, 16
    %vm1860 = vcmp.lt.s32.totalorder %v1812, 16
    %vm1861 = vcmp.lt.s32.totalorder %v1813, 16
    %vm1862 = vcmp.lt.s32.totalorder %v1814, 16
    %vm1863 = vmand %vm1831, %vm1847
    %vm1864 = vmand %vm1832, %vm1848
    %vm1865 = vmand %vm1833, %vm1849
    %vm1866 = vmand %vm1834, %vm1850
    %vm1867 = vmand %vm1835, %vm1851
    %vm1868 = vmand %vm1836, %vm1852
    %vm1869 = vmand %vm1837, %vm1853
    %vm1870 = vmand %vm1838, %vm1854
    %vm1871 = vmand %vm1839, %vm1855
    %vm1872 = vmand %vm1840, %vm1856
    %vm1873 = vmand %vm1841, %vm1857
    %vm1874 = vmand %vm1842, %vm1858
    %vm1875 = vmand %vm1843, %vm1859
    %vm1876 = vmand %vm1844, %vm1860
    %vm1877 = vmand %vm1845, %vm1861
    %vm1878 = vmand %vm1846, %vm1862
    %v1879 = vadd.s32 %v415, %v1799
    %v1880 = vadd.s32 %v416, %v1800
    %v1881 = vadd.s32 %v417, %v1801
    %v1882 = vadd.s32 %v418, %v1802
    %v1883 = vadd.s32 %v419, %v1803
    %v1884 = vadd.s32 %v420, %v1804
    %v1885 = vadd.s32 %v421, %v1805
    %v1886 = vadd.s32 %v422, %v1806
    %v1887 = vadd.s32 %v423, %v1807
    %v1888 = vadd.s32 %v424, %v1808
    %v1889 = vadd.s32 %v425, %v1809
    %v1890 = vadd.s32 %v426, %v1810
    %v1891 = vadd.s32 %v427, %v1811
    %v1892 = vadd.s32 %v428, %v1812
    %v1893 = vadd.s32 %v429, %v1813
    %v1894 = vadd.s32 %v430, %v1814
    %vm1895 = vcmp.eq.s32.totalorder %v203, %v1879
    %vm1896 = vcmp.eq.s32.totalorder %v204, %v1879
    %vm1897 = vcmp.eq.s32.totalorder %v205, %v1879
    %vm1898 = vcmp.eq.s32.totalorder %v206, %v1879
    %vm1899 = vcmp.eq.s32.totalorder %v203, %v1880
    %vm1900 = vcmp.eq.s32.totalorder %v204, %v1880
    %vm1901 = vcmp.eq.s32.totalorder %v205, %v1880
    %vm1902 = vcmp.eq.s32.totalorder %v206, %v1880
    %vm1903 = vcmp.eq.s32.totalorder %v203, %v1881
    %vm1904 = vcmp.eq.s32.totalorder %v204, %v1881
    %vm1905 = vcmp.eq.s32.totalorder %v205, %v1881
    %vm1906 = vcmp.eq.s32.totalorder %v206, %v1881
    %vm1907 = vcmp.eq.s32.totalorder %v203, %v1882
    %vm1908 = vcmp.eq.s32.totalorder %v204, %v1882
    %vm1909 = vcmp.eq.s32.totalorder %v205, %v1882
    %vm1910 = vcmp.eq.s32.totalorder %v206, %v1882
    %vm1911 = vcmp.eq.s32.totalorder %v203, %v1883
    %vm1912 = vcmp.eq.s32.totalorder %v204, %v1883
    %vm1913 = vcmp.eq.s32.totalorder %v205, %v1883
    %vm1914 = vcmp.eq.s32.totalorder %v206, %v1883
    %vm1915 = vcmp.eq.s32.totalorder %v203, %v1884
    %vm1916 = vcmp.eq.s32.totalorder %v204, %v1884
    %vm1917 = vcmp.eq.s32.totalorder %v205, %v1884
    %vm1918 = vcmp.eq.s32.totalorder %v206, %v1884
    %vm1919 = vcmp.eq.s32.totalorder %v203, %v1885
    %vm1920 = vcmp.eq.s32.totalorder %v204, %v1885
    %vm1921 = vcmp.eq.s32.totalorder %v205, %v1885
    %vm1922 = vcmp.eq.s32.totalorder %v206, %v1885
    %vm1923 = vcmp.eq.s32.totalorder %v203, %v1886
    %vm1924 = vcmp.eq.s32.totalorder %v204, %v1886
    %vm1925 = vcmp.eq.s32.totalorder %v205, %v1886
    %vm1926 = vcmp.eq.s32.totalorder %v206, %v1886
    %vm1927 = vcmp.eq.s32.totalorder %v203, %v1887
    %vm1928 = vcmp.eq.s32.totalorder %v204, %v1887
    %vm1929 = vcmp.eq.s32.totalorder %v205, %v1887
    %vm1930 = vcmp.eq.s32.totalorder %v206, %v1887
    %vm1931 = vcmp.eq.s32.totalorder %v203, %v1888
    %vm1932 = vcmp.eq.s32.totalorder %v204, %v1888
    %vm1933 = vcmp.eq.s32.totalorder %v205, %v1888
    %vm1934 = vcmp.eq.s32.totalorder %v206, %v1888
    %vm1935 = vcmp.eq.s32.totalorder %v203, %v1889
    %vm1936 = vcmp.eq.s32.totalorder %v204, %v1889
    %vm1937 = vcmp.eq.s32.totalorder %v205, %v1889
    %vm1938 = vcmp.eq.s32.totalorder %v206, %v1889
    %vm1939 = vcmp.eq.s32.totalorder %v203, %v1890
    %vm1940 = vcmp.eq.s32.totalorder %v204, %v1890
    %vm1941 = vcmp.eq.s32.totalorder %v205, %v1890
    %vm1942 = vcmp.eq.s32.totalorder %v206, %v1890
    %vm1943 = vcmp.eq.s32.totalorder %v203, %v1891
    %vm1944 = vcmp.eq.s32.totalorder %v204, %v1891
    %vm1945 = vcmp.eq.s32.totalorder %v205, %v1891
    %vm1946 = vcmp.eq.s32.totalorder %v206, %v1891
    %vm1947 = vcmp.eq.s32.totalorder %v203, %v1892
    %vm1948 = vcmp.eq.s32.totalorder %v204, %v1892
    %vm1949 = vcmp.eq.s32.totalorder %v205, %v1892
    %vm1950 = vcmp.eq.s32.totalorder %v206, %v1892
    %vm1951 = vcmp.eq.s32.totalorder %v203, %v1893
    %vm1952 = vcmp.eq.s32.totalorder %v204, %v1893
    %vm1953 = vcmp.eq.s32.totalorder %v205, %v1893
    %vm1954 = vcmp.eq.s32.totalorder %v206, %v1893
    %vm1955 = vcmp.eq.s32.totalorder %v203, %v1894
    %vm1956 = vcmp.eq.s32.totalorder %v204, %v1894
    %vm1957 = vcmp.eq.s32.totalorder %v205, %v1894
    %vm1958 = vcmp.eq.s32.totalorder %v206, %v1894
    %v1959 = vsel %vm1863, 1, 0
    %v1960 = vsel %vm1864, 1, 0
    %v1961 = vsel %vm1865, 1, 0
    %v1962 = vsel %vm1866, 1, 0
    %v1963 = vsel %vm1867, 1, 0
    %v1964 = vsel %vm1868, 1, 0
    %v1965 = vsel %vm1869, 1, 0
    %v1966 = vsel %vm1870, 1, 0
    %v1967 = vsel %vm1871, 1, 0
    %v1968 = vsel %vm1872, 1, 0
    %v1969 = vsel %vm1873, 1, 0
    %v1970 = vsel %vm1874, 1, 0
    %v1971 = vsel %vm1875, 1, 0
    %v1972 = vsel %vm1876, 1, 0
    %v1973 = vsel %vm1877, 1, 0
    %v1974 = vsel %vm1878, 1, 0
    %vm1975 = vcmp.eq.s32.totalorder %v1959, 1
    %vm1976 = vcmp.eq.s32.totalorder %v1960, 1
    %vm1977 = vcmp.eq.s32.totalorder %v1961, 1
    %vm1978 = vcmp.eq.s32.totalorder %v1962, 1
    %vm1979 = vcmp.eq.s32.totalorder %v1963, 1
    %vm1980 = vcmp.eq.s32.totalorder %v1964, 1
    %vm1981 = vcmp.eq.s32.totalorder %v1965, 1
    %vm1982 = vcmp.eq.s32.totalorder %v1966, 1
    %vm1983 = vcmp.eq.s32.totalorder %v1967, 1
    %vm1984 = vcmp.eq.s32.totalorder %v1968, 1
    %vm1985 = vcmp.eq.s32.totalorder %v1969, 1
    %vm1986 = vcmp.eq.s32.totalorder %v1970, 1
    %vm1987 = vcmp.eq.s32.totalorder %v1971, 1
    %vm1988 = vcmp.eq.s32.totalorder %v1972, 1
    %vm1989 = vcmp.eq.s32.totalorder %v1973, 1
    %vm1990 = vcmp.eq.s32.totalorder %v1974, 1
    %vm1991 = vmand %vm1975, %vm1895
    %vm1992 = vmand %vm1975, %vm1896
    %vm1993 = vmand %vm1975, %vm1897
    %vm1994 = vmand %vm1975, %vm1898
    %vm1995 = vmand %vm1976, %vm1899
    %vm1996 = vmand %vm1976, %vm1900
    %vm1997 = vmand %vm1976, %vm1901
    %vm1998 = vmand %vm1976, %vm1902
    %vm1999 = vmand %vm1977, %vm1903
    %vm2000 = vmand %vm1977, %vm1904
    %vm2001 = vmand %vm1977, %vm1905
    %vm2002 = vmand %vm1977, %vm1906
    %vm2003 = vmand %vm1978, %vm1907
    %vm2004 = vmand %vm1978, %vm1908
    %vm2005 = vmand %vm1978, %vm1909
    %vm2006 = vmand %vm1978, %vm1910
    %vm2007 = vmand %vm1979, %vm1911
    %vm2008 = vmand %vm1979, %vm1912
    %vm2009 = vmand %vm1979, %vm1913
    %vm2010 = vmand %vm1979, %vm1914
    %vm2011 = vmand %vm1980, %vm1915
    %vm2012 = vmand %vm1980, %vm1916
    %vm2013 = vmand %vm1980, %vm1917
    %vm2014 = vmand %vm1980, %vm1918
    %vm2015 = vmand %vm1981, %vm1919
    %vm2016 = vmand %vm1981, %vm1920
    %vm2017 = vmand %vm1981, %vm1921
    %vm2018 = vmand %vm1981, %vm1922
    %vm2019 = vmand %vm1982, %vm1923
    %vm2020 = vmand %vm1982, %vm1924
    %vm2021 = vmand %vm1982, %vm1925
    %vm2022 = vmand %vm1982, %vm1926
    %vm2023 = vmand %vm1983, %vm1927
    %vm2024 = vmand %vm1983, %vm1928
    %vm2025 = vmand %vm1983, %vm1929
    %vm2026 = vmand %vm1983, %vm1930
    %vm2027 = vmand %vm1984, %vm1931
    %vm2028 = vmand %vm1984, %vm1932
    %vm2029 = vmand %vm1984, %vm1933
    %vm2030 = vmand %vm1984, %vm1934
    %vm2031 = vmand %vm1985, %vm1935
    %vm2032 = vmand %vm1985, %vm1936
    %vm2033 = vmand %vm1985, %vm1937
    %vm2034 = vmand %vm1985, %vm1938
    %vm2035 = vmand %vm1986, %vm1939
    %vm2036 = vmand %vm1986, %vm1940
    %vm2037 = vmand %vm1986, %vm1941
    %vm2038 = vmand %vm1986, %vm1942
    %vm2039 = vmand %vm1987, %vm1943
    %vm2040 = vmand %vm1987, %vm1944
    %vm2041 = vmand %vm1987, %vm1945
    %vm2042 = vmand %vm1987, %vm1946
    %vm2043 = vmand %vm1988, %vm1947
    %vm2044 = vmand %vm1988, %vm1948
    %vm2045 = vmand %vm1988, %vm1949
    %vm2046 = vmand %vm1988, %vm1950
    %vm2047 = vmand %vm1989, %vm1951
    %vm2048 = vmand %vm1989, %vm1952
    %vm2049 = vmand %vm1989, %vm1953
    %vm2050 = vmand %vm1989, %vm1954
    %vm2051 = vmand %vm1990, %vm1955
    %vm2052 = vmand %vm1990, %vm1956
    %vm2053 = vmand %vm1990, %vm1957
    %vm2054 = vmand %vm1990, %vm1958
    %v2055 = vsel %vm1991, 1.0, 0.0
    %v2056 = vsel %vm1992, 1.0, 0.0
    %v2057 = vsel %vm1993, 1.0, 0.0
    %v2058 = vsel %vm1994, 1.0, 0.0
    %v2059 = vsel %vm1995, 1.0, 0.0
    %v2060 = vsel %vm1996, 1.0, 0.0
    %v2061 = vsel %vm1997, 1.0, 0.0
    %v2062 = vsel %vm1998, 1.0, 0.0
    %v2063 = vsel %vm1999, 1.0, 0.0
    %v2064 = vsel %vm2000, 1.0, 0.0
    %v2065 = vsel %vm2001, 1.0, 0.0
    %v2066 = vsel %vm2002, 1.0, 0.0
    %v2067 = vsel %vm2003, 1.0, 0.0
    %v2068 = vsel %vm2004, 1.0, 0.0
    %v2069 = vsel %vm2005, 1.0, 0.0
    %v2070 = vsel %vm2006, 1.0, 0.0
    %v2071 = vsel %vm2007, 1.0, 0.0
    %v2072 = vsel %vm2008, 1.0, 0.0
    %v2073 = vsel %vm2009, 1.0, 0.0
    %v2074 = vsel %vm2010, 1.0, 0.0
    %v2075 = vsel %vm2011, 1.0, 0.0
    %v2076 = vsel %vm2012, 1.0, 0.0
    %v2077 = vsel %vm2013, 1.0, 0.0
    %v2078 = vsel %vm2014, 1.0, 0.0
    %v2079 = vsel %vm2015, 1.0, 0.0
    %v2080 = vsel %vm2016, 1.0, 0.0
    %v2081 = vsel %vm2017, 1.0, 0.0
    %v2082 = vsel %vm2018, 1.0, 0.0
    %v2083 = vsel %vm2019, 1.0, 0.0
    %v2084 = vsel %vm2020, 1.0, 0.0
    %v2085 = vsel %vm2021, 1.0, 0.0
    %v2086 = vsel %vm2022, 1.0, 0.0
    %v2087 = vsel %vm2023, 1.0, 0.0
    %v2088 = vsel %vm2024, 1.0, 0.0
    %v2089 = vsel %vm2025, 1.0, 0.0
    %v2090 = vsel %vm2026, 1.0, 0.0
    %v2091 = vsel %vm2027, 1.0, 0.0
    %v2092 = vsel %vm2028, 1.0, 0.0
    %v2093 = vsel %vm2029, 1.0, 0.0
    %v2094 = vsel %vm2030, 1.0, 0.0
    %v2095 = vsel %vm2031, 1.0, 0.0
    %v2096 = vsel %vm2032, 1.0, 0.0
    %v2097 = vsel %vm2033, 1.0, 0.0
    %v2098 = vsel %vm2034, 1.0, 0.0
    %v2099 = vsel %vm2035, 1.0, 0.0
    %v2100 = vsel %vm2036, 1.0, 0.0
    %v2101 = vsel %vm2037, 1.0, 0.0
    %v2102 = vsel %vm2038, 1.0, 0.0
    %v2103 = vsel %vm2039, 1.0, 0.0
    %v2104 = vsel %vm2040, 1.0, 0.0
    %v2105 = vsel %vm2041, 1.0, 0.0
    %v2106 = vsel %vm2042, 1.0, 0.0
    %v2107 = vsel %vm2043, 1.0, 0.0
    %v2108 = vsel %vm2044, 1.0, 0.0
    %v2109 = vsel %vm2045, 1.0, 0.0
    %v2110 = vsel %vm2046, 1.0, 0.0
    %v2111 = vsel %vm2047, 1.0, 0.0
    %v2112 = vsel %vm2048, 1.0, 0.0
    %v2113 = vsel %vm2049, 1.0, 0.0
    %v2114 = vsel %vm2050, 1.0, 0.0
    %v2115 = vsel %vm2051, 1.0, 0.0
    %v2116 = vsel %vm2052, 1.0, 0.0
    %v2117 = vsel %vm2053, 1.0, 0.0
    %v2118 = vsel %vm2054, 1.0, 0.0
    %v2119 = vpack.c.bf16 %v2059, %v2055
    %v2120 = vpack.c.bf16 %v2060, %v2056
    %v2121 = vpack.c.bf16 %v2061, %v2057
    %v2122 = vpack.c.bf16 %v2062, %v2058
    %v2123 = vpack.c.bf16 %v2067, %v2063
    %v2124 = vpack.c.bf16 %v2068, %v2064
    %v2125 = vpack.c.bf16 %v2069, %v2065
    %v2126 = vpack.c.bf16 %v2070, %v2066
    %v2127 = vpack.c.bf16 %v2075, %v2071
    %v2128 = vpack.c.bf16 %v2076, %v2072
    %v2129 = vpack.c.bf16 %v2077, %v2073
    %v2130 = vpack.c.bf16 %v2078, %v2074
    %v2131 = vpack.c.bf16 %v2083, %v2079
    %v2132 = vpack.c.bf16 %v2084, %v2080
    %v2133 = vpack.c.bf16 %v2085, %v2081
    %v2134 = vpack.c.bf16 %v2086, %v2082
    %v2135 = vpack.c.bf16 %v2091, %v2087
    %v2136 = vpack.c.bf16 %v2092, %v2088
    %v2137 = vpack.c.bf16 %v2093, %v2089
    %v2138 = vpack.c.bf16 %v2094, %v2090
    %v2139 = vpack.c.bf16 %v2099, %v2095
    %v2140 = vpack.c.bf16 %v2100, %v2096
    %v2141 = vpack.c.bf16 %v2101, %v2097
    %v2142 = vpack.c.bf16 %v2102, %v2098
    %v2143 = vpack.c.bf16 %v2107, %v2103
    %v2144 = vpack.c.bf16 %v2108, %v2104
    %v2145 = vpack.c.bf16 %v2109, %v2105
    %v2146 = vpack.c.bf16 %v2110, %v2106
    %v2147 = vpack.c.bf16 %v2115, %v2111
    %v2148 = vpack.c.bf16 %v2116, %v2112
    %v2149 = vpack.c.bf16 %v2117, %v2113
    %v2150 = vpack.c.bf16 %v2118, %v2114
    %2151 = vmatpush.bf16.msra.mxu0 %v838
    %2152 = vmatpush.bf16.msra.mxu0 %v837
    %2153 = vmatpush.bf16.msra.mxu0 %v836
    %2154 = vmatpush.bf16.msra.mxu0 %v835
    %2155 = vmatpush.bf16.msra.mxu0 %v834
    %2156 = vmatpush.bf16.msra.mxu0 %v833
    %2157 = vmatpush.bf16.msra.mxu0 %v832
    %2158 = vmatpush.bf16.msra.mxu0 %v831
    %2159 = vmatmul.bf16.gmra.mxu0 %v2119
    %v2160 = vpop.f32.mrf.mxu0
    %v2161 = vadd.f32 0.0, %v2160
    %v2162 = vpop.f32.mrf.mxu0
    %v2163 = vadd.f32 0.0, %v2162
    %2164 = vmatmul.bf16.gmra.mxu0 %v2123
    %v2165 = vpop.f32.mrf.mxu0
    %v2166 = vadd.f32 0.0, %v2165
    %v2167 = vpop.f32.mrf.mxu0
    %v2168 = vadd.f32 0.0, %v2167
    %2169 = vmatmul.bf16.gmra.mxu0 %v2127
    %v2170 = vpop.f32.mrf.mxu0
    %v2171 = vadd.f32 0.0, %v2170
    %v2172 = vpop.f32.mrf.mxu0
    %v2173 = vadd.f32 0.0, %v2172
    %2174 = vmatmul.bf16.gmra.mxu0 %v2131
    %v2175 = vpop.f32.mrf.mxu0
    %v2176 = vadd.f32 0.0, %v2175
    %v2177 = vpop.f32.mrf.mxu0
    %v2178 = vadd.f32 0.0, %v2177
    %2179 = vmatmul.bf16.gmra.mxu0 %v2135
    %v2180 = vpop.f32.mrf.mxu0
    %v2181 = vadd.f32 0.0, %v2180
    %v2182 = vpop.f32.mrf.mxu0
    %v2183 = vadd.f32 0.0, %v2182
    %2184 = vmatmul.bf16.gmra.mxu0 %v2139
    %v2185 = vpop.f32.mrf.mxu0
    %v2186 = vadd.f32 0.0, %v2185
    %v2187 = vpop.f32.mrf.mxu0
    %v2188 = vadd.f32 0.0, %v2187
    %2189 = vmatmul.bf16.gmra.mxu0 %v2143
    %v2190 = vpop.f32.mrf.mxu0
    %v2191 = vadd.f32 0.0, %v2190
    %v2192 = vpop.f32.mrf.mxu0
    %v2193 = vadd.f32 0.0, %v2192
    %2194 = vmatmul.bf16.gmra.mxu0 %v2147
    %v2195 = vpop.f32.mrf.mxu0
    %v2196 = vadd.f32 0.0, %v2195
    %v2197 = vpop.f32.mrf.mxu0
    %v2198 = vadd.f32 0.0, %v2197
    %2199 = vdwg.mxu0
    %2200 = vmatpush.bf16.msra.mxu0 %v846
    %2201 = vmatpush.bf16.msra.mxu0 %v845
    %2202 = vmatpush.bf16.msra.mxu0 %v844
    %2203 = vmatpush.bf16.msra.mxu0 %v843
    %2204 = vmatpush.bf16.msra.mxu0 %v842
    %2205 = vmatpush.bf16.msra.mxu0 %v841
    %2206 = vmatpush.bf16.msra.mxu0 %v840
    %2207 = vmatpush.bf16.msra.mxu0 %v839
    %2208 = vmatmul.bf16.gmra.mxu0 %v2120
    %v2209 = vpop.f32.mrf.mxu0
    %v2210 = vadd.f32 %v2161, %v2209
    %v2211 = vpop.f32.mrf.mxu0
    %v2212 = vadd.f32 %v2163, %v2211
    %2213 = vmatmul.bf16.gmra.mxu0 %v2124
    %v2214 = vpop.f32.mrf.mxu0
    %v2215 = vadd.f32 %v2166, %v2214
    %v2216 = vpop.f32.mrf.mxu0
    %v2217 = vadd.f32 %v2168, %v2216
    %2218 = vmatmul.bf16.gmra.mxu0 %v2128
    %v2219 = vpop.f32.mrf.mxu0
    %v2220 = vadd.f32 %v2171, %v2219
    %v2221 = vpop.f32.mrf.mxu0
    %v2222 = vadd.f32 %v2173, %v2221
    %2223 = vmatmul.bf16.gmra.mxu0 %v2132
    %v2224 = vpop.f32.mrf.mxu0
    %v2225 = vadd.f32 %v2176, %v2224
    %v2226 = vpop.f32.mrf.mxu0
    %v2227 = vadd.f32 %v2178, %v2226
    %2228 = vmatmul.bf16.gmra.mxu0 %v2136
    %v2229 = vpop.f32.mrf.mxu0
    %v2230 = vadd.f32 %v2181, %v2229
    %v2231 = vpop.f32.mrf.mxu0
    %v2232 = vadd.f32 %v2183, %v2231
    %2233 = vmatmul.bf16.gmra.mxu0 %v2140
    %v2234 = vpop.f32.mrf.mxu0
    %v2235 = vadd.f32 %v2186, %v2234
    %v2236 = vpop.f32.mrf.mxu0
    %v2237 = vadd.f32 %v2188, %v2236
    %2238 = vmatmul.bf16.gmra.mxu0 %v2144
    %v2239 = vpop.f32.mrf.mxu0
    %v2240 = vadd.f32 %v2191, %v2239
    %v2241 = vpop.f32.mrf.mxu0
    %v2242 = vadd.f32 %v2193, %v2241
    %2243 = vmatmul.bf16.gmra.mxu0 %v2148
    %v2244 = vpop.f32.mrf.mxu0
    %v2245 = vadd.f32 %v2196, %v2244
    %v2246 = vpop.f32.mrf.mxu0
    %v2247 = vadd.f32 %v2198, %v2246
    %2248 = vdwg.mxu0
    %2249 = vmatpush.bf16.msra.mxu0 %v854
    %2250 = vmatpush.bf16.msra.mxu0 %v853
    %2251 = vmatpush.bf16.msra.mxu0 %v852
    %2252 = vmatpush.bf16.msra.mxu0 %v851
    %2253 = vmatpush.bf16.msra.mxu0 %v850
    %2254 = vmatpush.bf16.msra.mxu0 %v849
    %2255 = vmatpush.bf16.msra.mxu0 %v848
    %2256 = vmatpush.bf16.msra.mxu0 %v847
    %2257 = vmatmul.bf16.gmra.mxu0 %v2121
    %v2258 = vpop.f32.mrf.mxu0
    %v2259 = vadd.f32 %v2210, %v2258
    %v2260 = vpop.f32.mrf.mxu0
    %v2261 = vadd.f32 %v2212, %v2260
    %2262 = vmatmul.bf16.gmra.mxu0 %v2125
    %v2263 = vpop.f32.mrf.mxu0
    %v2264 = vadd.f32 %v2215, %v2263
    %v2265 = vpop.f32.mrf.mxu0
    %v2266 = vadd.f32 %v2217, %v2265
    %2267 = vmatmul.bf16.gmra.mxu0 %v2129
    %v2268 = vpop.f32.mrf.mxu0
    %v2269 = vadd.f32 %v2220, %v2268
    %v2270 = vpop.f32.mrf.mxu0
    %v2271 = vadd.f32 %v2222, %v2270
    %2272 = vmatmul.bf16.gmra.mxu0 %v2133
    %v2273 = vpop.f32.mrf.mxu0
    %v2274 = vadd.f32 %v2225, %v2273
    %v2275 = vpop.f32.mrf.mxu0
    %v2276 = vadd.f32 %v2227, %v2275
    %2277 = vmatmul.bf16.gmra.mxu0 %v2137
    %v2278 = vpop.f32.mrf.mxu0
    %v2279 = vadd.f32 %v2230, %v2278
    %v2280 = vpop.f32.mrf.mxu0
    %v2281 = vadd.f32 %v2232, %v2280
    %2282 = vmatmul.bf16.gmra.mxu0 %v2141
    %v2283 = vpop.f32.mrf.mxu0
    %v2284 = vadd.f32 %v2235, %v2283
    %v2285 = vpop.f32.mrf.mxu0
    %v2286 = vadd.f32 %v2237, %v2285
    %2287 = vmatmul.bf16.gmra.mxu0 %v2145
    %v2288 = vpop.f32.mrf.mxu0
    %v2289 = vadd.f32 %v2240, %v2288
    %v2290 = vpop.f32.mrf.mxu0
    %v2291 = vadd.f32 %v2242, %v2290
    %2292 = vmatmul.bf16.gmra.mxu0 %v2149
    %v2293 = vpop.f32.mrf.mxu0
    %v2294 = vadd.f32 %v2245, %v2293
    %v2295 = vpop.f32.mrf.mxu0
    %v2296 = vadd.f32 %v2247, %v2295
    %2297 = vdwg.mxu0
    %2298 = vmatpush.bf16.msra.mxu0 %v862
    %2299 = vmatpush.bf16.msra.mxu0 %v861
    %2300 = vmatpush.bf16.msra.mxu0 %v860
    %2301 = vmatpush.bf16.msra.mxu0 %v859
    %2302 = vmatpush.bf16.msra.mxu0 %v858
    %2303 = vmatpush.bf16.msra.mxu0 %v857
    %2304 = vmatpush.bf16.msra.mxu0 %v856
    %2305 = vmatpush.bf16.msra.mxu0 %v855
    %2306 = vmatmul.bf16.gmra.mxu0 %v2122
    %v2307 = vpop.f32.mrf.mxu0
    %v2308 = vadd.f32 %v2259, %v2307
    %v2309 = vpop.f32.mrf.mxu0
    %v2310 = vadd.f32 %v2261, %v2309
    %2311 = vmatmul.bf16.gmra.mxu0 %v2126
    %v2312 = vpop.f32.mrf.mxu0
    %v2313 = vadd.f32 %v2264, %v2312
    %v2314 = vpop.f32.mrf.mxu0
    %v2315 = vadd.f32 %v2266, %v2314
    %2316 = vmatmul.bf16.gmra.mxu0 %v2130
    %v2317 = vpop.f32.mrf.mxu0
    %v2318 = vadd.f32 %v2269, %v2317
    %v2319 = vpop.f32.mrf.mxu0
    %v2320 = vadd.f32 %v2271, %v2319
    %2321 = vmatmul.bf16.gmra.mxu0 %v2134
    %v2322 = vpop.f32.mrf.mxu0
    %v2323 = vadd.f32 %v2274, %v2322
    %v2324 = vpop.f32.mrf.mxu0
    %v2325 = vadd.f32 %v2276, %v2324
    %2326 = vmatmul.bf16.gmra.mxu0 %v2138
    %v2327 = vpop.f32.mrf.mxu0
    %v2328 = vadd.f32 %v2279, %v2327
    %v2329 = vpop.f32.mrf.mxu0
    %v2330 = vadd.f32 %v2281, %v2329
    %2331 = vmatmul.bf16.gmra.mxu0 %v2142
    %v2332 = vpop.f32.mrf.mxu0
    %v2333 = vadd.f32 %v2284, %v2332
    %v2334 = vpop.f32.mrf.mxu0
    %v2335 = vadd.f32 %v2286, %v2334
    %2336 = vmatmul.bf16.gmra.mxu0 %v2146
    %v2337 = vpop.f32.mrf.mxu0
    %v2338 = vadd.f32 %v2289, %v2337
    %v2339 = vpop.f32.mrf.mxu0
    %v2340 = vadd.f32 %v2291, %v2339
    %2341 = vmatmul.bf16.gmra.mxu0 %v2150
    %v2342 = vpop.f32.mrf.mxu0
    %v2343 = vadd.f32 %v2294, %v2342
    %v2344 = vpop.f32.mrf.mxu0
    %v2345 = vadd.f32 %v2296, %v2344
    %2346 = vdwg.mxu0
    %v2347 = vpack.c.bf16 %v2310, %v2308
    %v2348 = vpack.c.bf16 %v2315, %v2313
    %v2349 = vpack.c.bf16 %v2320, %v2318
    %v2350 = vpack.c.bf16 %v2325, %v2323
    %v2351 = vpack.c.bf16 %v2330, %v2328
    %v2352 = vpack.c.bf16 %v2335, %v2333
    %v2353 = vpack.c.bf16 %v2340, %v2338
    %v2354 = vpack.c.bf16 %v2345, %v2343
    %s2355 = scalar_lea.vmem %s1, 4
    %v2356 = vld [vmem:[%s2355] sm:$0x3]
    %v2358 = vsel %vm1642, %v2347, 0
    %v2361 = vsel %vm1642, %v2348, 0
    %v2364 = vsel %vm1642, %v2349, 0
    %v2367 = vsel %vm1642, %v2350, 0
    %v2370 = vsel %vm1642, %v2351, 0
    %v2373 = vsel %vm1642, %v2352, 0
    %v2376 = vsel %vm1642, %v2353, 0
    %v2379 = vsel %vm1642, %v2354, 0
    %v2382 = vand.u32 %v2356, %v1670
    %2384 = vmatpush.bf16.msra.mxu0 0
    %2385 = vmatpush.bf16.msra.mxu0 0
    %2386 = vmatpush.bf16.msra.mxu0 0
    %2387 = vmatpush.bf16.msra.mxu0 0
    %2388 = vmatpush.bf16.msra.mxu0 0
    %2389 = vmatpush.bf16.msra.mxu0 0
    %2390 = vmatpush.bf16.msra.mxu0 0
    %2391 = vmatpush.bf16.msra.mxu0 %v2382
    %2392 = vmatmul.bf16.gmra.mxu0 %v2358
    %v2393 = vpop.f32.mrf.mxu0
    %v2394 = vadd.f32 0.0, %v2393
    %v2395 = vpop.f32.mrf.mxu0
    %v2396 = vadd.f32 0.0, %v2395
    %2397 = vmatmul.bf16.gmra.mxu0 %v2361
    %v2398 = vpop.f32.mrf.mxu0
    %v2399 = vadd.f32 0.0, %v2398
    %v2400 = vpop.f32.mrf.mxu0
    %v2401 = vadd.f32 0.0, %v2400
    %2402 = vmatmul.bf16.gmra.mxu0 %v2364
    %v2403 = vpop.f32.mrf.mxu0
    %v2404 = vadd.f32 0.0, %v2403
    %v2405 = vpop.f32.mrf.mxu0
    %v2406 = vadd.f32 0.0, %v2405
    %2407 = vmatmul.bf16.gmra.mxu0 %v2367
    %v2408 = vpop.f32.mrf.mxu0
    %v2409 = vadd.f32 0.0, %v2408
    %v2410 = vpop.f32.mrf.mxu0
    %v2411 = vadd.f32 0.0, %v2410
    %2412 = vmatmul.bf16.gmra.mxu0 %v2370
    %v2413 = vpop.f32.mrf.mxu0
    %v2414 = vadd.f32 0.0, %v2413
    %v2415 = vpop.f32.mrf.mxu0
    %v2416 = vadd.f32 0.0, %v2415
    %2417 = vmatmul.bf16.gmra.mxu0 %v2373
    %v2418 = vpop.f32.mrf.mxu0
    %v2419 = vadd.f32 0.0, %v2418
    %v2420 = vpop.f32.mrf.mxu0
    %v2421 = vadd.f32 0.0, %v2420
    %2422 = vmatmul.bf16.gmra.mxu0 %v2376
    %v2423 = vpop.f32.mrf.mxu0
    %v2424 = vadd.f32 0.0, %v2423
    %v2425 = vpop.f32.mrf.mxu0
    %v2426 = vadd.f32 0.0, %v2425
    %2427 = vmatmul.bf16.gmra.mxu0 %v2379
    %v2428 = vpop.f32.mrf.mxu0
    %v2429 = vadd.f32 0.0, %v2428
    %v2430 = vpop.f32.mrf.mxu0
    %v2431 = vadd.f32 0.0, %v2430
    %2432 = vdwg.mxu0
    %v2433 = vadd.f32 %v1760, %v2394
    %v2434 = vadd.f32 %v1762, %v2396
    %v2435 = vadd.f32 %v1765, %v2399
    %v2436 = vadd.f32 %v1767, %v2401
    %v2437 = vadd.f32 %v1770, %v2404
    %v2438 = vadd.f32 %v1772, %v2406
    %v2439 = vadd.f32 %v1775, %v2409
    %v2440 = vadd.f32 %v1777, %v2411
    %v2441 = vadd.f32 %v1780, %v2414
    %v2442 = vadd.f32 %v1782, %v2416
    %v2443 = vadd.f32 %v1785, %v2419
    %v2444 = vadd.f32 %v1787, %v2421
    %v2445 = vadd.f32 %v1790, %v2424
    %v2446 = vadd.f32 %v1792, %v2426
    %v2447 = vadd.f32 %v1795, %v2429
    %v2448 = vadd.f32 %v1797, %v2431
    %vm2449 = vcmp.ge.s32.totalorder %v207, 0
    %vm2450 = vcmp.ge.s32.totalorder %v208, 0
    %vm2451 = vcmp.ge.s32.totalorder %v209, 0
    %vm2452 = vcmp.ge.s32.totalorder %v210, 0
    %vm2453 = vcmp.ge.s32.totalorder %v211, 0
    %vm2454 = vcmp.ge.s32.totalorder %v212, 0
    %vm2455 = vcmp.ge.s32.totalorder %v213, 0
    %vm2456 = vcmp.ge.s32.totalorder %v214, 0
    %vm2457 = vcmp.ge.s32.totalorder %v215, 0
    %vm2458 = vcmp.ge.s32.totalorder %v216, 0
    %vm2459 = vcmp.ge.s32.totalorder %v217, 0
    %vm2460 = vcmp.ge.s32.totalorder %v218, 0
    %vm2461 = vcmp.ge.s32.totalorder %v219, 0
    %vm2462 = vcmp.ge.s32.totalorder %v220, 0
    %vm2463 = vcmp.ge.s32.totalorder %v221, 0
    %vm2464 = vcmp.ge.s32.totalorder %v222, 0
    %vm2465 = vcmp.lt.s32.totalorder %v207, 16
    %vm2466 = vcmp.lt.s32.totalorder %v208, 16
    %vm2467 = vcmp.lt.s32.totalorder %v209, 16
    %vm2468 = vcmp.lt.s32.totalorder %v210, 16
    %vm2469 = vcmp.lt.s32.totalorder %v211, 16
    %vm2470 = vcmp.lt.s32.totalorder %v212, 16
    %vm2471 = vcmp.lt.s32.totalorder %v213, 16
    %vm2472 = vcmp.lt.s32.totalorder %v214, 16
    %vm2473 = vcmp.lt.s32.totalorder %v215, 16
    %vm2474 = vcmp.lt.s32.totalorder %v216, 16
    %vm2475 = vcmp.lt.s32.totalorder %v217, 16
    %vm2476 = vcmp.lt.s32.totalorder %v218, 16
    %vm2477 = vcmp.lt.s32.totalorder %v219, 16
    %vm2478 = vcmp.lt.s32.totalorder %v220, 16
    %vm2479 = vcmp.lt.s32.totalorder %v221, 16
    %vm2480 = vcmp.lt.s32.totalorder %v222, 16
    %vm2481 = vmand %vm2449, %vm2465
    %vm2482 = vmand %vm2450, %vm2466
    %vm2483 = vmand %vm2451, %vm2467
    %vm2484 = vmand %vm2452, %vm2468
    %vm2485 = vmand %vm2453, %vm2469
    %vm2486 = vmand %vm2454, %vm2470
    %vm2487 = vmand %vm2455, %vm2471
    %vm2488 = vmand %vm2456, %vm2472
    %vm2489 = vmand %vm2457, %vm2473
    %vm2490 = vmand %vm2458, %vm2474
    %vm2491 = vmand %vm2459, %vm2475
    %vm2492 = vmand %vm2460, %vm2476
    %vm2493 = vmand %vm2461, %vm2477
    %vm2494 = vmand %vm2462, %vm2478
    %vm2495 = vmand %vm2463, %vm2479
    %vm2496 = vmand %vm2464, %vm2480
    %vm2497 = vmand %vm2481, %vm319
    %vm2498 = vmand %vm2482, %vm320
    %vm2499 = vmand %vm2483, %vm321
    %vm2500 = vmand %vm2484, %vm322
    %vm2501 = vmand %vm2485, %vm323
    %vm2502 = vmand %vm2486, %vm324
    %vm2503 = vmand %vm2487, %vm325
    %vm2504 = vmand %vm2488, %vm326
    %vm2505 = vmand %vm2489, %vm327
    %vm2506 = vmand %vm2490, %vm328
    %vm2507 = vmand %vm2491, %vm329
    %vm2508 = vmand %vm2492, %vm330
    %vm2509 = vmand %vm2493, %vm331
    %vm2510 = vmand %vm2494, %vm332
    %vm2511 = vmand %vm2495, %vm333
    %vm2512 = vmand %vm2496, %vm334
    %vm2513 = vmand %vm2497, %vm351
    %vm2514 = vmand %vm2498, %vm352
    %vm2515 = vmand %vm2499, %vm353
    %vm2516 = vmand %vm2500, %vm354
    %vm2517 = vmand %vm2501, %vm355
    %vm2518 = vmand %vm2502, %vm356
    %vm2519 = vmand %vm2503, %vm357
    %vm2520 = vmand %vm2504, %vm358
    %vm2521 = vmand %vm2505, %vm359
    %vm2522 = vmand %vm2506, %vm360
    %vm2523 = vmand %vm2507, %vm361
    %vm2524 = vmand %vm2508, %vm362
    %vm2525 = vmand %vm2509, %vm363
    %vm2526 = vmand %vm2510, %vm364
    %vm2527 = vmand %vm2511, %vm365
    %vm2528 = vmand %vm2512, %vm366
    %v2529 = vmul.u32 %v207, 16
    %v2530 = vmul.u32 %v208, 16
    %v2531 = vmul.u32 %v209, 16
    %v2532 = vmul.u32 %v210, 16
    %v2533 = vmul.u32 %v211, 16
    %v2534 = vmul.u32 %v212, 16
    %v2535 = vmul.u32 %v213, 16
    %v2536 = vmul.u32 %v214, 16
    %v2537 = vmul.u32 %v215, 16
    %v2538 = vmul.u32 %v216, 16
    %v2539 = vmul.u32 %v217, 16
    %v2540 = vmul.u32 %v218, 16
    %v2541 = vmul.u32 %v219, 16
    %v2542 = vmul.u32 %v220, 16
    %v2543 = vmul.u32 %v221, 16
    %v2544 = vmul.u32 %v222, 16
    %v2545 = vadd.s32 %v383, %v2529
    %v2546 = vadd.s32 %v384, %v2530
    %v2547 = vadd.s32 %v385, %v2531
    %v2548 = vadd.s32 %v386, %v2532
    %v2549 = vadd.s32 %v387, %v2533
    %v2550 = vadd.s32 %v388, %v2534
    %v2551 = vadd.s32 %v389, %v2535
    %v2552 = vadd.s32 %v390, %v2536
    %v2553 = vadd.s32 %v391, %v2537
    %v2554 = vadd.s32 %v392, %v2538
    %v2555 = vadd.s32 %v393, %v2539
    %v2556 = vadd.s32 %v394, %v2540
    %v2557 = vadd.s32 %v395, %v2541
    %v2558 = vadd.s32 %v396, %v2542
    %v2559 = vadd.s32 %v397, %v2543
    %v2560 = vadd.s32 %v398, %v2544
    %v2561 = vadd.s32 %v2545, %v255
    %v2562 = vadd.s32 %v2546, %v256
    %v2563 = vadd.s32 %v2547, %v257
    %v2564 = vadd.s32 %v2548, %v258
    %v2565 = vadd.s32 %v2549, %v259
    %v2566 = vadd.s32 %v2550, %v260
    %v2567 = vadd.s32 %v2551, %v261
    %v2568 = vadd.s32 %v2552, %v262
    %v2569 = vadd.s32 %v2553, %v263
    %v2570 = vadd.s32 %v2554, %v264
    %v2571 = vadd.s32 %v2555, %v265
    %v2572 = vadd.s32 %v2556, %v266
    %v2573 = vadd.s32 %v2557, %v267
    %v2574 = vadd.s32 %v2558, %v268
    %v2575 = vadd.s32 %v2559, %v269
    %v2576 = vadd.s32 %v2560, %v270
    %vm2577 = vcmp.eq.s32.totalorder %v203, %v2561
    %vm2578 = vcmp.eq.s32.totalorder %v204, %v2561
    %vm2579 = vcmp.eq.s32.totalorder %v205, %v2561
    %vm2580 = vcmp.eq.s32.totalorder %v206, %v2561
    %vm2581 = vcmp.eq.s32.totalorder %v203, %v2562
    %vm2582 = vcmp.eq.s32.totalorder %v204, %v2562
    %vm2583 = vcmp.eq.s32.totalorder %v205, %v2562
    %vm2584 = vcmp.eq.s32.totalorder %v206, %v2562
    %vm2585 = vcmp.eq.s32.totalorder %v203, %v2563
    %vm2586 = vcmp.eq.s32.totalorder %v204, %v2563
    %vm2587 = vcmp.eq.s32.totalorder %v205, %v2563
    %vm2588 = vcmp.eq.s32.totalorder %v206, %v2563
    %vm2589 = vcmp.eq.s32.totalorder %v203, %v2564
    %vm2590 = vcmp.eq.s32.totalorder %v204, %v2564
    %vm2591 = vcmp.eq.s32.totalorder %v205, %v2564
    %vm2592 = vcmp.eq.s32.totalorder %v206, %v2564
    %vm2593 = vcmp.eq.s32.totalorder %v203, %v2565
    %vm2594 = vcmp.eq.s32.totalorder %v204, %v2565
    %vm2595 = vcmp.eq.s32.totalorder %v205, %v2565
    %vm2596 = vcmp.eq.s32.totalorder %v206, %v2565
    %vm2597 = vcmp.eq.s32.totalorder %v203, %v2566
    %vm2598 = vcmp.eq.s32.totalorder %v204, %v2566
    %vm2599 = vcmp.eq.s32.totalorder %v205, %v2566
    %vm2600 = vcmp.eq.s32.totalorder %v206, %v2566
    %vm2601 = vcmp.eq.s32.totalorder %v203, %v2567
    %vm2602 = vcmp.eq.s32.totalorder %v204, %v2567
    %vm2603 = vcmp.eq.s32.totalorder %v205, %v2567
    %vm2604 = vcmp.eq.s32.totalorder %v206, %v2567
    %vm2605 = vcmp.eq.s32.totalorder %v203, %v2568
    %vm2606 = vcmp.eq.s32.totalorder %v204, %v2568
    %vm2607 = vcmp.eq.s32.totalorder %v205, %v2568
    %vm2608 = vcmp.eq.s32.totalorder %v206, %v2568
    %vm2609 = vcmp.eq.s32.totalorder %v203, %v2569
    %vm2610 = vcmp.eq.s32.totalorder %v204, %v2569
    %vm2611 = vcmp.eq.s32.totalorder %v205, %v2569
    %vm2612 = vcmp.eq.s32.totalorder %v206, %v2569
    %vm2613 = vcmp.eq.s32.totalorder %v203, %v2570
    %vm2614 = vcmp.eq.s32.totalorder %v204, %v2570
    %vm2615 = vcmp.eq.s32.totalorder %v205, %v2570
    %vm2616 = vcmp.eq.s32.totalorder %v206, %v2570
    %vm2617 = vcmp.eq.s32.totalorder %v203, %v2571
    %vm2618 = vcmp.eq.s32.totalorder %v204, %v2571
    %vm2619 = vcmp.eq.s32.totalorder %v205, %v2571
    %vm2620 = vcmp.eq.s32.totalorder %v206, %v2571
    %vm2621 = vcmp.eq.s32.totalorder %v203, %v2572
    %vm2622 = vcmp.eq.s32.totalorder %v204, %v2572
    %vm2623 = vcmp.eq.s32.totalorder %v205, %v2572
    %vm2624 = vcmp.eq.s32.totalorder %v206, %v2572
    %vm2625 = vcmp.eq.s32.totalorder %v203, %v2573
    %vm2626 = vcmp.eq.s32.totalorder %v204, %v2573
    %vm2627 = vcmp.eq.s32.totalorder %v205, %v2573
    %vm2628 = vcmp.eq.s32.totalorder %v206, %v2573
    %vm2629 = vcmp.eq.s32.totalorder %v203, %v2574
    %vm2630 = vcmp.eq.s32.totalorder %v204, %v2574
    %vm2631 = vcmp.eq.s32.totalorder %v205, %v2574
    %vm2632 = vcmp.eq.s32.totalorder %v206, %v2574
    %vm2633 = vcmp.eq.s32.totalorder %v203, %v2575
    %vm2634 = vcmp.eq.s32.totalorder %v204, %v2575
    %vm2635 = vcmp.eq.s32.totalorder %v205, %v2575
    %vm2636 = vcmp.eq.s32.totalorder %v206, %v2575
    %vm2637 = vcmp.eq.s32.totalorder %v203, %v2576
    %vm2638 = vcmp.eq.s32.totalorder %v204, %v2576
    %vm2639 = vcmp.eq.s32.totalorder %v205, %v2576
    %vm2640 = vcmp.eq.s32.totalorder %v206, %v2576
    %v2641 = vsel %vm2513, 1, 0
    %v2642 = vsel %vm2514, 1, 0
    %v2643 = vsel %vm2515, 1, 0
    %v2644 = vsel %vm2516, 1, 0
    %v2645 = vsel %vm2517, 1, 0
    %v2646 = vsel %vm2518, 1, 0
    %v2647 = vsel %vm2519, 1, 0
    %v2648 = vsel %vm2520, 1, 0
    %v2649 = vsel %vm2521, 1, 0
    %v2650 = vsel %vm2522, 1, 0
    %v2651 = vsel %vm2523, 1, 0
    %v2652 = vsel %vm2524, 1, 0
    %v2653 = vsel %vm2525, 1, 0
    %v2654 = vsel %vm2526, 1, 0
    %v2655 = vsel %vm2527, 1, 0
    %v2656 = vsel %vm2528, 1, 0
    %vm2657 = vcmp.eq.s32.totalorder %v2641, 1
    %vm2658 = vcmp.eq.s32.totalorder %v2642, 1
    %vm2659 = vcmp.eq.s32.totalorder %v2643, 1
    %vm2660 = vcmp.eq.s32.totalorder %v2644, 1
    %vm2661 = vcmp.eq.s32.totalorder %v2645, 1
    %vm2662 = vcmp.eq.s32.totalorder %v2646, 1
    %vm2663 = vcmp.eq.s32.totalorder %v2647, 1
    %vm2664 = vcmp.eq.s32.totalorder %v2648, 1
    %vm2665 = vcmp.eq.s32.totalorder %v2649, 1
    %vm2666 = vcmp.eq.s32.totalorder %v2650, 1
    %vm2667 = vcmp.eq.s32.totalorder %v2651, 1
    %vm2668 = vcmp.eq.s32.totalorder %v2652, 1
    %vm2669 = vcmp.eq.s32.totalorder %v2653, 1
    %vm2670 = vcmp.eq.s32.totalorder %v2654, 1
    %vm2671 = vcmp.eq.s32.totalorder %v2655, 1
    %vm2672 = vcmp.eq.s32.totalorder %v2656, 1
    %vm2673 = vmand %vm2657, %vm2577
    %vm2674 = vmand %vm2657, %vm2578
    %vm2675 = vmand %vm2657, %vm2579
    %vm2676 = vmand %vm2657, %vm2580
    %vm2677 = vmand %vm2658, %vm2581
    %vm2678 = vmand %vm2658, %vm2582
    %vm2679 = vmand %vm2658, %vm2583
    %vm2680 = vmand %vm2658, %vm2584
    %vm2681 = vmand %vm2659, %vm2585
    %vm2682 = vmand %vm2659, %vm2586
    %vm2683 = vmand %vm2659, %vm2587
    %vm2684 = vmand %vm2659, %vm2588
    %vm2685 = vmand %vm2660, %vm2589
    %vm2686 = vmand %vm2660, %vm2590
    %vm2687 = vmand %vm2660, %vm2591
    %vm2688 = vmand %vm2660, %vm2592
    %vm2689 = vmand %vm2661, %vm2593
    %vm2690 = vmand %vm2661, %vm2594
    %vm2691 = vmand %vm2661, %vm2595
    %vm2692 = vmand %vm2661, %vm2596
    %vm2693 = vmand %vm2662, %vm2597
    %vm2694 = vmand %vm2662, %vm2598
    %vm2695 = vmand %vm2662, %vm2599
    %vm2696 = vmand %vm2662, %vm2600
    %vm2697 = vmand %vm2663, %vm2601
    %vm2698 = vmand %vm2663, %vm2602
    %vm2699 = vmand %vm2663, %vm2603
    %vm2700 = vmand %vm2663, %vm2604
    %vm2701 = vmand %vm2664, %vm2605
    %vm2702 = vmand %vm2664, %vm2606
    %vm2703 = vmand %vm2664, %vm2607
    %vm2704 = vmand %vm2664, %vm2608
    %vm2705 = vmand %vm2665, %vm2609
    %vm2706 = vmand %vm2665, %vm2610
    %vm2707 = vmand %vm2665, %vm2611
    %vm2708 = vmand %vm2665, %vm2612
    %vm2709 = vmand %vm2666, %vm2613
    %vm2710 = vmand %vm2666, %vm2614
    %vm2711 = vmand %vm2666, %vm2615
    %vm2712 = vmand %vm2666, %vm2616
    %vm2713 = vmand %vm2667, %vm2617
    %vm2714 = vmand %vm2667, %vm2618
    %vm2715 = vmand %vm2667, %vm2619
    %vm2716 = vmand %vm2667, %vm2620
    %vm2717 = vmand %vm2668, %vm2621
    %vm2718 = vmand %vm2668, %vm2622
    %vm2719 = vmand %vm2668, %vm2623
    %vm2720 = vmand %vm2668, %vm2624
    %vm2721 = vmand %vm2669, %vm2625
    %vm2722 = vmand %vm2669, %vm2626
    %vm2723 = vmand %vm2669, %vm2627
    %vm2724 = vmand %vm2669, %vm2628
    %vm2725 = vmand %vm2670, %vm2629
    %vm2726 = vmand %vm2670, %vm2630
    %vm2727 = vmand %vm2670, %vm2631
    %vm2728 = vmand %vm2670, %vm2632
    %vm2729 = vmand %vm2671, %vm2633
    %vm2730 = vmand %vm2671, %vm2634
    %vm2731 = vmand %vm2671, %vm2635
    %vm2732 = vmand %vm2671, %vm2636
    %vm2733 = vmand %vm2672, %vm2637
    %vm2734 = vmand %vm2672, %vm2638
    %vm2735 = vmand %vm2672, %vm2639
    %vm2736 = vmand %vm2672, %vm2640
    %v2737 = vsel %vm2673, 1.0, 0.0
    %v2738 = vsel %vm2674, 1.0, 0.0
    %v2739 = vsel %vm2675, 1.0, 0.0
    %v2740 = vsel %vm2676, 1.0, 0.0
    %v2741 = vsel %vm2677, 1.0, 0.0
    %v2742 = vsel %vm2678, 1.0, 0.0
    %v2743 = vsel %vm2679, 1.0, 0.0
    %v2744 = vsel %vm2680, 1.0, 0.0
    %v2745 = vsel %vm2681, 1.0, 0.0
    %v2746 = vsel %vm2682, 1.0, 0.0
    %v2747 = vsel %vm2683, 1.0, 0.0
    %v2748 = vsel %vm2684, 1.0, 0.0
    %v2749 = vsel %vm2685, 1.0, 0.0
    %v2750 = vsel %vm2686, 1.0, 0.0
    %v2751 = vsel %vm2687, 1.0, 0.0
    %v2752 = vsel %vm2688, 1.0, 0.0
    %v2753 = vsel %vm2689, 1.0, 0.0
    %v2754 = vsel %vm2690, 1.0, 0.0
    %v2755 = vsel %vm2691, 1.0, 0.0
    %v2756 = vsel %vm2692, 1.0, 0.0
    %v2757 = vsel %vm2693, 1.0, 0.0
    %v2758 = vsel %vm2694, 1.0, 0.0
    %v2759 = vsel %vm2695, 1.0, 0.0
    %v2760 = vsel %vm2696, 1.0, 0.0
    %v2761 = vsel %vm2697, 1.0, 0.0
    %v2762 = vsel %vm2698, 1.0, 0.0
    %v2763 = vsel %vm2699, 1.0, 0.0
    %v2764 = vsel %vm2700, 1.0, 0.0
    %v2765 = vsel %vm2701, 1.0, 0.0
    %v2766 = vsel %vm2702, 1.0, 0.0
    %v2767 = vsel %vm2703, 1.0, 0.0
    %v2768 = vsel %vm2704, 1.0, 0.0
    %v2769 = vsel %vm2705, 1.0, 0.0
    %v2770 = vsel %vm2706, 1.0, 0.0
    %v2771 = vsel %vm2707, 1.0, 0.0
    %v2772 = vsel %vm2708, 1.0, 0.0
    %v2773 = vsel %vm2709, 1.0, 0.0
    %v2774 = vsel %vm2710, 1.0, 0.0
    %v2775 = vsel %vm2711, 1.0, 0.0
    %v2776 = vsel %vm2712, 1.0, 0.0
    %v2777 = vsel %vm2713, 1.0, 0.0
    %v2778 = vsel %vm2714, 1.0, 0.0
    %v2779 = vsel %vm2715, 1.0, 0.0
    %v2780 = vsel %vm2716, 1.0, 0.0
    %v2781 = vsel %vm2717, 1.0, 0.0
    %v2782 = vsel %vm2718, 1.0, 0.0
    %v2783 = vsel %vm2719, 1.0, 0.0
    %v2784 = vsel %vm2720, 1.0, 0.0
    %v2785 = vsel %vm2721, 1.0, 0.0
    %v2786 = vsel %vm2722, 1.0, 0.0
    %v2787 = vsel %vm2723, 1.0, 0.0
    %v2788 = vsel %vm2724, 1.0, 0.0
    %v2789 = vsel %vm2725, 1.0, 0.0
    %v2790 = vsel %vm2726, 1.0, 0.0
    %v2791 = vsel %vm2727, 1.0, 0.0
    %v2792 = vsel %vm2728, 1.0, 0.0
    %v2793 = vsel %vm2729, 1.0, 0.0
    %v2794 = vsel %vm2730, 1.0, 0.0
    %v2795 = vsel %vm2731, 1.0, 0.0
    %v2796 = vsel %vm2732, 1.0, 0.0
    %v2797 = vsel %vm2733, 1.0, 0.0
    %v2798 = vsel %vm2734, 1.0, 0.0
    %v2799 = vsel %vm2735, 1.0, 0.0
    %v2800 = vsel %vm2736, 1.0, 0.0
    %v2801 = vpack.c.bf16 %v2741, %v2737
    %v2802 = vpack.c.bf16 %v2742, %v2738
    %v2803 = vpack.c.bf16 %v2743, %v2739
    %v2804 = vpack.c.bf16 %v2744, %v2740
    %v2805 = vpack.c.bf16 %v2749, %v2745
    %v2806 = vpack.c.bf16 %v2750, %v2746
    %v2807 = vpack.c.bf16 %v2751, %v2747
    %v2808 = vpack.c.bf16 %v2752, %v2748
    %v2809 = vpack.c.bf16 %v2757, %v2753
    %v2810 = vpack.c.bf16 %v2758, %v2754
    %v2811 = vpack.c.bf16 %v2759, %v2755
    %v2812 = vpack.c.bf16 %v2760, %v2756
    %v2813 = vpack.c.bf16 %v2765, %v2761
    %v2814 = vpack.c.bf16 %v2766, %v2762
    %v2815 = vpack.c.bf16 %v2767, %v2763
    %v2816 = vpack.c.bf16 %v2768, %v2764
    %v2817 = vpack.c.bf16 %v2773, %v2769
    %v2818 = vpack.c.bf16 %v2774, %v2770
    %v2819 = vpack.c.bf16 %v2775, %v2771
    %v2820 = vpack.c.bf16 %v2776, %v2772
    %v2821 = vpack.c.bf16 %v2781, %v2777
    %v2822 = vpack.c.bf16 %v2782, %v2778
    %v2823 = vpack.c.bf16 %v2783, %v2779
    %v2824 = vpack.c.bf16 %v2784, %v2780
    %v2825 = vpack.c.bf16 %v2789, %v2785
    %v2826 = vpack.c.bf16 %v2790, %v2786
    %v2827 = vpack.c.bf16 %v2791, %v2787
    %v2828 = vpack.c.bf16 %v2792, %v2788
    %v2829 = vpack.c.bf16 %v2797, %v2793
    %v2830 = vpack.c.bf16 %v2798, %v2794
    %v2831 = vpack.c.bf16 %v2799, %v2795
    %v2832 = vpack.c.bf16 %v2800, %v2796
    %2833 = vmatpush.bf16.msra.mxu0 %v838
    %2834 = vmatpush.bf16.msra.mxu0 %v837
    %2835 = vmatpush.bf16.msra.mxu0 %v836
    %2836 = vmatpush.bf16.msra.mxu0 %v835
    %2837 = vmatpush.bf16.msra.mxu0 %v834
    %2838 = vmatpush.bf16.msra.mxu0 %v833
    %2839 = vmatpush.bf16.msra.mxu0 %v832
    %2840 = vmatpush.bf16.msra.mxu0 %v831
    %2841 = vmatmul.bf16.gmra.mxu0 %v2801
    %v2842 = vpop.f32.mrf.mxu0
    %v2843 = vadd.f32 0.0, %v2842
    %v2844 = vpop.f32.mrf.mxu0
    %v2845 = vadd.f32 0.0, %v2844
    %2846 = vmatmul.bf16.gmra.mxu0 %v2805
    %v2847 = vpop.f32.mrf.mxu0
    %v2848 = vadd.f32 0.0, %v2847
    %v2849 = vpop.f32.mrf.mxu0
    %v2850 = vadd.f32 0.0, %v2849
    %2851 = vmatmul.bf16.gmra.mxu0 %v2809
    %v2852 = vpop.f32.mrf.mxu0
    %v2853 = vadd.f32 0.0, %v2852
    %v2854 = vpop.f32.mrf.mxu0
    %v2855 = vadd.f32 0.0, %v2854
    %2856 = vmatmul.bf16.gmra.mxu0 %v2813
    %v2857 = vpop.f32.mrf.mxu0
    %v2858 = vadd.f32 0.0, %v2857
    %v2859 = vpop.f32.mrf.mxu0
    %v2860 = vadd.f32 0.0, %v2859
    %2861 = vmatmul.bf16.gmra.mxu0 %v2817
    %v2862 = vpop.f32.mrf.mxu0
    %v2863 = vadd.f32 0.0, %v2862
    %v2864 = vpop.f32.mrf.mxu0
    %v2865 = vadd.f32 0.0, %v2864
    %2866 = vmatmul.bf16.gmra.mxu0 %v2821
    %v2867 = vpop.f32.mrf.mxu0
    %v2868 = vadd.f32 0.0, %v2867
    %v2869 = vpop.f32.mrf.mxu0
    %v2870 = vadd.f32 0.0, %v2869
    %2871 = vmatmul.bf16.gmra.mxu0 %v2825
    %v2872 = vpop.f32.mrf.mxu0
    %v2873 = vadd.f32 0.0, %v2872
    %v2874 = vpop.f32.mrf.mxu0
    %v2875 = vadd.f32 0.0, %v2874
    %2876 = vmatmul.bf16.gmra.mxu0 %v2829
    %v2877 = vpop.f32.mrf.mxu0
    %v2878 = vadd.f32 0.0, %v2877
    %v2879 = vpop.f32.mrf.mxu0
    %v2880 = vadd.f32 0.0, %v2879
    %2881 = vdwg.mxu0
    %2882 = vmatpush.bf16.msra.mxu0 %v846
    %2883 = vmatpush.bf16.msra.mxu0 %v845
    %2884 = vmatpush.bf16.msra.mxu0 %v844
    %2885 = vmatpush.bf16.msra.mxu0 %v843
    %2886 = vmatpush.bf16.msra.mxu0 %v842
    %2887 = vmatpush.bf16.msra.mxu0 %v841
    %2888 = vmatpush.bf16.msra.mxu0 %v840
    %2889 = vmatpush.bf16.msra.mxu0 %v839
    %2890 = vmatmul.bf16.gmra.mxu0 %v2802
    %v2891 = vpop.f32.mrf.mxu0
    %v2892 = vadd.f32 %v2843, %v2891
    %v2893 = vpop.f32.mrf.mxu0
    %v2894 = vadd.f32 %v2845, %v2893
    %2895 = vmatmul.bf16.gmra.mxu0 %v2806
    %v2896 = vpop.f32.mrf.mxu0
    %v2897 = vadd.f32 %v2848, %v2896
    %v2898 = vpop.f32.mrf.mxu0
    %v2899 = vadd.f32 %v2850, %v2898
    %2900 = vmatmul.bf16.gmra.mxu0 %v2810
    %v2901 = vpop.f32.mrf.mxu0
    %v2902 = vadd.f32 %v2853, %v2901
    %v2903 = vpop.f32.mrf.mxu0
    %v2904 = vadd.f32 %v2855, %v2903
    %2905 = vmatmul.bf16.gmra.mxu0 %v2814
    %v2906 = vpop.f32.mrf.mxu0
    %v2907 = vadd.f32 %v2858, %v2906
    %v2908 = vpop.f32.mrf.mxu0
    %v2909 = vadd.f32 %v2860, %v2908
    %2910 = vmatmul.bf16.gmra.mxu0 %v2818
    %v2911 = vpop.f32.mrf.mxu0
    %v2912 = vadd.f32 %v2863, %v2911
    %v2913 = vpop.f32.mrf.mxu0
    %v2914 = vadd.f32 %v2865, %v2913
    %2915 = vmatmul.bf16.gmra.mxu0 %v2822
    %v2916 = vpop.f32.mrf.mxu0
    %v2917 = vadd.f32 %v2868, %v2916
    %v2918 = vpop.f32.mrf.mxu0
    %v2919 = vadd.f32 %v2870, %v2918
    %2920 = vmatmul.bf16.gmra.mxu0 %v2826
    %v2921 = vpop.f32.mrf.mxu0
    %v2922 = vadd.f32 %v2873, %v2921
    %v2923 = vpop.f32.mrf.mxu0
    %v2924 = vadd.f32 %v2875, %v2923
    %2925 = vmatmul.bf16.gmra.mxu0 %v2830
    %v2926 = vpop.f32.mrf.mxu0
    %v2927 = vadd.f32 %v2878, %v2926
    %v2928 = vpop.f32.mrf.mxu0
    %v2929 = vadd.f32 %v2880, %v2928
    %2930 = vdwg.mxu0
    %2931 = vmatpush.bf16.msra.mxu0 %v854
    %2932 = vmatpush.bf16.msra.mxu0 %v853
    %2933 = vmatpush.bf16.msra.mxu0 %v852
    %2934 = vmatpush.bf16.msra.mxu0 %v851
    %2935 = vmatpush.bf16.msra.mxu0 %v850
    %2936 = vmatpush.bf16.msra.mxu0 %v849
    %2937 = vmatpush.bf16.msra.mxu0 %v848
    %2938 = vmatpush.bf16.msra.mxu0 %v847
    %2939 = vmatmul.bf16.gmra.mxu0 %v2803
    %v2940 = vpop.f32.mrf.mxu0
    %v2941 = vadd.f32 %v2892, %v2940
    %v2942 = vpop.f32.mrf.mxu0
    %v2943 = vadd.f32 %v2894, %v2942
    %2944 = vmatmul.bf16.gmra.mxu0 %v2807
    %v2945 = vpop.f32.mrf.mxu0
    %v2946 = vadd.f32 %v2897, %v2945
    %v2947 = vpop.f32.mrf.mxu0
    %v2948 = vadd.f32 %v2899, %v2947
    %2949 = vmatmul.bf16.gmra.mxu0 %v2811
    %v2950 = vpop.f32.mrf.mxu0
    %v2951 = vadd.f32 %v2902, %v2950
    %v2952 = vpop.f32.mrf.mxu0
    %v2953 = vadd.f32 %v2904, %v2952
    %2954 = vmatmul.bf16.gmra.mxu0 %v2815
    %v2955 = vpop.f32.mrf.mxu0
    %v2956 = vadd.f32 %v2907, %v2955
    %v2957 = vpop.f32.mrf.mxu0
    %v2958 = vadd.f32 %v2909, %v2957
    %2959 = vmatmul.bf16.gmra.mxu0 %v2819
    %v2960 = vpop.f32.mrf.mxu0
    %v2961 = vadd.f32 %v2912, %v2960
    %v2962 = vpop.f32.mrf.mxu0
    %v2963 = vadd.f32 %v2914, %v2962
    %2964 = vmatmul.bf16.gmra.mxu0 %v2823
    %v2965 = vpop.f32.mrf.mxu0
    %v2966 = vadd.f32 %v2917, %v2965
    %v2967 = vpop.f32.mrf.mxu0
    %v2968 = vadd.f32 %v2919, %v2967
    %2969 = vmatmul.bf16.gmra.mxu0 %v2827
    %v2970 = vpop.f32.mrf.mxu0
    %v2971 = vadd.f32 %v2922, %v2970
    %v2972 = vpop.f32.mrf.mxu0
    %v2973 = vadd.f32 %v2924, %v2972
    %2974 = vmatmul.bf16.gmra.mxu0 %v2831
    %v2975 = vpop.f32.mrf.mxu0
    %v2976 = vadd.f32 %v2927, %v2975
    %v2977 = vpop.f32.mrf.mxu0
    %v2978 = vadd.f32 %v2929, %v2977
    %2979 = vdwg.mxu0
    %2980 = vmatpush.bf16.msra.mxu0 %v862
    %2981 = vmatpush.bf16.msra.mxu0 %v861
    %2982 = vmatpush.bf16.msra.mxu0 %v860
    %2983 = vmatpush.bf16.msra.mxu0 %v859
    %2984 = vmatpush.bf16.msra.mxu0 %v858
    %2985 = vmatpush.bf16.msra.mxu0 %v857
    %2986 = vmatpush.bf16.msra.mxu0 %v856
    %2987 = vmatpush.bf16.msra.mxu0 %v855
    %2988 = vmatmul.bf16.gmra.mxu0 %v2804
    %v2989 = vpop.f32.mrf.mxu0
    %v2990 = vadd.f32 %v2941, %v2989
    %v2991 = vpop.f32.mrf.mxu0
    %v2992 = vadd.f32 %v2943, %v2991
    %2993 = vmatmul.bf16.gmra.mxu0 %v2808
    %v2994 = vpop.f32.mrf.mxu0
    %v2995 = vadd.f32 %v2946, %v2994
    %v2996 = vpop.f32.mrf.mxu0
    %v2997 = vadd.f32 %v2948, %v2996
    %2998 = vmatmul.bf16.gmra.mxu0 %v2812
    %v2999 = vpop.f32.mrf.mxu0
    %v3000 = vadd.f32 %v2951, %v2999
    %v3001 = vpop.f32.mrf.mxu0
    %v3002 = vadd.f32 %v2953, %v3001
    %3003 = vmatmul.bf16.gmra.mxu0 %v2816
    %v3004 = vpop.f32.mrf.mxu0
    %v3005 = vadd.f32 %v2956, %v3004
    %v3006 = vpop.f32.mrf.mxu0
    %v3007 = vadd.f32 %v2958, %v3006
    %3008 = vmatmul.bf16.gmra.mxu0 %v2820
    %v3009 = vpop.f32.mrf.mxu0
    %v3010 = vadd.f32 %v2961, %v3009
    %v3011 = vpop.f32.mrf.mxu0
    %v3012 = vadd.f32 %v2963, %v3011
    %3013 = vmatmul.bf16.gmra.mxu0 %v2824
    %v3014 = vpop.f32.mrf.mxu0
    %v3015 = vadd.f32 %v2966, %v3014
    %v3016 = vpop.f32.mrf.mxu0
    %v3017 = vadd.f32 %v2968, %v3016
    %3018 = vmatmul.bf16.gmra.mxu0 %v2828
    %v3019 = vpop.f32.mrf.mxu0
    %v3020 = vadd.f32 %v2971, %v3019
    %v3021 = vpop.f32.mrf.mxu0
    %v3022 = vadd.f32 %v2973, %v3021
    %3023 = vmatmul.bf16.gmra.mxu0 %v2832
    %v3024 = vpop.f32.mrf.mxu0
    %v3025 = vadd.f32 %v2976, %v3024
    %v3026 = vpop.f32.mrf.mxu0
    %v3027 = vadd.f32 %v2978, %v3026
    %3028 = vdwg.mxu0
    %v3029 = vpack.c.bf16 %v2992, %v2990
    %v3030 = vpack.c.bf16 %v2997, %v2995
    %v3031 = vpack.c.bf16 %v3002, %v3000
    %v3032 = vpack.c.bf16 %v3007, %v3005
    %v3033 = vpack.c.bf16 %v3012, %v3010
    %v3034 = vpack.c.bf16 %v3017, %v3015
    %v3035 = vpack.c.bf16 %v3022, %v3020
    %v3036 = vpack.c.bf16 %v3027, %v3025
    %s3037 = scalar_lea.vmem %s1, 6
    %v3038 = vld [vmem:[%s3037] sm:$0x3]
    %v3040 = vsel %vm1642, %v3029, 0
    %v3043 = vsel %vm1642, %v3030, 0
    %v3046 = vsel %vm1642, %v3031, 0
    %v3049 = vsel %vm1642, %v3032, 0
    %v3052 = vsel %vm1642, %v3033, 0
    %v3055 = vsel %vm1642, %v3034, 0
    %v3058 = vsel %vm1642, %v3035, 0
    %v3061 = vsel %vm1642, %v3036, 0
    %v3064 = vand.u32 %v3038, %v1670
    %3066 = vmatpush.bf16.msra.mxu0 0
    %3067 = vmatpush.bf16.msra.mxu0 0
    %3068 = vmatpush.bf16.msra.mxu0 0
    %3069 = vmatpush.bf16.msra.mxu0 0
    %3070 = vmatpush.bf16.msra.mxu0 0
    %3071 = vmatpush.bf16.msra.mxu0 0
    %3072 = vmatpush.bf16.msra.mxu0 0
    %3073 = vmatpush.bf16.msra.mxu0 %v3064
    %3074 = vmatmul.bf16.gmra.mxu0 %v3040
    %v3075 = vpop.f32.mrf.mxu0
    %v3076 = vadd.f32 0.0, %v3075
    %v3077 = vpop.f32.mrf.mxu0
    %v3078 = vadd.f32 0.0, %v3077
    %3079 = vmatmul.bf16.gmra.mxu0 %v3043
    %v3080 = vpop.f32.mrf.mxu0
    %v3081 = vadd.f32 0.0, %v3080
    %v3082 = vpop.f32.mrf.mxu0
    %v3083 = vadd.f32 0.0, %v3082
    %3084 = vmatmul.bf16.gmra.mxu0 %v3046
    %v3085 = vpop.f32.mrf.mxu0
    %v3086 = vadd.f32 0.0, %v3085
    %v3087 = vpop.f32.mrf.mxu0
    %v3088 = vadd.f32 0.0, %v3087
    %3089 = vmatmul.bf16.gmra.mxu0 %v3049
    %v3090 = vpop.f32.mrf.mxu0
    %v3091 = vadd.f32 0.0, %v3090
    %v3092 = vpop.f32.mrf.mxu0
    %v3093 = vadd.f32 0.0, %v3092
    %3094 = vmatmul.bf16.gmra.mxu0 %v3052
    %v3095 = vpop.f32.mrf.mxu0
    %v3096 = vadd.f32 0.0, %v3095
    %v3097 = vpop.f32.mrf.mxu0
    %v3098 = vadd.f32 0.0, %v3097
    %3099 = vmatmul.bf16.gmra.mxu0 %v3055
    %v3100 = vpop.f32.mrf.mxu0
    %v3101 = vadd.f32 0.0, %v3100
    %v3102 = vpop.f32.mrf.mxu0
    %v3103 = vadd.f32 0.0, %v3102
    %3104 = vmatmul.bf16.gmra.mxu0 %v3058
    %v3105 = vpop.f32.mrf.mxu0
    %v3106 = vadd.f32 0.0, %v3105
    %v3107 = vpop.f32.mrf.mxu0
    %v3108 = vadd.f32 0.0, %v3107
    %3109 = vmatmul.bf16.gmra.mxu0 %v3061
    %v3110 = vpop.f32.mrf.mxu0
    %v3111 = vadd.f32 0.0, %v3110
    %v3112 = vpop.f32.mrf.mxu0
    %v3113 = vadd.f32 0.0, %v3112
    %3114 = vdwg.mxu0
    %v3115 = vadd.f32 %v2433, %v3076
    %v3116 = vadd.f32 %v2434, %v3078
    %v3117 = vadd.f32 %v2435, %v3081
    %v3118 = vadd.f32 %v2436, %v3083
    %v3119 = vadd.f32 %v2437, %v3086
    %v3120 = vadd.f32 %v2438, %v3088
    %v3121 = vadd.f32 %v2439, %v3091
    %v3122 = vadd.f32 %v2440, %v3093
    %v3123 = vadd.f32 %v2441, %v3096
    %v3124 = vadd.f32 %v2442, %v3098
    %v3125 = vadd.f32 %v2443, %v3101
    %v3126 = vadd.f32 %v2444, %v3103
    %v3127 = vadd.f32 %v2445, %v3106
    %v3128 = vadd.f32 %v2446, %v3108
    %v3129 = vadd.f32 %v2447, %v3111
    %v3130 = vadd.f32 %v2448, %v3113
    %vm3131 = vmand %vm2481, %vm1100
    %vm3132 = vmand %vm2482, %vm1101
    %vm3133 = vmand %vm2483, %vm1102
    %vm3134 = vmand %vm2484, %vm1103
    %vm3135 = vmand %vm2485, %vm1104
    %vm3136 = vmand %vm2486, %vm1105
    %vm3137 = vmand %vm2487, %vm1106
    %vm3138 = vmand %vm2488, %vm1107
    %vm3139 = vmand %vm2489, %vm1108
    %vm3140 = vmand %vm2490, %vm1109
    %vm3141 = vmand %vm2491, %vm1110
    %vm3142 = vmand %vm2492, %vm1111
    %vm3143 = vmand %vm2493, %vm1112
    %vm3144 = vmand %vm2494, %vm1113
    %vm3145 = vmand %vm2495, %vm1114
    %vm3146 = vmand %vm2496, %vm1115
    %vm3147 = vmand %vm3131, %vm1132
    %vm3148 = vmand %vm3132, %vm1133
    %vm3149 = vmand %vm3133, %vm1134
    %vm3150 = vmand %vm3134, %vm1135
    %vm3151 = vmand %vm3135, %vm1136
    %vm3152 = vmand %vm3136, %vm1137
    %vm3153 = vmand %vm3137, %vm1138
    %vm3154 = vmand %vm3138, %vm1139
    %vm3155 = vmand %vm3139, %vm1140
    %vm3156 = vmand %vm3140, %vm1141
    %vm3157 = vmand %vm3141, %vm1142
    %vm3158 = vmand %vm3142, %vm1143
    %vm3159 = vmand %vm3143, %vm1144
    %vm3160 = vmand %vm3144, %vm1145
    %vm3161 = vmand %vm3145, %vm1146
    %vm3162 = vmand %vm3146, %vm1147
    %v3163 = vadd.s32 %v2545, %v239
    %v3164 = vadd.s32 %v2546, %v240
    %v3165 = vadd.s32 %v2547, %v241
    %v3166 = vadd.s32 %v2548, %v242
    %v3167 = vadd.s32 %v2549, %v243
    %v3168 = vadd.s32 %v2550, %v244
    %v3169 = vadd.s32 %v2551, %v245
    %v3170 = vadd.s32 %v2552, %v246
    %v3171 = vadd.s32 %v2553, %v247
    %v3172 = vadd.s32 %v2554, %v248
    %v3173 = vadd.s32 %v2555, %v249
    %v3174 = vadd.s32 %v2556, %v250
    %v3175 = vadd.s32 %v2557, %v251
    %v3176 = vadd.s32 %v2558, %v252
    %v3177 = vadd.s32 %v2559, %v253
    %v3178 = vadd.s32 %v2560, %v254
    %vm3179 = vcmp.eq.s32.totalorder %v203, %v3163
    %vm3180 = vcmp.eq.s32.totalorder %v204, %v3163
    %vm3181 = vcmp.eq.s32.totalorder %v205, %v3163
    %vm3182 = vcmp.eq.s32.totalorder %v206, %v3163
    %vm3183 = vcmp.eq.s32.totalorder %v203, %v3164
    %vm3184 = vcmp.eq.s32.totalorder %v204, %v3164
    %vm3185 = vcmp.eq.s32.totalorder %v205, %v3164
    %vm3186 = vcmp.eq.s32.totalorder %v206, %v3164
    %vm3187 = vcmp.eq.s32.totalorder %v203, %v3165
    %vm3188 = vcmp.eq.s32.totalorder %v204, %v3165
    %vm3189 = vcmp.eq.s32.totalorder %v205, %v3165
    %vm3190 = vcmp.eq.s32.totalorder %v206, %v3165
    %vm3191 = vcmp.eq.s32.totalorder %v203, %v3166
    %vm3192 = vcmp.eq.s32.totalorder %v204, %v3166
    %vm3193 = vcmp.eq.s32.totalorder %v205, %v3166
    %vm3194 = vcmp.eq.s32.totalorder %v206, %v3166
    %vm3195 = vcmp.eq.s32.totalorder %v203, %v3167
    %vm3196 = vcmp.eq.s32.totalorder %v204, %v3167
    %vm3197 = vcmp.eq.s32.totalorder %v205, %v3167
    %vm3198 = vcmp.eq.s32.totalorder %v206, %v3167
    %vm3199 = vcmp.eq.s32.totalorder %v203, %v3168
    %vm3200 = vcmp.eq.s32.totalorder %v204, %v3168
    %vm3201 = vcmp.eq.s32.totalorder %v205, %v3168
    %vm3202 = vcmp.eq.s32.totalorder %v206, %v3168
    %vm3203 = vcmp.eq.s32.totalorder %v203, %v3169
    %vm3204 = vcmp.eq.s32.totalorder %v204, %v3169
    %vm3205 = vcmp.eq.s32.totalorder %v205, %v3169
    %vm3206 = vcmp.eq.s32.totalorder %v206, %v3169
    %vm3207 = vcmp.eq.s32.totalorder %v203, %v3170
    %vm3208 = vcmp.eq.s32.totalorder %v204, %v3170
    %vm3209 = vcmp.eq.s32.totalorder %v205, %v3170
    %vm3210 = vcmp.eq.s32.totalorder %v206, %v3170
    %vm3211 = vcmp.eq.s32.totalorder %v203, %v3171
    %vm3212 = vcmp.eq.s32.totalorder %v204, %v3171
    %vm3213 = vcmp.eq.s32.totalorder %v205, %v3171
    %vm3214 = vcmp.eq.s32.totalorder %v206, %v3171
    %vm3215 = vcmp.eq.s32.totalorder %v203, %v3172
    %vm3216 = vcmp.eq.s32.totalorder %v204, %v3172
    %vm3217 = vcmp.eq.s32.totalorder %v205, %v3172
    %vm3218 = vcmp.eq.s32.totalorder %v206, %v3172
    %vm3219 = vcmp.eq.s32.totalorder %v203, %v3173
    %vm3220 = vcmp.eq.s32.totalorder %v204, %v3173
    %vm3221 = vcmp.eq.s32.totalorder %v205, %v3173
    %vm3222 = vcmp.eq.s32.totalorder %v206, %v3173
    %vm3223 = vcmp.eq.s32.totalorder %v203, %v3174
    %vm3224 = vcmp.eq.s32.totalorder %v204, %v3174
    %vm3225 = vcmp.eq.s32.totalorder %v205, %v3174
    %vm3226 = vcmp.eq.s32.totalorder %v206, %v3174
    %vm3227 = vcmp.eq.s32.totalorder %v203, %v3175
    %vm3228 = vcmp.eq.s32.totalorder %v204, %v3175
    %vm3229 = vcmp.eq.s32.totalorder %v205, %v3175
    %vm3230 = vcmp.eq.s32.totalorder %v206, %v3175
    %vm3231 = vcmp.eq.s32.totalorder %v203, %v3176
    %vm3232 = vcmp.eq.s32.totalorder %v204, %v3176
    %vm3233 = vcmp.eq.s32.totalorder %v205, %v3176
    %vm3234 = vcmp.eq.s32.totalorder %v206, %v3176
    %vm3235 = vcmp.eq.s32.totalorder %v203, %v3177
    %vm3236 = vcmp.eq.s32.totalorder %v204, %v3177
    %vm3237 = vcmp.eq.s32.totalorder %v205, %v3177
    %vm3238 = vcmp.eq.s32.totalorder %v206, %v3177
    %vm3239 = vcmp.eq.s32.totalorder %v203, %v3178
    %vm3240 = vcmp.eq.s32.totalorder %v204, %v3178
    %vm3241 = vcmp.eq.s32.totalorder %v205, %v3178
    %vm3242 = vcmp.eq.s32.totalorder %v206, %v3178
    %v3243 = vsel %vm3147, 1, 0
    %v3244 = vsel %vm3148, 1, 0
    %v3245 = vsel %vm3149, 1, 0
    %v3246 = vsel %vm3150, 1, 0
    %v3247 = vsel %vm3151, 1, 0
    %v3248 = vsel %vm3152, 1, 0
    %v3249 = vsel %vm3153, 1, 0
    %v3250 = vsel %vm3154, 1, 0
    %v3251 = vsel %vm3155, 1, 0
    %v3252 = vsel %vm3156, 1, 0
    %v3253 = vsel %vm3157, 1, 0
    %v3254 = vsel %vm3158, 1, 0
    %v3255 = vsel %vm3159, 1, 0
    %v3256 = vsel %vm3160, 1, 0
    %v3257 = vsel %vm3161, 1, 0
    %v3258 = vsel %vm3162, 1, 0
    %vm3259 = vcmp.eq.s32.totalorder %v3243, 1
    %vm3260 = vcmp.eq.s32.totalorder %v3244, 1
    %vm3261 = vcmp.eq.s32.totalorder %v3245, 1
    %vm3262 = vcmp.eq.s32.totalorder %v3246, 1
    %vm3263 = vcmp.eq.s32.totalorder %v3247, 1
    %vm3264 = vcmp.eq.s32.totalorder %v3248, 1
    %vm3265 = vcmp.eq.s32.totalorder %v3249, 1
    %vm3266 = vcmp.eq.s32.totalorder %v3250, 1
    %vm3267 = vcmp.eq.s32.totalorder %v3251, 1
    %vm3268 = vcmp.eq.s32.totalorder %v3252, 1
    %vm3269 = vcmp.eq.s32.totalorder %v3253, 1
    %vm3270 = vcmp.eq.s32.totalorder %v3254, 1
    %vm3271 = vcmp.eq.s32.totalorder %v3255, 1
    %vm3272 = vcmp.eq.s32.totalorder %v3256, 1
    %vm3273 = vcmp.eq.s32.totalorder %v3257, 1
    %vm3274 = vcmp.eq.s32.totalorder %v3258, 1
    %vm3275 = vmand %vm3259, %vm3179
    %vm3276 = vmand %vm3259, %vm3180
    %vm3277 = vmand %vm3259, %vm3181
    %vm3278 = vmand %vm3259, %vm3182
    %vm3279 = vmand %vm3260, %vm3183
    %vm3280 = vmand %vm3260, %vm3184
    %vm3281 = vmand %vm3260, %vm3185
    %vm3282 = vmand %vm3260, %vm3186
    %vm3283 = vmand %vm3261, %vm3187
    %vm3284 = vmand %vm3261, %vm3188
    %vm3285 = vmand %vm3261, %vm3189
    %vm3286 = vmand %vm3261, %vm3190
    %vm3287 = vmand %vm3262, %vm3191
    %vm3288 = vmand %vm3262, %vm3192
    %vm3289 = vmand %vm3262, %vm3193
    %vm3290 = vmand %vm3262, %vm3194
    %vm3291 = vmand %vm3263, %vm3195
    %vm3292 = vmand %vm3263, %vm3196
    %vm3293 = vmand %vm3263, %vm3197
    %vm3294 = vmand %vm3263, %vm3198
    %vm3295 = vmand %vm3264, %vm3199
    %vm3296 = vmand %vm3264, %vm3200
    %vm3297 = vmand %vm3264, %vm3201
    %vm3298 = vmand %vm3264, %vm3202
    %vm3299 = vmand %vm3265, %vm3203
    %vm3300 = vmand %vm3265, %vm3204
    %vm3301 = vmand %vm3265, %vm3205
    %vm3302 = vmand %vm3265, %vm3206
    %vm3303 = vmand %vm3266, %vm3207
    %vm3304 = vmand %vm3266, %vm3208
    %vm3305 = vmand %vm3266, %vm3209
    %vm3306 = vmand %vm3266, %vm3210
    %vm3307 = vmand %vm3267, %vm3211
    %vm3308 = vmand %vm3267, %vm3212
    %vm3309 = vmand %vm3267, %vm3213
    %vm3310 = vmand %vm3267, %vm3214
    %vm3311 = vmand %vm3268, %vm3215
    %vm3312 = vmand %vm3268, %vm3216
    %vm3313 = vmand %vm3268, %vm3217
    %vm3314 = vmand %vm3268, %vm3218
    %vm3315 = vmand %vm3269, %vm3219
    %vm3316 = vmand %vm3269, %vm3220
    %vm3317 = vmand %vm3269, %vm3221
    %vm3318 = vmand %vm3269, %vm3222
    %vm3319 = vmand %vm3270, %vm3223
    %vm3320 = vmand %vm3270, %vm3224
    %vm3321 = vmand %vm3270, %vm3225
    %vm3322 = vmand %vm3270, %vm3226
    %vm3323 = vmand %vm3271, %vm3227
    %vm3324 = vmand %vm3271, %vm3228
    %vm3325 = vmand %vm3271, %vm3229
    %vm3326 = vmand %vm3271, %vm3230
    %vm3327 = vmand %vm3272, %vm3231
    %vm3328 = vmand %vm3272, %vm3232
    %vm3329 = vmand %vm3272, %vm3233
    %vm3330 = vmand %vm3272, %vm3234
    %vm3331 = vmand %vm3273, %vm3235
    %vm3332 = vmand %vm3273, %vm3236
    %vm3333 = vmand %vm3273, %vm3237
    %vm3334 = vmand %vm3273, %vm3238
    %vm3335 = vmand %vm3274, %vm3239
    %vm3336 = vmand %vm3274, %vm3240
    %vm3337 = vmand %vm3274, %vm3241
    %vm3338 = vmand %vm3274, %vm3242
    %v3339 = vsel %vm3275, 1.0, 0.0
    %v3340 = vsel %vm3276, 1.0, 0.0
    %v3341 = vsel %vm3277, 1.0, 0.0
    %v3342 = vsel %vm3278, 1.0, 0.0
    %v3343 = vsel %vm3279, 1.0, 0.0
    %v3344 = vsel %vm3280, 1.0, 0.0
    %v3345 = vsel %vm3281, 1.0, 0.0
    %v3346 = vsel %vm3282, 1.0, 0.0
    %v3347 = vsel %vm3283, 1.0, 0.0
    %v3348 = vsel %vm3284, 1.0, 0.0
    %v3349 = vsel %vm3285, 1.0, 0.0
    %v3350 = vsel %vm3286, 1.0, 0.0
    %v3351 = vsel %vm3287, 1.0, 0.0
    %v3352 = vsel %vm3288, 1.0, 0.0
    %v3353 = vsel %vm3289, 1.0, 0.0
    %v3354 = vsel %vm3290, 1.0, 0.0
    %v3355 = vsel %vm3291, 1.0, 0.0
    %v3356 = vsel %vm3292, 1.0, 0.0
    %v3357 = vsel %vm3293, 1.0, 0.0
    %v3358 = vsel %vm3294, 1.0, 0.0
    %v3359 = vsel %vm3295, 1.0, 0.0
    %v3360 = vsel %vm3296, 1.0, 0.0
    %v3361 = vsel %vm3297, 1.0, 0.0
    %v3362 = vsel %vm3298, 1.0, 0.0
    %v3363 = vsel %vm3299, 1.0, 0.0
    %v3364 = vsel %vm3300, 1.0, 0.0
    %v3365 = vsel %vm3301, 1.0, 0.0
    %v3366 = vsel %vm3302, 1.0, 0.0
    %v3367 = vsel %vm3303, 1.0, 0.0
    %v3368 = vsel %vm3304, 1.0, 0.0
    %v3369 = vsel %vm3305, 1.0, 0.0
    %v3370 = vsel %vm3306, 1.0, 0.0
    %v3371 = vsel %vm3307, 1.0, 0.0
    %v3372 = vsel %vm3308, 1.0, 0.0
    %v3373 = vsel %vm3309, 1.0, 0.0
    %v3374 = vsel %vm3310, 1.0, 0.0
    %v3375 = vsel %vm3311, 1.0, 0.0
    %v3376 = vsel %vm3312, 1.0, 0.0
    %v3377 = vsel %vm3313, 1.0, 0.0
    %v3378 = vsel %vm3314, 1.0, 0.0
    %v3379 = vsel %vm3315, 1.0, 0.0
    %v3380 = vsel %vm3316, 1.0, 0.0
    %v3381 = vsel %vm3317, 1.0, 0.0
    %v3382 = vsel %vm3318, 1.0, 0.0
    %v3383 = vsel %vm3319, 1.0, 0.0
    %v3384 = vsel %vm3320, 1.0, 0.0
    %v3385 = vsel %vm3321, 1.0, 0.0
    %v3386 = vsel %vm3322, 1.0, 0.0
    %v3387 = vsel %vm3323, 1.0, 0.0
    %v3388 = vsel %vm3324, 1.0, 0.0
    %v3389 = vsel %vm3325, 1.0, 0.0
    %v3390 = vsel %vm3326, 1.0, 0.0
    %v3391 = vsel %vm3327, 1.0, 0.0
    %v3392 = vsel %vm3328, 1.0, 0.0
    %v3393 = vsel %vm3329, 1.0, 0.0
    %v3394 = vsel %vm3330, 1.0, 0.0
    %v3395 = vsel %vm3331, 1.0, 0.0
    %v3396 = vsel %vm3332, 1.0, 0.0
    %v3397 = vsel %vm3333, 1.0, 0.0
    %v3398 = vsel %vm3334, 1.0, 0.0
    %v3399 = vsel %vm3335, 1.0, 0.0
    %v3400 = vsel %vm3336, 1.0, 0.0
    %v3401 = vsel %vm3337, 1.0, 0.0
    %v3402 = vsel %vm3338, 1.0, 0.0
    %v3403 = vpack.c.bf16 %v3343, %v3339
    %v3404 = vpack.c.bf16 %v3344, %v3340
    %v3405 = vpack.c.bf16 %v3345, %v3341
    %v3406 = vpack.c.bf16 %v3346, %v3342
    %v3407 = vpack.c.bf16 %v3351, %v3347
    %v3408 = vpack.c.bf16 %v3352, %v3348
    %v3409 = vpack.c.bf16 %v3353, %v3349
    %v3410 = vpack.c.bf16 %v3354, %v3350
    %v3411 = vpack.c.bf16 %v3359, %v3355
    %v3412 = vpack.c.bf16 %v3360, %v3356
    %v3413 = vpack.c.bf16 %v3361, %v3357
    %v3414 = vpack.c.bf16 %v3362, %v3358
    %v3415 = vpack.c.bf16 %v3367, %v3363
    %v3416 = vpack.c.bf16 %v3368, %v3364
    %v3417 = vpack.c.bf16 %v3369, %v3365
    %v3418 = vpack.c.bf16 %v3370, %v3366
    %v3419 = vpack.c.bf16 %v3375, %v3371
    %v3420 = vpack.c.bf16 %v3376, %v3372
    %v3421 = vpack.c.bf16 %v3377, %v3373
    %v3422 = vpack.c.bf16 %v3378, %v3374
    %v3423 = vpack.c.bf16 %v3383, %v3379
    %v3424 = vpack.c.bf16 %v3384, %v3380
    %v3425 = vpack.c.bf16 %v3385, %v3381
    %v3426 = vpack.c.bf16 %v3386, %v3382
    %v3427 = vpack.c.bf16 %v3391, %v3387
    %v3428 = vpack.c.bf16 %v3392, %v3388
    %v3429 = vpack.c.bf16 %v3393, %v3389
    %v3430 = vpack.c.bf16 %v3394, %v3390
    %v3431 = vpack.c.bf16 %v3399, %v3395
    %v3432 = vpack.c.bf16 %v3400, %v3396
    %v3433 = vpack.c.bf16 %v3401, %v3397
    %v3434 = vpack.c.bf16 %v3402, %v3398
    %3435 = vmatpush.bf16.msra.mxu0 %v838
    %3436 = vmatpush.bf16.msra.mxu0 %v837
    %3437 = vmatpush.bf16.msra.mxu0 %v836
    %3438 = vmatpush.bf16.msra.mxu0 %v835
    %3439 = vmatpush.bf16.msra.mxu0 %v834
    %3440 = vmatpush.bf16.msra.mxu0 %v833
    %3441 = vmatpush.bf16.msra.mxu0 %v832
    %3442 = vmatpush.bf16.msra.mxu0 %v831
    %3443 = vmatmul.bf16.gmra.mxu0 %v3403
    %v3444 = vpop.f32.mrf.mxu0
    %v3445 = vadd.f32 0.0, %v3444
    %v3446 = vpop.f32.mrf.mxu0
    %v3447 = vadd.f32 0.0, %v3446
    %3448 = vmatmul.bf16.gmra.mxu0 %v3407
    %v3449 = vpop.f32.mrf.mxu0
    %v3450 = vadd.f32 0.0, %v3449
    %v3451 = vpop.f32.mrf.mxu0
    %v3452 = vadd.f32 0.0, %v3451
    %3453 = vmatmul.bf16.gmra.mxu0 %v3411
    %v3454 = vpop.f32.mrf.mxu0
    %v3455 = vadd.f32 0.0, %v3454
    %v3456 = vpop.f32.mrf.mxu0
    %v3457 = vadd.f32 0.0, %v3456
    %3458 = vmatmul.bf16.gmra.mxu0 %v3415
    %v3459 = vpop.f32.mrf.mxu0
    %v3460 = vadd.f32 0.0, %v3459
    %v3461 = vpop.f32.mrf.mxu0
    %v3462 = vadd.f32 0.0, %v3461
    %3463 = vmatmul.bf16.gmra.mxu0 %v3419
    %v3464 = vpop.f32.mrf.mxu0
    %v3465 = vadd.f32 0.0, %v3464
    %v3466 = vpop.f32.mrf.mxu0
    %v3467 = vadd.f32 0.0, %v3466
    %3468 = vmatmul.bf16.gmra.mxu0 %v3423
    %v3469 = vpop.f32.mrf.mxu0
    %v3470 = vadd.f32 0.0, %v3469
    %v3471 = vpop.f32.mrf.mxu0
    %v3472 = vadd.f32 0.0, %v3471
    %3473 = vmatmul.bf16.gmra.mxu0 %v3427
    %v3474 = vpop.f32.mrf.mxu0
    %v3475 = vadd.f32 0.0, %v3474
    %v3476 = vpop.f32.mrf.mxu0
    %v3477 = vadd.f32 0.0, %v3476
    %3478 = vmatmul.bf16.gmra.mxu0 %v3431
    %v3479 = vpop.f32.mrf.mxu0
    %v3480 = vadd.f32 0.0, %v3479
    %v3481 = vpop.f32.mrf.mxu0
    %v3482 = vadd.f32 0.0, %v3481
    %3483 = vdwg.mxu0
    %3484 = vmatpush.bf16.msra.mxu0 %v846
    %3485 = vmatpush.bf16.msra.mxu0 %v845
    %3486 = vmatpush.bf16.msra.mxu0 %v844
    %3487 = vmatpush.bf16.msra.mxu0 %v843
    %3488 = vmatpush.bf16.msra.mxu0 %v842
    %3489 = vmatpush.bf16.msra.mxu0 %v841
    %3490 = vmatpush.bf16.msra.mxu0 %v840
    %3491 = vmatpush.bf16.msra.mxu0 %v839
    %3492 = vmatmul.bf16.gmra.mxu0 %v3404
    %v3493 = vpop.f32.mrf.mxu0
    %v3494 = vadd.f32 %v3445, %v3493
    %v3495 = vpop.f32.mrf.mxu0
    %v3496 = vadd.f32 %v3447, %v3495
    %3497 = vmatmul.bf16.gmra.mxu0 %v3408
    %v3498 = vpop.f32.mrf.mxu0
    %v3499 = vadd.f32 %v3450, %v3498
    %v3500 = vpop.f32.mrf.mxu0
    %v3501 = vadd.f32 %v3452, %v3500
    %3502 = vmatmul.bf16.gmra.mxu0 %v3412
    %v3503 = vpop.f32.mrf.mxu0
    %v3504 = vadd.f32 %v3455, %v3503
    %v3505 = vpop.f32.mrf.mxu0
    %v3506 = vadd.f32 %v3457, %v3505
    %3507 = vmatmul.bf16.gmra.mxu0 %v3416
    %v3508 = vpop.f32.mrf.mxu0
    %v3509 = vadd.f32 %v3460, %v3508
    %v3510 = vpop.f32.mrf.mxu0
    %v3511 = vadd.f32 %v3462, %v3510
    %3512 = vmatmul.bf16.gmra.mxu0 %v3420
    %v3513 = vpop.f32.mrf.mxu0
    %v3514 = vadd.f32 %v3465, %v3513
    %v3515 = vpop.f32.mrf.mxu0
    %v3516 = vadd.f32 %v3467, %v3515
    %3517 = vmatmul.bf16.gmra.mxu0 %v3424
    %v3518 = vpop.f32.mrf.mxu0
    %v3519 = vadd.f32 %v3470, %v3518
    %v3520 = vpop.f32.mrf.mxu0
    %v3521 = vadd.f32 %v3472, %v3520
    %3522 = vmatmul.bf16.gmra.mxu0 %v3428
    %v3523 = vpop.f32.mrf.mxu0
    %v3524 = vadd.f32 %v3475, %v3523
    %v3525 = vpop.f32.mrf.mxu0
    %v3526 = vadd.f32 %v3477, %v3525
    %3527 = vmatmul.bf16.gmra.mxu0 %v3432
    %v3528 = vpop.f32.mrf.mxu0
    %v3529 = vadd.f32 %v3480, %v3528
    %v3530 = vpop.f32.mrf.mxu0
    %v3531 = vadd.f32 %v3482, %v3530
    %3532 = vdwg.mxu0
    %3533 = vmatpush.bf16.msra.mxu0 %v854
    %3534 = vmatpush.bf16.msra.mxu0 %v853
    %3535 = vmatpush.bf16.msra.mxu0 %v852
    %3536 = vmatpush.bf16.msra.mxu0 %v851
    %3537 = vmatpush.bf16.msra.mxu0 %v850
    %3538 = vmatpush.bf16.msra.mxu0 %v849
    %3539 = vmatpush.bf16.msra.mxu0 %v848
    %3540 = vmatpush.bf16.msra.mxu0 %v847
    %3541 = vmatmul.bf16.gmra.mxu0 %v3405
    %v3542 = vpop.f32.mrf.mxu0
    %v3543 = vadd.f32 %v3494, %v3542
    %v3544 = vpop.f32.mrf.mxu0
    %v3545 = vadd.f32 %v3496, %v3544
    %3546 = vmatmul.bf16.gmra.mxu0 %v3409
    %v3547 = vpop.f32.mrf.mxu0
    %v3548 = vadd.f32 %v3499, %v3547
    %v3549 = vpop.f32.mrf.mxu0
    %v3550 = vadd.f32 %v3501, %v3549
    %3551 = vmatmul.bf16.gmra.mxu0 %v3413
    %v3552 = vpop.f32.mrf.mxu0
    %v3553 = vadd.f32 %v3504, %v3552
    %v3554 = vpop.f32.mrf.mxu0
    %v3555 = vadd.f32 %v3506, %v3554
    %3556 = vmatmul.bf16.gmra.mxu0 %v3417
    %v3557 = vpop.f32.mrf.mxu0
    %v3558 = vadd.f32 %v3509, %v3557
    %v3559 = vpop.f32.mrf.mxu0
    %v3560 = vadd.f32 %v3511, %v3559
    %3561 = vmatmul.bf16.gmra.mxu0 %v3421
    %v3562 = vpop.f32.mrf.mxu0
    %v3563 = vadd.f32 %v3514, %v3562
    %v3564 = vpop.f32.mrf.mxu0
    %v3565 = vadd.f32 %v3516, %v3564
    %3566 = vmatmul.bf16.gmra.mxu0 %v3425
    %v3567 = vpop.f32.mrf.mxu0
    %v3568 = vadd.f32 %v3519, %v3567
    %v3569 = vpop.f32.mrf.mxu0
    %v3570 = vadd.f32 %v3521, %v3569
    %3571 = vmatmul.bf16.gmra.mxu0 %v3429
    %v3572 = vpop.f32.mrf.mxu0
    %v3573 = vadd.f32 %v3524, %v3572
    %v3574 = vpop.f32.mrf.mxu0
    %v3575 = vadd.f32 %v3526, %v3574
    %3576 = vmatmul.bf16.gmra.mxu0 %v3433
    %v3577 = vpop.f32.mrf.mxu0
    %v3578 = vadd.f32 %v3529, %v3577
    %v3579 = vpop.f32.mrf.mxu0
    %v3580 = vadd.f32 %v3531, %v3579
    %3581 = vdwg.mxu0
    %3582 = vmatpush.bf16.msra.mxu0 %v862
    %3583 = vmatpush.bf16.msra.mxu0 %v861
    %3584 = vmatpush.bf16.msra.mxu0 %v860
    %3585 = vmatpush.bf16.msra.mxu0 %v859
    %3586 = vmatpush.bf16.msra.mxu0 %v858
    %3587 = vmatpush.bf16.msra.mxu0 %v857
    %3588 = vmatpush.bf16.msra.mxu0 %v856
    %3589 = vmatpush.bf16.msra.mxu0 %v855
    %3590 = vmatmul.bf16.gmra.mxu0 %v3406
    %v3591 = vpop.f32.mrf.mxu0
    %v3592 = vadd.f32 %v3543, %v3591
    %v3593 = vpop.f32.mrf.mxu0
    %v3594 = vadd.f32 %v3545, %v3593
    %3595 = vmatmul.bf16.gmra.mxu0 %v3410
    %v3596 = vpop.f32.mrf.mxu0
    %v3597 = vadd.f32 %v3548, %v3596
    %v3598 = vpop.f32.mrf.mxu0
    %v3599 = vadd.f32 %v3550, %v3598
    %3600 = vmatmul.bf16.gmra.mxu0 %v3414
    %v3601 = vpop.f32.mrf.mxu0
    %v3602 = vadd.f32 %v3553, %v3601
    %v3603 = vpop.f32.mrf.mxu0
    %v3604 = vadd.f32 %v3555, %v3603
    %3605 = vmatmul.bf16.gmra.mxu0 %v3418
    %v3606 = vpop.f32.mrf.mxu0
    %v3607 = vadd.f32 %v3558, %v3606
    %v3608 = vpop.f32.mrf.mxu0
    %v3609 = vadd.f32 %v3560, %v3608
    %3610 = vmatmul.bf16.gmra.mxu0 %v3422
    %v3611 = vpop.f32.mrf.mxu0
    %v3612 = vadd.f32 %v3563, %v3611
    %v3613 = vpop.f32.mrf.mxu0
    %v3614 = vadd.f32 %v3565, %v3613
    %3615 = vmatmul.bf16.gmra.mxu0 %v3426
    %v3616 = vpop.f32.mrf.mxu0
    %v3617 = vadd.f32 %v3568, %v3616
    %v3618 = vpop.f32.mrf.mxu0
    %v3619 = vadd.f32 %v3570, %v3618
    %3620 = vmatmul.bf16.gmra.mxu0 %v3430
    %v3621 = vpop.f32.mrf.mxu0
    %v3622 = vadd.f32 %v3573, %v3621
    %v3623 = vpop.f32.mrf.mxu0
    %v3624 = vadd.f32 %v3575, %v3623
    %3625 = vmatmul.bf16.gmra.mxu0 %v3434
    %v3626 = vpop.f32.mrf.mxu0
    %v3627 = vadd.f32 %v3578, %v3626
    %v3628 = vpop.f32.mrf.mxu0
    %v3629 = vadd.f32 %v3580, %v3628
    %3630 = vdwg.mxu0
    %v3631 = vpack.c.bf16 %v3594, %v3592
    %v3632 = vpack.c.bf16 %v3599, %v3597
    %v3633 = vpack.c.bf16 %v3604, %v3602
    %v3634 = vpack.c.bf16 %v3609, %v3607
    %v3635 = vpack.c.bf16 %v3614, %v3612
    %v3636 = vpack.c.bf16 %v3619, %v3617
    %v3637 = vpack.c.bf16 %v3624, %v3622
    %v3638 = vpack.c.bf16 %v3629, %v3627
    %s3639 = scalar_lea.vmem %s1, 8
    %v3640 = vld [vmem:[%s3639] sm:$0x3]
    %v3642 = vsel %vm1642, %v3631, 0
    %v3645 = vsel %vm1642, %v3632, 0
    %v3648 = vsel %vm1642, %v3633, 0
    %v3651 = vsel %vm1642, %v3634, 0
    %v3654 = vsel %vm1642, %v3635, 0
    %v3657 = vsel %vm1642, %v3636, 0
    %v3660 = vsel %vm1642, %v3637, 0
    %v3663 = vsel %vm1642, %v3638, 0
    %v3666 = vand.u32 %v3640, %v1670
    %3668 = vmatpush.bf16.msra.mxu0 0
    %3669 = vmatpush.bf16.msra.mxu0 0
    %3670 = vmatpush.bf16.msra.mxu0 0
    %3671 = vmatpush.bf16.msra.mxu0 0
    %3672 = vmatpush.bf16.msra.mxu0 0
    %3673 = vmatpush.bf16.msra.mxu0 0
    %3674 = vmatpush.bf16.msra.mxu0 0
    %3675 = vmatpush.bf16.msra.mxu0 %v3666
    %3676 = vmatmul.bf16.gmra.mxu0 %v3642
    %v3677 = vpop.f32.mrf.mxu0
    %v3678 = vadd.f32 0.0, %v3677
    %v3679 = vpop.f32.mrf.mxu0
    %v3680 = vadd.f32 0.0, %v3679
    %3681 = vmatmul.bf16.gmra.mxu0 %v3645
    %v3682 = vpop.f32.mrf.mxu0
    %v3683 = vadd.f32 0.0, %v3682
    %v3684 = vpop.f32.mrf.mxu0
    %v3685 = vadd.f32 0.0, %v3684
    %3686 = vmatmul.bf16.gmra.mxu0 %v3648
    %v3687 = vpop.f32.mrf.mxu0
    %v3688 = vadd.f32 0.0, %v3687
    %v3689 = vpop.f32.mrf.mxu0
    %v3690 = vadd.f32 0.0, %v3689
    %3691 = vmatmul.bf16.gmra.mxu0 %v3651
    %v3692 = vpop.f32.mrf.mxu0
    %v3693 = vadd.f32 0.0, %v3692
    %v3694 = vpop.f32.mrf.mxu0
    %v3695 = vadd.f32 0.0, %v3694
    %3696 = vmatmul.bf16.gmra.mxu0 %v3654
    %v3697 = vpop.f32.mrf.mxu0
    %v3698 = vadd.f32 0.0, %v3697
    %v3699 = vpop.f32.mrf.mxu0
    %v3700 = vadd.f32 0.0, %v3699
    %3701 = vmatmul.bf16.gmra.mxu0 %v3657
    %v3702 = vpop.f32.mrf.mxu0
    %v3703 = vadd.f32 0.0, %v3702
    %v3704 = vpop.f32.mrf.mxu0
    %v3705 = vadd.f32 0.0, %v3704
    %3706 = vmatmul.bf16.gmra.mxu0 %v3660
    %v3707 = vpop.f32.mrf.mxu0
    %v3708 = vadd.f32 0.0, %v3707
    %v3709 = vpop.f32.mrf.mxu0
    %v3710 = vadd.f32 0.0, %v3709
    %3711 = vmatmul.bf16.gmra.mxu0 %v3663
    %v3712 = vpop.f32.mrf.mxu0
    %v3713 = vadd.f32 0.0, %v3712
    %v3714 = vpop.f32.mrf.mxu0
    %v3715 = vadd.f32 0.0, %v3714
    %3716 = vdwg.mxu0
    %v3717 = vadd.f32 %v3115, %v3678
    %v3718 = vadd.f32 %v3116, %v3680
    %v3719 = vadd.f32 %v3117, %v3683
    %v3720 = vadd.f32 %v3118, %v3685
    %v3721 = vadd.f32 %v3119, %v3688
    %v3722 = vadd.f32 %v3120, %v3690
    %v3723 = vadd.f32 %v3121, %v3693
    %v3724 = vadd.f32 %v3122, %v3695
    %v3725 = vadd.f32 %v3123, %v3698
    %v3726 = vadd.f32 %v3124, %v3700
    %v3727 = vadd.f32 %v3125, %v3703
    %v3728 = vadd.f32 %v3126, %v3705
    %v3729 = vadd.f32 %v3127, %v3708
    %v3730 = vadd.f32 %v3128, %v3710
    %v3731 = vadd.f32 %v3129, %v3713
    %v3732 = vadd.f32 %v3130, %v3715
    %vm3733 = vmand %vm2481, %vm1815
    %vm3734 = vmand %vm2482, %vm1816
    %vm3735 = vmand %vm2483, %vm1817
    %vm3736 = vmand %vm2484, %vm1818
    %vm3737 = vmand %vm2485, %vm1819
    %vm3738 = vmand %vm2486, %vm1820
    %vm3739 = vmand %vm2487, %vm1821
    %vm3740 = vmand %vm2488, %vm1822
    %vm3741 = vmand %vm2489, %vm1823
    %vm3742 = vmand %vm2490, %vm1824
    %vm3743 = vmand %vm2491, %vm1825
    %vm3744 = vmand %vm2492, %vm1826
    %vm3745 = vmand %vm2493, %vm1827
    %vm3746 = vmand %vm2494, %vm1828
    %vm3747 = vmand %vm2495, %vm1829
    %vm3748 = vmand %vm2496, %vm1830
    %vm3749 = vmand %vm3733, %vm1847
    %vm3750 = vmand %vm3734, %vm1848
    %vm3751 = vmand %vm3735, %vm1849
    %vm3752 = vmand %vm3736, %vm1850
    %vm3753 = vmand %vm3737, %vm1851
    %vm3754 = vmand %vm3738, %vm1852
    %vm3755 = vmand %vm3739, %vm1853
    %vm3756 = vmand %vm3740, %vm1854
    %vm3757 = vmand %vm3741, %vm1855
    %vm3758 = vmand %vm3742, %vm1856
    %vm3759 = vmand %vm3743, %vm1857
    %vm3760 = vmand %vm3744, %vm1858
    %vm3761 = vmand %vm3745, %vm1859
    %vm3762 = vmand %vm3746, %vm1860
    %vm3763 = vmand %vm3747, %vm1861
    %vm3764 = vmand %vm3748, %vm1862
    %v3765 = vadd.s32 %v2545, %v1799
    %v3766 = vadd.s32 %v2546, %v1800
    %v3767 = vadd.s32 %v2547, %v1801
    %v3768 = vadd.s32 %v2548, %v1802
    %v3769 = vadd.s32 %v2549, %v1803
    %v3770 = vadd.s32 %v2550, %v1804
    %v3771 = vadd.s32 %v2551, %v1805
    %v3772 = vadd.s32 %v2552, %v1806
    %v3773 = vadd.s32 %v2553, %v1807
    %v3774 = vadd.s32 %v2554, %v1808
    %v3775 = vadd.s32 %v2555, %v1809
    %v3776 = vadd.s32 %v2556, %v1810
    %v3777 = vadd.s32 %v2557, %v1811
    %v3778 = vadd.s32 %v2558, %v1812
    %v3779 = vadd.s32 %v2559, %v1813
    %v3780 = vadd.s32 %v2560, %v1814
    %vm3781 = vcmp.eq.s32.totalorder %v203, %v3765
    %vm3782 = vcmp.eq.s32.totalorder %v204, %v3765
    %vm3783 = vcmp.eq.s32.totalorder %v205, %v3765
    %vm3784 = vcmp.eq.s32.totalorder %v206, %v3765
    %vm3785 = vcmp.eq.s32.totalorder %v203, %v3766
    %vm3786 = vcmp.eq.s32.totalorder %v204, %v3766
    %vm3787 = vcmp.eq.s32.totalorder %v205, %v3766
    %vm3788 = vcmp.eq.s32.totalorder %v206, %v3766
    %vm3789 = vcmp.eq.s32.totalorder %v203, %v3767
    %vm3790 = vcmp.eq.s32.totalorder %v204, %v3767
    %vm3791 = vcmp.eq.s32.totalorder %v205, %v3767
    %vm3792 = vcmp.eq.s32.totalorder %v206, %v3767
    %vm3793 = vcmp.eq.s32.totalorder %v203, %v3768
    %vm3794 = vcmp.eq.s32.totalorder %v204, %v3768
    %vm3795 = vcmp.eq.s32.totalorder %v205, %v3768
    %vm3796 = vcmp.eq.s32.totalorder %v206, %v3768
    %vm3797 = vcmp.eq.s32.totalorder %v203, %v3769
    %vm3798 = vcmp.eq.s32.totalorder %v204, %v3769
    %vm3799 = vcmp.eq.s32.totalorder %v205, %v3769
    %vm3800 = vcmp.eq.s32.totalorder %v206, %v3769
    %vm3801 = vcmp.eq.s32.totalorder %v203, %v3770
    %vm3802 = vcmp.eq.s32.totalorder %v204, %v3770
    %vm3803 = vcmp.eq.s32.totalorder %v205, %v3770
    %vm3804 = vcmp.eq.s32.totalorder %v206, %v3770
    %vm3805 = vcmp.eq.s32.totalorder %v203, %v3771
    %vm3806 = vcmp.eq.s32.totalorder %v204, %v3771
    %vm3807 = vcmp.eq.s32.totalorder %v205, %v3771
    %vm3808 = vcmp.eq.s32.totalorder %v206, %v3771
    %vm3809 = vcmp.eq.s32.totalorder %v203, %v3772
    %vm3810 = vcmp.eq.s32.totalorder %v204, %v3772
    %vm3811 = vcmp.eq.s32.totalorder %v205, %v3772
    %vm3812 = vcmp.eq.s32.totalorder %v206, %v3772
    %vm3813 = vcmp.eq.s32.totalorder %v203, %v3773
    %vm3814 = vcmp.eq.s32.totalorder %v204, %v3773
    %vm3815 = vcmp.eq.s32.totalorder %v205, %v3773
    %vm3816 = vcmp.eq.s32.totalorder %v206, %v3773
    %vm3817 = vcmp.eq.s32.totalorder %v203, %v3774
    %vm3818 = vcmp.eq.s32.totalorder %v204, %v3774
    %vm3819 = vcmp.eq.s32.totalorder %v205, %v3774
    %vm3820 = vcmp.eq.s32.totalorder %v206, %v3774
    %vm3821 = vcmp.eq.s32.totalorder %v203, %v3775
    %vm3822 = vcmp.eq.s32.totalorder %v204, %v3775
    %vm3823 = vcmp.eq.s32.totalorder %v205, %v3775
    %vm3824 = vcmp.eq.s32.totalorder %v206, %v3775
    %vm3825 = vcmp.eq.s32.totalorder %v203, %v3776
    %vm3826 = vcmp.eq.s32.totalorder %v204, %v3776
    %vm3827 = vcmp.eq.s32.totalorder %v205, %v3776
    %vm3828 = vcmp.eq.s32.totalorder %v206, %v3776
    %vm3829 = vcmp.eq.s32.totalorder %v203, %v3777
    %vm3830 = vcmp.eq.s32.totalorder %v204, %v3777
    %vm3831 = vcmp.eq.s32.totalorder %v205, %v3777
    %vm3832 = vcmp.eq.s32.totalorder %v206, %v3777
    %vm3833 = vcmp.eq.s32.totalorder %v203, %v3778
    %vm3834 = vcmp.eq.s32.totalorder %v204, %v3778
    %vm3835 = vcmp.eq.s32.totalorder %v205, %v3778
    %vm3836 = vcmp.eq.s32.totalorder %v206, %v3778
    %vm3837 = vcmp.eq.s32.totalorder %v203, %v3779
    %vm3838 = vcmp.eq.s32.totalorder %v204, %v3779
    %vm3839 = vcmp.eq.s32.totalorder %v205, %v3779
    %vm3840 = vcmp.eq.s32.totalorder %v206, %v3779
    %vm3841 = vcmp.eq.s32.totalorder %v203, %v3780
    %vm3842 = vcmp.eq.s32.totalorder %v204, %v3780
    %vm3843 = vcmp.eq.s32.totalorder %v205, %v3780
    %vm3844 = vcmp.eq.s32.totalorder %v206, %v3780
    %v3845 = vsel %vm3749, 1, 0
    %v3846 = vsel %vm3750, 1, 0
    %v3847 = vsel %vm3751, 1, 0
    %v3848 = vsel %vm3752, 1, 0
    %v3849 = vsel %vm3753, 1, 0
    %v3850 = vsel %vm3754, 1, 0
    %v3851 = vsel %vm3755, 1, 0
    %v3852 = vsel %vm3756, 1, 0
    %v3853 = vsel %vm3757, 1, 0
    %v3854 = vsel %vm3758, 1, 0
    %v3855 = vsel %vm3759, 1, 0
    %v3856 = vsel %vm3760, 1, 0
    %v3857 = vsel %vm3761, 1, 0
    %v3858 = vsel %vm3762, 1, 0
    %v3859 = vsel %vm3763, 1, 0
    %v3860 = vsel %vm3764, 1, 0
    %vm3861 = vcmp.eq.s32.totalorder %v3845, 1
    %vm3862 = vcmp.eq.s32.totalorder %v3846, 1
    %vm3863 = vcmp.eq.s32.totalorder %v3847, 1
    %vm3864 = vcmp.eq.s32.totalorder %v3848, 1
    %vm3865 = vcmp.eq.s32.totalorder %v3849, 1
    %vm3866 = vcmp.eq.s32.totalorder %v3850, 1
    %vm3867 = vcmp.eq.s32.totalorder %v3851, 1
    %vm3868 = vcmp.eq.s32.totalorder %v3852, 1
    %vm3869 = vcmp.eq.s32.totalorder %v3853, 1
    %vm3870 = vcmp.eq.s32.totalorder %v3854, 1
    %vm3871 = vcmp.eq.s32.totalorder %v3855, 1
    %vm3872 = vcmp.eq.s32.totalorder %v3856, 1
    %vm3873 = vcmp.eq.s32.totalorder %v3857, 1
    %vm3874 = vcmp.eq.s32.totalorder %v3858, 1
    %vm3875 = vcmp.eq.s32.totalorder %v3859, 1
    %vm3876 = vcmp.eq.s32.totalorder %v3860, 1
    %vm3877 = vmand %vm3861, %vm3781
    %vm3878 = vmand %vm3861, %vm3782
    %vm3879 = vmand %vm3861, %vm3783
    %vm3880 = vmand %vm3861, %vm3784
    %vm3881 = vmand %vm3862, %vm3785
    %vm3882 = vmand %vm3862, %vm3786
    %vm3883 = vmand %vm3862, %vm3787
    %vm3884 = vmand %vm3862, %vm3788
    %vm3885 = vmand %vm3863, %vm3789
    %vm3886 = vmand %vm3863, %vm3790
    %vm3887 = vmand %vm3863, %vm3791
    %vm3888 = vmand %vm3863, %vm3792
    %vm3889 = vmand %vm3864, %vm3793
    %vm3890 = vmand %vm3864, %vm3794
    %vm3891 = vmand %vm3864, %vm3795
    %vm3892 = vmand %vm3864, %vm3796
    %vm3893 = vmand %vm3865, %vm3797
    %vm3894 = vmand %vm3865, %vm3798
    %vm3895 = vmand %vm3865, %vm3799
    %vm3896 = vmand %vm3865, %vm3800
    %vm3897 = vmand %vm3866, %vm3801
    %vm3898 = vmand %vm3866, %vm3802
    %vm3899 = vmand %vm3866, %vm3803
    %vm3900 = vmand %vm3866, %vm3804
    %vm3901 = vmand %vm3867, %vm3805
    %vm3902 = vmand %vm3867, %vm3806
    %vm3903 = vmand %vm3867, %vm3807
    %vm3904 = vmand %vm3867, %vm3808
    %vm3905 = vmand %vm3868, %vm3809
    %vm3906 = vmand %vm3868, %vm3810
    %vm3907 = vmand %vm3868, %vm3811
    %vm3908 = vmand %vm3868, %vm3812
    %vm3909 = vmand %vm3869, %vm3813
    %vm3910 = vmand %vm3869, %vm3814
    %vm3911 = vmand %vm3869, %vm3815
    %vm3912 = vmand %vm3869, %vm3816
    %vm3913 = vmand %vm3870, %vm3817
    %vm3914 = vmand %vm3870, %vm3818
    %vm3915 = vmand %vm3870, %vm3819
    %vm3916 = vmand %vm3870, %vm3820
    %vm3917 = vmand %vm3871, %vm3821
    %vm3918 = vmand %vm3871, %vm3822
    %vm3919 = vmand %vm3871, %vm3823
    %vm3920 = vmand %vm3871, %vm3824
    %vm3921 = vmand %vm3872, %vm3825
    %vm3922 = vmand %vm3872, %vm3826
    %vm3923 = vmand %vm3872, %vm3827
    %vm3924 = vmand %vm3872, %vm3828
    %vm3925 = vmand %vm3873, %vm3829
    %vm3926 = vmand %vm3873, %vm3830
    %vm3927 = vmand %vm3873, %vm3831
    %vm3928 = vmand %vm3873, %vm3832
    %vm3929 = vmand %vm3874, %vm3833
    %vm3930 = vmand %vm3874, %vm3834
    %vm3931 = vmand %vm3874, %vm3835
    %vm3932 = vmand %vm3874, %vm3836
    %vm3933 = vmand %vm3875, %vm3837
    %vm3934 = vmand %vm3875, %vm3838
    %vm3935 = vmand %vm3875, %vm3839
    %vm3936 = vmand %vm3875, %vm3840
    %vm3937 = vmand %vm3876, %vm3841
    %vm3938 = vmand %vm3876, %vm3842
    %vm3939 = vmand %vm3876, %vm3843
    %vm3940 = vmand %vm3876, %vm3844
    %v3941 = vsel %vm3877, 1.0, 0.0
    %v3942 = vsel %vm3878, 1.0, 0.0
    %v3943 = vsel %vm3879, 1.0, 0.0
    %v3944 = vsel %vm3880, 1.0, 0.0
    %v3945 = vsel %vm3881, 1.0, 0.0
    %v3946 = vsel %vm3882, 1.0, 0.0
    %v3947 = vsel %vm3883, 1.0, 0.0
    %v3948 = vsel %vm3884, 1.0, 0.0
    %v3949 = vsel %vm3885, 1.0, 0.0
    %v3950 = vsel %vm3886, 1.0, 0.0
    %v3951 = vsel %vm3887, 1.0, 0.0
    %v3952 = vsel %vm3888, 1.0, 0.0
    %v3953 = vsel %vm3889, 1.0, 0.0
    %v3954 = vsel %vm3890, 1.0, 0.0
    %v3955 = vsel %vm3891, 1.0, 0.0
    %v3956 = vsel %vm3892, 1.0, 0.0
    %v3957 = vsel %vm3893, 1.0, 0.0
    %v3958 = vsel %vm3894, 1.0, 0.0
    %v3959 = vsel %vm3895, 1.0, 0.0
    %v3960 = vsel %vm3896, 1.0, 0.0
    %v3961 = vsel %vm3897, 1.0, 0.0
    %v3962 = vsel %vm3898, 1.0, 0.0
    %v3963 = vsel %vm3899, 1.0, 0.0
    %v3964 = vsel %vm3900, 1.0, 0.0
    %v3965 = vsel %vm3901, 1.0, 0.0
    %v3966 = vsel %vm3902, 1.0, 0.0
    %v3967 = vsel %vm3903, 1.0, 0.0
    %v3968 = vsel %vm3904, 1.0, 0.0
    %v3969 = vsel %vm3905, 1.0, 0.0
    %v3970 = vsel %vm3906, 1.0, 0.0
    %v3971 = vsel %vm3907, 1.0, 0.0
    %v3972 = vsel %vm3908, 1.0, 0.0
    %v3973 = vsel %vm3909, 1.0, 0.0
    %v3974 = vsel %vm3910, 1.0, 0.0
    %v3975 = vsel %vm3911, 1.0, 0.0
    %v3976 = vsel %vm3912, 1.0, 0.0
    %v3977 = vsel %vm3913, 1.0, 0.0
    %v3978 = vsel %vm3914, 1.0, 0.0
    %v3979 = vsel %vm3915, 1.0, 0.0
    %v3980 = vsel %vm3916, 1.0, 0.0
    %v3981 = vsel %vm3917, 1.0, 0.0
    %v3982 = vsel %vm3918, 1.0, 0.0
    %v3983 = vsel %vm3919, 1.0, 0.0
    %v3984 = vsel %vm3920, 1.0, 0.0
    %v3985 = vsel %vm3921, 1.0, 0.0
    %v3986 = vsel %vm3922, 1.0, 0.0
    %v3987 = vsel %vm3923, 1.0, 0.0
    %v3988 = vsel %vm3924, 1.0, 0.0
    %v3989 = vsel %vm3925, 1.0, 0.0
    %v3990 = vsel %vm3926, 1.0, 0.0
    %v3991 = vsel %vm3927, 1.0, 0.0
    %v3992 = vsel %vm3928, 1.0, 0.0
    %v3993 = vsel %vm3929, 1.0, 0.0
    %v3994 = vsel %vm3930, 1.0, 0.0
    %v3995 = vsel %vm3931, 1.0, 0.0
    %v3996 = vsel %vm3932, 1.0, 0.0
    %v3997 = vsel %vm3933, 1.0, 0.0
    %v3998 = vsel %vm3934, 1.0, 0.0
    %v3999 = vsel %vm3935, 1.0, 0.0
    %v4000 = vsel %vm3936, 1.0, 0.0
    %v4001 = vsel %vm3937, 1.0, 0.0
    %v4002 = vsel %vm3938, 1.0, 0.0
    %v4003 = vsel %vm3939, 1.0, 0.0
    %v4004 = vsel %vm3940, 1.0, 0.0
    %v4005 = vpack.c.bf16 %v3945, %v3941
    %v4006 = vpack.c.bf16 %v3946, %v3942
    %v4007 = vpack.c.bf16 %v3947, %v3943
    %v4008 = vpack.c.bf16 %v3948, %v3944
    %v4009 = vpack.c.bf16 %v3953, %v3949
    %v4010 = vpack.c.bf16 %v3954, %v3950
    %v4011 = vpack.c.bf16 %v3955, %v3951
    %v4012 = vpack.c.bf16 %v3956, %v3952
    %v4013 = vpack.c.bf16 %v3961, %v3957
    %v4014 = vpack.c.bf16 %v3962, %v3958
    %v4015 = vpack.c.bf16 %v3963, %v3959
    %v4016 = vpack.c.bf16 %v3964, %v3960
    %v4017 = vpack.c.bf16 %v3969, %v3965
    %v4018 = vpack.c.bf16 %v3970, %v3966
    %v4019 = vpack.c.bf16 %v3971, %v3967
    %v4020 = vpack.c.bf16 %v3972, %v3968
    %v4021 = vpack.c.bf16 %v3977, %v3973
    %v4022 = vpack.c.bf16 %v3978, %v3974
    %v4023 = vpack.c.bf16 %v3979, %v3975
    %v4024 = vpack.c.bf16 %v3980, %v3976
    %v4025 = vpack.c.bf16 %v3985, %v3981
    %v4026 = vpack.c.bf16 %v3986, %v3982
    %v4027 = vpack.c.bf16 %v3987, %v3983
    %v4028 = vpack.c.bf16 %v3988, %v3984
    %v4029 = vpack.c.bf16 %v3993, %v3989
    %v4030 = vpack.c.bf16 %v3994, %v3990
    %v4031 = vpack.c.bf16 %v3995, %v3991
    %v4032 = vpack.c.bf16 %v3996, %v3992
    %v4033 = vpack.c.bf16 %v4001, %v3997
    %v4034 = vpack.c.bf16 %v4002, %v3998
    %v4035 = vpack.c.bf16 %v4003, %v3999
    %v4036 = vpack.c.bf16 %v4004, %v4000
    %4037 = vmatpush.bf16.msra.mxu0 %v838
    %4038 = vmatpush.bf16.msra.mxu0 %v837
    %4039 = vmatpush.bf16.msra.mxu0 %v836
    %4040 = vmatpush.bf16.msra.mxu0 %v835
    %4041 = vmatpush.bf16.msra.mxu0 %v834
    %4042 = vmatpush.bf16.msra.mxu0 %v833
    %4043 = vmatpush.bf16.msra.mxu0 %v832
    %4044 = vmatpush.bf16.msra.mxu0 %v831
    %4045 = vmatmul.bf16.gmra.mxu0 %v4005
    %v4046 = vpop.f32.mrf.mxu0
    %v4047 = vadd.f32 0.0, %v4046
    %v4048 = vpop.f32.mrf.mxu0
    %v4049 = vadd.f32 0.0, %v4048
    %4050 = vmatmul.bf16.gmra.mxu0 %v4009
    %v4051 = vpop.f32.mrf.mxu0
    %v4052 = vadd.f32 0.0, %v4051
    %v4053 = vpop.f32.mrf.mxu0
    %v4054 = vadd.f32 0.0, %v4053
    %4055 = vmatmul.bf16.gmra.mxu0 %v4013
    %v4056 = vpop.f32.mrf.mxu0
    %v4057 = vadd.f32 0.0, %v4056
    %v4058 = vpop.f32.mrf.mxu0
    %v4059 = vadd.f32 0.0, %v4058
    %4060 = vmatmul.bf16.gmra.mxu0 %v4017
    %v4061 = vpop.f32.mrf.mxu0
    %v4062 = vadd.f32 0.0, %v4061
    %v4063 = vpop.f32.mrf.mxu0
    %v4064 = vadd.f32 0.0, %v4063
    %4065 = vmatmul.bf16.gmra.mxu0 %v4021
    %v4066 = vpop.f32.mrf.mxu0
    %v4067 = vadd.f32 0.0, %v4066
    %v4068 = vpop.f32.mrf.mxu0
    %v4069 = vadd.f32 0.0, %v4068
    %4070 = vmatmul.bf16.gmra.mxu0 %v4025
    %v4071 = vpop.f32.mrf.mxu0
    %v4072 = vadd.f32 0.0, %v4071
    %v4073 = vpop.f32.mrf.mxu0
    %v4074 = vadd.f32 0.0, %v4073
    %4075 = vmatmul.bf16.gmra.mxu0 %v4029
    %v4076 = vpop.f32.mrf.mxu0
    %v4077 = vadd.f32 0.0, %v4076
    %v4078 = vpop.f32.mrf.mxu0
    %v4079 = vadd.f32 0.0, %v4078
    %4080 = vmatmul.bf16.gmra.mxu0 %v4033
    %v4081 = vpop.f32.mrf.mxu0
    %v4082 = vadd.f32 0.0, %v4081
    %v4083 = vpop.f32.mrf.mxu0
    %v4084 = vadd.f32 0.0, %v4083
    %4085 = vdwg.mxu0
    %4086 = vmatpush.bf16.msra.mxu0 %v846
    %4087 = vmatpush.bf16.msra.mxu0 %v845
    %4088 = vmatpush.bf16.msra.mxu0 %v844
    %4089 = vmatpush.bf16.msra.mxu0 %v843
    %4090 = vmatpush.bf16.msra.mxu0 %v842
    %4091 = vmatpush.bf16.msra.mxu0 %v841
    %4092 = vmatpush.bf16.msra.mxu0 %v840
    %4093 = vmatpush.bf16.msra.mxu0 %v839
    %4094 = vmatmul.bf16.gmra.mxu0 %v4006
    %v4095 = vpop.f32.mrf.mxu0
    %v4096 = vadd.f32 %v4047, %v4095
    %v4097 = vpop.f32.mrf.mxu0
    %v4098 = vadd.f32 %v4049, %v4097
    %4099 = vmatmul.bf16.gmra.mxu0 %v4010
    %v4100 = vpop.f32.mrf.mxu0
    %v4101 = vadd.f32 %v4052, %v4100
    %v4102 = vpop.f32.mrf.mxu0
    %v4103 = vadd.f32 %v4054, %v4102
    %4104 = vmatmul.bf16.gmra.mxu0 %v4014
    %v4105 = vpop.f32.mrf.mxu0
    %v4106 = vadd.f32 %v4057, %v4105
    %v4107 = vpop.f32.mrf.mxu0
    %v4108 = vadd.f32 %v4059, %v4107
    %4109 = vmatmul.bf16.gmra.mxu0 %v4018
    %v4110 = vpop.f32.mrf.mxu0
    %v4111 = vadd.f32 %v4062, %v4110
    %v4112 = vpop.f32.mrf.mxu0
    %v4113 = vadd.f32 %v4064, %v4112
    %4114 = vmatmul.bf16.gmra.mxu0 %v4022
    %v4115 = vpop.f32.mrf.mxu0
    %v4116 = vadd.f32 %v4067, %v4115
    %v4117 = vpop.f32.mrf.mxu0
    %v4118 = vadd.f32 %v4069, %v4117
    %4119 = vmatmul.bf16.gmra.mxu0 %v4026
    %v4120 = vpop.f32.mrf.mxu0
    %v4121 = vadd.f32 %v4072, %v4120
    %v4122 = vpop.f32.mrf.mxu0
    %v4123 = vadd.f32 %v4074, %v4122
    %4124 = vmatmul.bf16.gmra.mxu0 %v4030
    %v4125 = vpop.f32.mrf.mxu0
    %v4126 = vadd.f32 %v4077, %v4125
    %v4127 = vpop.f32.mrf.mxu0
    %v4128 = vadd.f32 %v4079, %v4127
    %4129 = vmatmul.bf16.gmra.mxu0 %v4034
    %v4130 = vpop.f32.mrf.mxu0
    %v4131 = vadd.f32 %v4082, %v4130
    %v4132 = vpop.f32.mrf.mxu0
    %v4133 = vadd.f32 %v4084, %v4132
    %4134 = vdwg.mxu0
    %4135 = vmatpush.bf16.msra.mxu0 %v854
    %4136 = vmatpush.bf16.msra.mxu0 %v853
    %4137 = vmatpush.bf16.msra.mxu0 %v852
    %4138 = vmatpush.bf16.msra.mxu0 %v851
    %4139 = vmatpush.bf16.msra.mxu0 %v850
    %4140 = vmatpush.bf16.msra.mxu0 %v849
    %4141 = vmatpush.bf16.msra.mxu0 %v848
    %4142 = vmatpush.bf16.msra.mxu0 %v847
    %4143 = vmatmul.bf16.gmra.mxu0 %v4007
    %v4144 = vpop.f32.mrf.mxu0
    %v4145 = vadd.f32 %v4096, %v4144
    %v4146 = vpop.f32.mrf.mxu0
    %v4147 = vadd.f32 %v4098, %v4146
    %4148 = vmatmul.bf16.gmra.mxu0 %v4011
    %v4149 = vpop.f32.mrf.mxu0
    %v4150 = vadd.f32 %v4101, %v4149
    %v4151 = vpop.f32.mrf.mxu0
    %v4152 = vadd.f32 %v4103, %v4151
    %4153 = vmatmul.bf16.gmra.mxu0 %v4015
    %v4154 = vpop.f32.mrf.mxu0
    %v4155 = vadd.f32 %v4106, %v4154
    %v4156 = vpop.f32.mrf.mxu0
    %v4157 = vadd.f32 %v4108, %v4156
    %4158 = vmatmul.bf16.gmra.mxu0 %v4019
    %v4159 = vpop.f32.mrf.mxu0
    %v4160 = vadd.f32 %v4111, %v4159
    %v4161 = vpop.f32.mrf.mxu0
    %v4162 = vadd.f32 %v4113, %v4161
    %4163 = vmatmul.bf16.gmra.mxu0 %v4023
    %v4164 = vpop.f32.mrf.mxu0
    %v4165 = vadd.f32 %v4116, %v4164
    %v4166 = vpop.f32.mrf.mxu0
    %v4167 = vadd.f32 %v4118, %v4166
    %4168 = vmatmul.bf16.gmra.mxu0 %v4027
    %v4169 = vpop.f32.mrf.mxu0
    %v4170 = vadd.f32 %v4121, %v4169
    %v4171 = vpop.f32.mrf.mxu0
    %v4172 = vadd.f32 %v4123, %v4171
    %4173 = vmatmul.bf16.gmra.mxu0 %v4031
    %v4174 = vpop.f32.mrf.mxu0
    %v4175 = vadd.f32 %v4126, %v4174
    %v4176 = vpop.f32.mrf.mxu0
    %v4177 = vadd.f32 %v4128, %v4176
    %4178 = vmatmul.bf16.gmra.mxu0 %v4035
    %v4179 = vpop.f32.mrf.mxu0
    %v4180 = vadd.f32 %v4131, %v4179
    %v4181 = vpop.f32.mrf.mxu0
    %v4182 = vadd.f32 %v4133, %v4181
    %4183 = vdwg.mxu0
    %4184 = vmatpush.bf16.msra.mxu0 %v862
    %4185 = vmatpush.bf16.msra.mxu0 %v861
    %4186 = vmatpush.bf16.msra.mxu0 %v860
    %4187 = vmatpush.bf16.msra.mxu0 %v859
    %4188 = vmatpush.bf16.msra.mxu0 %v858
    %4189 = vmatpush.bf16.msra.mxu0 %v857
    %4190 = vmatpush.bf16.msra.mxu0 %v856
    %4191 = vmatpush.bf16.msra.mxu0 %v855
    %4192 = vmatmul.bf16.gmra.mxu0 %v4008
    %v4193 = vpop.f32.mrf.mxu0
    %v4194 = vadd.f32 %v4145, %v4193
    %v4195 = vpop.f32.mrf.mxu0
    %v4196 = vadd.f32 %v4147, %v4195
    %4197 = vmatmul.bf16.gmra.mxu0 %v4012
    %v4198 = vpop.f32.mrf.mxu0
    %v4199 = vadd.f32 %v4150, %v4198
    %v4200 = vpop.f32.mrf.mxu0
    %v4201 = vadd.f32 %v4152, %v4200
    %4202 = vmatmul.bf16.gmra.mxu0 %v4016
    %v4203 = vpop.f32.mrf.mxu0
    %v4204 = vadd.f32 %v4155, %v4203
    %v4205 = vpop.f32.mrf.mxu0
    %v4206 = vadd.f32 %v4157, %v4205
    %4207 = vmatmul.bf16.gmra.mxu0 %v4020
    %v4208 = vpop.f32.mrf.mxu0
    %v4209 = vadd.f32 %v4160, %v4208
    %v4210 = vpop.f32.mrf.mxu0
    %v4211 = vadd.f32 %v4162, %v4210
    %4212 = vmatmul.bf16.gmra.mxu0 %v4024
    %v4213 = vpop.f32.mrf.mxu0
    %v4214 = vadd.f32 %v4165, %v4213
    %v4215 = vpop.f32.mrf.mxu0
    %v4216 = vadd.f32 %v4167, %v4215
    %4217 = vmatmul.bf16.gmra.mxu0 %v4028
    %v4218 = vpop.f32.mrf.mxu0
    %v4219 = vadd.f32 %v4170, %v4218
    %v4220 = vpop.f32.mrf.mxu0
    %v4221 = vadd.f32 %v4172, %v4220
    %4222 = vmatmul.bf16.gmra.mxu0 %v4032
    %v4223 = vpop.f32.mrf.mxu0
    %v4224 = vadd.f32 %v4175, %v4223
    %v4225 = vpop.f32.mrf.mxu0
    %v4226 = vadd.f32 %v4177, %v4225
    %4227 = vmatmul.bf16.gmra.mxu0 %v4036
    %v4228 = vpop.f32.mrf.mxu0
    %v4229 = vadd.f32 %v4180, %v4228
    %v4230 = vpop.f32.mrf.mxu0
    %v4231 = vadd.f32 %v4182, %v4230
    %4232 = vdwg.mxu0
    %v4233 = vpack.c.bf16 %v4196, %v4194
    %v4234 = vpack.c.bf16 %v4201, %v4199
    %v4235 = vpack.c.bf16 %v4206, %v4204
    %v4236 = vpack.c.bf16 %v4211, %v4209
    %v4237 = vpack.c.bf16 %v4216, %v4214
    %v4238 = vpack.c.bf16 %v4221, %v4219
    %v4239 = vpack.c.bf16 %v4226, %v4224
    %v4240 = vpack.c.bf16 %v4231, %v4229
    %s4241 = scalar_lea.vmem %s1, 10
    %v4242 = vld [vmem:[%s4241] sm:$0x3]
    %v4244 = vsel %vm1642, %v4233, 0
    %v4247 = vsel %vm1642, %v4234, 0
    %v4250 = vsel %vm1642, %v4235, 0
    %v4253 = vsel %vm1642, %v4236, 0
    %v4256 = vsel %vm1642, %v4237, 0
    %v4259 = vsel %vm1642, %v4238, 0
    %v4262 = vsel %vm1642, %v4239, 0
    %v4265 = vsel %vm1642, %v4240, 0
    %v4268 = vand.u32 %v4242, %v1670
    %4270 = vmatpush.bf16.msra.mxu0 0
    %4271 = vmatpush.bf16.msra.mxu0 0
    %4272 = vmatpush.bf16.msra.mxu0 0
    %4273 = vmatpush.bf16.msra.mxu0 0
    %4274 = vmatpush.bf16.msra.mxu0 0
    %4275 = vmatpush.bf16.msra.mxu0 0
    %4276 = vmatpush.bf16.msra.mxu0 0
    %4277 = vmatpush.bf16.msra.mxu0 %v4268
    %4278 = vmatmul.bf16.gmra.mxu0 %v4244
    %v4279 = vpop.f32.mrf.mxu0
    %v4280 = vadd.f32 0.0, %v4279
    %v4281 = vpop.f32.mrf.mxu0
    %v4282 = vadd.f32 0.0, %v4281
    %4283 = vmatmul.bf16.gmra.mxu0 %v4247
    %v4284 = vpop.f32.mrf.mxu0
    %v4285 = vadd.f32 0.0, %v4284
    %v4286 = vpop.f32.mrf.mxu0
    %v4287 = vadd.f32 0.0, %v4286
    %4288 = vmatmul.bf16.gmra.mxu0 %v4250
    %v4289 = vpop.f32.mrf.mxu0
    %v4290 = vadd.f32 0.0, %v4289
    %v4291 = vpop.f32.mrf.mxu0
    %v4292 = vadd.f32 0.0, %v4291
    %4293 = vmatmul.bf16.gmra.mxu0 %v4253
    %v4294 = vpop.f32.mrf.mxu0
    %v4295 = vadd.f32 0.0, %v4294
    %v4296 = vpop.f32.mrf.mxu0
    %v4297 = vadd.f32 0.0, %v4296
    %4298 = vmatmul.bf16.gmra.mxu0 %v4256
    %v4299 = vpop.f32.mrf.mxu0
    %v4300 = vadd.f32 0.0, %v4299
    %v4301 = vpop.f32.mrf.mxu0
    %v4302 = vadd.f32 0.0, %v4301
    %4303 = vmatmul.bf16.gmra.mxu0 %v4259
    %v4304 = vpop.f32.mrf.mxu0
    %v4305 = vadd.f32 0.0, %v4304
    %v4306 = vpop.f32.mrf.mxu0
    %v4307 = vadd.f32 0.0, %v4306
    %4308 = vmatmul.bf16.gmra.mxu0 %v4262
    %v4309 = vpop.f32.mrf.mxu0
    %v4310 = vadd.f32 0.0, %v4309
    %v4311 = vpop.f32.mrf.mxu0
    %v4312 = vadd.f32 0.0, %v4311
    %4313 = vmatmul.bf16.gmra.mxu0 %v4265
    %v4314 = vpop.f32.mrf.mxu0
    %v4315 = vadd.f32 0.0, %v4314
    %v4316 = vpop.f32.mrf.mxu0
    %v4317 = vadd.f32 0.0, %v4316
    %4318 = vdwg.mxu0
    %v4319 = vadd.f32 %v3717, %v4280
    %v4320 = vadd.f32 %v3718, %v4282
    %v4321 = vadd.f32 %v3719, %v4285
    %v4322 = vadd.f32 %v3720, %v4287
    %v4323 = vadd.f32 %v3721, %v4290
    %v4324 = vadd.f32 %v3722, %v4292
    %v4325 = vadd.f32 %v3723, %v4295
    %v4326 = vadd.f32 %v3724, %v4297
    %v4327 = vadd.f32 %v3725, %v4300
    %v4328 = vadd.f32 %v3726, %v4302
    %v4329 = vadd.f32 %v3727, %v4305
    %v4330 = vadd.f32 %v3728, %v4307
    %v4331 = vadd.f32 %v3729, %v4310
    %v4332 = vadd.f32 %v3730, %v4312
    %v4333 = vadd.f32 %v3731, %v4315
    %v4334 = vadd.f32 %v3732, %v4317
    %v4335 = vadd.s32 %v223, 2
    %v4336 = vadd.s32 %v224, 2
    %v4337 = vadd.s32 %v225, 2
    %v4338 = vadd.s32 %v226, 2
    %v4339 = vadd.s32 %v227, 2
    %v4340 = vadd.s32 %v228, 2
    %v4341 = vadd.s32 %v229, 2
    %v4342 = vadd.s32 %v230, 2
    %v4343 = vadd.s32 %v231, 2
    %v4344 = vadd.s32 %v232, 2
    %v4345 = vadd.s32 %v233, 2
    %v4346 = vadd.s32 %v234, 2
    %v4347 = vadd.s32 %v235, 2
    %v4348 = vadd.s32 %v236, 2
    %v4349 = vadd.s32 %v237, 2
    %v4350 = vadd.s32 %v238, 2
    %vm4351 = vcmp.ge.s32.totalorder %v4335, 0
    %vm4352 = vcmp.ge.s32.totalorder %v4336, 0
    %vm4353 = vcmp.ge.s32.totalorder %v4337, 0
    %vm4354 = vcmp.ge.s32.totalorder %v4338, 0
    %vm4355 = vcmp.ge.s32.totalorder %v4339, 0
    %vm4356 = vcmp.ge.s32.totalorder %v4340, 0
    %vm4357 = vcmp.ge.s32.totalorder %v4341, 0
    %vm4358 = vcmp.ge.s32.totalorder %v4342, 0
    %vm4359 = vcmp.ge.s32.totalorder %v4343, 0
    %vm4360 = vcmp.ge.s32.totalorder %v4344, 0
    %vm4361 = vcmp.ge.s32.totalorder %v4345, 0
    %vm4362 = vcmp.ge.s32.totalorder %v4346, 0
    %vm4363 = vcmp.ge.s32.totalorder %v4347, 0
    %vm4364 = vcmp.ge.s32.totalorder %v4348, 0
    %vm4365 = vcmp.ge.s32.totalorder %v4349, 0
    %vm4366 = vcmp.ge.s32.totalorder %v4350, 0
    %vm4367 = vcmp.lt.s32.totalorder %v4335, 16
    %vm4368 = vcmp.lt.s32.totalorder %v4336, 16
    %vm4369 = vcmp.lt.s32.totalorder %v4337, 16
    %vm4370 = vcmp.lt.s32.totalorder %v4338, 16
    %vm4371 = vcmp.lt.s32.totalorder %v4339, 16
    %vm4372 = vcmp.lt.s32.totalorder %v4340, 16
    %vm4373 = vcmp.lt.s32.totalorder %v4341, 16
    %vm4374 = vcmp.lt.s32.totalorder %v4342, 16
    %vm4375 = vcmp.lt.s32.totalorder %v4343, 16
    %vm4376 = vcmp.lt.s32.totalorder %v4344, 16
    %vm4377 = vcmp.lt.s32.totalorder %v4345, 16
    %vm4378 = vcmp.lt.s32.totalorder %v4346, 16
    %vm4379 = vcmp.lt.s32.totalorder %v4347, 16
    %vm4380 = vcmp.lt.s32.totalorder %v4348, 16
    %vm4381 = vcmp.lt.s32.totalorder %v4349, 16
    %vm4382 = vcmp.lt.s32.totalorder %v4350, 16
    %vm4383 = vmand %vm4351, %vm4367
    %vm4384 = vmand %vm4352, %vm4368
    %vm4385 = vmand %vm4353, %vm4369
    %vm4386 = vmand %vm4354, %vm4370
    %vm4387 = vmand %vm4355, %vm4371
    %vm4388 = vmand %vm4356, %vm4372
    %vm4389 = vmand %vm4357, %vm4373
    %vm4390 = vmand %vm4358, %vm4374
    %vm4391 = vmand %vm4359, %vm4375
    %vm4392 = vmand %vm4360, %vm4376
    %vm4393 = vmand %vm4361, %vm4377
    %vm4394 = vmand %vm4362, %vm4378
    %vm4395 = vmand %vm4363, %vm4379
    %vm4396 = vmand %vm4364, %vm4380
    %vm4397 = vmand %vm4365, %vm4381
    %vm4398 = vmand %vm4366, %vm4382
    %vm4399 = vmand %vm4383, %vm319
    %vm4400 = vmand %vm4384, %vm320
    %vm4401 = vmand %vm4385, %vm321
    %vm4402 = vmand %vm4386, %vm322
    %vm4403 = vmand %vm4387, %vm323
    %vm4404 = vmand %vm4388, %vm324
    %vm4405 = vmand %vm4389, %vm325
    %vm4406 = vmand %vm4390, %vm326
    %vm4407 = vmand %vm4391, %vm327
    %vm4408 = vmand %vm4392, %vm328
    %vm4409 = vmand %vm4393, %vm329
    %vm4410 = vmand %vm4394, %vm330
    %vm4411 = vmand %vm4395, %vm331
    %vm4412 = vmand %vm4396, %vm332
    %vm4413 = vmand %vm4397, %vm333
    %vm4414 = vmand %vm4398, %vm334
    %vm4415 = vmand %vm4399, %vm351
    %vm4416 = vmand %vm4400, %vm352
    %vm4417 = vmand %vm4401, %vm353
    %vm4418 = vmand %vm4402, %vm354
    %vm4419 = vmand %vm4403, %vm355
    %vm4420 = vmand %vm4404, %vm356
    %vm4421 = vmand %vm4405, %vm357
    %vm4422 = vmand %vm4406, %vm358
    %vm4423 = vmand %vm4407, %vm359
    %vm4424 = vmand %vm4408, %vm360
    %vm4425 = vmand %vm4409, %vm361
    %vm4426 = vmand %vm4410, %vm362
    %vm4427 = vmand %vm4411, %vm363
    %vm4428 = vmand %vm4412, %vm364
    %vm4429 = vmand %vm4413, %vm365
    %vm4430 = vmand %vm4414, %vm366
    %v4431 = vmul.u32 %v4335, 16
    %v4432 = vmul.u32 %v4336, 16
    %v4433 = vmul.u32 %v4337, 16
    %v4434 = vmul.u32 %v4338, 16
    %v4435 = vmul.u32 %v4339, 16
    %v4436 = vmul.u32 %v4340, 16
    %v4437 = vmul.u32 %v4341, 16
    %v4438 = vmul.u32 %v4342, 16
    %v4439 = vmul.u32 %v4343, 16
    %v4440 = vmul.u32 %v4344, 16
    %v4441 = vmul.u32 %v4345, 16
    %v4442 = vmul.u32 %v4346, 16
    %v4443 = vmul.u32 %v4347, 16
    %v4444 = vmul.u32 %v4348, 16
    %v4445 = vmul.u32 %v4349, 16
    %v4446 = vmul.u32 %v4350, 16
    %v4447 = vadd.s32 %v383, %v4431
    %v4448 = vadd.s32 %v384, %v4432
    %v4449 = vadd.s32 %v385, %v4433
    %v4450 = vadd.s32 %v386, %v4434
    %v4451 = vadd.s32 %v387, %v4435
    %v4452 = vadd.s32 %v388, %v4436
    %v4453 = vadd.s32 %v389, %v4437
    %v4454 = vadd.s32 %v390, %v4438
    %v4455 = vadd.s32 %v391, %v4439
    %v4456 = vadd.s32 %v392, %v4440
    %v4457 = vadd.s32 %v393, %v4441
    %v4458 = vadd.s32 %v394, %v4442
    %v4459 = vadd.s32 %v395, %v4443
    %v4460 = vadd.s32 %v396, %v4444
    %v4461 = vadd.s32 %v397, %v4445
    %v4462 = vadd.s32 %v398, %v4446
    %v4463 = vadd.s32 %v4447, %v255
    %v4464 = vadd.s32 %v4448, %v256
    %v4465 = vadd.s32 %v4449, %v257
    %v4466 = vadd.s32 %v4450, %v258
    %v4467 = vadd.s32 %v4451, %v259
    %v4468 = vadd.s32 %v4452, %v260
    %v4469 = vadd.s32 %v4453, %v261
    %v4470 = vadd.s32 %v4454, %v262
    %v4471 = vadd.s32 %v4455, %v263
    %v4472 = vadd.s32 %v4456, %v264
    %v4473 = vadd.s32 %v4457, %v265
    %v4474 = vadd.s32 %v4458, %v266
    %v4475 = vadd.s32 %v4459, %v267
    %v4476 = vadd.s32 %v4460, %v268
    %v4477 = vadd.s32 %v4461, %v269
    %v4478 = vadd.s32 %v4462, %v270
    %vm4479 = vcmp.eq.s32.totalorder %v203, %v4463
    %vm4480 = vcmp.eq.s32.totalorder %v204, %v4463
    %vm4481 = vcmp.eq.s32.totalorder %v205, %v4463
    %vm4482 = vcmp.eq.s32.totalorder %v206, %v4463
    %vm4483 = vcmp.eq.s32.totalorder %v203, %v4464
    %vm4484 = vcmp.eq.s32.totalorder %v204, %v4464
    %vm4485 = vcmp.eq.s32.totalorder %v205, %v4464
    %vm4486 = vcmp.eq.s32.totalorder %v206, %v4464
    %vm4487 = vcmp.eq.s32.totalorder %v203, %v4465
    %vm4488 = vcmp.eq.s32.totalorder %v204, %v4465
    %vm4489 = vcmp.eq.s32.totalorder %v205, %v4465
    %vm4490 = vcmp.eq.s32.totalorder %v206, %v4465
    %vm4491 = vcmp.eq.s32.totalorder %v203, %v4466
    %vm4492 = vcmp.eq.s32.totalorder %v204, %v4466
    %vm4493 = vcmp.eq.s32.totalorder %v205, %v4466
    %vm4494 = vcmp.eq.s32.totalorder %v206, %v4466
    %vm4495 = vcmp.eq.s32.totalorder %v203, %v4467
    %vm4496 = vcmp.eq.s32.totalorder %v204, %v4467
    %vm4497 = vcmp.eq.s32.totalorder %v205, %v4467
    %vm4498 = vcmp.eq.s32.totalorder %v206, %v4467
    %vm4499 = vcmp.eq.s32.totalorder %v203, %v4468
    %vm4500 = vcmp.eq.s32.totalorder %v204, %v4468
    %vm4501 = vcmp.eq.s32.totalorder %v205, %v4468
    %vm4502 = vcmp.eq.s32.totalorder %v206, %v4468
    %vm4503 = vcmp.eq.s32.totalorder %v203, %v4469
    %vm4504 = vcmp.eq.s32.totalorder %v204, %v4469
    %vm4505 = vcmp.eq.s32.totalorder %v205, %v4469
    %vm4506 = vcmp.eq.s32.totalorder %v206, %v4469
    %vm4507 = vcmp.eq.s32.totalorder %v203, %v4470
    %vm4508 = vcmp.eq.s32.totalorder %v204, %v4470
    %vm4509 = vcmp.eq.s32.totalorder %v205, %v4470
    %vm4510 = vcmp.eq.s32.totalorder %v206, %v4470
    %vm4511 = vcmp.eq.s32.totalorder %v203, %v4471
    %vm4512 = vcmp.eq.s32.totalorder %v204, %v4471
    %vm4513 = vcmp.eq.s32.totalorder %v205, %v4471
    %vm4514 = vcmp.eq.s32.totalorder %v206, %v4471
    %vm4515 = vcmp.eq.s32.totalorder %v203, %v4472
    %vm4516 = vcmp.eq.s32.totalorder %v204, %v4472
    %vm4517 = vcmp.eq.s32.totalorder %v205, %v4472
    %vm4518 = vcmp.eq.s32.totalorder %v206, %v4472
    %vm4519 = vcmp.eq.s32.totalorder %v203, %v4473
    %vm4520 = vcmp.eq.s32.totalorder %v204, %v4473
    %vm4521 = vcmp.eq.s32.totalorder %v205, %v4473
    %vm4522 = vcmp.eq.s32.totalorder %v206, %v4473
    %vm4523 = vcmp.eq.s32.totalorder %v203, %v4474
    %vm4524 = vcmp.eq.s32.totalorder %v204, %v4474
    %vm4525 = vcmp.eq.s32.totalorder %v205, %v4474
    %vm4526 = vcmp.eq.s32.totalorder %v206, %v4474
    %vm4527 = vcmp.eq.s32.totalorder %v203, %v4475
    %vm4528 = vcmp.eq.s32.totalorder %v204, %v4475
    %vm4529 = vcmp.eq.s32.totalorder %v205, %v4475
    %vm4530 = vcmp.eq.s32.totalorder %v206, %v4475
    %vm4531 = vcmp.eq.s32.totalorder %v203, %v4476
    %vm4532 = vcmp.eq.s32.totalorder %v204, %v4476
    %vm4533 = vcmp.eq.s32.totalorder %v205, %v4476
    %vm4534 = vcmp.eq.s32.totalorder %v206, %v4476
    %vm4535 = vcmp.eq.s32.totalorder %v203, %v4477
    %vm4536 = vcmp.eq.s32.totalorder %v204, %v4477
    %vm4537 = vcmp.eq.s32.totalorder %v205, %v4477
    %vm4538 = vcmp.eq.s32.totalorder %v206, %v4477
    %vm4539 = vcmp.eq.s32.totalorder %v203, %v4478
    %vm4540 = vcmp.eq.s32.totalorder %v204, %v4478
    %vm4541 = vcmp.eq.s32.totalorder %v205, %v4478
    %vm4542 = vcmp.eq.s32.totalorder %v206, %v4478
    %v4543 = vsel %vm4415, 1, 0
    %v4544 = vsel %vm4416, 1, 0
    %v4545 = vsel %vm4417, 1, 0
    %v4546 = vsel %vm4418, 1, 0
    %v4547 = vsel %vm4419, 1, 0
    %v4548 = vsel %vm4420, 1, 0
    %v4549 = vsel %vm4421, 1, 0
    %v4550 = vsel %vm4422, 1, 0
    %v4551 = vsel %vm4423, 1, 0
    %v4552 = vsel %vm4424, 1, 0
    %v4553 = vsel %vm4425, 1, 0
    %v4554 = vsel %vm4426, 1, 0
    %v4555 = vsel %vm4427, 1, 0
    %v4556 = vsel %vm4428, 1, 0
    %v4557 = vsel %vm4429, 1, 0
    %v4558 = vsel %vm4430, 1, 0
    %vm4559 = vcmp.eq.s32.totalorder %v4543, 1
    %vm4560 = vcmp.eq.s32.totalorder %v4544, 1
    %vm4561 = vcmp.eq.s32.totalorder %v4545, 1
    %vm4562 = vcmp.eq.s32.totalorder %v4546, 1
    %vm4563 = vcmp.eq.s32.totalorder %v4547, 1
    %vm4564 = vcmp.eq.s32.totalorder %v4548, 1
    %vm4565 = vcmp.eq.s32.totalorder %v4549, 1
    %vm4566 = vcmp.eq.s32.totalorder %v4550, 1
    %vm4567 = vcmp.eq.s32.totalorder %v4551, 1
    %vm4568 = vcmp.eq.s32.totalorder %v4552, 1
    %vm4569 = vcmp.eq.s32.totalorder %v4553, 1
    %vm4570 = vcmp.eq.s32.totalorder %v4554, 1
    %vm4571 = vcmp.eq.s32.totalorder %v4555, 1
    %vm4572 = vcmp.eq.s32.totalorder %v4556, 1
    %vm4573 = vcmp.eq.s32.totalorder %v4557, 1
    %vm4574 = vcmp.eq.s32.totalorder %v4558, 1
    %vm4575 = vmand %vm4559, %vm4479
    %vm4576 = vmand %vm4559, %vm4480
    %vm4577 = vmand %vm4559, %vm4481
    %vm4578 = vmand %vm4559, %vm4482
    %vm4579 = vmand %vm4560, %vm4483
    %vm4580 = vmand %vm4560, %vm4484
    %vm4581 = vmand %vm4560, %vm4485
    %vm4582 = vmand %vm4560, %vm4486
    %vm4583 = vmand %vm4561, %vm4487
    %vm4584 = vmand %vm4561, %vm4488
    %vm4585 = vmand %vm4561, %vm4489
    %vm4586 = vmand %vm4561, %vm4490
    %vm4587 = vmand %vm4562, %vm4491
    %vm4588 = vmand %vm4562, %vm4492
    %vm4589 = vmand %vm4562, %vm4493
    %vm4590 = vmand %vm4562, %vm4494
    %vm4591 = vmand %vm4563, %vm4495
    %vm4592 = vmand %vm4563, %vm4496
    %vm4593 = vmand %vm4563, %vm4497
    %vm4594 = vmand %vm4563, %vm4498
    %vm4595 = vmand %vm4564, %vm4499
    %vm4596 = vmand %vm4564, %vm4500
    %vm4597 = vmand %vm4564, %vm4501
    %vm4598 = vmand %vm4564, %vm4502
    %vm4599 = vmand %vm4565, %vm4503
    %vm4600 = vmand %vm4565, %vm4504
    %vm4601 = vmand %vm4565, %vm4505
    %vm4602 = vmand %vm4565, %vm4506
    %vm4603 = vmand %vm4566, %vm4507
    %vm4604 = vmand %vm4566, %vm4508
    %vm4605 = vmand %vm4566, %vm4509
    %vm4606 = vmand %vm4566, %vm4510
    %vm4607 = vmand %vm4567, %vm4511
    %vm4608 = vmand %vm4567, %vm4512
    %vm4609 = vmand %vm4567, %vm4513
    %vm4610 = vmand %vm4567, %vm4514
    %vm4611 = vmand %vm4568, %vm4515
    %vm4612 = vmand %vm4568, %vm4516
    %vm4613 = vmand %vm4568, %vm4517
    %vm4614 = vmand %vm4568, %vm4518
    %vm4615 = vmand %vm4569, %vm4519
    %vm4616 = vmand %vm4569, %vm4520
    %vm4617 = vmand %vm4569, %vm4521
    %vm4618 = vmand %vm4569, %vm4522
    %vm4619 = vmand %vm4570, %vm4523
    %vm4620 = vmand %vm4570, %vm4524
    %vm4621 = vmand %vm4570, %vm4525
    %vm4622 = vmand %vm4570, %vm4526
    %vm4623 = vmand %vm4571, %vm4527
    %vm4624 = vmand %vm4571, %vm4528
    %vm4625 = vmand %vm4571, %vm4529
    %vm4626 = vmand %vm4571, %vm4530
    %vm4627 = vmand %vm4572, %vm4531
    %vm4628 = vmand %vm4572, %vm4532
    %vm4629 = vmand %vm4572, %vm4533
    %vm4630 = vmand %vm4572, %vm4534
    %vm4631 = vmand %vm4573, %vm4535
    %vm4632 = vmand %vm4573, %vm4536
    %vm4633 = vmand %vm4573, %vm4537
    %vm4634 = vmand %vm4573, %vm4538
    %vm4635 = vmand %vm4574, %vm4539
    %vm4636 = vmand %vm4574, %vm4540
    %vm4637 = vmand %vm4574, %vm4541
    %vm4638 = vmand %vm4574, %vm4542
    %v4639 = vsel %vm4575, 1.0, 0.0
    %v4640 = vsel %vm4576, 1.0, 0.0
    %v4641 = vsel %vm4577, 1.0, 0.0
    %v4642 = vsel %vm4578, 1.0, 0.0
    %v4643 = vsel %vm4579, 1.0, 0.0
    %v4644 = vsel %vm4580, 1.0, 0.0
    %v4645 = vsel %vm4581, 1.0, 0.0
    %v4646 = vsel %vm4582, 1.0, 0.0
    %v4647 = vsel %vm4583, 1.0, 0.0
    %v4648 = vsel %vm4584, 1.0, 0.0
    %v4649 = vsel %vm4585, 1.0, 0.0
    %v4650 = vsel %vm4586, 1.0, 0.0
    %v4651 = vsel %vm4587, 1.0, 0.0
    %v4652 = vsel %vm4588, 1.0, 0.0
    %v4653 = vsel %vm4589, 1.0, 0.0
    %v4654 = vsel %vm4590, 1.0, 0.0
    %v4655 = vsel %vm4591, 1.0, 0.0
    %v4656 = vsel %vm4592, 1.0, 0.0
    %v4657 = vsel %vm4593, 1.0, 0.0
    %v4658 = vsel %vm4594, 1.0, 0.0
    %v4659 = vsel %vm4595, 1.0, 0.0
    %v4660 = vsel %vm4596, 1.0, 0.0
    %v4661 = vsel %vm4597, 1.0, 0.0
    %v4662 = vsel %vm4598, 1.0, 0.0
    %v4663 = vsel %vm4599, 1.0, 0.0
    %v4664 = vsel %vm4600, 1.0, 0.0
    %v4665 = vsel %vm4601, 1.0, 0.0
    %v4666 = vsel %vm4602, 1.0, 0.0
    %v4667 = vsel %vm4603, 1.0, 0.0
    %v4668 = vsel %vm4604, 1.0, 0.0
    %v4669 = vsel %vm4605, 1.0, 0.0
    %v4670 = vsel %vm4606, 1.0, 0.0
    %v4671 = vsel %vm4607, 1.0, 0.0
    %v4672 = vsel %vm4608, 1.0, 0.0
    %v4673 = vsel %vm4609, 1.0, 0.0
    %v4674 = vsel %vm4610, 1.0, 0.0
    %v4675 = vsel %vm4611, 1.0, 0.0
    %v4676 = vsel %vm4612, 1.0, 0.0
    %v4677 = vsel %vm4613, 1.0, 0.0
    %v4678 = vsel %vm4614, 1.0, 0.0
    %v4679 = vsel %vm4615, 1.0, 0.0
    %v4680 = vsel %vm4616, 1.0, 0.0
    %v4681 = vsel %vm4617, 1.0, 0.0
    %v4682 = vsel %vm4618, 1.0, 0.0
    %v4683 = vsel %vm4619, 1.0, 0.0
    %v4684 = vsel %vm4620, 1.0, 0.0
    %v4685 = vsel %vm4621, 1.0, 0.0
    %v4686 = vsel %vm4622, 1.0, 0.0
    %v4687 = vsel %vm4623, 1.0, 0.0
    %v4688 = vsel %vm4624, 1.0, 0.0
    %v4689 = vsel %vm4625, 1.0, 0.0
    %v4690 = vsel %vm4626, 1.0, 0.0
    %v4691 = vsel %vm4627, 1.0, 0.0
    %v4692 = vsel %vm4628, 1.0, 0.0
    %v4693 = vsel %vm4629, 1.0, 0.0
    %v4694 = vsel %vm4630, 1.0, 0.0
    %v4695 = vsel %vm4631, 1.0, 0.0
    %v4696 = vsel %vm4632, 1.0, 0.0
    %v4697 = vsel %vm4633, 1.0, 0.0
    %v4698 = vsel %vm4634, 1.0, 0.0
    %v4699 = vsel %vm4635, 1.0, 0.0
    %v4700 = vsel %vm4636, 1.0, 0.0
    %v4701 = vsel %vm4637, 1.0, 0.0
    %v4702 = vsel %vm4638, 1.0, 0.0
    %v4703 = vpack.c.bf16 %v4643, %v4639
    %v4704 = vpack.c.bf16 %v4644, %v4640
    %v4705 = vpack.c.bf16 %v4645, %v4641
    %v4706 = vpack.c.bf16 %v4646, %v4642
    %v4707 = vpack.c.bf16 %v4651, %v4647
    %v4708 = vpack.c.bf16 %v4652, %v4648
    %v4709 = vpack.c.bf16 %v4653, %v4649
    %v4710 = vpack.c.bf16 %v4654, %v4650
    %v4711 = vpack.c.bf16 %v4659, %v4655
    %v4712 = vpack.c.bf16 %v4660, %v4656
    %v4713 = vpack.c.bf16 %v4661, %v4657
    %v4714 = vpack.c.bf16 %v4662, %v4658
    %v4715 = vpack.c.bf16 %v4667, %v4663
    %v4716 = vpack.c.bf16 %v4668, %v4664
    %v4717 = vpack.c.bf16 %v4669, %v4665
    %v4718 = vpack.c.bf16 %v4670, %v4666
    %v4719 = vpack.c.bf16 %v4675, %v4671
    %v4720 = vpack.c.bf16 %v4676, %v4672
    %v4721 = vpack.c.bf16 %v4677, %v4673
    %v4722 = vpack.c.bf16 %v4678, %v4674
    %v4723 = vpack.c.bf16 %v4683, %v4679
    %v4724 = vpack.c.bf16 %v4684, %v4680
    %v4725 = vpack.c.bf16 %v4685, %v4681
    %v4726 = vpack.c.bf16 %v4686, %v4682
    %v4727 = vpack.c.bf16 %v4691, %v4687
    %v4728 = vpack.c.bf16 %v4692, %v4688
    %v4729 = vpack.c.bf16 %v4693, %v4689
    %v4730 = vpack.c.bf16 %v4694, %v4690
    %v4731 = vpack.c.bf16 %v4699, %v4695
    %v4732 = vpack.c.bf16 %v4700, %v4696
    %v4733 = vpack.c.bf16 %v4701, %v4697
    %v4734 = vpack.c.bf16 %v4702, %v4698
    %4735 = vmatpush.bf16.msra.mxu0 %v838
    %4736 = vmatpush.bf16.msra.mxu0 %v837
    %4737 = vmatpush.bf16.msra.mxu0 %v836
    %4738 = vmatpush.bf16.msra.mxu0 %v835
    %4739 = vmatpush.bf16.msra.mxu0 %v834
    %4740 = vmatpush.bf16.msra.mxu0 %v833
    %4741 = vmatpush.bf16.msra.mxu0 %v832
    %4742 = vmatpush.bf16.msra.mxu0 %v831
    %4743 = vmatmul.bf16.gmra.mxu0 %v4703
    %v4744 = vpop.f32.mrf.mxu0
    %v4745 = vadd.f32 0.0, %v4744
    %v4746 = vpop.f32.mrf.mxu0
    %v4747 = vadd.f32 0.0, %v4746
    %4748 = vmatmul.bf16.gmra.mxu0 %v4707
    %v4749 = vpop.f32.mrf.mxu0
    %v4750 = vadd.f32 0.0, %v4749
    %v4751 = vpop.f32.mrf.mxu0
    %v4752 = vadd.f32 0.0, %v4751
    %4753 = vmatmul.bf16.gmra.mxu0 %v4711
    %v4754 = vpop.f32.mrf.mxu0
    %v4755 = vadd.f32 0.0, %v4754
    %v4756 = vpop.f32.mrf.mxu0
    %v4757 = vadd.f32 0.0, %v4756
    %4758 = vmatmul.bf16.gmra.mxu0 %v4715
    %v4759 = vpop.f32.mrf.mxu0
    %v4760 = vadd.f32 0.0, %v4759
    %v4761 = vpop.f32.mrf.mxu0
    %v4762 = vadd.f32 0.0, %v4761
    %4763 = vmatmul.bf16.gmra.mxu0 %v4719
    %v4764 = vpop.f32.mrf.mxu0
    %v4765 = vadd.f32 0.0, %v4764
    %v4766 = vpop.f32.mrf.mxu0
    %v4767 = vadd.f32 0.0, %v4766
    %4768 = vmatmul.bf16.gmra.mxu0 %v4723
    %v4769 = vpop.f32.mrf.mxu0
    %v4770 = vadd.f32 0.0, %v4769
    %v4771 = vpop.f32.mrf.mxu0
    %v4772 = vadd.f32 0.0, %v4771
    %4773 = vmatmul.bf16.gmra.mxu0 %v4727
    %v4774 = vpop.f32.mrf.mxu0
    %v4775 = vadd.f32 0.0, %v4774
    %v4776 = vpop.f32.mrf.mxu0
    %v4777 = vadd.f32 0.0, %v4776
    %4778 = vmatmul.bf16.gmra.mxu0 %v4731
    %v4779 = vpop.f32.mrf.mxu0
    %v4780 = vadd.f32 0.0, %v4779
    %v4781 = vpop.f32.mrf.mxu0
    %v4782 = vadd.f32 0.0, %v4781
    %4783 = vdwg.mxu0
    %4784 = vmatpush.bf16.msra.mxu0 %v846
    %4785 = vmatpush.bf16.msra.mxu0 %v845
    %4786 = vmatpush.bf16.msra.mxu0 %v844
    %4787 = vmatpush.bf16.msra.mxu0 %v843
    %4788 = vmatpush.bf16.msra.mxu0 %v842
    %4789 = vmatpush.bf16.msra.mxu0 %v841
    %4790 = vmatpush.bf16.msra.mxu0 %v840
    %4791 = vmatpush.bf16.msra.mxu0 %v839
    %4792 = vmatmul.bf16.gmra.mxu0 %v4704
    %v4793 = vpop.f32.mrf.mxu0
    %v4794 = vadd.f32 %v4745, %v4793
    %v4795 = vpop.f32.mrf.mxu0
    %v4796 = vadd.f32 %v4747, %v4795
    %4797 = vmatmul.bf16.gmra.mxu0 %v4708
    %v4798 = vpop.f32.mrf.mxu0
    %v4799 = vadd.f32 %v4750, %v4798
    %v4800 = vpop.f32.mrf.mxu0
    %v4801 = vadd.f32 %v4752, %v4800
    %4802 = vmatmul.bf16.gmra.mxu0 %v4712
    %v4803 = vpop.f32.mrf.mxu0
    %v4804 = vadd.f32 %v4755, %v4803
    %v4805 = vpop.f32.mrf.mxu0
    %v4806 = vadd.f32 %v4757, %v4805
    %4807 = vmatmul.bf16.gmra.mxu0 %v4716
    %v4808 = vpop.f32.mrf.mxu0
    %v4809 = vadd.f32 %v4760, %v4808
    %v4810 = vpop.f32.mrf.mxu0
    %v4811 = vadd.f32 %v4762, %v4810
    %4812 = vmatmul.bf16.gmra.mxu0 %v4720
    %v4813 = vpop.f32.mrf.mxu0
    %v4814 = vadd.f32 %v4765, %v4813
    %v4815 = vpop.f32.mrf.mxu0
    %v4816 = vadd.f32 %v4767, %v4815
    %4817 = vmatmul.bf16.gmra.mxu0 %v4724
    %v4818 = vpop.f32.mrf.mxu0
    %v4819 = vadd.f32 %v4770, %v4818
    %v4820 = vpop.f32.mrf.mxu0
    %v4821 = vadd.f32 %v4772, %v4820
    %4822 = vmatmul.bf16.gmra.mxu0 %v4728
    %v4823 = vpop.f32.mrf.mxu0
    %v4824 = vadd.f32 %v4775, %v4823
    %v4825 = vpop.f32.mrf.mxu0
    %v4826 = vadd.f32 %v4777, %v4825
    %4827 = vmatmul.bf16.gmra.mxu0 %v4732
    %v4828 = vpop.f32.mrf.mxu0
    %v4829 = vadd.f32 %v4780, %v4828
    %v4830 = vpop.f32.mrf.mxu0
    %v4831 = vadd.f32 %v4782, %v4830
    %4832 = vdwg.mxu0
    %4833 = vmatpush.bf16.msra.mxu0 %v854
    %4834 = vmatpush.bf16.msra.mxu0 %v853
    %4835 = vmatpush.bf16.msra.mxu0 %v852
    %4836 = vmatpush.bf16.msra.mxu0 %v851
    %4837 = vmatpush.bf16.msra.mxu0 %v850
    %4838 = vmatpush.bf16.msra.mxu0 %v849
    %4839 = vmatpush.bf16.msra.mxu0 %v848
    %4840 = vmatpush.bf16.msra.mxu0 %v847
    %4841 = vmatmul.bf16.gmra.mxu0 %v4705
    %v4842 = vpop.f32.mrf.mxu0
    %v4843 = vadd.f32 %v4794, %v4842
    %v4844 = vpop.f32.mrf.mxu0
    %v4845 = vadd.f32 %v4796, %v4844
    %4846 = vmatmul.bf16.gmra.mxu0 %v4709
    %v4847 = vpop.f32.mrf.mxu0
    %v4848 = vadd.f32 %v4799, %v4847
    %v4849 = vpop.f32.mrf.mxu0
    %v4850 = vadd.f32 %v4801, %v4849
    %4851 = vmatmul.bf16.gmra.mxu0 %v4713
    %v4852 = vpop.f32.mrf.mxu0
    %v4853 = vadd.f32 %v4804, %v4852
    %v4854 = vpop.f32.mrf.mxu0
    %v4855 = vadd.f32 %v4806, %v4854
    %4856 = vmatmul.bf16.gmra.mxu0 %v4717
    %v4857 = vpop.f32.mrf.mxu0
    %v4858 = vadd.f32 %v4809, %v4857
    %v4859 = vpop.f32.mrf.mxu0
    %v4860 = vadd.f32 %v4811, %v4859
    %4861 = vmatmul.bf16.gmra.mxu0 %v4721
    %v4862 = vpop.f32.mrf.mxu0
    %v4863 = vadd.f32 %v4814, %v4862
    %v4864 = vpop.f32.mrf.mxu0
    %v4865 = vadd.f32 %v4816, %v4864
    %4866 = vmatmul.bf16.gmra.mxu0 %v4725
    %v4867 = vpop.f32.mrf.mxu0
    %v4868 = vadd.f32 %v4819, %v4867
    %v4869 = vpop.f32.mrf.mxu0
    %v4870 = vadd.f32 %v4821, %v4869
    %4871 = vmatmul.bf16.gmra.mxu0 %v4729
    %v4872 = vpop.f32.mrf.mxu0
    %v4873 = vadd.f32 %v4824, %v4872
    %v4874 = vpop.f32.mrf.mxu0
    %v4875 = vadd.f32 %v4826, %v4874
    %4876 = vmatmul.bf16.gmra.mxu0 %v4733
    %v4877 = vpop.f32.mrf.mxu0
    %v4878 = vadd.f32 %v4829, %v4877
    %v4879 = vpop.f32.mrf.mxu0
    %v4880 = vadd.f32 %v4831, %v4879
    %4881 = vdwg.mxu0
    %4882 = vmatpush.bf16.msra.mxu0 %v862
    %4883 = vmatpush.bf16.msra.mxu0 %v861
    %4884 = vmatpush.bf16.msra.mxu0 %v860
    %4885 = vmatpush.bf16.msra.mxu0 %v859
    %4886 = vmatpush.bf16.msra.mxu0 %v858
    %4887 = vmatpush.bf16.msra.mxu0 %v857
    %4888 = vmatpush.bf16.msra.mxu0 %v856
    %4889 = vmatpush.bf16.msra.mxu0 %v855
    %4890 = vmatmul.bf16.gmra.mxu0 %v4706
    %v4891 = vpop.f32.mrf.mxu0
    %v4892 = vadd.f32 %v4843, %v4891
    %v4893 = vpop.f32.mrf.mxu0
    %v4894 = vadd.f32 %v4845, %v4893
    %4895 = vmatmul.bf16.gmra.mxu0 %v4710
    %v4896 = vpop.f32.mrf.mxu0
    %v4897 = vadd.f32 %v4848, %v4896
    %v4898 = vpop.f32.mrf.mxu0
    %v4899 = vadd.f32 %v4850, %v4898
    %4900 = vmatmul.bf16.gmra.mxu0 %v4714
    %v4901 = vpop.f32.mrf.mxu0
    %v4902 = vadd.f32 %v4853, %v4901
    %v4903 = vpop.f32.mrf.mxu0
    %v4904 = vadd.f32 %v4855, %v4903
    %4905 = vmatmul.bf16.gmra.mxu0 %v4718
    %v4906 = vpop.f32.mrf.mxu0
    %v4907 = vadd.f32 %v4858, %v4906
    %v4908 = vpop.f32.mrf.mxu0
    %v4909 = vadd.f32 %v4860, %v4908
    %4910 = vmatmul.bf16.gmra.mxu0 %v4722
    %v4911 = vpop.f32.mrf.mxu0
    %v4912 = vadd.f32 %v4863, %v4911
    %v4913 = vpop.f32.mrf.mxu0
    %v4914 = vadd.f32 %v4865, %v4913
    %4915 = vmatmul.bf16.gmra.mxu0 %v4726
    %v4916 = vpop.f32.mrf.mxu0
    %v4917 = vadd.f32 %v4868, %v4916
    %v4918 = vpop.f32.mrf.mxu0
    %v4919 = vadd.f32 %v4870, %v4918
    %4920 = vmatmul.bf16.gmra.mxu0 %v4730
    %v4921 = vpop.f32.mrf.mxu0
    %v4922 = vadd.f32 %v4873, %v4921
    %v4923 = vpop.f32.mrf.mxu0
    %v4924 = vadd.f32 %v4875, %v4923
    %4925 = vmatmul.bf16.gmra.mxu0 %v4734
    %v4926 = vpop.f32.mrf.mxu0
    %v4927 = vadd.f32 %v4878, %v4926
    %v4928 = vpop.f32.mrf.mxu0
    %v4929 = vadd.f32 %v4880, %v4928
    %4930 = vdwg.mxu0
    %v4931 = vpack.c.bf16 %v4894, %v4892
    %v4932 = vpack.c.bf16 %v4899, %v4897
    %v4933 = vpack.c.bf16 %v4904, %v4902
    %v4934 = vpack.c.bf16 %v4909, %v4907
    %v4935 = vpack.c.bf16 %v4914, %v4912
    %v4936 = vpack.c.bf16 %v4919, %v4917
    %v4937 = vpack.c.bf16 %v4924, %v4922
    %v4938 = vpack.c.bf16 %v4929, %v4927
    %s4939 = scalar_lea.vmem %s1, 12
    %v4940 = vld [vmem:[%s4939] sm:$0x3]
    %v4942 = vsel %vm1642, %v4931, 0
    %v4945 = vsel %vm1642, %v4932, 0
    %v4948 = vsel %vm1642, %v4933, 0
    %v4951 = vsel %vm1642, %v4934, 0
    %v4954 = vsel %vm1642, %v4935, 0
    %v4957 = vsel %vm1642, %v4936, 0
    %v4960 = vsel %vm1642, %v4937, 0
    %v4963 = vsel %vm1642, %v4938, 0
    %v4966 = vand.u32 %v4940, %v1670
    %4968 = vmatpush.bf16.msra.mxu0 0
    %4969 = vmatpush.bf16.msra.mxu0 0
    %4970 = vmatpush.bf16.msra.mxu0 0
    %4971 = vmatpush.bf16.msra.mxu0 0
    %4972 = vmatpush.bf16.msra.mxu0 0
    %4973 = vmatpush.bf16.msra.mxu0 0
    %4974 = vmatpush.bf16.msra.mxu0 0
    %4975 = vmatpush.bf16.msra.mxu0 %v4966
    %4976 = vmatmul.bf16.gmra.mxu0 %v4942
    %v4977 = vpop.f32.mrf.mxu0
    %v4978 = vadd.f32 0.0, %v4977
    %v4979 = vpop.f32.mrf.mxu0
    %v4980 = vadd.f32 0.0, %v4979
    %4981 = vmatmul.bf16.gmra.mxu0 %v4945
    %v4982 = vpop.f32.mrf.mxu0
    %v4983 = vadd.f32 0.0, %v4982
    %v4984 = vpop.f32.mrf.mxu0
    %v4985 = vadd.f32 0.0, %v4984
    %4986 = vmatmul.bf16.gmra.mxu0 %v4948
    %v4987 = vpop.f32.mrf.mxu0
    %v4988 = vadd.f32 0.0, %v4987
    %v4989 = vpop.f32.mrf.mxu0
    %v4990 = vadd.f32 0.0, %v4989
    %4991 = vmatmul.bf16.gmra.mxu0 %v4951
    %v4992 = vpop.f32.mrf.mxu0
    %v4993 = vadd.f32 0.0, %v4992
    %v4994 = vpop.f32.mrf.mxu0
    %v4995 = vadd.f32 0.0, %v4994
    %4996 = vmatmul.bf16.gmra.mxu0 %v4954
    %v4997 = vpop.f32.mrf.mxu0
    %v4998 = vadd.f32 0.0, %v4997
    %v4999 = vpop.f32.mrf.mxu0
    %v5000 = vadd.f32 0.0, %v4999
    %5001 = vmatmul.bf16.gmra.mxu0 %v4957
    %v5002 = vpop.f32.mrf.mxu0
    %v5003 = vadd.f32 0.0, %v5002
    %v5004 = vpop.f32.mrf.mxu0
    %v5005 = vadd.f32 0.0, %v5004
    %5006 = vmatmul.bf16.gmra.mxu0 %v4960
    %v5007 = vpop.f32.mrf.mxu0
    %v5008 = vadd.f32 0.0, %v5007
    %v5009 = vpop.f32.mrf.mxu0
    %v5010 = vadd.f32 0.0, %v5009
    %5011 = vmatmul.bf16.gmra.mxu0 %v4963
    %v5012 = vpop.f32.mrf.mxu0
    %v5013 = vadd.f32 0.0, %v5012
    %v5014 = vpop.f32.mrf.mxu0
    %v5015 = vadd.f32 0.0, %v5014
    %5016 = vdwg.mxu0
    %v5017 = vadd.f32 %v4319, %v4978
    %v5018 = vadd.f32 %v4320, %v4980
    %v5019 = vadd.f32 %v4321, %v4983
    %v5020 = vadd.f32 %v4322, %v4985
    %v5021 = vadd.f32 %v4323, %v4988
    %v5022 = vadd.f32 %v4324, %v4990
    %v5023 = vadd.f32 %v4325, %v4993
    %v5024 = vadd.f32 %v4326, %v4995
    %v5025 = vadd.f32 %v4327, %v4998
    %v5026 = vadd.f32 %v4328, %v5000
    %v5027 = vadd.f32 %v4329, %v5003
    %v5028 = vadd.f32 %v4330, %v5005
    %v5029 = vadd.f32 %v4331, %v5008
    %v5030 = vadd.f32 %v4332, %v5010
    %v5031 = vadd.f32 %v4333, %v5013
    %v5032 = vadd.f32 %v4334, %v5015
    %vm5033 = vmand %vm4383, %vm1100
    %vm5034 = vmand %vm4384, %vm1101
    %vm5035 = vmand %vm4385, %vm1102
    %vm5036 = vmand %vm4386, %vm1103
    %vm5037 = vmand %vm4387, %vm1104
    %vm5038 = vmand %vm4388, %vm1105
    %vm5039 = vmand %vm4389, %vm1106
    %vm5040 = vmand %vm4390, %vm1107
    %vm5041 = vmand %vm4391, %vm1108
    %vm5042 = vmand %vm4392, %vm1109
    %vm5043 = vmand %vm4393, %vm1110
    %vm5044 = vmand %vm4394, %vm1111
    %vm5045 = vmand %vm4395, %vm1112
    %vm5046 = vmand %vm4396, %vm1113
    %vm5047 = vmand %vm4397, %vm1114
    %vm5048 = vmand %vm4398, %vm1115
    %vm5049 = vmand %vm5033, %vm1132
    %vm5050 = vmand %vm5034, %vm1133
    %vm5051 = vmand %vm5035, %vm1134
    %vm5052 = vmand %vm5036, %vm1135
    %vm5053 = vmand %vm5037, %vm1136
    %vm5054 = vmand %vm5038, %vm1137
    %vm5055 = vmand %vm5039, %vm1138
    %vm5056 = vmand %vm5040, %vm1139
    %vm5057 = vmand %vm5041, %vm1140
    %vm5058 = vmand %vm5042, %vm1141
    %vm5059 = vmand %vm5043, %vm1142
    %vm5060 = vmand %vm5044, %vm1143
    %vm5061 = vmand %vm5045, %vm1144
    %vm5062 = vmand %vm5046, %vm1145
    %vm5063 = vmand %vm5047, %vm1146
    %vm5064 = vmand %vm5048, %vm1147
    %v5065 = vadd.s32 %v4447, %v239
    %v5066 = vadd.s32 %v4448, %v240
    %v5067 = vadd.s32 %v4449, %v241
    %v5068 = vadd.s32 %v4450, %v242
    %v5069 = vadd.s32 %v4451, %v243
    %v5070 = vadd.s32 %v4452, %v244
    %v5071 = vadd.s32 %v4453, %v245
    %v5072 = vadd.s32 %v4454, %v246
    %v5073 = vadd.s32 %v4455, %v247
    %v5074 = vadd.s32 %v4456, %v248
    %v5075 = vadd.s32 %v4457, %v249
    %v5076 = vadd.s32 %v4458, %v250
    %v5077 = vadd.s32 %v4459, %v251
    %v5078 = vadd.s32 %v4460, %v252
    %v5079 = vadd.s32 %v4461, %v253
    %v5080 = vadd.s32 %v4462, %v254
    %vm5081 = vcmp.eq.s32.totalorder %v203, %v5065
    %vm5082 = vcmp.eq.s32.totalorder %v204, %v5065
    %vm5083 = vcmp.eq.s32.totalorder %v205, %v5065
    %vm5084 = vcmp.eq.s32.totalorder %v206, %v5065
    %vm5085 = vcmp.eq.s32.totalorder %v203, %v5066
    %vm5086 = vcmp.eq.s32.totalorder %v204, %v5066
    %vm5087 = vcmp.eq.s32.totalorder %v205, %v5066
    %vm5088 = vcmp.eq.s32.totalorder %v206, %v5066
    %vm5089 = vcmp.eq.s32.totalorder %v203, %v5067
    %vm5090 = vcmp.eq.s32.totalorder %v204, %v5067
    %vm5091 = vcmp.eq.s32.totalorder %v205, %v5067
    %vm5092 = vcmp.eq.s32.totalorder %v206, %v5067
    %vm5093 = vcmp.eq.s32.totalorder %v203, %v5068
    %vm5094 = vcmp.eq.s32.totalorder %v204, %v5068
    %vm5095 = vcmp.eq.s32.totalorder %v205, %v5068
    %vm5096 = vcmp.eq.s32.totalorder %v206, %v5068
    %vm5097 = vcmp.eq.s32.totalorder %v203, %v5069
    %vm5098 = vcmp.eq.s32.totalorder %v204, %v5069
    %vm5099 = vcmp.eq.s32.totalorder %v205, %v5069
    %vm5100 = vcmp.eq.s32.totalorder %v206, %v5069
    %vm5101 = vcmp.eq.s32.totalorder %v203, %v5070
    %vm5102 = vcmp.eq.s32.totalorder %v204, %v5070
    %vm5103 = vcmp.eq.s32.totalorder %v205, %v5070
    %vm5104 = vcmp.eq.s32.totalorder %v206, %v5070
    %vm5105 = vcmp.eq.s32.totalorder %v203, %v5071
    %vm5106 = vcmp.eq.s32.totalorder %v204, %v5071
    %vm5107 = vcmp.eq.s32.totalorder %v205, %v5071
    %vm5108 = vcmp.eq.s32.totalorder %v206, %v5071
    %vm5109 = vcmp.eq.s32.totalorder %v203, %v5072
    %vm5110 = vcmp.eq.s32.totalorder %v204, %v5072
    %vm5111 = vcmp.eq.s32.totalorder %v205, %v5072
    %vm5112 = vcmp.eq.s32.totalorder %v206, %v5072
    %vm5113 = vcmp.eq.s32.totalorder %v203, %v5073
    %vm5114 = vcmp.eq.s32.totalorder %v204, %v5073
    %vm5115 = vcmp.eq.s32.totalorder %v205, %v5073
    %vm5116 = vcmp.eq.s32.totalorder %v206, %v5073
    %vm5117 = vcmp.eq.s32.totalorder %v203, %v5074
    %vm5118 = vcmp.eq.s32.totalorder %v204, %v5074
    %vm5119 = vcmp.eq.s32.totalorder %v205, %v5074
    %vm5120 = vcmp.eq.s32.totalorder %v206, %v5074
    %vm5121 = vcmp.eq.s32.totalorder %v203, %v5075
    %vm5122 = vcmp.eq.s32.totalorder %v204, %v5075
    %vm5123 = vcmp.eq.s32.totalorder %v205, %v5075
    %vm5124 = vcmp.eq.s32.totalorder %v206, %v5075
    %vm5125 = vcmp.eq.s32.totalorder %v203, %v5076
    %vm5126 = vcmp.eq.s32.totalorder %v204, %v5076
    %vm5127 = vcmp.eq.s32.totalorder %v205, %v5076
    %vm5128 = vcmp.eq.s32.totalorder %v206, %v5076
    %vm5129 = vcmp.eq.s32.totalorder %v203, %v5077
    %vm5130 = vcmp.eq.s32.totalorder %v204, %v5077
    %vm5131 = vcmp.eq.s32.totalorder %v205, %v5077
    %vm5132 = vcmp.eq.s32.totalorder %v206, %v5077
    %vm5133 = vcmp.eq.s32.totalorder %v203, %v5078
    %vm5134 = vcmp.eq.s32.totalorder %v204, %v5078
    %vm5135 = vcmp.eq.s32.totalorder %v205, %v5078
    %vm5136 = vcmp.eq.s32.totalorder %v206, %v5078
    %vm5137 = vcmp.eq.s32.totalorder %v203, %v5079
    %vm5138 = vcmp.eq.s32.totalorder %v204, %v5079
    %vm5139 = vcmp.eq.s32.totalorder %v205, %v5079
    %vm5140 = vcmp.eq.s32.totalorder %v206, %v5079
    %vm5141 = vcmp.eq.s32.totalorder %v203, %v5080
    %vm5142 = vcmp.eq.s32.totalorder %v204, %v5080
    %vm5143 = vcmp.eq.s32.totalorder %v205, %v5080
    %vm5144 = vcmp.eq.s32.totalorder %v206, %v5080
    %v5145 = vsel %vm5049, 1, 0
    %v5146 = vsel %vm5050, 1, 0
    %v5147 = vsel %vm5051, 1, 0
    %v5148 = vsel %vm5052, 1, 0
    %v5149 = vsel %vm5053, 1, 0
    %v5150 = vsel %vm5054, 1, 0
    %v5151 = vsel %vm5055, 1, 0
    %v5152 = vsel %vm5056, 1, 0
    %v5153 = vsel %vm5057, 1, 0
    %v5154 = vsel %vm5058, 1, 0
    %v5155 = vsel %vm5059, 1, 0
    %v5156 = vsel %vm5060, 1, 0
    %v5157 = vsel %vm5061, 1, 0
    %v5158 = vsel %vm5062, 1, 0
    %v5159 = vsel %vm5063, 1, 0
    %v5160 = vsel %vm5064, 1, 0
    %vm5161 = vcmp.eq.s32.totalorder %v5145, 1
    %vm5162 = vcmp.eq.s32.totalorder %v5146, 1
    %vm5163 = vcmp.eq.s32.totalorder %v5147, 1
    %vm5164 = vcmp.eq.s32.totalorder %v5148, 1
    %vm5165 = vcmp.eq.s32.totalorder %v5149, 1
    %vm5166 = vcmp.eq.s32.totalorder %v5150, 1
    %vm5167 = vcmp.eq.s32.totalorder %v5151, 1
    %vm5168 = vcmp.eq.s32.totalorder %v5152, 1
    %vm5169 = vcmp.eq.s32.totalorder %v5153, 1
    %vm5170 = vcmp.eq.s32.totalorder %v5154, 1
    %vm5171 = vcmp.eq.s32.totalorder %v5155, 1
    %vm5172 = vcmp.eq.s32.totalorder %v5156, 1
    %vm5173 = vcmp.eq.s32.totalorder %v5157, 1
    %vm5174 = vcmp.eq.s32.totalorder %v5158, 1
    %vm5175 = vcmp.eq.s32.totalorder %v5159, 1
    %vm5176 = vcmp.eq.s32.totalorder %v5160, 1
    %vm5177 = vmand %vm5161, %vm5081
    %vm5178 = vmand %vm5161, %vm5082
    %vm5179 = vmand %vm5161, %vm5083
    %vm5180 = vmand %vm5161, %vm5084
    %vm5181 = vmand %vm5162, %vm5085
    %vm5182 = vmand %vm5162, %vm5086
    %vm5183 = vmand %vm5162, %vm5087
    %vm5184 = vmand %vm5162, %vm5088
    %vm5185 = vmand %vm5163, %vm5089
    %vm5186 = vmand %vm5163, %vm5090
    %vm5187 = vmand %vm5163, %vm5091
    %vm5188 = vmand %vm5163, %vm5092
    %vm5189 = vmand %vm5164, %vm5093
    %vm5190 = vmand %vm5164, %vm5094
    %vm5191 = vmand %vm5164, %vm5095
    %vm5192 = vmand %vm5164, %vm5096
    %vm5193 = vmand %vm5165, %vm5097
    %vm5194 = vmand %vm5165, %vm5098
    %vm5195 = vmand %vm5165, %vm5099
    %vm5196 = vmand %vm5165, %vm5100
    %vm5197 = vmand %vm5166, %vm5101
    %vm5198 = vmand %vm5166, %vm5102
    %vm5199 = vmand %vm5166, %vm5103
    %vm5200 = vmand %vm5166, %vm5104
    %vm5201 = vmand %vm5167, %vm5105
    %vm5202 = vmand %vm5167, %vm5106
    %vm5203 = vmand %vm5167, %vm5107
    %vm5204 = vmand %vm5167, %vm5108
    %vm5205 = vmand %vm5168, %vm5109
    %vm5206 = vmand %vm5168, %vm5110
    %vm5207 = vmand %vm5168, %vm5111
    %vm5208 = vmand %vm5168, %vm5112
    %vm5209 = vmand %vm5169, %vm5113
    %vm5210 = vmand %vm5169, %vm5114
    %vm5211 = vmand %vm5169, %vm5115
    %vm5212 = vmand %vm5169, %vm5116
    %vm5213 = vmand %vm5170, %vm5117
    %vm5214 = vmand %vm5170, %vm5118
    %vm5215 = vmand %vm5170, %vm5119
    %vm5216 = vmand %vm5170, %vm5120
    %vm5217 = vmand %vm5171, %vm5121
    %vm5218 = vmand %vm5171, %vm5122
    %vm5219 = vmand %vm5171, %vm5123
    %vm5220 = vmand %vm5171, %vm5124
    %vm5221 = vmand %vm5172, %vm5125
    %vm5222 = vmand %vm5172, %vm5126
    %vm5223 = vmand %vm5172, %vm5127
    %vm5224 = vmand %vm5172, %vm5128
    %vm5225 = vmand %vm5173, %vm5129
    %vm5226 = vmand %vm5173, %vm5130
    %vm5227 = vmand %vm5173, %vm5131
    %vm5228 = vmand %vm5173, %vm5132
    %vm5229 = vmand %vm5174, %vm5133
    %vm5230 = vmand %vm5174, %vm5134
    %vm5231 = vmand %vm5174, %vm5135
    %vm5232 = vmand %vm5174, %vm5136
    %vm5233 = vmand %vm5175, %vm5137
    %vm5234 = vmand %vm5175, %vm5138
    %vm5235 = vmand %vm5175, %vm5139
    %vm5236 = vmand %vm5175, %vm5140
    %vm5237 = vmand %vm5176, %vm5141
    %vm5238 = vmand %vm5176, %vm5142
    %vm5239 = vmand %vm5176, %vm5143
    %vm5240 = vmand %vm5176, %vm5144
    %v5241 = vsel %vm5177, 1.0, 0.0
    %v5242 = vsel %vm5178, 1.0, 0.0
    %v5243 = vsel %vm5179, 1.0, 0.0
    %v5244 = vsel %vm5180, 1.0, 0.0
    %v5245 = vsel %vm5181, 1.0, 0.0
    %v5246 = vsel %vm5182, 1.0, 0.0
    %v5247 = vsel %vm5183, 1.0, 0.0
    %v5248 = vsel %vm5184, 1.0, 0.0
    %v5249 = vsel %vm5185, 1.0, 0.0
    %v5250 = vsel %vm5186, 1.0, 0.0
    %v5251 = vsel %vm5187, 1.0, 0.0
    %v5252 = vsel %vm5188, 1.0, 0.0
    %v5253 = vsel %vm5189, 1.0, 0.0
    %v5254 = vsel %vm5190, 1.0, 0.0
    %v5255 = vsel %vm5191, 1.0, 0.0
    %v5256 = vsel %vm5192, 1.0, 0.0
    %v5257 = vsel %vm5193, 1.0, 0.0
    %v5258 = vsel %vm5194, 1.0, 0.0
    %v5259 = vsel %vm5195, 1.0, 0.0
    %v5260 = vsel %vm5196, 1.0, 0.0
    %v5261 = vsel %vm5197, 1.0, 0.0
    %v5262 = vsel %vm5198, 1.0, 0.0
    %v5263 = vsel %vm5199, 1.0, 0.0
    %v5264 = vsel %vm5200, 1.0, 0.0
    %v5265 = vsel %vm5201, 1.0, 0.0
    %v5266 = vsel %vm5202, 1.0, 0.0
    %v5267 = vsel %vm5203, 1.0, 0.0
    %v5268 = vsel %vm5204, 1.0, 0.0
    %v5269 = vsel %vm5205, 1.0, 0.0
    %v5270 = vsel %vm5206, 1.0, 0.0
    %v5271 = vsel %vm5207, 1.0, 0.0
    %v5272 = vsel %vm5208, 1.0, 0.0
    %v5273 = vsel %vm5209, 1.0, 0.0
    %v5274 = vsel %vm5210, 1.0, 0.0
    %v5275 = vsel %vm5211, 1.0, 0.0
    %v5276 = vsel %vm5212, 1.0, 0.0
    %v5277 = vsel %vm5213, 1.0, 0.0
    %v5278 = vsel %vm5214, 1.0, 0.0
    %v5279 = vsel %vm5215, 1.0, 0.0
    %v5280 = vsel %vm5216, 1.0, 0.0
    %v5281 = vsel %vm5217, 1.0, 0.0
    %v5282 = vsel %vm5218, 1.0, 0.0
    %v5283 = vsel %vm5219, 1.0, 0.0
    %v5284 = vsel %vm5220, 1.0, 0.0
    %v5285 = vsel %vm5221, 1.0, 0.0
    %v5286 = vsel %vm5222, 1.0, 0.0
    %v5287 = vsel %vm5223, 1.0, 0.0
    %v5288 = vsel %vm5224, 1.0, 0.0
    %v5289 = vsel %vm5225, 1.0, 0.0
    %v5290 = vsel %vm5226, 1.0, 0.0
    %v5291 = vsel %vm5227, 1.0, 0.0
    %v5292 = vsel %vm5228, 1.0, 0.0
    %v5293 = vsel %vm5229, 1.0, 0.0
    %v5294 = vsel %vm5230, 1.0, 0.0
    %v5295 = vsel %vm5231, 1.0, 0.0
    %v5296 = vsel %vm5232, 1.0, 0.0
    %v5297 = vsel %vm5233, 1.0, 0.0
    %v5298 = vsel %vm5234, 1.0, 0.0
    %v5299 = vsel %vm5235, 1.0, 0.0
    %v5300 = vsel %vm5236, 1.0, 0.0
    %v5301 = vsel %vm5237, 1.0, 0.0
    %v5302 = vsel %vm5238, 1.0, 0.0
    %v5303 = vsel %vm5239, 1.0, 0.0
    %v5304 = vsel %vm5240, 1.0, 0.0
    %v5305 = vpack.c.bf16 %v5245, %v5241
    %v5306 = vpack.c.bf16 %v5246, %v5242
    %v5307 = vpack.c.bf16 %v5247, %v5243
    %v5308 = vpack.c.bf16 %v5248, %v5244
    %v5309 = vpack.c.bf16 %v5253, %v5249
    %v5310 = vpack.c.bf16 %v5254, %v5250
    %v5311 = vpack.c.bf16 %v5255, %v5251
    %v5312 = vpack.c.bf16 %v5256, %v5252
    %v5313 = vpack.c.bf16 %v5261, %v5257
    %v5314 = vpack.c.bf16 %v5262, %v5258
    %v5315 = vpack.c.bf16 %v5263, %v5259
    %v5316 = vpack.c.bf16 %v5264, %v5260
    %v5317 = vpack.c.bf16 %v5269, %v5265
    %v5318 = vpack.c.bf16 %v5270, %v5266
    %v5319 = vpack.c.bf16 %v5271, %v5267
    %v5320 = vpack.c.bf16 %v5272, %v5268
    %v5321 = vpack.c.bf16 %v5277, %v5273
    %v5322 = vpack.c.bf16 %v5278, %v5274
    %v5323 = vpack.c.bf16 %v5279, %v5275
    %v5324 = vpack.c.bf16 %v5280, %v5276
    %v5325 = vpack.c.bf16 %v5285, %v5281
    %v5326 = vpack.c.bf16 %v5286, %v5282
    %v5327 = vpack.c.bf16 %v5287, %v5283
    %v5328 = vpack.c.bf16 %v5288, %v5284
    %v5329 = vpack.c.bf16 %v5293, %v5289
    %v5330 = vpack.c.bf16 %v5294, %v5290
    %v5331 = vpack.c.bf16 %v5295, %v5291
    %v5332 = vpack.c.bf16 %v5296, %v5292
    %v5333 = vpack.c.bf16 %v5301, %v5297
    %v5334 = vpack.c.bf16 %v5302, %v5298
    %v5335 = vpack.c.bf16 %v5303, %v5299
    %v5336 = vpack.c.bf16 %v5304, %v5300
    %5337 = vmatpush.bf16.msra.mxu0 %v838
    %5338 = vmatpush.bf16.msra.mxu0 %v837
    %5339 = vmatpush.bf16.msra.mxu0 %v836
    %5340 = vmatpush.bf16.msra.mxu0 %v835
    %5341 = vmatpush.bf16.msra.mxu0 %v834
    %5342 = vmatpush.bf16.msra.mxu0 %v833
    %5343 = vmatpush.bf16.msra.mxu0 %v832
    %5344 = vmatpush.bf16.msra.mxu0 %v831
    %5345 = vmatmul.bf16.gmra.mxu0 %v5305
    %v5346 = vpop.f32.mrf.mxu0
    %v5347 = vadd.f32 0.0, %v5346
    %v5348 = vpop.f32.mrf.mxu0
    %v5349 = vadd.f32 0.0, %v5348
    %5350 = vmatmul.bf16.gmra.mxu0 %v5309
    %v5351 = vpop.f32.mrf.mxu0
    %v5352 = vadd.f32 0.0, %v5351
    %v5353 = vpop.f32.mrf.mxu0
    %v5354 = vadd.f32 0.0, %v5353
    %5355 = vmatmul.bf16.gmra.mxu0 %v5313
    %v5356 = vpop.f32.mrf.mxu0
    %v5357 = vadd.f32 0.0, %v5356
    %v5358 = vpop.f32.mrf.mxu0
    %v5359 = vadd.f32 0.0, %v5358
    %5360 = vmatmul.bf16.gmra.mxu0 %v5317
    %v5361 = vpop.f32.mrf.mxu0
    %v5362 = vadd.f32 0.0, %v5361
    %v5363 = vpop.f32.mrf.mxu0
    %v5364 = vadd.f32 0.0, %v5363
    %5365 = vmatmul.bf16.gmra.mxu0 %v5321
    %v5366 = vpop.f32.mrf.mxu0
    %v5367 = vadd.f32 0.0, %v5366
    %v5368 = vpop.f32.mrf.mxu0
    %v5369 = vadd.f32 0.0, %v5368
    %5370 = vmatmul.bf16.gmra.mxu0 %v5325
    %v5371 = vpop.f32.mrf.mxu0
    %v5372 = vadd.f32 0.0, %v5371
    %v5373 = vpop.f32.mrf.mxu0
    %v5374 = vadd.f32 0.0, %v5373
    %5375 = vmatmul.bf16.gmra.mxu0 %v5329
    %v5376 = vpop.f32.mrf.mxu0
    %v5377 = vadd.f32 0.0, %v5376
    %v5378 = vpop.f32.mrf.mxu0
    %v5379 = vadd.f32 0.0, %v5378
    %5380 = vmatmul.bf16.gmra.mxu0 %v5333
    %v5381 = vpop.f32.mrf.mxu0
    %v5382 = vadd.f32 0.0, %v5381
    %v5383 = vpop.f32.mrf.mxu0
    %v5384 = vadd.f32 0.0, %v5383
    %5385 = vdwg.mxu0
    %5386 = vmatpush.bf16.msra.mxu0 %v846
    %5387 = vmatpush.bf16.msra.mxu0 %v845
    %5388 = vmatpush.bf16.msra.mxu0 %v844
    %5389 = vmatpush.bf16.msra.mxu0 %v843
    %5390 = vmatpush.bf16.msra.mxu0 %v842
    %5391 = vmatpush.bf16.msra.mxu0 %v841
    %5392 = vmatpush.bf16.msra.mxu0 %v840
    %5393 = vmatpush.bf16.msra.mxu0 %v839
    %5394 = vmatmul.bf16.gmra.mxu0 %v5306
    %v5395 = vpop.f32.mrf.mxu0
    %v5396 = vadd.f32 %v5347, %v5395
    %v5397 = vpop.f32.mrf.mxu0
    %v5398 = vadd.f32 %v5349, %v5397
    %5399 = vmatmul.bf16.gmra.mxu0 %v5310
    %v5400 = vpop.f32.mrf.mxu0
    %v5401 = vadd.f32 %v5352, %v5400
    %v5402 = vpop.f32.mrf.mxu0
    %v5403 = vadd.f32 %v5354, %v5402
    %5404 = vmatmul.bf16.gmra.mxu0 %v5314
    %v5405 = vpop.f32.mrf.mxu0
    %v5406 = vadd.f32 %v5357, %v5405
    %v5407 = vpop.f32.mrf.mxu0
    %v5408 = vadd.f32 %v5359, %v5407
    %5409 = vmatmul.bf16.gmra.mxu0 %v5318
    %v5410 = vpop.f32.mrf.mxu0
    %v5411 = vadd.f32 %v5362, %v5410
    %v5412 = vpop.f32.mrf.mxu0
    %v5413 = vadd.f32 %v5364, %v5412
    %5414 = vmatmul.bf16.gmra.mxu0 %v5322
    %v5415 = vpop.f32.mrf.mxu0
    %v5416 = vadd.f32 %v5367, %v5415
    %v5417 = vpop.f32.mrf.mxu0
    %v5418 = vadd.f32 %v5369, %v5417
    %5419 = vmatmul.bf16.gmra.mxu0 %v5326
    %v5420 = vpop.f32.mrf.mxu0
    %v5421 = vadd.f32 %v5372, %v5420
    %v5422 = vpop.f32.mrf.mxu0
    %v5423 = vadd.f32 %v5374, %v5422
    %5424 = vmatmul.bf16.gmra.mxu0 %v5330
    %v5425 = vpop.f32.mrf.mxu0
    %v5426 = vadd.f32 %v5377, %v5425
    %v5427 = vpop.f32.mrf.mxu0
    %v5428 = vadd.f32 %v5379, %v5427
    %5429 = vmatmul.bf16.gmra.mxu0 %v5334
    %v5430 = vpop.f32.mrf.mxu0
    %v5431 = vadd.f32 %v5382, %v5430
    %v5432 = vpop.f32.mrf.mxu0
    %v5433 = vadd.f32 %v5384, %v5432
    %5434 = vdwg.mxu0
    %5435 = vmatpush.bf16.msra.mxu0 %v854
    %5436 = vmatpush.bf16.msra.mxu0 %v853
    %5437 = vmatpush.bf16.msra.mxu0 %v852
    %5438 = vmatpush.bf16.msra.mxu0 %v851
    %5439 = vmatpush.bf16.msra.mxu0 %v850
    %5440 = vmatpush.bf16.msra.mxu0 %v849
    %5441 = vmatpush.bf16.msra.mxu0 %v848
    %5442 = vmatpush.bf16.msra.mxu0 %v847
    %5443 = vmatmul.bf16.gmra.mxu0 %v5307
    %v5444 = vpop.f32.mrf.mxu0
    %v5445 = vadd.f32 %v5396, %v5444
    %v5446 = vpop.f32.mrf.mxu0
    %v5447 = vadd.f32 %v5398, %v5446
    %5448 = vmatmul.bf16.gmra.mxu0 %v5311
    %v5449 = vpop.f32.mrf.mxu0
    %v5450 = vadd.f32 %v5401, %v5449
    %v5451 = vpop.f32.mrf.mxu0
    %v5452 = vadd.f32 %v5403, %v5451
    %5453 = vmatmul.bf16.gmra.mxu0 %v5315
    %v5454 = vpop.f32.mrf.mxu0
    %v5455 = vadd.f32 %v5406, %v5454
    %v5456 = vpop.f32.mrf.mxu0
    %v5457 = vadd.f32 %v5408, %v5456
    %5458 = vmatmul.bf16.gmra.mxu0 %v5319
    %v5459 = vpop.f32.mrf.mxu0
    %v5460 = vadd.f32 %v5411, %v5459
    %v5461 = vpop.f32.mrf.mxu0
    %v5462 = vadd.f32 %v5413, %v5461
    %5463 = vmatmul.bf16.gmra.mxu0 %v5323
    %v5464 = vpop.f32.mrf.mxu0
    %v5465 = vadd.f32 %v5416, %v5464
    %v5466 = vpop.f32.mrf.mxu0
    %v5467 = vadd.f32 %v5418, %v5466
    %5468 = vmatmul.bf16.gmra.mxu0 %v5327
    %v5469 = vpop.f32.mrf.mxu0
    %v5470 = vadd.f32 %v5421, %v5469
    %v5471 = vpop.f32.mrf.mxu0
    %v5472 = vadd.f32 %v5423, %v5471
    %5473 = vmatmul.bf16.gmra.mxu0 %v5331
    %v5474 = vpop.f32.mrf.mxu0
    %v5475 = vadd.f32 %v5426, %v5474
    %v5476 = vpop.f32.mrf.mxu0
    %v5477 = vadd.f32 %v5428, %v5476
    %5478 = vmatmul.bf16.gmra.mxu0 %v5335
    %v5479 = vpop.f32.mrf.mxu0
    %v5480 = vadd.f32 %v5431, %v5479
    %v5481 = vpop.f32.mrf.mxu0
    %v5482 = vadd.f32 %v5433, %v5481
    %5483 = vdwg.mxu0
    %5484 = vmatpush.bf16.msra.mxu0 %v862
    %5485 = vmatpush.bf16.msra.mxu0 %v861
    %5486 = vmatpush.bf16.msra.mxu0 %v860
    %5487 = vmatpush.bf16.msra.mxu0 %v859
    %5488 = vmatpush.bf16.msra.mxu0 %v858
    %5489 = vmatpush.bf16.msra.mxu0 %v857
    %5490 = vmatpush.bf16.msra.mxu0 %v856
    %5491 = vmatpush.bf16.msra.mxu0 %v855
    %5492 = vmatmul.bf16.gmra.mxu0 %v5308
    %v5493 = vpop.f32.mrf.mxu0
    %v5494 = vadd.f32 %v5445, %v5493
    %v5495 = vpop.f32.mrf.mxu0
    %v5496 = vadd.f32 %v5447, %v5495
    %5497 = vmatmul.bf16.gmra.mxu0 %v5312
    %v5498 = vpop.f32.mrf.mxu0
    %v5499 = vadd.f32 %v5450, %v5498
    %v5500 = vpop.f32.mrf.mxu0
    %v5501 = vadd.f32 %v5452, %v5500
    %5502 = vmatmul.bf16.gmra.mxu0 %v5316
    %v5503 = vpop.f32.mrf.mxu0
    %v5504 = vadd.f32 %v5455, %v5503
    %v5505 = vpop.f32.mrf.mxu0
    %v5506 = vadd.f32 %v5457, %v5505
    %5507 = vmatmul.bf16.gmra.mxu0 %v5320
    %v5508 = vpop.f32.mrf.mxu0
    %v5509 = vadd.f32 %v5460, %v5508
    %v5510 = vpop.f32.mrf.mxu0
    %v5511 = vadd.f32 %v5462, %v5510
    %5512 = vmatmul.bf16.gmra.mxu0 %v5324
    %v5513 = vpop.f32.mrf.mxu0
    %v5514 = vadd.f32 %v5465, %v5513
    %v5515 = vpop.f32.mrf.mxu0
    %v5516 = vadd.f32 %v5467, %v5515
    %5517 = vmatmul.bf16.gmra.mxu0 %v5328
    %v5518 = vpop.f32.mrf.mxu0
    %v5519 = vadd.f32 %v5470, %v5518
    %v5520 = vpop.f32.mrf.mxu0
    %v5521 = vadd.f32 %v5472, %v5520
    %5522 = vmatmul.bf16.gmra.mxu0 %v5332
    %v5523 = vpop.f32.mrf.mxu0
    %v5524 = vadd.f32 %v5475, %v5523
    %v5525 = vpop.f32.mrf.mxu0
    %v5526 = vadd.f32 %v5477, %v5525
    %5527 = vmatmul.bf16.gmra.mxu0 %v5336
    %v5528 = vpop.f32.mrf.mxu0
    %v5529 = vadd.f32 %v5480, %v5528
    %v5530 = vpop.f32.mrf.mxu0
    %v5531 = vadd.f32 %v5482, %v5530
    %5532 = vdwg.mxu0
    %v5533 = vpack.c.bf16 %v5496, %v5494
    %v5534 = vpack.c.bf16 %v5501, %v5499
    %v5535 = vpack.c.bf16 %v5506, %v5504
    %v5536 = vpack.c.bf16 %v5511, %v5509
    %v5537 = vpack.c.bf16 %v5516, %v5514
    %v5538 = vpack.c.bf16 %v5521, %v5519
    %v5539 = vpack.c.bf16 %v5526, %v5524
    %v5540 = vpack.c.bf16 %v5531, %v5529
    %s5541 = scalar_lea.vmem %s1, 14
    %v5542 = vld [vmem:[%s5541] sm:$0x3]
    %v5544 = vsel %vm1642, %v5533, 0
    %v5547 = vsel %vm1642, %v5534, 0
    %v5550 = vsel %vm1642, %v5535, 0
    %v5553 = vsel %vm1642, %v5536, 0
    %v5556 = vsel %vm1642, %v5537, 0
    %v5559 = vsel %vm1642, %v5538, 0
    %v5562 = vsel %vm1642, %v5539, 0
    %v5565 = vsel %vm1642, %v5540, 0
    %v5568 = vand.u32 %v5542, %v1670
    %5570 = vmatpush.bf16.msra.mxu0 0
    %5571 = vmatpush.bf16.msra.mxu0 0
    %5572 = vmatpush.bf16.msra.mxu0 0
    %5573 = vmatpush.bf16.msra.mxu0 0
    %5574 = vmatpush.bf16.msra.mxu0 0
    %5575 = vmatpush.bf16.msra.mxu0 0
    %5576 = vmatpush.bf16.msra.mxu0 0
    %5577 = vmatpush.bf16.msra.mxu0 %v5568
    %5578 = vmatmul.bf16.gmra.mxu0 %v5544
    %v5579 = vpop.f32.mrf.mxu0
    %v5580 = vadd.f32 0.0, %v5579
    %v5581 = vpop.f32.mrf.mxu0
    %v5582 = vadd.f32 0.0, %v5581
    %5583 = vmatmul.bf16.gmra.mxu0 %v5547
    %v5584 = vpop.f32.mrf.mxu0
    %v5585 = vadd.f32 0.0, %v5584
    %v5586 = vpop.f32.mrf.mxu0
    %v5587 = vadd.f32 0.0, %v5586
    %5588 = vmatmul.bf16.gmra.mxu0 %v5550
    %v5589 = vpop.f32.mrf.mxu0
    %v5590 = vadd.f32 0.0, %v5589
    %v5591 = vpop.f32.mrf.mxu0
    %v5592 = vadd.f32 0.0, %v5591
    %5593 = vmatmul.bf16.gmra.mxu0 %v5553
    %v5594 = vpop.f32.mrf.mxu0
    %v5595 = vadd.f32 0.0, %v5594
    %v5596 = vpop.f32.mrf.mxu0
    %v5597 = vadd.f32 0.0, %v5596
    %5598 = vmatmul.bf16.gmra.mxu0 %v5556
    %v5599 = vpop.f32.mrf.mxu0
    %v5600 = vadd.f32 0.0, %v5599
    %v5601 = vpop.f32.mrf.mxu0
    %v5602 = vadd.f32 0.0, %v5601
    %5603 = vmatmul.bf16.gmra.mxu0 %v5559
    %v5604 = vpop.f32.mrf.mxu0
    %v5605 = vadd.f32 0.0, %v5604
    %v5606 = vpop.f32.mrf.mxu0
    %v5607 = vadd.f32 0.0, %v5606
    %5608 = vmatmul.bf16.gmra.mxu0 %v5562
    %v5609 = vpop.f32.mrf.mxu0
    %v5610 = vadd.f32 0.0, %v5609
    %v5611 = vpop.f32.mrf.mxu0
    %v5612 = vadd.f32 0.0, %v5611
    %5613 = vmatmul.bf16.gmra.mxu0 %v5565
    %v5614 = vpop.f32.mrf.mxu0
    %v5615 = vadd.f32 0.0, %v5614
    %v5616 = vpop.f32.mrf.mxu0
    %v5617 = vadd.f32 0.0, %v5616
    %5618 = vdwg.mxu0
    %v5619 = vadd.f32 %v5017, %v5580
    %v5620 = vadd.f32 %v5018, %v5582
    %v5621 = vadd.f32 %v5019, %v5585
    %v5622 = vadd.f32 %v5020, %v5587
    %v5623 = vadd.f32 %v5021, %v5590
    %v5624 = vadd.f32 %v5022, %v5592
    %v5625 = vadd.f32 %v5023, %v5595
    %v5626 = vadd.f32 %v5024, %v5597
    %v5627 = vadd.f32 %v5025, %v5600
    %v5628 = vadd.f32 %v5026, %v5602
    %v5629 = vadd.f32 %v5027, %v5605
    %v5630 = vadd.f32 %v5028, %v5607
    %v5631 = vadd.f32 %v5029, %v5610
    %v5632 = vadd.f32 %v5030, %v5612
    %v5633 = vadd.f32 %v5031, %v5615
    %v5634 = vadd.f32 %v5032, %v5617
    %vm5635 = vmand %vm4383, %vm1815
    %vm5636 = vmand %vm4384, %vm1816
    %vm5637 = vmand %vm4385, %vm1817
    %vm5638 = vmand %vm4386, %vm1818
    %vm5639 = vmand %vm4387, %vm1819
    %vm5640 = vmand %vm4388, %vm1820
    %vm5641 = vmand %vm4389, %vm1821
    %vm5642 = vmand %vm4390, %vm1822
    %vm5643 = vmand %vm4391, %vm1823
    %vm5644 = vmand %vm4392, %vm1824
    %vm5645 = vmand %vm4393, %vm1825
    %vm5646 = vmand %vm4394, %vm1826
    %vm5647 = vmand %vm4395, %vm1827
    %vm5648 = vmand %vm4396, %vm1828
    %vm5649 = vmand %vm4397, %vm1829
    %vm5650 = vmand %vm4398, %vm1830
    %vm5651 = vmand %vm5635, %vm1847
    %vm5652 = vmand %vm5636, %vm1848
    %vm5653 = vmand %vm5637, %vm1849
    %vm5654 = vmand %vm5638, %vm1850
    %vm5655 = vmand %vm5639, %vm1851
    %vm5656 = vmand %vm5640, %vm1852
    %vm5657 = vmand %vm5641, %vm1853
    %vm5658 = vmand %vm5642, %vm1854
    %vm5659 = vmand %vm5643, %vm1855
    %vm5660 = vmand %vm5644, %vm1856
    %vm5661 = vmand %vm5645, %vm1857
    %vm5662 = vmand %vm5646, %vm1858
    %vm5663 = vmand %vm5647, %vm1859
    %vm5664 = vmand %vm5648, %vm1860
    %vm5665 = vmand %vm5649, %vm1861
    %vm5666 = vmand %vm5650, %vm1862
    %v5667 = vadd.s32 %v4447, %v1799
    %v5668 = vadd.s32 %v4448, %v1800
    %v5669 = vadd.s32 %v4449, %v1801
    %v5670 = vadd.s32 %v4450, %v1802
    %v5671 = vadd.s32 %v4451, %v1803
    %v5672 = vadd.s32 %v4452, %v1804
    %v5673 = vadd.s32 %v4453, %v1805
    %v5674 = vadd.s32 %v4454, %v1806
    %v5675 = vadd.s32 %v4455, %v1807
    %v5676 = vadd.s32 %v4456, %v1808
    %v5677 = vadd.s32 %v4457, %v1809
    %v5678 = vadd.s32 %v4458, %v1810
    %v5679 = vadd.s32 %v4459, %v1811
    %v5680 = vadd.s32 %v4460, %v1812
    %v5681 = vadd.s32 %v4461, %v1813
    %v5682 = vadd.s32 %v4462, %v1814
    %vm5683 = vcmp.eq.s32.totalorder %v203, %v5667
    %vm5684 = vcmp.eq.s32.totalorder %v204, %v5667
    %vm5685 = vcmp.eq.s32.totalorder %v205, %v5667
    %vm5686 = vcmp.eq.s32.totalorder %v206, %v5667
    %vm5687 = vcmp.eq.s32.totalorder %v203, %v5668
    %vm5688 = vcmp.eq.s32.totalorder %v204, %v5668
    %vm5689 = vcmp.eq.s32.totalorder %v205, %v5668
    %vm5690 = vcmp.eq.s32.totalorder %v206, %v5668
    %vm5691 = vcmp.eq.s32.totalorder %v203, %v5669
    %vm5692 = vcmp.eq.s32.totalorder %v204, %v5669
    %vm5693 = vcmp.eq.s32.totalorder %v205, %v5669
    %vm5694 = vcmp.eq.s32.totalorder %v206, %v5669
    %vm5695 = vcmp.eq.s32.totalorder %v203, %v5670
    %vm5696 = vcmp.eq.s32.totalorder %v204, %v5670
    %vm5697 = vcmp.eq.s32.totalorder %v205, %v5670
    %vm5698 = vcmp.eq.s32.totalorder %v206, %v5670
    %vm5699 = vcmp.eq.s32.totalorder %v203, %v5671
    %vm5700 = vcmp.eq.s32.totalorder %v204, %v5671
    %vm5701 = vcmp.eq.s32.totalorder %v205, %v5671
    %vm5702 = vcmp.eq.s32.totalorder %v206, %v5671
    %vm5703 = vcmp.eq.s32.totalorder %v203, %v5672
    %vm5704 = vcmp.eq.s32.totalorder %v204, %v5672
    %vm5705 = vcmp.eq.s32.totalorder %v205, %v5672
    %vm5706 = vcmp.eq.s32.totalorder %v206, %v5672
    %vm5707 = vcmp.eq.s32.totalorder %v203, %v5673
    %vm5708 = vcmp.eq.s32.totalorder %v204, %v5673
    %vm5709 = vcmp.eq.s32.totalorder %v205, %v5673
    %vm5710 = vcmp.eq.s32.totalorder %v206, %v5673
    %vm5711 = vcmp.eq.s32.totalorder %v203, %v5674
    %vm5712 = vcmp.eq.s32.totalorder %v204, %v5674
    %vm5713 = vcmp.eq.s32.totalorder %v205, %v5674
    %vm5714 = vcmp.eq.s32.totalorder %v206, %v5674
    %vm5715 = vcmp.eq.s32.totalorder %v203, %v5675
    %vm5716 = vcmp.eq.s32.totalorder %v204, %v5675
    %vm5717 = vcmp.eq.s32.totalorder %v205, %v5675
    %vm5718 = vcmp.eq.s32.totalorder %v206, %v5675
    %vm5719 = vcmp.eq.s32.totalorder %v203, %v5676
    %vm5720 = vcmp.eq.s32.totalorder %v204, %v5676
    %vm5721 = vcmp.eq.s32.totalorder %v205, %v5676
    %vm5722 = vcmp.eq.s32.totalorder %v206, %v5676
    %vm5723 = vcmp.eq.s32.totalorder %v203, %v5677
    %vm5724 = vcmp.eq.s32.totalorder %v204, %v5677
    %vm5725 = vcmp.eq.s32.totalorder %v205, %v5677
    %vm5726 = vcmp.eq.s32.totalorder %v206, %v5677
    %vm5727 = vcmp.eq.s32.totalorder %v203, %v5678
    %vm5728 = vcmp.eq.s32.totalorder %v204, %v5678
    %vm5729 = vcmp.eq.s32.totalorder %v205, %v5678
    %vm5730 = vcmp.eq.s32.totalorder %v206, %v5678
    %vm5731 = vcmp.eq.s32.totalorder %v203, %v5679
    %vm5732 = vcmp.eq.s32.totalorder %v204, %v5679
    %vm5733 = vcmp.eq.s32.totalorder %v205, %v5679
    %vm5734 = vcmp.eq.s32.totalorder %v206, %v5679
    %vm5735 = vcmp.eq.s32.totalorder %v203, %v5680
    %vm5736 = vcmp.eq.s32.totalorder %v204, %v5680
    %vm5737 = vcmp.eq.s32.totalorder %v205, %v5680
    %vm5738 = vcmp.eq.s32.totalorder %v206, %v5680
    %vm5739 = vcmp.eq.s32.totalorder %v203, %v5681
    %vm5740 = vcmp.eq.s32.totalorder %v204, %v5681
    %vm5741 = vcmp.eq.s32.totalorder %v205, %v5681
    %vm5742 = vcmp.eq.s32.totalorder %v206, %v5681
    %vm5743 = vcmp.eq.s32.totalorder %v203, %v5682
    %vm5744 = vcmp.eq.s32.totalorder %v204, %v5682
    %vm5745 = vcmp.eq.s32.totalorder %v205, %v5682
    %vm5746 = vcmp.eq.s32.totalorder %v206, %v5682
    %v5747 = vsel %vm5651, 1, 0
    %v5748 = vsel %vm5652, 1, 0
    %v5749 = vsel %vm5653, 1, 0
    %v5750 = vsel %vm5654, 1, 0
    %v5751 = vsel %vm5655, 1, 0
    %v5752 = vsel %vm5656, 1, 0
    %v5753 = vsel %vm5657, 1, 0
    %v5754 = vsel %vm5658, 1, 0
    %v5755 = vsel %vm5659, 1, 0
    %v5756 = vsel %vm5660, 1, 0
    %v5757 = vsel %vm5661, 1, 0
    %v5758 = vsel %vm5662, 1, 0
    %v5759 = vsel %vm5663, 1, 0
    %v5760 = vsel %vm5664, 1, 0
    %v5761 = vsel %vm5665, 1, 0
    %v5762 = vsel %vm5666, 1, 0
    %vm5763 = vcmp.eq.s32.totalorder %v5747, 1
    %vm5764 = vcmp.eq.s32.totalorder %v5748, 1
    %vm5765 = vcmp.eq.s32.totalorder %v5749, 1
    %vm5766 = vcmp.eq.s32.totalorder %v5750, 1
    %vm5767 = vcmp.eq.s32.totalorder %v5751, 1
    %vm5768 = vcmp.eq.s32.totalorder %v5752, 1
    %vm5769 = vcmp.eq.s32.totalorder %v5753, 1
    %vm5770 = vcmp.eq.s32.totalorder %v5754, 1
    %vm5771 = vcmp.eq.s32.totalorder %v5755, 1
    %vm5772 = vcmp.eq.s32.totalorder %v5756, 1
    %vm5773 = vcmp.eq.s32.totalorder %v5757, 1
    %vm5774 = vcmp.eq.s32.totalorder %v5758, 1
    %vm5775 = vcmp.eq.s32.totalorder %v5759, 1
    %vm5776 = vcmp.eq.s32.totalorder %v5760, 1
    %vm5777 = vcmp.eq.s32.totalorder %v5761, 1
    %vm5778 = vcmp.eq.s32.totalorder %v5762, 1
    %vm5779 = vmand %vm5763, %vm5683
    %vm5780 = vmand %vm5763, %vm5684
    %vm5781 = vmand %vm5763, %vm5685
    %vm5782 = vmand %vm5763, %vm5686
    %vm5783 = vmand %vm5764, %vm5687
    %vm5784 = vmand %vm5764, %vm5688
    %vm5785 = vmand %vm5764, %vm5689
    %vm5786 = vmand %vm5764, %vm5690
    %vm5787 = vmand %vm5765, %vm5691
    %vm5788 = vmand %vm5765, %vm5692
    %vm5789 = vmand %vm5765, %vm5693
    %vm5790 = vmand %vm5765, %vm5694
    %vm5791 = vmand %vm5766, %vm5695
    %vm5792 = vmand %vm5766, %vm5696
    %vm5793 = vmand %vm5766, %vm5697
    %vm5794 = vmand %vm5766, %vm5698
    %vm5795 = vmand %vm5767, %vm5699
    %vm5796 = vmand %vm5767, %vm5700
    %vm5797 = vmand %vm5767, %vm5701
    %vm5798 = vmand %vm5767, %vm5702
    %vm5799 = vmand %vm5768, %vm5703
    %vm5800 = vmand %vm5768, %vm5704
    %vm5801 = vmand %vm5768, %vm5705
    %vm5802 = vmand %vm5768, %vm5706
    %vm5803 = vmand %vm5769, %vm5707
    %vm5804 = vmand %vm5769, %vm5708
    %vm5805 = vmand %vm5769, %vm5709
    %vm5806 = vmand %vm5769, %vm5710
    %vm5807 = vmand %vm5770, %vm5711
    %vm5808 = vmand %vm5770, %vm5712
    %vm5809 = vmand %vm5770, %vm5713
    %vm5810 = vmand %vm5770, %vm5714
    %vm5811 = vmand %vm5771, %vm5715
    %vm5812 = vmand %vm5771, %vm5716
    %vm5813 = vmand %vm5771, %vm5717
    %vm5814 = vmand %vm5771, %vm5718
    %vm5815 = vmand %vm5772, %vm5719
    %vm5816 = vmand %vm5772, %vm5720
    %vm5817 = vmand %vm5772, %vm5721
    %vm5818 = vmand %vm5772, %vm5722
    %vm5819 = vmand %vm5773, %vm5723
    %vm5820 = vmand %vm5773, %vm5724
    %vm5821 = vmand %vm5773, %vm5725
    %vm5822 = vmand %vm5773, %vm5726
    %vm5823 = vmand %vm5774, %vm5727
    %vm5824 = vmand %vm5774, %vm5728
    %vm5825 = vmand %vm5774, %vm5729
    %vm5826 = vmand %vm5774, %vm5730
    %vm5827 = vmand %vm5775, %vm5731
    %vm5828 = vmand %vm5775, %vm5732
    %vm5829 = vmand %vm5775, %vm5733
    %vm5830 = vmand %vm5775, %vm5734
    %vm5831 = vmand %vm5776, %vm5735
    %vm5832 = vmand %vm5776, %vm5736
    %vm5833 = vmand %vm5776, %vm5737
    %vm5834 = vmand %vm5776, %vm5738
    %vm5835 = vmand %vm5777, %vm5739
    %vm5836 = vmand %vm5777, %vm5740
    %vm5837 = vmand %vm5777, %vm5741
    %vm5838 = vmand %vm5777, %vm5742
    %vm5839 = vmand %vm5778, %vm5743
    %vm5840 = vmand %vm5778, %vm5744
    %vm5841 = vmand %vm5778, %vm5745
    %vm5842 = vmand %vm5778, %vm5746
    %v5843 = vsel %vm5779, 1.0, 0.0
    %v5844 = vsel %vm5780, 1.0, 0.0
    %v5845 = vsel %vm5781, 1.0, 0.0
    %v5846 = vsel %vm5782, 1.0, 0.0
    %v5847 = vsel %vm5783, 1.0, 0.0
    %v5848 = vsel %vm5784, 1.0, 0.0
    %v5849 = vsel %vm5785, 1.0, 0.0
    %v5850 = vsel %vm5786, 1.0, 0.0
    %v5851 = vsel %vm5787, 1.0, 0.0
    %v5852 = vsel %vm5788, 1.0, 0.0
    %v5853 = vsel %vm5789, 1.0, 0.0
    %v5854 = vsel %vm5790, 1.0, 0.0
    %v5855 = vsel %vm5791, 1.0, 0.0
    %v5856 = vsel %vm5792, 1.0, 0.0
    %v5857 = vsel %vm5793, 1.0, 0.0
    %v5858 = vsel %vm5794, 1.0, 0.0
    %v5859 = vsel %vm5795, 1.0, 0.0
    %v5860 = vsel %vm5796, 1.0, 0.0
    %v5861 = vsel %vm5797, 1.0, 0.0
    %v5862 = vsel %vm5798, 1.0, 0.0
    %v5863 = vsel %vm5799, 1.0, 0.0
    %v5864 = vsel %vm5800, 1.0, 0.0
    %v5865 = vsel %vm5801, 1.0, 0.0
    %v5866 = vsel %vm5802, 1.0, 0.0
    %v5867 = vsel %vm5803, 1.0, 0.0
    %v5868 = vsel %vm5804, 1.0, 0.0
    %v5869 = vsel %vm5805, 1.0, 0.0
    %v5870 = vsel %vm5806, 1.0, 0.0
    %v5871 = vsel %vm5807, 1.0, 0.0
    %v5872 = vsel %vm5808, 1.0, 0.0
    %v5873 = vsel %vm5809, 1.0, 0.0
    %v5874 = vsel %vm5810, 1.0, 0.0
    %v5875 = vsel %vm5811, 1.0, 0.0
    %v5876 = vsel %vm5812, 1.0, 0.0
    %v5877 = vsel %vm5813, 1.0, 0.0
    %v5878 = vsel %vm5814, 1.0, 0.0
    %v5879 = vsel %vm5815, 1.0, 0.0
    %v5880 = vsel %vm5816, 1.0, 0.0
    %v5881 = vsel %vm5817, 1.0, 0.0
    %v5882 = vsel %vm5818, 1.0, 0.0
    %v5883 = vsel %vm5819, 1.0, 0.0
    %v5884 = vsel %vm5820, 1.0, 0.0
    %v5885 = vsel %vm5821, 1.0, 0.0
    %v5886 = vsel %vm5822, 1.0, 0.0
    %v5887 = vsel %vm5823, 1.0, 0.0
    %v5888 = vsel %vm5824, 1.0, 0.0
    %v5889 = vsel %vm5825, 1.0, 0.0
    %v5890 = vsel %vm5826, 1.0, 0.0
    %v5891 = vsel %vm5827, 1.0, 0.0
    %v5892 = vsel %vm5828, 1.0, 0.0
    %v5893 = vsel %vm5829, 1.0, 0.0
    %v5894 = vsel %vm5830, 1.0, 0.0
    %v5895 = vsel %vm5831, 1.0, 0.0
    %v5896 = vsel %vm5832, 1.0, 0.0
    %v5897 = vsel %vm5833, 1.0, 0.0
    %v5898 = vsel %vm5834, 1.0, 0.0
    %v5899 = vsel %vm5835, 1.0, 0.0
    %v5900 = vsel %vm5836, 1.0, 0.0
    %v5901 = vsel %vm5837, 1.0, 0.0
    %v5902 = vsel %vm5838, 1.0, 0.0
    %v5903 = vsel %vm5839, 1.0, 0.0
    %v5904 = vsel %vm5840, 1.0, 0.0
    %v5905 = vsel %vm5841, 1.0, 0.0
    %v5906 = vsel %vm5842, 1.0, 0.0
    %v5907 = vpack.c.bf16 %v5847, %v5843
    %v5908 = vpack.c.bf16 %v5848, %v5844
    %v5909 = vpack.c.bf16 %v5849, %v5845
    %v5910 = vpack.c.bf16 %v5850, %v5846
    %v5911 = vpack.c.bf16 %v5855, %v5851
    %v5912 = vpack.c.bf16 %v5856, %v5852
    %v5913 = vpack.c.bf16 %v5857, %v5853
    %v5914 = vpack.c.bf16 %v5858, %v5854
    %v5915 = vpack.c.bf16 %v5863, %v5859
    %v5916 = vpack.c.bf16 %v5864, %v5860
    %v5917 = vpack.c.bf16 %v5865, %v5861
    %v5918 = vpack.c.bf16 %v5866, %v5862
    %v5919 = vpack.c.bf16 %v5871, %v5867
    %v5920 = vpack.c.bf16 %v5872, %v5868
    %v5921 = vpack.c.bf16 %v5873, %v5869
    %v5922 = vpack.c.bf16 %v5874, %v5870
    %v5923 = vpack.c.bf16 %v5879, %v5875
    %v5924 = vpack.c.bf16 %v5880, %v5876
    %v5925 = vpack.c.bf16 %v5881, %v5877
    %v5926 = vpack.c.bf16 %v5882, %v5878
    %v5927 = vpack.c.bf16 %v5887, %v5883
    %v5928 = vpack.c.bf16 %v5888, %v5884
    %v5929 = vpack.c.bf16 %v5889, %v5885
    %v5930 = vpack.c.bf16 %v5890, %v5886
    %v5931 = vpack.c.bf16 %v5895, %v5891
    %v5932 = vpack.c.bf16 %v5896, %v5892
    %v5933 = vpack.c.bf16 %v5897, %v5893
    %v5934 = vpack.c.bf16 %v5898, %v5894
    %v5935 = vpack.c.bf16 %v5903, %v5899
    %v5936 = vpack.c.bf16 %v5904, %v5900
    %v5937 = vpack.c.bf16 %v5905, %v5901
    %v5938 = vpack.c.bf16 %v5906, %v5902
    %5939 = vmatpush.bf16.msra.mxu0 %v838
    %5940 = vmatpush.bf16.msra.mxu0 %v837
    %5941 = vmatpush.bf16.msra.mxu0 %v836
    %5942 = vmatpush.bf16.msra.mxu0 %v835
    %5943 = vmatpush.bf16.msra.mxu0 %v834
    %5944 = vmatpush.bf16.msra.mxu0 %v833
    %5945 = vmatpush.bf16.msra.mxu0 %v832
    %5946 = vmatpush.bf16.msra.mxu0 %v831
    %5947 = vmatmul.bf16.gmra.mxu0 %v5907
    %v5948 = vpop.f32.mrf.mxu0
    %v5949 = vadd.f32 0.0, %v5948
    %v5950 = vpop.f32.mrf.mxu0
    %v5951 = vadd.f32 0.0, %v5950
    %5952 = vmatmul.bf16.gmra.mxu0 %v5911
    %v5953 = vpop.f32.mrf.mxu0
    %v5954 = vadd.f32 0.0, %v5953
    %v5955 = vpop.f32.mrf.mxu0
    %v5956 = vadd.f32 0.0, %v5955
    %5957 = vmatmul.bf16.gmra.mxu0 %v5915
    %v5958 = vpop.f32.mrf.mxu0
    %v5959 = vadd.f32 0.0, %v5958
    %v5960 = vpop.f32.mrf.mxu0
    %v5961 = vadd.f32 0.0, %v5960
    %5962 = vmatmul.bf16.gmra.mxu0 %v5919
    %v5963 = vpop.f32.mrf.mxu0
    %v5964 = vadd.f32 0.0, %v5963
    %v5965 = vpop.f32.mrf.mxu0
    %v5966 = vadd.f32 0.0, %v5965
    %5967 = vmatmul.bf16.gmra.mxu0 %v5923
    %v5968 = vpop.f32.mrf.mxu0
    %v5969 = vadd.f32 0.0, %v5968
    %v5970 = vpop.f32.mrf.mxu0
    %v5971 = vadd.f32 0.0, %v5970
    %5972 = vmatmul.bf16.gmra.mxu0 %v5927
    %v5973 = vpop.f32.mrf.mxu0
    %v5974 = vadd.f32 0.0, %v5973
    %v5975 = vpop.f32.mrf.mxu0
    %v5976 = vadd.f32 0.0, %v5975
    %5977 = vmatmul.bf16.gmra.mxu0 %v5931
    %v5978 = vpop.f32.mrf.mxu0
    %v5979 = vadd.f32 0.0, %v5978
    %v5980 = vpop.f32.mrf.mxu0
    %v5981 = vadd.f32 0.0, %v5980
    %5982 = vmatmul.bf16.gmra.mxu0 %v5935
    %v5983 = vpop.f32.mrf.mxu0
    %v5984 = vadd.f32 0.0, %v5983
    %v5985 = vpop.f32.mrf.mxu0
    %v5986 = vadd.f32 0.0, %v5985
    %5987 = vdwg.mxu0
    %5988 = vmatpush.bf16.msra.mxu0 %v846
    %5989 = vmatpush.bf16.msra.mxu0 %v845
    %5990 = vmatpush.bf16.msra.mxu0 %v844
    %5991 = vmatpush.bf16.msra.mxu0 %v843
    %5992 = vmatpush.bf16.msra.mxu0 %v842
    %5993 = vmatpush.bf16.msra.mxu0 %v841
    %5994 = vmatpush.bf16.msra.mxu0 %v840
    %5995 = vmatpush.bf16.msra.mxu0 %v839
    %5996 = vmatmul.bf16.gmra.mxu0 %v5908
    %v5997 = vpop.f32.mrf.mxu0
    %v5998 = vadd.f32 %v5949, %v5997
    %v5999 = vpop.f32.mrf.mxu0
    %v6000 = vadd.f32 %v5951, %v5999
    %6001 = vmatmul.bf16.gmra.mxu0 %v5912
    %v6002 = vpop.f32.mrf.mxu0
    %v6003 = vadd.f32 %v5954, %v6002
    %v6004 = vpop.f32.mrf.mxu0
    %v6005 = vadd.f32 %v5956, %v6004
    %6006 = vmatmul.bf16.gmra.mxu0 %v5916
    %v6007 = vpop.f32.mrf.mxu0
    %v6008 = vadd.f32 %v5959, %v6007
    %v6009 = vpop.f32.mrf.mxu0
    %v6010 = vadd.f32 %v5961, %v6009
    %6011 = vmatmul.bf16.gmra.mxu0 %v5920
    %v6012 = vpop.f32.mrf.mxu0
    %v6013 = vadd.f32 %v5964, %v6012
    %v6014 = vpop.f32.mrf.mxu0
    %v6015 = vadd.f32 %v5966, %v6014
    %6016 = vmatmul.bf16.gmra.mxu0 %v5924
    %v6017 = vpop.f32.mrf.mxu0
    %v6018 = vadd.f32 %v5969, %v6017
    %v6019 = vpop.f32.mrf.mxu0
    %v6020 = vadd.f32 %v5971, %v6019
    %6021 = vmatmul.bf16.gmra.mxu0 %v5928
    %v6022 = vpop.f32.mrf.mxu0
    %v6023 = vadd.f32 %v5974, %v6022
    %v6024 = vpop.f32.mrf.mxu0
    %v6025 = vadd.f32 %v5976, %v6024
    %6026 = vmatmul.bf16.gmra.mxu0 %v5932
    %v6027 = vpop.f32.mrf.mxu0
    %v6028 = vadd.f32 %v5979, %v6027
    %v6029 = vpop.f32.mrf.mxu0
    %v6030 = vadd.f32 %v5981, %v6029
    %6031 = vmatmul.bf16.gmra.mxu0 %v5936
    %v6032 = vpop.f32.mrf.mxu0
    %v6033 = vadd.f32 %v5984, %v6032
    %v6034 = vpop.f32.mrf.mxu0
    %v6035 = vadd.f32 %v5986, %v6034
    %6036 = vdwg.mxu0
    %6037 = vmatpush.bf16.msra.mxu0 %v854
    %6038 = vmatpush.bf16.msra.mxu0 %v853
    %6039 = vmatpush.bf16.msra.mxu0 %v852
    %6040 = vmatpush.bf16.msra.mxu0 %v851
    %6041 = vmatpush.bf16.msra.mxu0 %v850
    %6042 = vmatpush.bf16.msra.mxu0 %v849
    %6043 = vmatpush.bf16.msra.mxu0 %v848
    %6044 = vmatpush.bf16.msra.mxu0 %v847
    %6045 = vmatmul.bf16.gmra.mxu0 %v5909
    %v6046 = vpop.f32.mrf.mxu0
    %v6047 = vadd.f32 %v5998, %v6046
    %v6048 = vpop.f32.mrf.mxu0
    %v6049 = vadd.f32 %v6000, %v6048
    %6050 = vmatmul.bf16.gmra.mxu0 %v5913
    %v6051 = vpop.f32.mrf.mxu0
    %v6052 = vadd.f32 %v6003, %v6051
    %v6053 = vpop.f32.mrf.mxu0
    %v6054 = vadd.f32 %v6005, %v6053
    %6055 = vmatmul.bf16.gmra.mxu0 %v5917
    %v6056 = vpop.f32.mrf.mxu0
    %v6057 = vadd.f32 %v6008, %v6056
    %v6058 = vpop.f32.mrf.mxu0
    %v6059 = vadd.f32 %v6010, %v6058
    %6060 = vmatmul.bf16.gmra.mxu0 %v5921
    %v6061 = vpop.f32.mrf.mxu0
    %v6062 = vadd.f32 %v6013, %v6061
    %v6063 = vpop.f32.mrf.mxu0
    %v6064 = vadd.f32 %v6015, %v6063
    %6065 = vmatmul.bf16.gmra.mxu0 %v5925
    %v6066 = vpop.f32.mrf.mxu0
    %v6067 = vadd.f32 %v6018, %v6066
    %v6068 = vpop.f32.mrf.mxu0
    %v6069 = vadd.f32 %v6020, %v6068
    %6070 = vmatmul.bf16.gmra.mxu0 %v5929
    %v6071 = vpop.f32.mrf.mxu0
    %v6072 = vadd.f32 %v6023, %v6071
    %v6073 = vpop.f32.mrf.mxu0
    %v6074 = vadd.f32 %v6025, %v6073
    %6075 = vmatmul.bf16.gmra.mxu0 %v5933
    %v6076 = vpop.f32.mrf.mxu0
    %v6077 = vadd.f32 %v6028, %v6076
    %v6078 = vpop.f32.mrf.mxu0
    %v6079 = vadd.f32 %v6030, %v6078
    %6080 = vmatmul.bf16.gmra.mxu0 %v5937
    %v6081 = vpop.f32.mrf.mxu0
    %v6082 = vadd.f32 %v6033, %v6081
    %v6083 = vpop.f32.mrf.mxu0
    %v6084 = vadd.f32 %v6035, %v6083
    %6085 = vdwg.mxu0
    %6086 = vmatpush.bf16.msra.mxu0 %v862
    %6087 = vmatpush.bf16.msra.mxu0 %v861
    %6088 = vmatpush.bf16.msra.mxu0 %v860
    %6089 = vmatpush.bf16.msra.mxu0 %v859
    %6090 = vmatpush.bf16.msra.mxu0 %v858
    %6091 = vmatpush.bf16.msra.mxu0 %v857
    %6092 = vmatpush.bf16.msra.mxu0 %v856
    %6093 = vmatpush.bf16.msra.mxu0 %v855
    %6094 = vmatmul.bf16.gmra.mxu0 %v5910
    %v6095 = vpop.f32.mrf.mxu0
    %v6096 = vadd.f32 %v6047, %v6095
    %v6097 = vpop.f32.mrf.mxu0
    %v6098 = vadd.f32 %v6049, %v6097
    %6099 = vmatmul.bf16.gmra.mxu0 %v5914
    %v6100 = vpop.f32.mrf.mxu0
    %v6101 = vadd.f32 %v6052, %v6100
    %v6102 = vpop.f32.mrf.mxu0
    %v6103 = vadd.f32 %v6054, %v6102
    %6104 = vmatmul.bf16.gmra.mxu0 %v5918
    %v6105 = vpop.f32.mrf.mxu0
    %v6106 = vadd.f32 %v6057, %v6105
    %v6107 = vpop.f32.mrf.mxu0
    %v6108 = vadd.f32 %v6059, %v6107
    %6109 = vmatmul.bf16.gmra.mxu0 %v5922
    %v6110 = vpop.f32.mrf.mxu0
    %v6111 = vadd.f32 %v6062, %v6110
    %v6112 = vpop.f32.mrf.mxu0
    %v6113 = vadd.f32 %v6064, %v6112
    %6114 = vmatmul.bf16.gmra.mxu0 %v5926
    %v6115 = vpop.f32.mrf.mxu0
    %v6116 = vadd.f32 %v6067, %v6115
    %v6117 = vpop.f32.mrf.mxu0
    %v6118 = vadd.f32 %v6069, %v6117
    %6119 = vmatmul.bf16.gmra.mxu0 %v5930
    %v6120 = vpop.f32.mrf.mxu0
    %v6121 = vadd.f32 %v6072, %v6120
    %v6122 = vpop.f32.mrf.mxu0
    %v6123 = vadd.f32 %v6074, %v6122
    %6124 = vmatmul.bf16.gmra.mxu0 %v5934
    %v6125 = vpop.f32.mrf.mxu0
    %v6126 = vadd.f32 %v6077, %v6125
    %v6127 = vpop.f32.mrf.mxu0
    %v6128 = vadd.f32 %v6079, %v6127
    %6129 = vmatmul.bf16.gmra.mxu0 %v5938
    %v6130 = vpop.f32.mrf.mxu0
    %v6131 = vadd.f32 %v6082, %v6130
    %v6132 = vpop.f32.mrf.mxu0
    %v6133 = vadd.f32 %v6084, %v6132
    %6134 = vdwg.mxu0
    %v6135 = vpack.c.bf16 %v6098, %v6096
    %v6136 = vpack.c.bf16 %v6103, %v6101
    %v6137 = vpack.c.bf16 %v6108, %v6106
    %v6138 = vpack.c.bf16 %v6113, %v6111
    %v6139 = vpack.c.bf16 %v6118, %v6116
    %v6140 = vpack.c.bf16 %v6123, %v6121
    %v6141 = vpack.c.bf16 %v6128, %v6126
    %v6142 = vpack.c.bf16 %v6133, %v6131
    %s6143 = scalar_lea.vmem %s1, 16
    %v6144 = vld [vmem:[%s6143] sm:$0x3]
    %v6146 = vsel %vm1642, %v6135, 0
    %v6149 = vsel %vm1642, %v6136, 0
    %v6152 = vsel %vm1642, %v6137, 0
    %v6155 = vsel %vm1642, %v6138, 0
    %v6158 = vsel %vm1642, %v6139, 0
    %v6161 = vsel %vm1642, %v6140, 0
    %v6164 = vsel %vm1642, %v6141, 0
    %v6167 = vsel %vm1642, %v6142, 0
    %v6170 = vand.u32 %v6144, %v1670
    %6172 = vmatpush.bf16.msra.mxu0 0
    %6173 = vmatpush.bf16.msra.mxu0 0
    %6174 = vmatpush.bf16.msra.mxu0 0
    %6175 = vmatpush.bf16.msra.mxu0 0
    %6176 = vmatpush.bf16.msra.mxu0 0
    %6177 = vmatpush.bf16.msra.mxu0 0
    %6178 = vmatpush.bf16.msra.mxu0 0
    %6179 = vmatpush.bf16.msra.mxu0 %v6170
    %6180 = vmatmul.bf16.gmra.mxu0 %v6146
    %v6181 = vpop.f32.mrf.mxu0
    %v6182 = vadd.f32 0.0, %v6181
    %v6183 = vpop.f32.mrf.mxu0
    %v6184 = vadd.f32 0.0, %v6183
    %6185 = vmatmul.bf16.gmra.mxu0 %v6149
    %v6186 = vpop.f32.mrf.mxu0
    %v6187 = vadd.f32 0.0, %v6186
    %v6188 = vpop.f32.mrf.mxu0
    %v6189 = vadd.f32 0.0, %v6188
    %6190 = vmatmul.bf16.gmra.mxu0 %v6152
    %v6191 = vpop.f32.mrf.mxu0
    %v6192 = vadd.f32 0.0, %v6191
    %v6193 = vpop.f32.mrf.mxu0
    %v6194 = vadd.f32 0.0, %v6193
    %6195 = vmatmul.bf16.gmra.mxu0 %v6155
    %v6196 = vpop.f32.mrf.mxu0
    %v6197 = vadd.f32 0.0, %v6196
    %v6198 = vpop.f32.mrf.mxu0
    %v6199 = vadd.f32 0.0, %v6198
    %6200 = vmatmul.bf16.gmra.mxu0 %v6158
    %v6201 = vpop.f32.mrf.mxu0
    %v6202 = vadd.f32 0.0, %v6201
    %v6203 = vpop.f32.mrf.mxu0
    %v6204 = vadd.f32 0.0, %v6203
    %6205 = vmatmul.bf16.gmra.mxu0 %v6161
    %v6206 = vpop.f32.mrf.mxu0
    %v6207 = vadd.f32 0.0, %v6206
    %v6208 = vpop.f32.mrf.mxu0
    %v6209 = vadd.f32 0.0, %v6208
    %6210 = vmatmul.bf16.gmra.mxu0 %v6164
    %v6211 = vpop.f32.mrf.mxu0
    %v6212 = vadd.f32 0.0, %v6211
    %v6213 = vpop.f32.mrf.mxu0
    %v6214 = vadd.f32 0.0, %v6213
    %6215 = vmatmul.bf16.gmra.mxu0 %v6167
    %v6216 = vpop.f32.mrf.mxu0
    %v6217 = vadd.f32 0.0, %v6216
    %v6218 = vpop.f32.mrf.mxu0
    %v6219 = vadd.f32 0.0, %v6218
    %6220 = vdwg.mxu0
    %v6221 = vadd.f32 %v5619, %v6182
    %v6222 = vadd.f32 %v5620, %v6184
    %v6223 = vadd.f32 %v5621, %v6187
    %v6224 = vadd.f32 %v5622, %v6189
    %v6225 = vadd.f32 %v5623, %v6192
    %v6226 = vadd.f32 %v5624, %v6194
    %v6227 = vadd.f32 %v5625, %v6197
    %v6228 = vadd.f32 %v5626, %v6199
    %v6229 = vadd.f32 %v5627, %v6202
    %v6230 = vadd.f32 %v5628, %v6204
    %v6231 = vadd.f32 %v5629, %v6207
    %v6232 = vadd.f32 %v5630, %v6209
    %v6233 = vadd.f32 %v5631, %v6212
    %v6234 = vadd.f32 %v5632, %v6214
    %v6235 = vadd.f32 %v5633, %v6217
    %v6236 = vadd.f32 %v5634, %v6219
    %vm6237 = vcmask 130048
    %v6238 = vsel %vm6237, %v6221, 0.0
    %v6239 = vsel %vm6237, %v6222, 0.0
    %v6240 = vadd.f32 %v6238, %v6239
    %v6241 = vsel %vm6237, %v6223, 0.0
    %v6242 = vadd.f32 %v6240, %v6241
    %v6243 = vsel %vm6237, %v6224, 0.0
    %v6244 = vadd.f32 %v6242, %v6243
    %v6245 = vsel %vm6237, %v6225, 0.0
    %v6246 = vadd.f32 %v6244, %v6245
    %v6247 = vsel %vm6237, %v6226, 0.0
    %v6248 = vadd.f32 %v6246, %v6247
    %v6249 = vsel %vm6237, %v6227, 0.0
    %v6250 = vadd.f32 %v6248, %v6249
    %v6251 = vsel %vm6237, %v6228, 0.0
    %v6252 = vadd.f32 %v6250, %v6251
    %v6253 = vsel %vm6237, %v6229, 0.0
    %v6254 = vadd.f32 %v6252, %v6253
    %v6255 = vsel %vm6237, %v6230, 0.0
    %v6256 = vadd.f32 %v6254, %v6255
    %v6257 = vsel %vm6237, %v6231, 0.0
    %v6258 = vadd.f32 %v6256, %v6257
    %v6259 = vsel %vm6237, %v6232, 0.0
    %v6260 = vadd.f32 %v6258, %v6259
    %v6261 = vsel %vm6237, %v6233, 0.0
    %v6262 = vadd.f32 %v6260, %v6261
    %v6263 = vsel %vm6237, %v6234, 0.0
    %v6264 = vadd.f32 %v6262, %v6263
    %v6265 = vsel %vm6237, %v6235, 0.0
    %v6266 = vadd.f32 %v6264, %v6265
    %v6267 = vsel %vm6237, %v6236, 0.0
    %v6268 = vadd.f32 %v6266, %v6267
    %v6269 = vrot.slane %v6268, 4
    %v6270 = vadd.f32 %v6268, %v6269
    %v6271 = vrot.slane %v6270, 2
    %v6272 = vadd.f32 %v6270, %v6271
    %v6273 = vrot.slane %v6272, 1
    %v6274 = vadd.f32 %v6272, %v6273
    %v6275 = vmul.f32 %v6221, %v6221
    %v6276 = vmul.f32 %v6222, %v6222
    %v6277 = vmul.f32 %v6223, %v6223
    %v6278 = vmul.f32 %v6224, %v6224
    %v6279 = vmul.f32 %v6225, %v6225
    %v6280 = vmul.f32 %v6226, %v6226
    %v6281 = vmul.f32 %v6227, %v6227
    %v6282 = vmul.f32 %v6228, %v6228
    %v6283 = vmul.f32 %v6229, %v6229
    %v6284 = vmul.f32 %v6230, %v6230
    %v6285 = vmul.f32 %v6231, %v6231
    %v6286 = vmul.f32 %v6232, %v6232
    %v6287 = vmul.f32 %v6233, %v6233
    %v6288 = vmul.f32 %v6234, %v6234
    %v6289 = vmul.f32 %v6235, %v6235
    %v6290 = vmul.f32 %v6236, %v6236
    %v6291 = vsel %vm6237, %v6275, 0.0
    %v6292 = vsel %vm6237, %v6276, 0.0
    %v6293 = vadd.f32 %v6291, %v6292
    %v6294 = vsel %vm6237, %v6277, 0.0
    %v6295 = vadd.f32 %v6293, %v6294
    %v6296 = vsel %vm6237, %v6278, 0.0
    %v6297 = vadd.f32 %v6295, %v6296
    %v6298 = vsel %vm6237, %v6279, 0.0
    %v6299 = vadd.f32 %v6297, %v6298
    %v6300 = vsel %vm6237, %v6280, 0.0
    %v6301 = vadd.f32 %v6299, %v6300
    %v6302 = vsel %vm6237, %v6281, 0.0
    %v6303 = vadd.f32 %v6301, %v6302
    %v6304 = vsel %vm6237, %v6282, 0.0
    %v6305 = vadd.f32 %v6303, %v6304
    %v6306 = vsel %vm6237, %v6283, 0.0
    %v6307 = vadd.f32 %v6305, %v6306
    %v6308 = vsel %vm6237, %v6284, 0.0
    %v6309 = vadd.f32 %v6307, %v6308
    %v6310 = vsel %vm6237, %v6285, 0.0
    %v6311 = vadd.f32 %v6309, %v6310
    %v6312 = vsel %vm6237, %v6286, 0.0
    %v6313 = vadd.f32 %v6311, %v6312
    %v6314 = vsel %vm6237, %v6287, 0.0
    %v6315 = vadd.f32 %v6313, %v6314
    %v6316 = vsel %vm6237, %v6288, 0.0
    %v6317 = vadd.f32 %v6315, %v6316
    %v6318 = vsel %vm6237, %v6289, 0.0
    %v6319 = vadd.f32 %v6317, %v6318
    %v6320 = vsel %vm6237, %v6290, 0.0
    %v6321 = vadd.f32 %v6319, %v6320
    %v6322 = vrot.slane %v6321, 4
    %v6323 = vadd.f32 %v6321, %v6322
    %v6324 = vrot.slane %v6323, 2
    %v6325 = vadd.f32 %v6323, %v6324
    %v6326 = vrot.slane %v6325, 1
    %v6327 = vadd.f32 %v6325, %v6326
    %v6328 = vmul.f32 %v6274, 0.0078125
    %v6329 = vmul.f32 %v6327, 0.0078125
    %v6330 = vmul.f32 %v6328, %v6328
    %v6331 = vsub.f32 %v6329, %v6330
    %v6332 = vadd.f32 %v6331, 1e-05
    %v6333 = vrsqrt.pop %v6332
    %v6334 = vmul.f32 %v6333, %v6332
    %v6335 = vmul.f32 %v6334, %v6333
    %v6336 = vmul.f32 0.5, %v6335
    %v6337 = vsub.f32 1.5, %v6336
    %v6338 = vmul.f32 %v6333, %v6337
    %vm6339 = vweird.f32 %v6332
    %vm6340 = vweird.f32 %v6333
    %vm6341 = vmor %vm6339, %vm6340
    %v6342 = vsel %vm6341, %v6333, %v6338
    %v6343 = vmul.f32 %v6342, %v119
    %v6344 = vsub.f32 %v6221, %v6328
    %v6345 = vsub.f32 %v6222, %v6328
    %v6346 = vsub.f32 %v6223, %v6328
    %v6347 = vsub.f32 %v6224, %v6328
    %v6348 = vsub.f32 %v6225, %v6328
    %v6349 = vsub.f32 %v6226, %v6328
    %v6350 = vsub.f32 %v6227, %v6328
    %v6351 = vsub.f32 %v6228, %v6328
    %v6352 = vsub.f32 %v6229, %v6328
    %v6353 = vsub.f32 %v6230, %v6328
    %v6354 = vsub.f32 %v6231, %v6328
    %v6355 = vsub.f32 %v6232, %v6328
    %v6356 = vsub.f32 %v6233, %v6328
    %v6357 = vsub.f32 %v6234, %v6328
    %v6358 = vsub.f32 %v6235, %v6328
    %v6359 = vsub.f32 %v6236, %v6328
    %v6360 = vperm.slane %v6343, 0
    %v6361 = vmul.f32 %v6344, %v6360
    %v6362 = vmul.f32 %v6345, %v6360
    %v6363 = vmul.f32 %v6346, %v6360
    %v6364 = vmul.f32 %v6347, %v6360
    %v6365 = vmul.f32 %v6348, %v6360
    %v6366 = vmul.f32 %v6349, %v6360
    %v6367 = vmul.f32 %v6350, %v6360
    %v6368 = vmul.f32 %v6351, %v6360
    %v6369 = vmul.f32 %v6352, %v6360
    %v6370 = vmul.f32 %v6353, %v6360
    %v6371 = vmul.f32 %v6354, %v6360
    %v6372 = vmul.f32 %v6355, %v6360
    %v6373 = vmul.f32 %v6356, %v6360
    %v6374 = vmul.f32 %v6357, %v6360
    %v6375 = vmul.f32 %v6358, %v6360
    %v6376 = vmul.f32 %v6359, %v6360
    %v6377 = vperm.slane %v120, 0
    %v6378 = vadd.f32 %v6361, %v6377
    %v6379 = vadd.f32 %v6362, %v6377
    %v6380 = vadd.f32 %v6363, %v6377
    %v6381 = vadd.f32 %v6364, %v6377
    %v6382 = vadd.f32 %v6365, %v6377
    %v6383 = vadd.f32 %v6366, %v6377
    %v6384 = vadd.f32 %v6367, %v6377
    %v6385 = vadd.f32 %v6368, %v6377
    %v6386 = vadd.f32 %v6369, %v6377
    %v6387 = vadd.f32 %v6370, %v6377
    %v6388 = vadd.f32 %v6371, %v6377
    %v6389 = vadd.f32 %v6372, %v6377
    %v6390 = vadd.f32 %v6373, %v6377
    %v6391 = vadd.f32 %v6374, %v6377
    %v6392 = vadd.f32 %v6375, %v6377
    %v6393 = vadd.f32 %v6376, %v6377
    %v6394 = vmax.f32 %v6378, 0.0
    %v6395 = vmax.f32 %v6379, 0.0
    %v6396 = vmax.f32 %v6380, 0.0
    %v6397 = vmax.f32 %v6381, 0.0
    %v6398 = vmax.f32 %v6382, 0.0
    %v6399 = vmax.f32 %v6383, 0.0
    %v6400 = vmax.f32 %v6384, 0.0
    %v6401 = vmax.f32 %v6385, 0.0
    %v6402 = vmax.f32 %v6386, 0.0
    %v6403 = vmax.f32 %v6387, 0.0
    %v6404 = vmax.f32 %v6388, 0.0
    %v6405 = vmax.f32 %v6389, 0.0
    %v6406 = vmax.f32 %v6390, 0.0
    %v6407 = vmax.f32 %v6391, 0.0
    %v6408 = vmax.f32 %v6392, 0.0
    %v6409 = vmax.f32 %v6393, 0.0
    %v6410 = vpack.c.bf16 %v6395, %v6394
    %v6411 = vpack.c.bf16 %v6397, %v6396
    %v6412 = vpack.c.bf16 %v6399, %v6398
    %v6413 = vpack.c.bf16 %v6401, %v6400
    %v6414 = vpack.c.bf16 %v6403, %v6402
    %v6415 = vpack.c.bf16 %v6405, %v6404
    %v6416 = vpack.c.bf16 %v6407, %v6406
    %v6417 = vpack.c.bf16 %v6409, %v6408
    %v6418 = vld [vmem:[#allocation5 + $0x2] sm:$0x1]
    %v6419 = vld [vmem:[#allocation5 + $0x3] sm:$0x1]
    %v6420 = vshra.s32 %v122, 4
    %v6421 = vshra.s32 %v123, 4
    %v6422 = vshra.s32 %v124, 4
    %v6423 = vshra.s32 %v125, 4
    %v6424 = vand.u32 %v122, 15
    %v6425 = vand.u32 %v123, 15
    %v6426 = vand.u32 %v124, 15
    %v6427 = vand.u32 %v125, 15
    %v6428 = vshra.s32 %v6424, 2
    %v6429 = vshra.s32 %v6425, 2
    %v6430 = vshra.s32 %v6426, 2
    %v6431 = vshra.s32 %v6427, 2
    %v6432 = vand.u32 %v6424, 3
    %v6433 = vand.u32 %v6425, 3
    %v6434 = vand.u32 %v6426, 3
    %v6435 = vand.u32 %v6427, 3
    %v6436 = vmul.u32 %v6428, 2
    %v6437 = vmul.u32 %v6429, 2
    %v6438 = vmul.u32 %v6430, 2
    %v6439 = vmul.u32 %v6431, 2
    %v6440 = vsub.s32 %v6436, 1
    %v6441 = vsub.s32 %v6437, 1
    %v6442 = vsub.s32 %v6438, 1
    %v6443 = vsub.s32 %v6439, 1
    %v6444 = vmul.u32 %v6432, 2
    %v6445 = vmul.u32 %v6433, 2
    %v6446 = vmul.u32 %v6434, 2
    %v6447 = vmul.u32 %v6435, 2
    %v6448 = vsub.s32 %v6444, 1
    %v6449 = vsub.s32 %v6445, 1
    %v6450 = vsub.s32 %v6446, 1
    %v6451 = vsub.s32 %v6447, 1
    %vm6452 = vcmp.ge.s32.totalorder %v6440, 0
    %vm6453 = vcmp.ge.s32.totalorder %v6441, 0
    %vm6454 = vcmp.ge.s32.totalorder %v6442, 0
    %vm6455 = vcmp.ge.s32.totalorder %v6443, 0
    %vm6456 = vcmp.lt.s32.totalorder %v6440, 8
    %vm6457 = vcmp.lt.s32.totalorder %v6441, 8
    %vm6458 = vcmp.lt.s32.totalorder %v6442, 8
    %vm6459 = vcmp.lt.s32.totalorder %v6443, 8
    %vm6460 = vmand %vm6452, %vm6456
    %vm6461 = vmand %vm6453, %vm6457
    %vm6462 = vmand %vm6454, %vm6458
    %vm6463 = vmand %vm6455, %vm6459
    %vm6464 = vcmp.ge.s32.totalorder %v6448, 0
    %vm6465 = vcmp.ge.s32.totalorder %v6449, 0
    %vm6466 = vcmp.ge.s32.totalorder %v6450, 0
    %vm6467 = vcmp.ge.s32.totalorder %v6451, 0
    %vm6468 = vmand %vm6460, %vm6464
    %vm6469 = vmand %vm6461, %vm6465
    %vm6470 = vmand %vm6462, %vm6466
    %vm6471 = vmand %vm6463, %vm6467
    %vm6472 = vcmp.lt.s32.totalorder %v6448, 8
    %vm6473 = vcmp.lt.s32.totalorder %v6449, 8
    %vm6474 = vcmp.lt.s32.totalorder %v6450, 8
    %vm6475 = vcmp.lt.s32.totalorder %v6451, 8
    %vm6476 = vmand %vm6468, %vm6472
    %vm6477 = vmand %vm6469, %vm6473
    %vm6478 = vmand %vm6470, %vm6474
    %vm6479 = vmand %vm6471, %vm6475
    %v6480 = vmul.u32 %v6420, 64
    %v6481 = vmul.u32 %v6421, 64
    %v6482 = vmul.u32 %v6422, 64
    %v6483 = vmul.u32 %v6423, 64
    %v6484 = vmul.u32 %v6440, 8
    %v6485 = vmul.u32 %v6441, 8
    %v6486 = vmul.u32 %v6442, 8
    %v6487 = vmul.u32 %v6443, 8
    %v6488 = vadd.s32 %v6480, %v6484
    %v6489 = vadd.s32 %v6481, %v6485
    %v6490 = vadd.s32 %v6482, %v6486
    %v6491 = vadd.s32 %v6483, %v6487
    %v6492 = vadd.s32 %v6488, %v6448
    %v6493 = vadd.s32 %v6489, %v6449
    %v6494 = vadd.s32 %v6490, %v6450
    %v6495 = vadd.s32 %v6491, %v6451
    %vm6496 = vcmp.eq.s32.totalorder %v203, %v6492
    %vm6497 = vcmp.eq.s32.totalorder %v203, %v6493
    %vm6498 = vcmp.eq.s32.totalorder %v203, %v6494
    %vm6499 = vcmp.eq.s32.totalorder %v203, %v6495
    %v6500 = vsel %vm6476, 1, 0
    %v6501 = vsel %vm6477, 1, 0
    %v6502 = vsel %vm6478, 1, 0
    %v6503 = vsel %vm6479, 1, 0
    %vm6504 = vcmp.eq.s32.totalorder %v6500, 1
    %vm6505 = vcmp.eq.s32.totalorder %v6501, 1
    %vm6506 = vcmp.eq.s32.totalorder %v6502, 1
    %vm6507 = vcmp.eq.s32.totalorder %v6503, 1
    %vm6508 = vmand %vm6504, %vm6496
    %vm6509 = vmand %vm6505, %vm6497
    %vm6510 = vmand %vm6506, %vm6498
    %vm6511 = vmand %vm6507, %vm6499
    %v6512 = vsel %vm6508, 1.0, 0.0
    %v6513 = vsel %vm6509, 1.0, 0.0
    %v6514 = vsel %vm6510, 1.0, 0.0
    %v6515 = vsel %vm6511, 1.0, 0.0
    %v6516 = vpack.c.bf16 %v6513, %v6512
    %v6517 = vpack.c.bf16 %v6515, %v6514
    %6518 = vmatpush.bf16.msra.mxu0 %v6417
    %6519 = vmatpush.bf16.msra.mxu0 %v6416
    %6520 = vmatpush.bf16.msra.mxu0 %v6415
    %6521 = vmatpush.bf16.msra.mxu0 %v6414
    %6522 = vmatpush.bf16.msra.mxu0 %v6413
    %6523 = vmatpush.bf16.msra.mxu0 %v6412
    %6524 = vmatpush.bf16.msra.mxu0 %v6411
    %6525 = vmatpush.bf16.msra.mxu0 %v6410
    %6526 = vmatmul.bf16.gmra.mxu0 %v6516
    %v6527 = vpop.f32.mrf.mxu0
    %v6528 = vadd.f32 0.0, %v6527
    %v6529 = vpop.f32.mrf.mxu0
    %v6530 = vadd.f32 0.0, %v6529
    %6531 = vmatmul.bf16.gmra.mxu0 %v6517
    %v6532 = vpop.f32.mrf.mxu0
    %v6533 = vadd.f32 0.0, %v6532
    %v6534 = vpop.f32.mrf.mxu0
    %v6535 = vadd.f32 0.0, %v6534
    %6536 = vdwg.mxu0
    %v6537 = vpack.c.bf16 %v6530, %v6528
    %v6538 = vpack.c.bf16 %v6535, %v6533
    %v6539 = vld [vmem:[#allocation2] sm:$0xf]
    %v6540 = vld [vmem:[#allocation2 + $0x4] sm:$0xf]
    %vm6541 = vcmp.ge.s32.totalorder %v6444, 0
    %vm6542 = vcmp.ge.s32.totalorder %v6445, 0
    %vm6543 = vcmp.ge.s32.totalorder %v6446, 0
    %vm6544 = vcmp.ge.s32.totalorder %v6447, 0
    %vm6545 = vmand %vm6460, %vm6541
    %vm6546 = vmand %vm6461, %vm6542
    %vm6547 = vmand %vm6462, %vm6543
    %vm6548 = vmand %vm6463, %vm6544
    %vm6549 = vcmp.lt.s32.totalorder %v6444, 8
    %vm6550 = vcmp.lt.s32.totalorder %v6445, 8
    %vm6551 = vcmp.lt.s32.totalorder %v6446, 8
    %vm6552 = vcmp.lt.s32.totalorder %v6447, 8
    %vm6553 = vmand %vm6545, %vm6549
    %vm6554 = vmand %vm6546, %vm6550
    %vm6555 = vmand %vm6547, %vm6551
    %vm6556 = vmand %vm6548, %vm6552
    %v6557 = vadd.s32 %v6488, %v6444
    %v6558 = vadd.s32 %v6489, %v6445
    %v6559 = vadd.s32 %v6490, %v6446
    %v6560 = vadd.s32 %v6491, %v6447
    %vm6561 = vcmp.eq.s32.totalorder %v203, %v6557
    %vm6562 = vcmp.eq.s32.totalorder %v203, %v6558
    %vm6563 = vcmp.eq.s32.totalorder %v203, %v6559
    %vm6564 = vcmp.eq.s32.totalorder %v203, %v6560
    %v6565 = vsel %vm6553, 1, 0
    %v6566 = vsel %vm6554, 1, 0
    %v6567 = vsel %vm6555, 1, 0
    %v6568 = vsel %vm6556, 1, 0
    %vm6569 = vcmp.eq.s32.totalorder %v6565, 1
    %vm6570 = vcmp.eq.s32.totalorder %v6566, 1
    %vm6571 = vcmp.eq.s32.totalorder %v6567, 1
    %vm6572 = vcmp.eq.s32.totalorder %v6568, 1
    %vm6573 = vmand %vm6569, %vm6561
    %vm6574 = vmand %vm6570, %vm6562
    %vm6575 = vmand %vm6571, %vm6563
    %vm6576 = vmand %vm6572, %vm6564
    %v6577 = vsel %vm6573, 1.0, 0.0
    %v6578 = vsel %vm6574, 1.0, 0.0
    %v6579 = vsel %vm6575, 1.0, 0.0
    %v6580 = vsel %vm6576, 1.0, 0.0
    %v6581 = vpack.c.bf16 %v6578, %v6577
    %v6582 = vpack.c.bf16 %v6580, %v6579
    %6583 = vmatpush.bf16.msra.mxu0 %v6417
    %6584 = vmatpush.bf16.msra.mxu0 %v6416
    %6585 = vmatpush.bf16.msra.mxu0 %v6415
    %6586 = vmatpush.bf16.msra.mxu0 %v6414
    %6587 = vmatpush.bf16.msra.mxu0 %v6413
    %6588 = vmatpush.bf16.msra.mxu0 %v6412
    %6589 = vmatpush.bf16.msra.mxu0 %v6411
    %6590 = vmatpush.bf16.msra.mxu0 %v6410
    %6591 = vmatmul.bf16.gmra.mxu0 %v6581
    %v6592 = vpop.f32.mrf.mxu0
    %v6593 = vadd.f32 0.0, %v6592
    %v6594 = vpop.f32.mrf.mxu0
    %v6595 = vadd.f32 0.0, %v6594
    %6596 = vmatmul.bf16.gmra.mxu0 %v6582
    %v6597 = vpop.f32.mrf.mxu0
    %v6598 = vadd.f32 0.0, %v6597
    %v6599 = vpop.f32.mrf.mxu0
    %v6600 = vadd.f32 0.0, %v6599
    %6601 = vdwg.mxu0
    %v6602 = vpack.c.bf16 %v6595, %v6593
    %v6603 = vpack.c.bf16 %v6600, %v6598
    %s6604 = scalar_lea.vmem [#allocation2], 8
    %v6605 = vld [vmem:[%s6604] sm:$0xf]
    %v6606 = vld [vmem:[%s6604 + $0x4] sm:$0xf]
    %v6609 = vunpack.c.l.b16 %v6605
    %v6610 = vunpack.c.l.b16 %v6606
    %v6611 = vpack.c.b16 %v6610, %v6609
    %v6614 = vsel %vm6237, %v6602, 0
    %v6617 = vsel %vm6237, %v6603, 0
    %6619 = vmatpush.bf16.msra.mxu0 0
    %6620 = vmatpush.bf16.msra.mxu0 0
    %6621 = vmatpush.bf16.msra.mxu0 0
    %6622 = vmatpush.bf16.msra.mxu0 0
    %6623 = vmatpush.bf16.msra.mxu0 0
    %6624 = vmatpush.bf16.msra.mxu0 0
    %6625 = vmatpush.bf16.msra.mxu0 0
    %6626 = vmatpush.bf16.msra.mxu0 %v6611
    %6627 = vmatmul.bf16.gmra.mxu0 %v6614
    %v6628 = vpop.f32.mrf.mxu0
    %v6629 = vadd.f32 0.0, %v6628
    %v6630 = vpop.f32.mrf.mxu0
    %v6631 = vadd.f32 0.0, %v6630
    %6632 = vmatmul.bf16.gmra.mxu0 %v6617
    %v6633 = vpop.f32.mrf.mxu0
    %v6634 = vadd.f32 0.0, %v6633
    %v6635 = vpop.f32.mrf.mxu0
    %v6636 = vadd.f32 0.0, %v6635
    %6637 = vdwg.mxu0
    %v6640 = vunpack.c.l.b16 %v6539
    %v6641 = vunpack.c.l.b16 %v6540
    %v6642 = vpack.c.b16 %v6641, %v6640
    %v6645 = vsel %vm6237, %v6537, 0
    %v6648 = vsel %vm6237, %v6538, 0
    %6650 = vmatpush.bf16.msra.mxu0 0
    %6651 = vmatpush.bf16.msra.mxu0 0
    %6652 = vmatpush.bf16.msra.mxu0 0
    %6653 = vmatpush.bf16.msra.mxu0 0
    %6654 = vmatpush.bf16.msra.mxu0 0
    %6655 = vmatpush.bf16.msra.mxu0 0
    %6656 = vmatpush.bf16.msra.mxu0 0
    %6657 = vmatpush.bf16.msra.mxu0 %v6642
    %6658 = vmatmul.bf16.gmra.mxu0 %v6645
    %v6659 = vpop.f32.mrf.mxu0
    %v6660 = vadd.f32 %v6629, %v6659
    %v6661 = vpop.f32.mrf.mxu0
    %v6662 = vadd.f32 %v6631, %v6661
    %6663 = vmatmul.bf16.gmra.mxu0 %v6648
    %v6664 = vpop.f32.mrf.mxu0
    %v6665 = vadd.f32 %v6634, %v6664
    %v6666 = vpop.f32.mrf.mxu0
    %v6667 = vadd.f32 %v6636, %v6666
    %6668 = vdwg.mxu0
    %v6669 = vadd.s32 %v6448, 2
    %v6670 = vadd.s32 %v6449, 2
    %v6671 = vadd.s32 %v6450, 2
    %v6672 = vadd.s32 %v6451, 2
    %vm6673 = vcmp.ge.s32.totalorder %v6669, 0
    %vm6674 = vcmp.ge.s32.totalorder %v6670, 0
    %vm6675 = vcmp.ge.s32.totalorder %v6671, 0
    %vm6676 = vcmp.ge.s32.totalorder %v6672, 0
    %vm6677 = vmand %vm6460, %vm6673
    %vm6678 = vmand %vm6461, %vm6674
    %vm6679 = vmand %vm6462, %vm6675
    %vm6680 = vmand %vm6463, %vm6676
    %vm6681 = vcmp.lt.s32.totalorder %v6669, 8
    %vm6682 = vcmp.lt.s32.totalorder %v6670, 8
    %vm6683 = vcmp.lt.s32.totalorder %v6671, 8
    %vm6684 = vcmp.lt.s32.totalorder %v6672, 8
    %vm6685 = vmand %vm6677, %vm6681
    %vm6686 = vmand %vm6678, %vm6682
    %vm6687 = vmand %vm6679, %vm6683
    %vm6688 = vmand %vm6680, %vm6684
    %v6689 = vadd.s32 %v6488, %v6669
    %v6690 = vadd.s32 %v6489, %v6670
    %v6691 = vadd.s32 %v6490, %v6671
    %v6692 = vadd.s32 %v6491, %v6672
    %vm6693 = vcmp.eq.s32.totalorder %v203, %v6689
    %vm6694 = vcmp.eq.s32.totalorder %v203, %v6690
    %vm6695 = vcmp.eq.s32.totalorder %v203, %v6691
    %vm6696 = vcmp.eq.s32.totalorder %v203, %v6692
    %v6697 = vsel %vm6685, 1, 0
    %v6698 = vsel %vm6686, 1, 0
    %v6699 = vsel %vm6687, 1, 0
    %v6700 = vsel %vm6688, 1, 0
    %vm6701 = vcmp.eq.s32.totalorder %v6697, 1
    %vm6702 = vcmp.eq.s32.totalorder %v6698, 1
    %vm6703 = vcmp.eq.s32.totalorder %v6699, 1
    %vm6704 = vcmp.eq.s32.totalorder %v6700, 1
    %vm6705 = vmand %vm6701, %vm6693
    %vm6706 = vmand %vm6702, %vm6694
    %vm6707 = vmand %vm6703, %vm6695
    %vm6708 = vmand %vm6704, %vm6696
    %v6709 = vsel %vm6705, 1.0, 0.0
    %v6710 = vsel %vm6706, 1.0, 0.0
    %v6711 = vsel %vm6707, 1.0, 0.0
    %v6712 = vsel %vm6708, 1.0, 0.0
    %v6713 = vpack.c.bf16 %v6710, %v6709
    %v6714 = vpack.c.bf16 %v6712, %v6711
    %6715 = vmatpush.bf16.msra.mxu0 %v6417
    %6716 = vmatpush.bf16.msra.mxu0 %v6416
    %6717 = vmatpush.bf16.msra.mxu0 %v6415
    %6718 = vmatpush.bf16.msra.mxu0 %v6414
    %6719 = vmatpush.bf16.msra.mxu0 %v6413
    %6720 = vmatpush.bf16.msra.mxu0 %v6412
    %6721 = vmatpush.bf16.msra.mxu0 %v6411
    %6722 = vmatpush.bf16.msra.mxu0 %v6410
    %6723 = vmatmul.bf16.gmra.mxu0 %v6713
    %v6724 = vpop.f32.mrf.mxu0
    %v6725 = vadd.f32 0.0, %v6724
    %v6726 = vpop.f32.mrf.mxu0
    %v6727 = vadd.f32 0.0, %v6726
    %6728 = vmatmul.bf16.gmra.mxu0 %v6714
    %v6729 = vpop.f32.mrf.mxu0
    %v6730 = vadd.f32 0.0, %v6729
    %v6731 = vpop.f32.mrf.mxu0
    %v6732 = vadd.f32 0.0, %v6731
    %6733 = vdwg.mxu0
    %v6734 = vpack.c.bf16 %v6727, %v6725
    %v6735 = vpack.c.bf16 %v6732, %v6730
    %s6736 = scalar_lea.vmem [#allocation2], 16
    %v6737 = vld [vmem:[%s6736] sm:$0xf]
    %v6738 = vld [vmem:[%s6736 + $0x4] sm:$0xf]
    %v6741 = vunpack.c.l.b16 %v6737
    %v6742 = vunpack.c.l.b16 %v6738
    %v6743 = vpack.c.b16 %v6742, %v6741
    %v6746 = vsel %vm6237, %v6734, 0
    %v6749 = vsel %vm6237, %v6735, 0
    %6751 = vmatpush.bf16.msra.mxu0 0
    %6752 = vmatpush.bf16.msra.mxu0 0
    %6753 = vmatpush.bf16.msra.mxu0 0
    %6754 = vmatpush.bf16.msra.mxu0 0
    %6755 = vmatpush.bf16.msra.mxu0 0
    %6756 = vmatpush.bf16.msra.mxu0 0
    %6757 = vmatpush.bf16.msra.mxu0 0
    %6758 = vmatpush.bf16.msra.mxu0 %v6743
    %6759 = vmatmul.bf16.gmra.mxu0 %v6746
    %v6760 = vpop.f32.mrf.mxu0
    %v6761 = vadd.f32 0.0, %v6760
    %v6762 = vpop.f32.mrf.mxu0
    %v6763 = vadd.f32 0.0, %v6762
    %6764 = vmatmul.bf16.gmra.mxu0 %v6749
    %v6765 = vpop.f32.mrf.mxu0
    %v6766 = vadd.f32 0.0, %v6765
    %v6767 = vpop.f32.mrf.mxu0
    %v6768 = vadd.f32 0.0, %v6767
    %6769 = vdwg.mxu0
    %v6770 = vadd.f32 %v6660, %v6761
    %v6771 = vadd.f32 %v6662, %v6763
    %v6772 = vadd.f32 %v6665, %v6766
    %v6773 = vadd.f32 %v6667, %v6768
    %vm6774 = vcmp.ge.s32.totalorder %v6436, 0
    %vm6775 = vcmp.ge.s32.totalorder %v6437, 0
    %vm6776 = vcmp.ge.s32.totalorder %v6438, 0
    %vm6777 = vcmp.ge.s32.totalorder %v6439, 0
    %vm6778 = vcmp.lt.s32.totalorder %v6436, 8
    %vm6779 = vcmp.lt.s32.totalorder %v6437, 8
    %vm6780 = vcmp.lt.s32.totalorder %v6438, 8
    %vm6781 = vcmp.lt.s32.totalorder %v6439, 8
    %vm6782 = vmand %vm6774, %vm6778
    %vm6783 = vmand %vm6775, %vm6779
    %vm6784 = vmand %vm6776, %vm6780
    %vm6785 = vmand %vm6777, %vm6781
    %vm6786 = vmand %vm6782, %vm6464
    %vm6787 = vmand %vm6783, %vm6465
    %vm6788 = vmand %vm6784, %vm6466
    %vm6789 = vmand %vm6785, %vm6467
    %vm6790 = vmand %vm6786, %vm6472
    %vm6791 = vmand %vm6787, %vm6473
    %vm6792 = vmand %vm6788, %vm6474
    %vm6793 = vmand %vm6789, %vm6475
    %v6794 = vmul.u32 %v6436, 8
    %v6795 = vmul.u32 %v6437, 8
    %v6796 = vmul.u32 %v6438, 8
    %v6797 = vmul.u32 %v6439, 8
    %v6798 = vadd.s32 %v6480, %v6794
    %v6799 = vadd.s32 %v6481, %v6795
    %v6800 = vadd.s32 %v6482, %v6796
    %v6801 = vadd.s32 %v6483, %v6797
    %v6802 = vadd.s32 %v6798, %v6448
    %v6803 = vadd.s32 %v6799, %v6449
    %v6804 = vadd.s32 %v6800, %v6450
    %v6805 = vadd.s32 %v6801, %v6451
    %vm6806 = vcmp.eq.s32.totalorder %v203, %v6802
    %vm6807 = vcmp.eq.s32.totalorder %v203, %v6803
    %vm6808 = vcmp.eq.s32.totalorder %v203, %v6804
    %vm6809 = vcmp.eq.s32.totalorder %v203, %v6805
    %v6810 = vsel %vm6790, 1, 0
    %v6811 = vsel %vm6791, 1, 0
    %v6812 = vsel %vm6792, 1, 0
    %v6813 = vsel %vm6793, 1, 0
    %vm6814 = vcmp.eq.s32.totalorder %v6810, 1
    %vm6815 = vcmp.eq.s32.totalorder %v6811, 1
    %vm6816 = vcmp.eq.s32.totalorder %v6812, 1
    %vm6817 = vcmp.eq.s32.totalorder %v6813, 1
    %vm6818 = vmand %vm6814, %vm6806
    %vm6819 = vmand %vm6815, %vm6807
    %vm6820 = vmand %vm6816, %vm6808
    %vm6821 = vmand %vm6817, %vm6809
    %v6822 = vsel %vm6818, 1.0, 0.0
    %v6823 = vsel %vm6819, 1.0, 0.0
    %v6824 = vsel %vm6820, 1.0, 0.0
    %v6825 = vsel %vm6821, 1.0, 0.0
    %v6826 = vpack.c.bf16 %v6823, %v6822
    %v6827 = vpack.c.bf16 %v6825, %v6824
    %6828 = vmatpush.bf16.msra.mxu0 %v6417
    %6829 = vmatpush.bf16.msra.mxu0 %v6416
    %6830 = vmatpush.bf16.msra.mxu0 %v6415
    %6831 = vmatpush.bf16.msra.mxu0 %v6414
    %6832 = vmatpush.bf16.msra.mxu0 %v6413
    %6833 = vmatpush.bf16.msra.mxu0 %v6412
    %6834 = vmatpush.bf16.msra.mxu0 %v6411
    %6835 = vmatpush.bf16.msra.mxu0 %v6410
    %6836 = vmatmul.bf16.gmra.mxu0 %v6826
    %v6837 = vpop.f32.mrf.mxu0
    %v6838 = vadd.f32 0.0, %v6837
    %v6839 = vpop.f32.mrf.mxu0
    %v6840 = vadd.f32 0.0, %v6839
    %6841 = vmatmul.bf16.gmra.mxu0 %v6827
    %v6842 = vpop.f32.mrf.mxu0
    %v6843 = vadd.f32 0.0, %v6842
    %v6844 = vpop.f32.mrf.mxu0
    %v6845 = vadd.f32 0.0, %v6844
    %6846 = vdwg.mxu0
    %v6847 = vpack.c.bf16 %v6840, %v6838
    %v6848 = vpack.c.bf16 %v6845, %v6843
    %s6849 = scalar_lea.vmem [#allocation2], 24
    %v6850 = vld [vmem:[%s6849] sm:$0xf]
    %v6851 = vld [vmem:[%s6849 + $0x4] sm:$0xf]
    %v6854 = vunpack.c.l.b16 %v6850
    %v6855 = vunpack.c.l.b16 %v6851
    %v6856 = vpack.c.b16 %v6855, %v6854
    %v6859 = vsel %vm6237, %v6847, 0
    %v6862 = vsel %vm6237, %v6848, 0
    %6864 = vmatpush.bf16.msra.mxu0 0
    %6865 = vmatpush.bf16.msra.mxu0 0
    %6866 = vmatpush.bf16.msra.mxu0 0
    %6867 = vmatpush.bf16.msra.mxu0 0
    %6868 = vmatpush.bf16.msra.mxu0 0
    %6869 = vmatpush.bf16.msra.mxu0 0
    %6870 = vmatpush.bf16.msra.mxu0 0
    %6871 = vmatpush.bf16.msra.mxu0 %v6856
    %6872 = vmatmul.bf16.gmra.mxu0 %v6859
    %v6873 = vpop.f32.mrf.mxu0
    %v6874 = vadd.f32 0.0, %v6873
    %v6875 = vpop.f32.mrf.mxu0
    %v6876 = vadd.f32 0.0, %v6875
    %6877 = vmatmul.bf16.gmra.mxu0 %v6862
    %v6878 = vpop.f32.mrf.mxu0
    %v6879 = vadd.f32 0.0, %v6878
    %v6880 = vpop.f32.mrf.mxu0
    %v6881 = vadd.f32 0.0, %v6880
    %6882 = vdwg.mxu0
    %v6883 = vadd.f32 %v6770, %v6874
    %v6884 = vadd.f32 %v6771, %v6876
    %v6885 = vadd.f32 %v6772, %v6879
    %v6886 = vadd.f32 %v6773, %v6881
    %vm6887 = vmand %vm6782, %vm6541
    %vm6888 = vmand %vm6783, %vm6542
    %vm6889 = vmand %vm6784, %vm6543
    %vm6890 = vmand %vm6785, %vm6544
    %vm6891 = vmand %vm6887, %vm6549
    %vm6892 = vmand %vm6888, %vm6550
    %vm6893 = vmand %vm6889, %vm6551
    %vm6894 = vmand %vm6890, %vm6552
    %v6895 = vadd.s32 %v6798, %v6444
    %v6896 = vadd.s32 %v6799, %v6445
    %v6897 = vadd.s32 %v6800, %v6446
    %v6898 = vadd.s32 %v6801, %v6447
    %vm6899 = vcmp.eq.s32.totalorder %v203, %v6895
    %vm6900 = vcmp.eq.s32.totalorder %v203, %v6896
    %vm6901 = vcmp.eq.s32.totalorder %v203, %v6897
    %vm6902 = vcmp.eq.s32.totalorder %v203, %v6898
    %v6903 = vsel %vm6891, 1, 0
    %v6904 = vsel %vm6892, 1, 0
    %v6905 = vsel %vm6893, 1, 0
    %v6906 = vsel %vm6894, 1, 0
    %vm6907 = vcmp.eq.s32.totalorder %v6903, 1
    %vm6908 = vcmp.eq.s32.totalorder %v6904, 1
    %vm6909 = vcmp.eq.s32.totalorder %v6905, 1
    %vm6910 = vcmp.eq.s32.totalorder %v6906, 1
    %vm6911 = vmand %vm6907, %vm6899
    %vm6912 = vmand %vm6908, %vm6900
    %vm6913 = vmand %vm6909, %vm6901
    %vm6914 = vmand %vm6910, %vm6902
    %v6915 = vsel %vm6911, 1.0, 0.0
    %v6916 = vsel %vm6912, 1.0, 0.0
    %v6917 = vsel %vm6913, 1.0, 0.0
    %v6918 = vsel %vm6914, 1.0, 0.0
    %v6919 = vpack.c.bf16 %v6916, %v6915
    %v6920 = vpack.c.bf16 %v6918, %v6917
    %6921 = vmatpush.bf16.msra.mxu0 %v6417
    %6922 = vmatpush.bf16.msra.mxu0 %v6416
    %6923 = vmatpush.bf16.msra.mxu0 %v6415
    %6924 = vmatpush.bf16.msra.mxu0 %v6414
    %6925 = vmatpush.bf16.msra.mxu0 %v6413
    %6926 = vmatpush.bf16.msra.mxu0 %v6412
    %6927 = vmatpush.bf16.msra.mxu0 %v6411
    %6928 = vmatpush.bf16.msra.mxu0 %v6410
    %6929 = vmatmul.bf16.gmra.mxu0 %v6919
    %v6930 = vpop.f32.mrf.mxu0
    %v6931 = vadd.f32 0.0, %v6930
    %v6932 = vpop.f32.mrf.mxu0
    %v6933 = vadd.f32 0.0, %v6932
    %6934 = vmatmul.bf16.gmra.mxu0 %v6920
    %v6935 = vpop.f32.mrf.mxu0
    %v6936 = vadd.f32 0.0, %v6935
    %v6937 = vpop.f32.mrf.mxu0
    %v6938 = vadd.f32 0.0, %v6937
    %6939 = vdwg.mxu0
    %v6940 = vpack.c.bf16 %v6933, %v6931
    %v6941 = vpack.c.bf16 %v6938, %v6936
    %s6942 = scalar_lea.vmem [#allocation2], 32
    %v6943 = vld [vmem:[%s6942] sm:$0xf]
    %v6944 = vld [vmem:[%s6942 + $0x4] sm:$0xf]
    %v6947 = vunpack.c.l.b16 %v6943
    %v6948 = vunpack.c.l.b16 %v6944
    %v6949 = vpack.c.b16 %v6948, %v6947
    %v6952 = vsel %vm6237, %v6940, 0
    %v6955 = vsel %vm6237, %v6941, 0
    %6957 = vmatpush.bf16.msra.mxu0 0
    %6958 = vmatpush.bf16.msra.mxu0 0
    %6959 = vmatpush.bf16.msra.mxu0 0
    %6960 = vmatpush.bf16.msra.mxu0 0
    %6961 = vmatpush.bf16.msra.mxu0 0
    %6962 = vmatpush.bf16.msra.mxu0 0
    %6963 = vmatpush.bf16.msra.mxu0 0
    %6964 = vmatpush.bf16.msra.mxu0 %v6949
    %6965 = vmatmul.bf16.gmra.mxu0 %v6952
    %v6966 = vpop.f32.mrf.mxu0
    %v6967 = vadd.f32 0.0, %v6966
    %v6968 = vpop.f32.mrf.mxu0
    %v6969 = vadd.f32 0.0, %v6968
    %6970 = vmatmul.bf16.gmra.mxu0 %v6955
    %v6971 = vpop.f32.mrf.mxu0
    %v6972 = vadd.f32 0.0, %v6971
    %v6973 = vpop.f32.mrf.mxu0
    %v6974 = vadd.f32 0.0, %v6973
    %6975 = vdwg.mxu0
    %v6976 = vadd.f32 %v6883, %v6967
    %v6977 = vadd.f32 %v6884, %v6969
    %v6978 = vadd.f32 %v6885, %v6972
    %v6979 = vadd.f32 %v6886, %v6974
    %vm6980 = vmand %vm6782, %vm6673
    %vm6981 = vmand %vm6783, %vm6674
    %vm6982 = vmand %vm6784, %vm6675
    %vm6983 = vmand %vm6785, %vm6676
    %vm6984 = vmand %vm6980, %vm6681
    %vm6985 = vmand %vm6981, %vm6682
    %vm6986 = vmand %vm6982, %vm6683
    %vm6987 = vmand %vm6983, %vm6684
    %v6988 = vadd.s32 %v6798, %v6669
    %v6989 = vadd.s32 %v6799, %v6670
    %v6990 = vadd.s32 %v6800, %v6671
    %v6991 = vadd.s32 %v6801, %v6672
    %vm6992 = vcmp.eq.s32.totalorder %v203, %v6988
    %vm6993 = vcmp.eq.s32.totalorder %v203, %v6989
    %vm6994 = vcmp.eq.s32.totalorder %v203, %v6990
    %vm6995 = vcmp.eq.s32.totalorder %v203, %v6991
    %v6996 = vsel %vm6984, 1, 0
    %v6997 = vsel %vm6985, 1, 0
    %v6998 = vsel %vm6986, 1, 0
    %v6999 = vsel %vm6987, 1, 0
    %vm7000 = vcmp.eq.s32.totalorder %v6996, 1
    %vm7001 = vcmp.eq.s32.totalorder %v6997, 1
    %vm7002 = vcmp.eq.s32.totalorder %v6998, 1
    %vm7003 = vcmp.eq.s32.totalorder %v6999, 1
    %vm7004 = vmand %vm7000, %vm6992
    %vm7005 = vmand %vm7001, %vm6993
    %vm7006 = vmand %vm7002, %vm6994
    %vm7007 = vmand %vm7003, %vm6995
    %v7008 = vsel %vm7004, 1.0, 0.0
    %v7009 = vsel %vm7005, 1.0, 0.0
    %v7010 = vsel %vm7006, 1.0, 0.0
    %v7011 = vsel %vm7007, 1.0, 0.0
    %v7012 = vpack.c.bf16 %v7009, %v7008
    %v7013 = vpack.c.bf16 %v7011, %v7010
    %7014 = vmatpush.bf16.msra.mxu0 %v6417
    %7015 = vmatpush.bf16.msra.mxu0 %v6416
    %7016 = vmatpush.bf16.msra.mxu0 %v6415
    %7017 = vmatpush.bf16.msra.mxu0 %v6414
    %7018 = vmatpush.bf16.msra.mxu0 %v6413
    %7019 = vmatpush.bf16.msra.mxu0 %v6412
    %7020 = vmatpush.bf16.msra.mxu0 %v6411
    %7021 = vmatpush.bf16.msra.mxu0 %v6410
    %7022 = vmatmul.bf16.gmra.mxu0 %v7012
    %v7023 = vpop.f32.mrf.mxu0
    %v7024 = vadd.f32 0.0, %v7023
    %v7025 = vpop.f32.mrf.mxu0
    %v7026 = vadd.f32 0.0, %v7025
    %7027 = vmatmul.bf16.gmra.mxu0 %v7013
    %v7028 = vpop.f32.mrf.mxu0
    %v7029 = vadd.f32 0.0, %v7028
    %v7030 = vpop.f32.mrf.mxu0
    %v7031 = vadd.f32 0.0, %v7030
    %7032 = vdwg.mxu0
    %v7033 = vpack.c.bf16 %v7026, %v7024
    %v7034 = vpack.c.bf16 %v7031, %v7029
    %s7035 = scalar_lea.vmem [#allocation2], 40
    %v7036 = vld [vmem:[%s7035] sm:$0xf]
    %v7037 = vld [vmem:[%s7035 + $0x4] sm:$0xf]
    %v7040 = vunpack.c.l.b16 %v7036
    %v7041 = vunpack.c.l.b16 %v7037
    %v7042 = vpack.c.b16 %v7041, %v7040
    %v7045 = vsel %vm6237, %v7033, 0
    %v7048 = vsel %vm6237, %v7034, 0
    %7050 = vmatpush.bf16.msra.mxu0 0
    %7051 = vmatpush.bf16.msra.mxu0 0
    %7052 = vmatpush.bf16.msra.mxu0 0
    %7053 = vmatpush.bf16.msra.mxu0 0
    %7054 = vmatpush.bf16.msra.mxu0 0
    %7055 = vmatpush.bf16.msra.mxu0 0
    %7056 = vmatpush.bf16.msra.mxu0 0
    %7057 = vmatpush.bf16.msra.mxu0 %v7042
    %7058 = vmatmul.bf16.gmra.mxu0 %v7045
    %v7059 = vpop.f32.mrf.mxu0
    %v7060 = vadd.f32 0.0, %v7059
    %v7061 = vpop.f32.mrf.mxu0
    %v7062 = vadd.f32 0.0, %v7061
    %7063 = vmatmul.bf16.gmra.mxu0 %v7048
    %v7064 = vpop.f32.mrf.mxu0
    %v7065 = vadd.f32 0.0, %v7064
    %v7066 = vpop.f32.mrf.mxu0
    %v7067 = vadd.f32 0.0, %v7066
    %7068 = vdwg.mxu0
    %v7069 = vadd.f32 %v6976, %v7060
    %v7070 = vadd.f32 %v6977, %v7062
    %v7071 = vadd.f32 %v6978, %v7065
    %v7072 = vadd.f32 %v6979, %v7067
    %v7073 = vadd.s32 %v6440, 2
    %v7074 = vadd.s32 %v6441, 2
    %v7075 = vadd.s32 %v6442, 2
    %v7076 = vadd.s32 %v6443, 2
    %vm7077 = vcmp.ge.s32.totalorder %v7073, 0
    %vm7078 = vcmp.ge.s32.totalorder %v7074, 0
    %vm7079 = vcmp.ge.s32.totalorder %v7075, 0
    %vm7080 = vcmp.ge.s32.totalorder %v7076, 0
    %vm7081 = vcmp.lt.s32.totalorder %v7073, 8
    %vm7082 = vcmp.lt.s32.totalorder %v7074, 8
    %vm7083 = vcmp.lt.s32.totalorder %v7075, 8
    %vm7084 = vcmp.lt.s32.totalorder %v7076, 8
    %vm7085 = vmand %vm7077, %vm7081
    %vm7086 = vmand %vm7078, %vm7082
    %vm7087 = vmand %vm7079, %vm7083
    %vm7088 = vmand %vm7080, %vm7084
    %vm7089 = vmand %vm7085, %vm6464
    %vm7090 = vmand %vm7086, %vm6465
    %vm7091 = vmand %vm7087, %vm6466
    %vm7092 = vmand %vm7088, %vm6467
    %vm7093 = vmand %vm7089, %vm6472
    %vm7094 = vmand %vm7090, %vm6473
    %vm7095 = vmand %vm7091, %vm6474
    %vm7096 = vmand %vm7092, %vm6475
    %v7097 = vmul.u32 %v7073, 8
    %v7098 = vmul.u32 %v7074, 8
    %v7099 = vmul.u32 %v7075, 8
    %v7100 = vmul.u32 %v7076, 8
    %v7101 = vadd.s32 %v6480, %v7097
    %v7102 = vadd.s32 %v6481, %v7098
    %v7103 = vadd.s32 %v6482, %v7099
    %v7104 = vadd.s32 %v6483, %v7100
    %v7105 = vadd.s32 %v7101, %v6448
    %v7106 = vadd.s32 %v7102, %v6449
    %v7107 = vadd.s32 %v7103, %v6450
    %v7108 = vadd.s32 %v7104, %v6451
    %vm7109 = vcmp.eq.s32.totalorder %v203, %v7105
    %vm7110 = vcmp.eq.s32.totalorder %v203, %v7106
    %vm7111 = vcmp.eq.s32.totalorder %v203, %v7107
    %vm7112 = vcmp.eq.s32.totalorder %v203, %v7108
    %v7113 = vsel %vm7093, 1, 0
    %v7114 = vsel %vm7094, 1, 0
    %v7115 = vsel %vm7095, 1, 0
    %v7116 = vsel %vm7096, 1, 0
    %vm7117 = vcmp.eq.s32.totalorder %v7113, 1
    %vm7118 = vcmp.eq.s32.totalorder %v7114, 1
    %vm7119 = vcmp.eq.s32.totalorder %v7115, 1
    %vm7120 = vcmp.eq.s32.totalorder %v7116, 1
    %vm7121 = vmand %vm7117, %vm7109
    %vm7122 = vmand %vm7118, %vm7110
    %vm7123 = vmand %vm7119, %vm7111
    %vm7124 = vmand %vm7120, %vm7112
    %v7125 = vsel %vm7121, 1.0, 0.0
    %v7126 = vsel %vm7122, 1.0, 0.0
    %v7127 = vsel %vm7123, 1.0, 0.0
    %v7128 = vsel %vm7124, 1.0, 0.0
    %v7129 = vpack.c.bf16 %v7126, %v7125
    %v7130 = vpack.c.bf16 %v7128, %v7127
    %7131 = vmatpush.bf16.msra.mxu0 %v6417
    %7132 = vmatpush.bf16.msra.mxu0 %v6416
    %7133 = vmatpush.bf16.msra.mxu0 %v6415
    %7134 = vmatpush.bf16.msra.mxu0 %v6414
    %7135 = vmatpush.bf16.msra.mxu0 %v6413
    %7136 = vmatpush.bf16.msra.mxu0 %v6412
    %7137 = vmatpush.bf16.msra.mxu0 %v6411
    %7138 = vmatpush.bf16.msra.mxu0 %v6410
    %7139 = vmatmul.bf16.gmra.mxu0 %v7129
    %v7140 = vpop.f32.mrf.mxu0
    %v7141 = vadd.f32 0.0, %v7140
    %v7142 = vpop.f32.mrf.mxu0
    %v7143 = vadd.f32 0.0, %v7142
    %7144 = vmatmul.bf16.gmra.mxu0 %v7130
    %v7145 = vpop.f32.mrf.mxu0
    %v7146 = vadd.f32 0.0, %v7145
    %v7147 = vpop.f32.mrf.mxu0
    %v7148 = vadd.f32 0.0, %v7147
    %7149 = vdwg.mxu0
    %v7150 = vpack.c.bf16 %v7143, %v7141
    %v7151 = vpack.c.bf16 %v7148, %v7146
    %s7152 = scalar_lea.vmem [#allocation2], 48
    %v7153 = vld [vmem:[%s7152] sm:$0xf]
    %v7154 = vld [vmem:[%s7152 + $0x4] sm:$0xf]
    %v7157 = vunpack.c.l.b16 %v7153
    %v7158 = vunpack.c.l.b16 %v7154
    %v7159 = vpack.c.b16 %v7158, %v7157
    %v7162 = vsel %vm6237, %v7150, 0
    %v7165 = vsel %vm6237, %v7151, 0
    %7167 = vmatpush.bf16.msra.mxu0 0
    %7168 = vmatpush.bf16.msra.mxu0 0
    %7169 = vmatpush.bf16.msra.mxu0 0
    %7170 = vmatpush.bf16.msra.mxu0 0
    %7171 = vmatpush.bf16.msra.mxu0 0
    %7172 = vmatpush.bf16.msra.mxu0 0
    %7173 = vmatpush.bf16.msra.mxu0 0
    %7174 = vmatpush.bf16.msra.mxu0 %v7159
    %7175 = vmatmul.bf16.gmra.mxu0 %v7162
    %v7176 = vpop.f32.mrf.mxu0
    %v7177 = vadd.f32 0.0, %v7176
    %v7178 = vpop.f32.mrf.mxu0
    %v7179 = vadd.f32 0.0, %v7178
    %7180 = vmatmul.bf16.gmra.mxu0 %v7165
    %v7181 = vpop.f32.mrf.mxu0
    %v7182 = vadd.f32 0.0, %v7181
    %v7183 = vpop.f32.mrf.mxu0
    %v7184 = vadd.f32 0.0, %v7183
    %7185 = vdwg.mxu0
    %v7186 = vadd.f32 %v7069, %v7177
    %v7187 = vadd.f32 %v7070, %v7179
    %v7188 = vadd.f32 %v7071, %v7182
    %v7189 = vadd.f32 %v7072, %v7184
    %vm7190 = vmand %vm7085, %vm6541
    %vm7191 = vmand %vm7086, %vm6542
    %vm7192 = vmand %vm7087, %vm6543
    %vm7193 = vmand %vm7088, %vm6544
    %vm7194 = vmand %vm7190, %vm6549
    %vm7195 = vmand %vm7191, %vm6550
    %vm7196 = vmand %vm7192, %vm6551
    %vm7197 = vmand %vm7193, %vm6552
    %v7198 = vadd.s32 %v7101, %v6444
    %v7199 = vadd.s32 %v7102, %v6445
    %v7200 = vadd.s32 %v7103, %v6446
    %v7201 = vadd.s32 %v7104, %v6447
    %vm7202 = vcmp.eq.s32.totalorder %v203, %v7198
    %vm7203 = vcmp.eq.s32.totalorder %v203, %v7199
    %vm7204 = vcmp.eq.s32.totalorder %v203, %v7200
    %vm7205 = vcmp.eq.s32.totalorder %v203, %v7201
    %v7206 = vsel %vm7194, 1, 0
    %v7207 = vsel %vm7195, 1, 0
    %v7208 = vsel %vm7196, 1, 0
    %v7209 = vsel %vm7197, 1, 0
    %vm7210 = vcmp.eq.s32.totalorder %v7206, 1
    %vm7211 = vcmp.eq.s32.totalorder %v7207, 1
    %vm7212 = vcmp.eq.s32.totalorder %v7208, 1
    %vm7213 = vcmp.eq.s32.totalorder %v7209, 1
    %vm7214 = vmand %vm7210, %vm7202
    %vm7215 = vmand %vm7211, %vm7203
    %vm7216 = vmand %vm7212, %vm7204
    %vm7217 = vmand %vm7213, %vm7205
    %v7218 = vsel %vm7214, 1.0, 0.0
    %v7219 = vsel %vm7215, 1.0, 0.0
    %v7220 = vsel %vm7216, 1.0, 0.0
    %v7221 = vsel %vm7217, 1.0, 0.0
    %v7222 = vpack.c.bf16 %v7219, %v7218
    %v7223 = vpack.c.bf16 %v7221, %v7220
    %7224 = vmatpush.bf16.msra.mxu0 %v6417
    %7225 = vmatpush.bf16.msra.mxu0 %v6416
    %7226 = vmatpush.bf16.msra.mxu0 %v6415
    %7227 = vmatpush.bf16.msra.mxu0 %v6414
    %7228 = vmatpush.bf16.msra.mxu0 %v6413
    %7229 = vmatpush.bf16.msra.mxu0 %v6412
    %7230 = vmatpush.bf16.msra.mxu0 %v6411
    %7231 = vmatpush.bf16.msra.mxu0 %v6410
    %7232 = vmatmul.bf16.gmra.mxu0 %v7222
    %v7233 = vpop.f32.mrf.mxu0
    %v7234 = vadd.f32 0.0, %v7233
    %v7235 = vpop.f32.mrf.mxu0
    %v7236 = vadd.f32 0.0, %v7235
    %7237 = vmatmul.bf16.gmra.mxu0 %v7223
    %v7238 = vpop.f32.mrf.mxu0
    %v7239 = vadd.f32 0.0, %v7238
    %v7240 = vpop.f32.mrf.mxu0
    %v7241 = vadd.f32 0.0, %v7240
    %7242 = vdwg.mxu0
    %v7243 = vpack.c.bf16 %v7236, %v7234
    %v7244 = vpack.c.bf16 %v7241, %v7239
    %s7245 = scalar_lea.vmem [#allocation2], 56
    %v7246 = vld [vmem:[%s7245] sm:$0xf]
    %v7247 = vld [vmem:[%s7245 + $0x4] sm:$0xf]
    %v7250 = vunpack.c.l.b16 %v7246
    %v7251 = vunpack.c.l.b16 %v7247
    %v7252 = vpack.c.b16 %v7251, %v7250
    %v7255 = vsel %vm6237, %v7243, 0
    %v7258 = vsel %vm6237, %v7244, 0
    %7260 = vmatpush.bf16.msra.mxu0 0
    %7261 = vmatpush.bf16.msra.mxu0 0
    %7262 = vmatpush.bf16.msra.mxu0 0
    %7263 = vmatpush.bf16.msra.mxu0 0
    %7264 = vmatpush.bf16.msra.mxu0 0
    %7265 = vmatpush.bf16.msra.mxu0 0
    %7266 = vmatpush.bf16.msra.mxu0 0
    %7267 = vmatpush.bf16.msra.mxu0 %v7252
    %7268 = vmatmul.bf16.gmra.mxu0 %v7255
    %v7269 = vpop.f32.mrf.mxu0
    %v7270 = vadd.f32 0.0, %v7269
    %v7271 = vpop.f32.mrf.mxu0
    %v7272 = vadd.f32 0.0, %v7271
    %7273 = vmatmul.bf16.gmra.mxu0 %v7258
    %v7274 = vpop.f32.mrf.mxu0
    %v7275 = vadd.f32 0.0, %v7274
    %v7276 = vpop.f32.mrf.mxu0
    %v7277 = vadd.f32 0.0, %v7276
    %7278 = vdwg.mxu0
    %v7279 = vadd.f32 %v7186, %v7270
    %v7280 = vadd.f32 %v7187, %v7272
    %v7281 = vadd.f32 %v7188, %v7275
    %v7282 = vadd.f32 %v7189, %v7277
    %vm7283 = vmand %vm7085, %vm6673
    %vm7284 = vmand %vm7086, %vm6674
    %vm7285 = vmand %vm7087, %vm6675
    %vm7286 = vmand %vm7088, %vm6676
    %vm7287 = vmand %vm7283, %vm6681
    %vm7288 = vmand %vm7284, %vm6682
    %vm7289 = vmand %vm7285, %vm6683
    %vm7290 = vmand %vm7286, %vm6684
    %v7291 = vadd.s32 %v7101, %v6669
    %v7292 = vadd.s32 %v7102, %v6670
    %v7293 = vadd.s32 %v7103, %v6671
    %v7294 = vadd.s32 %v7104, %v6672
    %vm7295 = vcmp.eq.s32.totalorder %v203, %v7291
    %vm7296 = vcmp.eq.s32.totalorder %v203, %v7292
    %vm7297 = vcmp.eq.s32.totalorder %v203, %v7293
    %vm7298 = vcmp.eq.s32.totalorder %v203, %v7294
    %v7299 = vsel %vm7287, 1, 0
    %v7300 = vsel %vm7288, 1, 0
    %v7301 = vsel %vm7289, 1, 0
    %v7302 = vsel %vm7290, 1, 0
    %vm7303 = vcmp.eq.s32.totalorder %v7299, 1
    %vm7304 = vcmp.eq.s32.totalorder %v7300, 1
    %vm7305 = vcmp.eq.s32.totalorder %v7301, 1
    %vm7306 = vcmp.eq.s32.totalorder %v7302, 1
    %vm7307 = vmand %vm7303, %vm7295
    %vm7308 = vmand %vm7304, %vm7296
    %vm7309 = vmand %vm7305, %vm7297
    %vm7310 = vmand %vm7306, %vm7298
    %v7311 = vsel %vm7307, 1.0, 0.0
    %v7312 = vsel %vm7308, 1.0, 0.0
    %v7313 = vsel %vm7309, 1.0, 0.0
    %v7314 = vsel %vm7310, 1.0, 0.0
    %v7315 = vpack.c.bf16 %v7312, %v7311
    %v7316 = vpack.c.bf16 %v7314, %v7313
    %7317 = vmatpush.bf16.msra.mxu0 %v6417
    %7318 = vmatpush.bf16.msra.mxu0 %v6416
    %7319 = vmatpush.bf16.msra.mxu0 %v6415
    %7320 = vmatpush.bf16.msra.mxu0 %v6414
    %7321 = vmatpush.bf16.msra.mxu0 %v6413
    %7322 = vmatpush.bf16.msra.mxu0 %v6412
    %7323 = vmatpush.bf16.msra.mxu0 %v6411
    %7324 = vmatpush.bf16.msra.mxu0 %v6410
    %7325 = vmatmul.bf16.gmra.mxu0 %v7315
    %v7326 = vpop.f32.mrf.mxu0
    %v7327 = vadd.f32 0.0, %v7326
    %v7328 = vpop.f32.mrf.mxu0
    %v7329 = vadd.f32 0.0, %v7328
    %7330 = vmatmul.bf16.gmra.mxu0 %v7316
    %v7331 = vpop.f32.mrf.mxu0
    %v7332 = vadd.f32 0.0, %v7331
    %v7333 = vpop.f32.mrf.mxu0
    %v7334 = vadd.f32 0.0, %v7333
    %7335 = vdwg.mxu0
    %v7336 = vpack.c.bf16 %v7329, %v7327
    %v7337 = vpack.c.bf16 %v7334, %v7332
    %s7338 = scalar_lea.vmem [#allocation2], 64
    %v7339 = vld [vmem:[%s7338] sm:$0xf]
    %v7340 = vld [vmem:[%s7338 + $0x4] sm:$0xf]
    %v7343 = vunpack.c.l.b16 %v7339
    %v7344 = vunpack.c.l.b16 %v7340
    %v7345 = vpack.c.b16 %v7344, %v7343
    %v7348 = vsel %vm6237, %v7336, 0
    %v7351 = vsel %vm6237, %v7337, 0
    %7353 = vmatpush.bf16.msra.mxu0 0
    %7354 = vmatpush.bf16.msra.mxu0 0
    %7355 = vmatpush.bf16.msra.mxu0 0
    %7356 = vmatpush.bf16.msra.mxu0 0
    %7357 = vmatpush.bf16.msra.mxu0 0
    %7358 = vmatpush.bf16.msra.mxu0 0
    %7359 = vmatpush.bf16.msra.mxu0 0
    %7360 = vmatpush.bf16.msra.mxu0 %v7345
    %7361 = vmatmul.bf16.gmra.mxu0 %v7348
    %v7362 = vpop.f32.mrf.mxu0
    %v7363 = vadd.f32 0.0, %v7362
    %v7364 = vpop.f32.mrf.mxu0
    %v7365 = vadd.f32 0.0, %v7364
    %7366 = vmatmul.bf16.gmra.mxu0 %v7351
    %v7367 = vpop.f32.mrf.mxu0
    %v7368 = vadd.f32 0.0, %v7367
    %v7369 = vpop.f32.mrf.mxu0
    %v7370 = vadd.f32 0.0, %v7369
    %7371 = vdwg.mxu0
    %v7372 = vadd.f32 %v7279, %v7363
    %v7373 = vadd.f32 %v7280, %v7365
    %v7374 = vadd.f32 %v7281, %v7368
    %v7375 = vadd.f32 %v7282, %v7370
    %vm7376 = vcmask 261120
    %v7377 = vsel %vm7376, %v7372, 0.0
    %v7378 = vsel %vm7376, %v7373, 0.0
    %v7379 = vadd.f32 %v7377, %v7378
    %v7380 = vsel %vm7376, %v7374, 0.0
    %v7381 = vadd.f32 %v7379, %v7380
    %v7382 = vsel %vm7376, %v7375, 0.0
    %v7383 = vadd.f32 %v7381, %v7382
    %v7384 = vrot.slane %v7383, 4
    %v7385 = vadd.f32 %v7383, %v7384
    %v7386 = vrot.slane %v7385, 2
    %v7387 = vadd.f32 %v7385, %v7386
    %v7388 = vrot.slane %v7387, 1
    %v7389 = vadd.f32 %v7387, %v7388
    %v7390 = vmul.f32 %v7372, %v7372
    %v7391 = vmul.f32 %v7373, %v7373
    %v7392 = vmul.f32 %v7374, %v7374
    %v7393 = vmul.f32 %v7375, %v7375
    %v7394 = vsel %vm7376, %v7390, 0.0
    %v7395 = vsel %vm7376, %v7391, 0.0
    %v7396 = vadd.f32 %v7394, %v7395
    %v7397 = vsel %vm7376, %v7392, 0.0
    %v7398 = vadd.f32 %v7396, %v7397
    %v7399 = vsel %vm7376, %v7393, 0.0
    %v7400 = vadd.f32 %v7398, %v7399
    %v7401 = vrot.slane %v7400, 4
    %v7402 = vadd.f32 %v7400, %v7401
    %v7403 = vrot.slane %v7402, 2
    %v7404 = vadd.f32 %v7402, %v7403
    %v7405 = vrot.slane %v7404, 1
    %v7406 = vadd.f32 %v7404, %v7405
    %v7407 = vmul.f32 %v7389, 0.03125
    %v7408 = vmul.f32 %v7406, 0.03125
    %v7409 = vmul.f32 %v7407, %v7407
    %v7410 = vsub.f32 %v7408, %v7409
    %v7411 = vadd.f32 %v7410, 1e-05
    %v7412 = vrsqrt.pop %v7411
    %v7413 = vmul.f32 %v7412, %v7411
    %v7414 = vmul.f32 %v7413, %v7412
    %v7415 = vmul.f32 0.5, %v7414
    %v7416 = vsub.f32 1.5, %v7415
    %v7417 = vmul.f32 %v7412, %v7416
    %vm7418 = vweird.f32 %v7411
    %vm7419 = vweird.f32 %v7412
    %vm7420 = vmor %vm7418, %vm7419
    %v7421 = vsel %vm7420, %v7412, %v7417
    %v7422 = vmul.f32 %v7421, %v6418
    %v7423 = vsub.f32 %v7372, %v7407
    %v7424 = vsub.f32 %v7373, %v7407
    %v7425 = vsub.f32 %v7374, %v7407
    %v7426 = vsub.f32 %v7375, %v7407
    %v7427 = vperm.slane %v7422, 0
    %v7428 = vmul.f32 %v7423, %v7427
    %v7429 = vmul.f32 %v7424, %v7427
    %v7430 = vmul.f32 %v7425, %v7427
    %v7431 = vmul.f32 %v7426, %v7427
    %v7432 = vperm.slane %v6419, 0
    %v7433 = vadd.f32 %v7428, %v7432
    %v7434 = vadd.f32 %v7429, %v7432
    %v7435 = vadd.f32 %v7430, %v7432
    %v7436 = vadd.f32 %v7431, %v7432
    %v7437 = vmax.f32 %v7433, 0.0
    %v7438 = vmax.f32 %v7434, 0.0
    %v7439 = vmax.f32 %v7435, 0.0
    %v7440 = vmax.f32 %v7436, 0.0
    %v7441 = vpack.c.bf16 %v7438, %v7437
    %v7442 = vpack.c.bf16 %v7440, %v7439
    %v7443 = vld [vmem:[#allocation5 + $0x4] sm:$0x1]
    %v7444 = vld [vmem:[#allocation5 + $0x5] sm:$0x1]
    %v7445 = vshra.s32 %v122, 2
    %v7446 = vand.u32 %v122, 3
    %v7447 = vshra.s32 %v7446, 1
    %v7448 = vand.u32 %v7446, 1
    %v7449 = vmul.u32 %v7447, 2
    %v7450 = vsub.s32 %v7449, 1
    %v7451 = vmul.u32 %v7448, 2
    %v7452 = vsub.s32 %v7451, 1
    %vm7453 = vcmp.ge.s32.totalorder %v7450, 0
    %vm7454 = vcmp.lt.s32.totalorder %v7450, 4
    %vm7455 = vmand %vm7453, %vm7454
    %vm7456 = vcmp.ge.s32.totalorder %v7452, 0
    %vm7457 = vmand %vm7455, %vm7456
    %vm7458 = vcmp.lt.s32.totalorder %v7452, 4
    %vm7459 = vmand %vm7457, %vm7458
    %v7460 = vmul.u32 %v7445, 16
    %v7461 = vmul.u32 %v7450, 4
    %v7462 = vadd.s32 %v7460, %v7461
    %v7463 = vadd.s32 %v7462, %v7452
    %vm7464 = vcmp.eq.s32.totalorder %v203, %v7463
    %v7465 = vsel %vm7459, 1, 0
    %vm7466 = vcmp.eq.s32.totalorder %v7465, 1
    %vm7467 = vmand %vm7466, %vm7464
    %v7468 = vsel %vm7467, 1.0, 0.0
    %v7469 = vpack.c.bf16 %v7468, %v7468
    %v7471 = vsel %vm7376, %v7469, 0
    %7473 = vmatpush.bf16.msra.mxu0 0
    %7474 = vmatpush.bf16.msra.mxu0 0
    %7475 = vmatpush.bf16.msra.mxu0 0
    %7476 = vmatpush.bf16.msra.mxu0 0
    %7477 = vmatpush.bf16.msra.mxu0 0
    %7478 = vmatpush.bf16.msra.mxu0 0
    %7479 = vmatpush.bf16.msra.mxu0 %v7442
    %7480 = vmatpush.bf16.msra.mxu0 %v7441
    %7481 = vmatmul.bf16.gmra.mxu0 %v7471
    %v7482 = vpop.f32.mrf.mxu0
    %v7483 = vadd.f32 0.0, %v7482
    %v7484 = vpop.f32.mrf.mxu0
    %7485 = vdwg.mxu0
    %v7486 = vpack.c.bf16 %v7483, %v7483
    %v7487 = vld [vmem:[%s3] sm:$0xf]
    %v7488 = vld [vmem:[%s3 + $0x4] sm:$0xf]
    %v7489 = vld [vmem:[%s3 + $0x8] sm:$0xf]
    %v7490 = vld [vmem:[%s3 + $0xc] sm:$0xf]
    %vm7491 = vcmp.ge.s32.totalorder %v7451, 0
    %vm7492 = vmand %vm7455, %vm7491
    %vm7493 = vcmp.lt.s32.totalorder %v7451, 4
    %vm7494 = vmand %vm7492, %vm7493
    %v7495 = vadd.s32 %v7462, %v7451
    %vm7496 = vcmp.eq.s32.totalorder %v203, %v7495
    %v7497 = vsel %vm7494, 1, 0
    %vm7498 = vcmp.eq.s32.totalorder %v7497, 1
    %vm7499 = vmand %vm7498, %vm7496
    %v7500 = vsel %vm7499, 1.0, 0.0
    %v7501 = vpack.c.bf16 %v7500, %v7500
    %v7503 = vsel %vm7376, %v7501, 0
    %7505 = vmatpush.bf16.msra.mxu0 0
    %7506 = vmatpush.bf16.msra.mxu0 0
    %7507 = vmatpush.bf16.msra.mxu0 0
    %7508 = vmatpush.bf16.msra.mxu0 0
    %7509 = vmatpush.bf16.msra.mxu0 0
    %7510 = vmatpush.bf16.msra.mxu0 0
    %7511 = vmatpush.bf16.msra.mxu0 %v7442
    %7512 = vmatpush.bf16.msra.mxu0 %v7441
    %7513 = vmatmul.bf16.gmra.mxu0 %v7503
    %v7514 = vpop.f32.mrf.mxu0
    %v7515 = vadd.f32 0.0, %v7514
    %v7516 = vpop.f32.mrf.mxu0
    %7517 = vdwg.mxu0
    %v7518 = vpack.c.bf16 %v7515, %v7515
    %s7519 = scalar_lea.vmem %s3, 16
    %v7520 = vld [vmem:[%s7519] sm:$0xf]
    %v7521 = vld [vmem:[%s7519 + $0x4] sm:$0xf]
    %v7522 = vld [vmem:[%s7519 + $0x8] sm:$0xf]
    %v7523 = vld [vmem:[%s7519 + $0xc] sm:$0xf]
    %v7528 = vunpack.c.l.b16 %v7520
    %v7529 = vunpack.c.l.b16 %v7521
    %v7530 = vunpack.c.l.b16 %v7522
    %v7531 = vunpack.c.l.b16 %v7523
    %v7532 = vpack.c.b16 %v7529, %v7528
    %v7533 = vpack.c.b16 %v7531, %v7530
    %v7537 = vsel %vm7376, %v7518, 0
    %7539 = vmatpush.bf16.msra.mxu0 0
    %7540 = vmatpush.bf16.msra.mxu0 0
    %7541 = vmatpush.bf16.msra.mxu0 0
    %7542 = vmatpush.bf16.msra.mxu0 0
    %7543 = vmatpush.bf16.msra.mxu0 0
    %7544 = vmatpush.bf16.msra.mxu0 0
    %7545 = vmatpush.bf16.msra.mxu0 %v7533
    %7546 = vmatpush.bf16.msra.mxu0 %v7532
    %7547 = vmatmul.bf16.gmra.mxu0 %v7537
    %v7548 = vpop.f32.mrf.mxu0
    %v7549 = vadd.f32 0.0, %v7548
    %v7550 = vpop.f32.mrf.mxu0
    %7551 = vdwg.mxu0
    %v7556 = vunpack.c.l.b16 %v7487
    %v7557 = vunpack.c.l.b16 %v7488
    %v7558 = vunpack.c.l.b16 %v7489
    %v7559 = vunpack.c.l.b16 %v7490
    %v7560 = vpack.c.b16 %v7557, %v7556
    %v7561 = vpack.c.b16 %v7559, %v7558
    %v7565 = vsel %vm7376, %v7486, 0
    %7567 = vmatpush.bf16.msra.mxu0 0
    %7568 = vmatpush.bf16.msra.mxu0 0
    %7569 = vmatpush.bf16.msra.mxu0 0
    %7570 = vmatpush.bf16.msra.mxu0 0
    %7571 = vmatpush.bf16.msra.mxu0 0
    %7572 = vmatpush.bf16.msra.mxu0 0
    %7573 = vmatpush.bf16.msra.mxu0 %v7561
    %7574 = vmatpush.bf16.msra.mxu0 %v7560
    %7575 = vmatmul.bf16.gmra.mxu0 %v7565
    %v7576 = vpop.f32.mrf.mxu0
    %v7577 = vadd.f32 %v7549, %v7576
    %v7578 = vpop.f32.mrf.mxu0
    %7579 = vdwg.mxu0
    %v7580 = vadd.s32 %v7452, 2
    %vm7581 = vcmp.ge.s32.totalorder %v7580, 0
    %vm7582 = vmand %vm7455, %vm7581
    %vm7583 = vcmp.lt.s32.totalorder %v7580, 4
    %vm7584 = vmand %vm7582, %vm7583
    %v7585 = vadd.s32 %v7462, %v7580
    %vm7586 = vcmp.eq.s32.totalorder %v203, %v7585
    %v7587 = vsel %vm7584, 1, 0
    %vm7588 = vcmp.eq.s32.totalorder %v7587, 1
    %vm7589 = vmand %vm7588, %vm7586
    %v7590 = vsel %vm7589, 1.0, 0.0
    %v7591 = vpack.c.bf16 %v7590, %v7590
    %v7593 = vsel %vm7376, %v7591, 0
    %7595 = vmatpush.bf16.msra.mxu0 0
    %7596 = vmatpush.bf16.msra.mxu0 0
    %7597 = vmatpush.bf16.msra.mxu0 0
    %7598 = vmatpush.bf16.msra.mxu0 0
    %7599 = vmatpush.bf16.msra.mxu0 0
    %7600 = vmatpush.bf16.msra.mxu0 0
    %7601 = vmatpush.bf16.msra.mxu0 %v7442
    %7602 = vmatpush.bf16.msra.mxu0 %v7441
    %7603 = vmatmul.bf16.gmra.mxu0 %v7593
    %v7604 = vpop.f32.mrf.mxu0
    %v7605 = vadd.f32 0.0, %v7604
    %v7606 = vpop.f32.mrf.mxu0
    %7607 = vdwg.mxu0
    %v7608 = vpack.c.bf16 %v7605, %v7605
    %s7609 = scalar_lea.vmem %s3, 32
    %v7610 = vld [vmem:[%s7609] sm:$0xf]
    %v7611 = vld [vmem:[%s7609 + $0x4] sm:$0xf]
    %v7612 = vld [vmem:[%s7609 + $0x8] sm:$0xf]
    %v7613 = vld [vmem:[%s7609 + $0xc] sm:$0xf]
    %v7618 = vunpack.c.l.b16 %v7610
    %v7619 = vunpack.c.l.b16 %v7611
    %v7620 = vunpack.c.l.b16 %v7612
    %v7621 = vunpack.c.l.b16 %v7613
    %v7622 = vpack.c.b16 %v7619, %v7618
    %v7623 = vpack.c.b16 %v7621, %v7620
    %v7627 = vsel %vm7376, %v7608, 0
    %7629 = vmatpush.bf16.msra.mxu0 0
    %7630 = vmatpush.bf16.msra.mxu0 0
    %7631 = vmatpush.bf16.msra.mxu0 0
    %7632 = vmatpush.bf16.msra.mxu0 0
    %7633 = vmatpush.bf16.msra.mxu0 0
    %7634 = vmatpush.bf16.msra.mxu0 0
    %7635 = vmatpush.bf16.msra.mxu0 %v7623
    %7636 = vmatpush.bf16.msra.mxu0 %v7622
    %7637 = vmatmul.bf16.gmra.mxu0 %v7627
    %v7638 = vpop.f32.mrf.mxu0
    %v7639 = vadd.f32 0.0, %v7638
    %v7640 = vpop.f32.mrf.mxu0
    %7641 = vdwg.mxu0
    %v7642 = vadd.f32 %v7577, %v7639
    %vm7643 = vcmp.ge.s32.totalorder %v7449, 0
    %vm7644 = vcmp.lt.s32.totalorder %v7449, 4
    %vm7645 = vmand %vm7643, %vm7644
    %vm7646 = vmand %vm7645, %vm7456
    %vm7647 = vmand %vm7646, %vm7458
    %v7648 = vmul.u32 %v7449, 4
    %v7649 = vadd.s32 %v7460, %v7648
    %v7650 = vadd.s32 %v7649, %v7452
    %vm7651 = vcmp.eq.s32.totalorder %v203, %v7650
    %v7652 = vsel %vm7647, 1, 0
    %vm7653 = vcmp.eq.s32.totalorder %v7652, 1
    %vm7654 = vmand %vm7653, %vm7651
    %v7655 = vsel %vm7654, 1.0, 0.0
    %v7656 = vpack.c.bf16 %v7655, %v7655
    %v7658 = vsel %vm7376, %v7656, 0
    %7660 = vmatpush.bf16.msra.mxu0 0
    %7661 = vmatpush.bf16.msra.mxu0 0
    %7662 = vmatpush.bf16.msra.mxu0 0
    %7663 = vmatpush.bf16.msra.mxu0 0
    %7664 = vmatpush.bf16.msra.mxu0 0
    %7665 = vmatpush.bf16.msra.mxu0 0
    %7666 = vmatpush.bf16.msra.mxu0 %v7442
    %7667 = vmatpush.bf16.msra.mxu0 %v7441
    %7668 = vmatmul.bf16.gmra.mxu0 %v7658
    %v7669 = vpop.f32.mrf.mxu0
    %v7670 = vadd.f32 0.0, %v7669
    %v7671 = vpop.f32.mrf.mxu0
    %7672 = vdwg.mxu0
    %v7673 = vpack.c.bf16 %v7670, %v7670
    %s7674 = scalar_lea.vmem %s3, 48
    %v7675 = vld [vmem:[%s7674] sm:$0xf]
    %v7676 = vld [vmem:[%s7674 + $0x4] sm:$0xf]
    %v7677 = vld [vmem:[%s7674 + $0x8] sm:$0xf]
    %v7678 = vld [vmem:[%s7674 + $0xc] sm:$0xf]
    %v7683 = vunpack.c.l.b16 %v7675
    %v7684 = vunpack.c.l.b16 %v7676
    %v7685 = vunpack.c.l.b16 %v7677
    %v7686 = vunpack.c.l.b16 %v7678
    %v7687 = vpack.c.b16 %v7684, %v7683
    %v7688 = vpack.c.b16 %v7686, %v7685
    %v7692 = vsel %vm7376, %v7673, 0
    %7694 = vmatpush.bf16.msra.mxu0 0
    %7695 = vmatpush.bf16.msra.mxu0 0
    %7696 = vmatpush.bf16.msra.mxu0 0
    %7697 = vmatpush.bf16.msra.mxu0 0
    %7698 = vmatpush.bf16.msra.mxu0 0
    %7699 = vmatpush.bf16.msra.mxu0 0
    %7700 = vmatpush.bf16.msra.mxu0 %v7688
    %7701 = vmatpush.bf16.msra.mxu0 %v7687
    %7702 = vmatmul.bf16.gmra.mxu0 %v7692
    %v7703 = vpop.f32.mrf.mxu0
    %v7704 = vadd.f32 0.0, %v7703
    %v7705 = vpop.f32.mrf.mxu0
    %7706 = vdwg.mxu0
    %v7707 = vadd.f32 %v7642, %v7704
    %vm7708 = vmand %vm7645, %vm7491
    %vm7709 = vmand %vm7708, %vm7493
    %v7710 = vadd.s32 %v7649, %v7451
    %vm7711 = vcmp.eq.s32.totalorder %v203, %v7710
    %v7712 = vsel %vm7709, 1, 0
    %vm7713 = vcmp.eq.s32.totalorder %v7712, 1
    %vm7714 = vmand %vm7713, %vm7711
    %v7715 = vsel %vm7714, 1.0, 0.0
    %v7716 = vpack.c.bf16 %v7715, %v7715
    %v7718 = vsel %vm7376, %v7716, 0
    %7720 = vmatpush.bf16.msra.mxu0 0
    %7721 = vmatpush.bf16.msra.mxu0 0
    %7722 = vmatpush.bf16.msra.mxu0 0
    %7723 = vmatpush.bf16.msra.mxu0 0
    %7724 = vmatpush.bf16.msra.mxu0 0
    %7725 = vmatpush.bf16.msra.mxu0 0
    %7726 = vmatpush.bf16.msra.mxu0 %v7442
    %7727 = vmatpush.bf16.msra.mxu0 %v7441
    %7728 = vmatmul.bf16.gmra.mxu0 %v7718
    %v7729 = vpop.f32.mrf.mxu0
    %v7730 = vadd.f32 0.0, %v7729
    %v7731 = vpop.f32.mrf.mxu0
    %7732 = vdwg.mxu0
    %v7733 = vpack.c.bf16 %v7730, %v7730
    %s7734 = scalar_lea.vmem %s3, 64
    %v7735 = vld [vmem:[%s7734] sm:$0xf]
    %v7736 = vld [vmem:[%s7734 + $0x4] sm:$0xf]
    %v7737 = vld [vmem:[%s7734 + $0x8] sm:$0xf]
    %v7738 = vld [vmem:[%s7734 + $0xc] sm:$0xf]
    %v7743 = vunpack.c.l.b16 %v7735
    %v7744 = vunpack.c.l.b16 %v7736
    %v7745 = vunpack.c.l.b16 %v7737
    %v7746 = vunpack.c.l.b16 %v7738
    %v7747 = vpack.c.b16 %v7744, %v7743
    %v7748 = vpack.c.b16 %v7746, %v7745
    %v7752 = vsel %vm7376, %v7733, 0
    %7754 = vmatpush.bf16.msra.mxu0 0
    %7755 = vmatpush.bf16.msra.mxu0 0
    %7756 = vmatpush.bf16.msra.mxu0 0
    %7757 = vmatpush.bf16.msra.mxu0 0
    %7758 = vmatpush.bf16.msra.mxu0 0
    %7759 = vmatpush.bf16.msra.mxu0 0
    %7760 = vmatpush.bf16.msra.mxu0 %v7748
    %7761 = vmatpush.bf16.msra.mxu0 %v7747
    %7762 = vmatmul.bf16.gmra.mxu0 %v7752
    %v7763 = vpop.f32.mrf.mxu0
    %v7764 = vadd.f32 0.0, %v7763
    %v7765 = vpop.f32.mrf.mxu0
    %7766 = vdwg.mxu0
    %v7767 = vadd.f32 %v7707, %v7764
    %vm7768 = vmand %vm7645, %vm7581
    %vm7769 = vmand %vm7768, %vm7583
    %v7770 = vadd.s32 %v7649, %v7580
    %vm7771 = vcmp.eq.s32.totalorder %v203, %v7770
    %v7772 = vsel %vm7769, 1, 0
    %vm7773 = vcmp.eq.s32.totalorder %v7772, 1
    %vm7774 = vmand %vm7773, %vm7771
    %v7775 = vsel %vm7774, 1.0, 0.0
    %v7776 = vpack.c.bf16 %v7775, %v7775
    %v7778 = vsel %vm7376, %v7776, 0
    %7780 = vmatpush.bf16.msra.mxu0 0
    %7781 = vmatpush.bf16.msra.mxu0 0
    %7782 = vmatpush.bf16.msra.mxu0 0
    %7783 = vmatpush.bf16.msra.mxu0 0
    %7784 = vmatpush.bf16.msra.mxu0 0
    %7785 = vmatpush.bf16.msra.mxu0 0
    %7786 = vmatpush.bf16.msra.mxu0 %v7442
    %7787 = vmatpush.bf16.msra.mxu0 %v7441
    %7788 = vmatmul.bf16.gmra.mxu0 %v7778
    %v7789 = vpop.f32.mrf.mxu0
    %v7790 = vadd.f32 0.0, %v7789
    %v7791 = vpop.f32.mrf.mxu0
    %7792 = vdwg.mxu0
    %v7793 = vpack.c.bf16 %v7790, %v7790
    %s7794 = scalar_lea.vmem %s3, 80
    %v7795 = vld [vmem:[%s7794] sm:$0xf]
    %v7796 = vld [vmem:[%s7794 + $0x4] sm:$0xf]
    %v7797 = vld [vmem:[%s7794 + $0x8] sm:$0xf]
    %v7798 = vld [vmem:[%s7794 + $0xc] sm:$0xf]
    %v7803 = vunpack.c.l.b16 %v7795
    %v7804 = vunpack.c.l.b16 %v7796
    %v7805 = vunpack.c.l.b16 %v7797
    %v7806 = vunpack.c.l.b16 %v7798
    %v7807 = vpack.c.b16 %v7804, %v7803
    %v7808 = vpack.c.b16 %v7806, %v7805
    %v7812 = vsel %vm7376, %v7793, 0
    %7814 = vmatpush.bf16.msra.mxu0 0
    %7815 = vmatpush.bf16.msra.mxu0 0
    %7816 = vmatpush.bf16.msra.mxu0 0
    %7817 = vmatpush.bf16.msra.mxu0 0
    %7818 = vmatpush.bf16.msra.mxu0 0
    %7819 = vmatpush.bf16.msra.mxu0 0
    %7820 = vmatpush.bf16.msra.mxu0 %v7808
    %7821 = vmatpush.bf16.msra.mxu0 %v7807
    %7822 = vmatmul.bf16.gmra.mxu0 %v7812
    %v7823 = vpop.f32.mrf.mxu0
    %v7824 = vadd.f32 0.0, %v7823
    %v7825 = vpop.f32.mrf.mxu0
    %7826 = vdwg.mxu0
    %v7827 = vadd.f32 %v7767, %v7824
    %v7828 = vadd.s32 %v7450, 2
    %vm7829 = vcmp.ge.s32.totalorder %v7828, 0
    %vm7830 = vcmp.lt.s32.totalorder %v7828, 4
    %vm7831 = vmand %vm7829, %vm7830
    %vm7832 = vmand %vm7831, %vm7456
    %vm7833 = vmand %vm7832, %vm7458
    %v7834 = vmul.u32 %v7828, 4
    %v7835 = vadd.s32 %v7460, %v7834
    %v7836 = vadd.s32 %v7835, %v7452
    %vm7837 = vcmp.eq.s32.totalorder %v203, %v7836
    %v7838 = vsel %vm7833, 1, 0
    %vm7839 = vcmp.eq.s32.totalorder %v7838, 1
    %vm7840 = vmand %vm7839, %vm7837
    %v7841 = vsel %vm7840, 1.0, 0.0
    %v7842 = vpack.c.bf16 %v7841, %v7841
    %v7844 = vsel %vm7376, %v7842, 0
    %7846 = vmatpush.bf16.msra.mxu0 0
    %7847 = vmatpush.bf16.msra.mxu0 0
    %7848 = vmatpush.bf16.msra.mxu0 0
    %7849 = vmatpush.bf16.msra.mxu0 0
    %7850 = vmatpush.bf16.msra.mxu0 0
    %7851 = vmatpush.bf16.msra.mxu0 0
    %7852 = vmatpush.bf16.msra.mxu0 %v7442
    %7853 = vmatpush.bf16.msra.mxu0 %v7441
    %7854 = vmatmul.bf16.gmra.mxu0 %v7844
    %v7855 = vpop.f32.mrf.mxu0
    %v7856 = vadd.f32 0.0, %v7855
    %v7857 = vpop.f32.mrf.mxu0
    %7858 = vdwg.mxu0
    %v7859 = vpack.c.bf16 %v7856, %v7856
    %s7860 = scalar_lea.vmem %s3, 96
    %v7861 = vld [vmem:[%s7860] sm:$0xf]
    %v7862 = vld [vmem:[%s7860 + $0x4] sm:$0xf]
    %v7863 = vld [vmem:[%s7860 + $0x8] sm:$0xf]
    %v7864 = vld [vmem:[%s7860 + $0xc] sm:$0xf]
    %v7869 = vunpack.c.l.b16 %v7861
    %v7870 = vunpack.c.l.b16 %v7862
    %v7871 = vunpack.c.l.b16 %v7863
    %v7872 = vunpack.c.l.b16 %v7864
    %v7873 = vpack.c.b16 %v7870, %v7869
    %v7874 = vpack.c.b16 %v7872, %v7871
    %v7878 = vsel %vm7376, %v7859, 0
    %7880 = vmatpush.bf16.msra.mxu0 0
    %7881 = vmatpush.bf16.msra.mxu0 0
    %7882 = vmatpush.bf16.msra.mxu0 0
    %7883 = vmatpush.bf16.msra.mxu0 0
    %7884 = vmatpush.bf16.msra.mxu0 0
    %7885 = vmatpush.bf16.msra.mxu0 0
    %7886 = vmatpush.bf16.msra.mxu0 %v7874
    %7887 = vmatpush.bf16.msra.mxu0 %v7873
    %7888 = vmatmul.bf16.gmra.mxu0 %v7878
    %v7889 = vpop.f32.mrf.mxu0
    %v7890 = vadd.f32 0.0, %v7889
    %v7891 = vpop.f32.mrf.mxu0
    %7892 = vdwg.mxu0
    %v7893 = vadd.f32 %v7827, %v7890
    %vm7894 = vmand %vm7831, %vm7491
    %vm7895 = vmand %vm7894, %vm7493
    %v7896 = vadd.s32 %v7835, %v7451
    %vm7897 = vcmp.eq.s32.totalorder %v203, %v7896
    %v7898 = vsel %vm7895, 1, 0
    %vm7899 = vcmp.eq.s32.totalorder %v7898, 1
    %vm7900 = vmand %vm7899, %vm7897
    %v7901 = vsel %vm7900, 1.0, 0.0
    %v7902 = vpack.c.bf16 %v7901, %v7901
    %v7904 = vsel %vm7376, %v7902, 0
    %7906 = vmatpush.bf16.msra.mxu0 0
    %7907 = vmatpush.bf16.msra.mxu0 0
    %7908 = vmatpush.bf16.msra.mxu0 0
    %7909 = vmatpush.bf16.msra.mxu0 0
    %7910 = vmatpush.bf16.msra.mxu0 0
    %7911 = vmatpush.bf16.msra.mxu0 0
    %7912 = vmatpush.bf16.msra.mxu0 %v7442
    %7913 = vmatpush.bf16.msra.mxu0 %v7441
    %7914 = vmatmul.bf16.gmra.mxu0 %v7904
    %v7915 = vpop.f32.mrf.mxu0
    %v7916 = vadd.f32 0.0, %v7915
    %v7917 = vpop.f32.mrf.mxu0
    %7918 = vdwg.mxu0
    %v7919 = vpack.c.bf16 %v7916, %v7916
    %s7920 = scalar_lea.vmem %s3, 112
    %v7921 = vld [vmem:[%s7920] sm:$0xf]
    %v7922 = vld [vmem:[%s7920 + $0x4] sm:$0xf]
    %v7923 = vld [vmem:[%s7920 + $0x8] sm:$0xf]
    %v7924 = vld [vmem:[%s7920 + $0xc] sm:$0xf]
    %v7929 = vunpack.c.l.b16 %v7921
    %v7930 = vunpack.c.l.b16 %v7922
    %v7931 = vunpack.c.l.b16 %v7923
    %v7932 = vunpack.c.l.b16 %v7924
    %v7933 = vpack.c.b16 %v7930, %v7929
    %v7934 = vpack.c.b16 %v7932, %v7931
    %v7938 = vsel %vm7376, %v7919, 0
    %7940 = vmatpush.bf16.msra.mxu0 0
    %7941 = vmatpush.bf16.msra.mxu0 0
    %7942 = vmatpush.bf16.msra.mxu0 0
    %7943 = vmatpush.bf16.msra.mxu0 0
    %7944 = vmatpush.bf16.msra.mxu0 0
    %7945 = vmatpush.bf16.msra.mxu0 0
    %7946 = vmatpush.bf16.msra.mxu0 %v7934
    %7947 = vmatpush.bf16.msra.mxu0 %v7933
    %7948 = vmatmul.bf16.gmra.mxu0 %v7938
    %v7949 = vpop.f32.mrf.mxu0
    %v7950 = vadd.f32 0.0, %v7949
    %v7951 = vpop.f32.mrf.mxu0
    %7952 = vdwg.mxu0
    %v7953 = vadd.f32 %v7893, %v7950
    %vm7954 = vmand %vm7831, %vm7581
    %vm7955 = vmand %vm7954, %vm7583
    %v7956 = vadd.s32 %v7835, %v7580
    %vm7957 = vcmp.eq.s32.totalorder %v203, %v7956
    %v7958 = vsel %vm7955, 1, 0
    %vm7959 = vcmp.eq.s32.totalorder %v7958, 1
    %vm7960 = vmand %vm7959, %vm7957
    %v7961 = vsel %vm7960, 1.0, 0.0
    %v7962 = vpack.c.bf16 %v7961, %v7961
    %v7964 = vsel %vm7376, %v7962, 0
    %7966 = vmatpush.bf16.msra.mxu0 0
    %7967 = vmatpush.bf16.msra.mxu0 0
    %7968 = vmatpush.bf16.msra.mxu0 0
    %7969 = vmatpush.bf16.msra.mxu0 0
    %7970 = vmatpush.bf16.msra.mxu0 0
    %7971 = vmatpush.bf16.msra.mxu0 0
    %7972 = vmatpush.bf16.msra.mxu0 %v7442
    %7973 = vmatpush.bf16.msra.mxu0 %v7441
    %7974 = vmatmul.bf16.gmra.mxu0 %v7964
    %v7975 = vpop.f32.mrf.mxu0
    %v7976 = vadd.f32 0.0, %v7975
    %v7977 = vpop.f32.mrf.mxu0
    %7978 = vdwg.mxu0
    %v7979 = vpack.c.bf16 %v7976, %v7976
    %s7980 = scalar_lea.vmem %s3, 128
    %v7981 = vld [vmem:[%s7980] sm:$0xf]
    %v7982 = vld [vmem:[%s7980 + $0x4] sm:$0xf]
    %v7983 = vld [vmem:[%s7980 + $0x8] sm:$0xf]
    %v7984 = vld [vmem:[%s7980 + $0xc] sm:$0xf]
    %v7989 = vunpack.c.l.b16 %v7981
    %v7990 = vunpack.c.l.b16 %v7982
    %v7991 = vunpack.c.l.b16 %v7983
    %v7992 = vunpack.c.l.b16 %v7984
    %v7993 = vpack.c.b16 %v7990, %v7989
    %v7994 = vpack.c.b16 %v7992, %v7991
    %v7998 = vsel %vm7376, %v7979, 0
    %8000 = vmatpush.bf16.msra.mxu0 0
    %8001 = vmatpush.bf16.msra.mxu0 0
    %8002 = vmatpush.bf16.msra.mxu0 0
    %8003 = vmatpush.bf16.msra.mxu0 0
    %8004 = vmatpush.bf16.msra.mxu0 0
    %8005 = vmatpush.bf16.msra.mxu0 0
    %8006 = vmatpush.bf16.msra.mxu0 %v7994
    %8007 = vmatpush.bf16.msra.mxu0 %v7993
    %8008 = vmatmul.bf16.gmra.mxu0 %v7998
    %v8009 = vpop.f32.mrf.mxu0
    %v8010 = vadd.f32 0.0, %v8009
    %v8011 = vpop.f32.mrf.mxu0
    %8012 = vdwg.mxu0
    %v8013 = vadd.f32 %v7953, %v8010
    %vm8014 = vcmask 523264
    %v8015 = vsel %vm8014, %v8013, 0.0
    %v8016 = vrot.slane %v8015, 4
    %v8017 = vadd.f32 %v8015, %v8016
    %v8018 = vrot.slane %v8017, 2
    %v8019 = vadd.f32 %v8017, %v8018
    %v8020 = vrot.slane %v8019, 1
    %v8021 = vadd.f32 %v8019, %v8020
    %v8022 = vmul.f32 %v8013, %v8013
    %v8023 = vsel %vm8014, %v8022, 0.0
    %v8024 = vrot.slane %v8023, 4
    %v8025 = vadd.f32 %v8023, %v8024
    %v8026 = vrot.slane %v8025, 2
    %v8027 = vadd.f32 %v8025, %v8026
    %v8028 = vrot.slane %v8027, 1
    %v8029 = vadd.f32 %v8027, %v8028
    %v8030 = vmul.f32 %v8021, 0.125
    %v8031 = vmul.f32 %v8029, 0.125
    %v8032 = vmul.f32 %v8030, %v8030
    %v8033 = vsub.f32 %v8031, %v8032
    %v8034 = vadd.f32 %v8033, 1e-05
    %v8035 = vrsqrt.pop %v8034
    %v8036 = vmul.f32 %v8035, %v8034
    %v8037 = vmul.f32 %v8036, %v8035
    %v8038 = vmul.f32 0.5, %v8037
    %v8039 = vsub.f32 1.5, %v8038
    %v8040 = vmul.f32 %v8035, %v8039
    %vm8041 = vweird.f32 %v8034
    %vm8042 = vweird.f32 %v8035
    %vm8043 = vmor %vm8041, %vm8042
    %v8044 = vsel %vm8043, %v8035, %v8040
    %v8045 = vmul.f32 %v8044, %v7443
    %v8046 = vsub.f32 %v8013, %v8030
    %v8047 = vperm.slane %v8045, 0
    %v8048 = vmul.f32 %v8046, %v8047
    %v8049 = vperm.slane %v7444, 0
    %v8050 = vadd.f32 %v8048, %v8049
    %v8051 = vmax.f32 %v8050, 0.0
    %v8052 = vpack.c.bf16 %v8051, %v8051
    %v8053 = vld [vmem:[#allocation5 + $0x6] sm:$0x1]
    %v8054 = vld [vmem:[#allocation5 + $0x7] sm:$0x1]
    %vm8055 = vcmask 64512
    %v8057 = vsel %vm8055, 0, 0
    %vm8059 = vcmask 1043456
    %v8061 = vsel %vm8059, %v8052, 0
    %8063 = vmatpush.bf16.msra.mxu0 0
    %8064 = vmatpush.bf16.msra.mxu0 0
    %8065 = vmatpush.bf16.msra.mxu0 0
    %8066 = vmatpush.bf16.msra.mxu0 0
    %8067 = vmatpush.bf16.msra.mxu0 0
    %8068 = vmatpush.bf16.msra.mxu0 0
    %8069 = vmatpush.bf16.msra.mxu0 0
    %8070 = vmatpush.bf16.msra.mxu0 %v8061
    %8071 = vmatmul.bf16.gmra.mxu0 %v8057
    %v8072 = vpop.f32.mrf.mxu0
    %v8073 = vadd.f32 0.0, %v8072
    %v8074 = vpop.f32.mrf.mxu0
    %8075 = vdwg.mxu0
    %v8076 = vpack.c.bf16 %v8073, %v8073
    %v8077 = vld [vmem:[%s4] sm:$0xf]
    %v8078 = vld [vmem:[%s4 + $0x4] sm:$0xf]
    %v8079 = vld [vmem:[%s4 + $0x8] sm:$0xf]
    %v8080 = vld [vmem:[%s4 + $0xc] sm:$0xf]
    %v8081 = vld [vmem:[%s4 + $0x10] sm:$0xf]
    %v8082 = vld [vmem:[%s4 + $0x14] sm:$0xf]
    %v8083 = vld [vmem:[%s4 + $0x18] sm:$0xf]
    %v8084 = vld [vmem:[%s4 + $0x1c] sm:$0xf]
    %s8085 = scalar_lea.vmem %s4, 32
    %v8086 = vld [vmem:[%s8085] sm:$0xf]
    %v8087 = vld [vmem:[%s8085 + $0x4] sm:$0xf]
    %v8088 = vld [vmem:[%s8085 + $0x8] sm:$0xf]
    %v8089 = vld [vmem:[%s8085 + $0xc] sm:$0xf]
    %v8090 = vld [vmem:[%s8085 + $0x10] sm:$0xf]
    %v8091 = vld [vmem:[%s8085 + $0x14] sm:$0xf]
    %v8092 = vld [vmem:[%s8085 + $0x18] sm:$0xf]
    %v8093 = vld [vmem:[%s8085 + $0x1c] sm:$0xf]
    %v8102 = vunpack.c.l.b16 %v8086
    %v8103 = vunpack.c.l.b16 %v8087
    %v8104 = vunpack.c.l.b16 %v8088
    %v8105 = vunpack.c.l.b16 %v8089
    %v8106 = vunpack.c.l.b16 %v8090
    %v8107 = vunpack.c.l.b16 %v8091
    %v8108 = vunpack.c.l.b16 %v8092
    %v8109 = vunpack.c.l.b16 %v8093
    %v8110 = vpack.c.b16 %v8103, %v8102
    %v8111 = vpack.c.b16 %v8105, %v8104
    %v8112 = vpack.c.b16 %v8107, %v8106
    %v8113 = vpack.c.b16 %v8109, %v8108
    %v8119 = vsel %vm8014, %v8076, 0
    %8121 = vmatpush.bf16.msra.mxu0 0
    %8122 = vmatpush.bf16.msra.mxu0 0
    %8123 = vmatpush.bf16.msra.mxu0 0
    %8124 = vmatpush.bf16.msra.mxu0 0
    %8125 = vmatpush.bf16.msra.mxu0 %v8113
    %8126 = vmatpush.bf16.msra.mxu0 %v8112
    %8127 = vmatpush.bf16.msra.mxu0 %v8111
    %8128 = vmatpush.bf16.msra.mxu0 %v8110
    %8129 = vmatmul.bf16.gmra.mxu0 %v8119
    %v8130 = vpop.f32.mrf.mxu0
    %v8131 = vadd.f32 0.0, %v8130
    %v8132 = vpop.f32.mrf.mxu0
    %8133 = vdwg.mxu0
    %v8142 = vunpack.c.l.b16 %v8077
    %v8143 = vunpack.c.l.b16 %v8078
    %v8144 = vunpack.c.l.b16 %v8079
    %v8145 = vunpack.c.l.b16 %v8080
    %v8146 = vunpack.c.l.b16 %v8081
    %v8147 = vunpack.c.l.b16 %v8082
    %v8148 = vunpack.c.l.b16 %v8083
    %v8149 = vunpack.c.l.b16 %v8084
    %v8150 = vpack.c.b16 %v8143, %v8142
    %v8151 = vpack.c.b16 %v8145, %v8144
    %v8152 = vpack.c.b16 %v8147, %v8146
    %v8153 = vpack.c.b16 %v8149, %v8148
    %8158 = vmatpush.bf16.msra.mxu0 0
    %8159 = vmatpush.bf16.msra.mxu0 0
    %8160 = vmatpush.bf16.msra.mxu0 0
    %8161 = vmatpush.bf16.msra.mxu0 0
    %8162 = vmatpush.bf16.msra.mxu0 %v8153
    %8163 = vmatpush.bf16.msra.mxu0 %v8152
    %8164 = vmatpush.bf16.msra.mxu0 %v8151
    %8165 = vmatpush.bf16.msra.mxu0 %v8150
    %8166 = vmatmul.bf16.gmra.mxu0 %v8119
    %v8167 = vpop.f32.mrf.mxu0
    %v8168 = vadd.f32 %v8131, %v8167
    %v8169 = vpop.f32.mrf.mxu0
    %8170 = vdwg.mxu0
    %s8171 = scalar_lea.vmem %s4, 64
    %v8172 = vld [vmem:[%s8171] sm:$0xf]
    %v8173 = vld [vmem:[%s8171 + $0x4] sm:$0xf]
    %v8174 = vld [vmem:[%s8171 + $0x8] sm:$0xf]
    %v8175 = vld [vmem:[%s8171 + $0xc] sm:$0xf]
    %v8176 = vld [vmem:[%s8171 + $0x10] sm:$0xf]
    %v8177 = vld [vmem:[%s8171 + $0x14] sm:$0xf]
    %v8178 = vld [vmem:[%s8171 + $0x18] sm:$0xf]
    %v8179 = vld [vmem:[%s8171 + $0x1c] sm:$0xf]
    %v8188 = vunpack.c.l.b16 %v8172
    %v8189 = vunpack.c.l.b16 %v8173
    %v8190 = vunpack.c.l.b16 %v8174
    %v8191 = vunpack.c.l.b16 %v8175
    %v8192 = vunpack.c.l.b16 %v8176
    %v8193 = vunpack.c.l.b16 %v8177
    %v8194 = vunpack.c.l.b16 %v8178
    %v8195 = vunpack.c.l.b16 %v8179
    %v8196 = vpack.c.b16 %v8189, %v8188
    %v8197 = vpack.c.b16 %v8191, %v8190
    %v8198 = vpack.c.b16 %v8193, %v8192
    %v8199 = vpack.c.b16 %v8195, %v8194
    %8204 = vmatpush.bf16.msra.mxu0 0
    %8205 = vmatpush.bf16.msra.mxu0 0
    %8206 = vmatpush.bf16.msra.mxu0 0
    %8207 = vmatpush.bf16.msra.mxu0 0
    %8208 = vmatpush.bf16.msra.mxu0 %v8199
    %8209 = vmatpush.bf16.msra.mxu0 %v8198
    %8210 = vmatpush.bf16.msra.mxu0 %v8197
    %8211 = vmatpush.bf16.msra.mxu0 %v8196
    %8212 = vmatmul.bf16.gmra.mxu0 %v8119
    %v8213 = vpop.f32.mrf.mxu0
    %v8214 = vadd.f32 0.0, %v8213
    %v8215 = vpop.f32.mrf.mxu0
    %8216 = vdwg.mxu0
    %v8217 = vadd.f32 %v8168, %v8214
    %s8218 = scalar_lea.vmem %s4, 96
    %v8219 = vld [vmem:[%s8218] sm:$0xf]
    %v8220 = vld [vmem:[%s8218 + $0x4] sm:$0xf]
    %v8221 = vld [vmem:[%s8218 + $0x8] sm:$0xf]
    %v8222 = vld [vmem:[%s8218 + $0xc] sm:$0xf]
    %v8223 = vld [vmem:[%s8218 + $0x10] sm:$0xf]
    %v8224 = vld [vmem:[%s8218 + $0x14] sm:$0xf]
    %v8225 = vld [vmem:[%s8218 + $0x18] sm:$0xf]
    %v8226 = vld [vmem:[%s8218 + $0x1c] sm:$0xf]
    %v8235 = vunpack.c.l.b16 %v8219
    %v8236 = vunpack.c.l.b16 %v8220
    %v8237 = vunpack.c.l.b16 %v8221
    %v8238 = vunpack.c.l.b16 %v8222
    %v8239 = vunpack.c.l.b16 %v8223
    %v8240 = vunpack.c.l.b16 %v8224
    %v8241 = vunpack.c.l.b16 %v8225
    %v8242 = vunpack.c.l.b16 %v8226
    %v8243 = vpack.c.b16 %v8236, %v8235
    %v8244 = vpack.c.b16 %v8238, %v8237
    %v8245 = vpack.c.b16 %v8240, %v8239
    %v8246 = vpack.c.b16 %v8242, %v8241
    %8251 = vmatpush.bf16.msra.mxu0 0
    %8252 = vmatpush.bf16.msra.mxu0 0
    %8253 = vmatpush.bf16.msra.mxu0 0
    %8254 = vmatpush.bf16.msra.mxu0 0
    %8255 = vmatpush.bf16.msra.mxu0 %v8246
    %8256 = vmatpush.bf16.msra.mxu0 %v8245
    %8257 = vmatpush.bf16.msra.mxu0 %v8244
    %8258 = vmatpush.bf16.msra.mxu0 %v8243
    %8259 = vmatmul.bf16.gmra.mxu0 %v8119
    %v8260 = vpop.f32.mrf.mxu0
    %v8261 = vadd.f32 0.0, %v8260
    %v8262 = vpop.f32.mrf.mxu0
    %8263 = vdwg.mxu0
    %v8264 = vadd.f32 %v8217, %v8261
    %v8265 = vmul.u32 %v122, 4
    %vm8266 = vcmp.eq.s32.totalorder %v203, %v8265
    %v8267 = vsel %vm8266, 1.0, 0.0
    %v8268 = vpack.c.bf16 %v8267, %v8267
    %v8270 = vsel %vm8055, %v8268, 0
    %8272 = vmatpush.bf16.msra.mxu0 0
    %8273 = vmatpush.bf16.msra.mxu0 0
    %8274 = vmatpush.bf16.msra.mxu0 0
    %8275 = vmatpush.bf16.msra.mxu0 0
    %8276 = vmatpush.bf16.msra.mxu0 0
    %8277 = vmatpush.bf16.msra.mxu0 0
    %8278 = vmatpush.bf16.msra.mxu0 0
    %8279 = vmatpush.bf16.msra.mxu0 %v8061
    %8280 = vmatmul.bf16.gmra.mxu0 %v8270
    %v8281 = vpop.f32.mrf.mxu0
    %v8282 = vadd.f32 0.0, %v8281
    %v8283 = vpop.f32.mrf.mxu0
    %8284 = vdwg.mxu0
    %v8285 = vpack.c.bf16 %v8282, %v8282
    %s8286 = scalar_lea.vmem %s4, 128
    %v8287 = vld [vmem:[%s8286] sm:$0xf]
    %v8288 = vld [vmem:[%s8286 + $0x4] sm:$0xf]
    %v8289 = vld [vmem:[%s8286 + $0x8] sm:$0xf]
    %v8290 = vld [vmem:[%s8286 + $0xc] sm:$0xf]
    %v8291 = vld [vmem:[%s8286 + $0x10] sm:$0xf]
    %v8292 = vld [vmem:[%s8286 + $0x14] sm:$0xf]
    %v8293 = vld [vmem:[%s8286 + $0x18] sm:$0xf]
    %v8294 = vld [vmem:[%s8286 + $0x1c] sm:$0xf]
    %v8303 = vunpack.c.l.b16 %v8287
    %v8304 = vunpack.c.l.b16 %v8288
    %v8305 = vunpack.c.l.b16 %v8289
    %v8306 = vunpack.c.l.b16 %v8290
    %v8307 = vunpack.c.l.b16 %v8291
    %v8308 = vunpack.c.l.b16 %v8292
    %v8309 = vunpack.c.l.b16 %v8293
    %v8310 = vunpack.c.l.b16 %v8294
    %v8311 = vpack.c.b16 %v8304, %v8303
    %v8312 = vpack.c.b16 %v8306, %v8305
    %v8313 = vpack.c.b16 %v8308, %v8307
    %v8314 = vpack.c.b16 %v8310, %v8309
    %v8320 = vsel %vm8014, %v8285, 0
    %8322 = vmatpush.bf16.msra.mxu0 0
    %8323 = vmatpush.bf16.msra.mxu0 0
    %8324 = vmatpush.bf16.msra.mxu0 0
    %8325 = vmatpush.bf16.msra.mxu0 0
    %8326 = vmatpush.bf16.msra.mxu0 %v8314
    %8327 = vmatpush.bf16.msra.mxu0 %v8313
    %8328 = vmatpush.bf16.msra.mxu0 %v8312
    %8329 = vmatpush.bf16.msra.mxu0 %v8311
    %8330 = vmatmul.bf16.gmra.mxu0 %v8320
    %v8331 = vpop.f32.mrf.mxu0
    %v8332 = vadd.f32 0.0, %v8331
    %v8333 = vpop.f32.mrf.mxu0
    %8334 = vdwg.mxu0
    %v8335 = vadd.f32 %v8264, %v8332
    %v8336 = vadd.s32 %v8265, 1
    %vm8337 = vcmp.eq.s32.totalorder %v203, %v8336
    %v8338 = vsel %vm8337, 1.0, 0.0
    %v8339 = vpack.c.bf16 %v8338, %v8338
    %v8341 = vsel %vm8055, %v8339, 0
    %8343 = vmatpush.bf16.msra.mxu0 0
    %8344 = vmatpush.bf16.msra.mxu0 0
    %8345 = vmatpush.bf16.msra.mxu0 0
    %8346 = vmatpush.bf16.msra.mxu0 0
    %8347 = vmatpush.bf16.msra.mxu0 0
    %8348 = vmatpush.bf16.msra.mxu0 0
    %8349 = vmatpush.bf16.msra.mxu0 0
    %8350 = vmatpush.bf16.msra.mxu0 %v8061
    %8351 = vmatmul.bf16.gmra.mxu0 %v8341
    %v8352 = vpop.f32.mrf.mxu0
    %v8353 = vadd.f32 0.0, %v8352
    %v8354 = vpop.f32.mrf.mxu0
    %8355 = vdwg.mxu0
    %v8356 = vpack.c.bf16 %v8353, %v8353
    %s8357 = scalar_lea.vmem %s4, 160
    %v8358 = vld [vmem:[%s8357] sm:$0xf]
    %v8359 = vld [vmem:[%s8357 + $0x4] sm:$0xf]
    %v8360 = vld [vmem:[%s8357 + $0x8] sm:$0xf]
    %v8361 = vld [vmem:[%s8357 + $0xc] sm:$0xf]
    %v8362 = vld [vmem:[%s8357 + $0x10] sm:$0xf]
    %v8363 = vld [vmem:[%s8357 + $0x14] sm:$0xf]
    %v8364 = vld [vmem:[%s8357 + $0x18] sm:$0xf]
    %v8365 = vld [vmem:[%s8357 + $0x1c] sm:$0xf]
    %v8374 = vunpack.c.l.b16 %v8358
    %v8375 = vunpack.c.l.b16 %v8359
    %v8376 = vunpack.c.l.b16 %v8360
    %v8377 = vunpack.c.l.b16 %v8361
    %v8378 = vunpack.c.l.b16 %v8362
    %v8379 = vunpack.c.l.b16 %v8363
    %v8380 = vunpack.c.l.b16 %v8364
    %v8381 = vunpack.c.l.b16 %v8365
    %v8382 = vpack.c.b16 %v8375, %v8374
    %v8383 = vpack.c.b16 %v8377, %v8376
    %v8384 = vpack.c.b16 %v8379, %v8378
    %v8385 = vpack.c.b16 %v8381, %v8380
    %v8391 = vsel %vm8014, %v8356, 0
    %8393 = vmatpush.bf16.msra.mxu0 0
    %8394 = vmatpush.bf16.msra.mxu0 0
    %8395 = vmatpush.bf16.msra.mxu0 0
    %8396 = vmatpush.bf16.msra.mxu0 0
    %8397 = vmatpush.bf16.msra.mxu0 %v8385
    %8398 = vmatpush.bf16.msra.mxu0 %v8384
    %8399 = vmatpush.bf16.msra.mxu0 %v8383
    %8400 = vmatpush.bf16.msra.mxu0 %v8382
    %8401 = vmatmul.bf16.gmra.mxu0 %v8391
    %v8402 = vpop.f32.mrf.mxu0
    %v8403 = vadd.f32 0.0, %v8402
    %v8404 = vpop.f32.mrf.mxu0
    %8405 = vdwg.mxu0
    %v8406 = vadd.f32 %v8335, %v8403
    %s8407 = scalar_lea.vmem %s4, 192
    %v8408 = vld [vmem:[%s8407] sm:$0xf]
    %v8409 = vld [vmem:[%s8407 + $0x4] sm:$0xf]
    %v8410 = vld [vmem:[%s8407 + $0x8] sm:$0xf]
    %v8411 = vld [vmem:[%s8407 + $0xc] sm:$0xf]
    %v8412 = vld [vmem:[%s8407 + $0x10] sm:$0xf]
    %v8413 = vld [vmem:[%s8407 + $0x14] sm:$0xf]
    %v8414 = vld [vmem:[%s8407 + $0x18] sm:$0xf]
    %v8415 = vld [vmem:[%s8407 + $0x1c] sm:$0xf]
    %v8424 = vunpack.c.l.b16 %v8408
    %v8425 = vunpack.c.l.b16 %v8409
    %v8426 = vunpack.c.l.b16 %v8410
    %v8427 = vunpack.c.l.b16 %v8411
    %v8428 = vunpack.c.l.b16 %v8412
    %v8429 = vunpack.c.l.b16 %v8413
    %v8430 = vunpack.c.l.b16 %v8414
    %v8431 = vunpack.c.l.b16 %v8415
    %v8432 = vpack.c.b16 %v8425, %v8424
    %v8433 = vpack.c.b16 %v8427, %v8426
    %v8434 = vpack.c.b16 %v8429, %v8428
    %v8435 = vpack.c.b16 %v8431, %v8430
    %8440 = vmatpush.bf16.msra.mxu0 0
    %8441 = vmatpush.bf16.msra.mxu0 0
    %8442 = vmatpush.bf16.msra.mxu0 0
    %8443 = vmatpush.bf16.msra.mxu0 0
    %8444 = vmatpush.bf16.msra.mxu0 %v8435
    %8445 = vmatpush.bf16.msra.mxu0 %v8434
    %8446 = vmatpush.bf16.msra.mxu0 %v8433
    %8447 = vmatpush.bf16.msra.mxu0 %v8432
    %8448 = vmatmul.bf16.gmra.mxu0 %v8119
    %v8449 = vpop.f32.mrf.mxu0
    %v8450 = vadd.f32 0.0, %v8449
    %v8451 = vpop.f32.mrf.mxu0
    %8452 = vdwg.mxu0
    %v8453 = vadd.f32 %v8406, %v8450
    %v8454 = vadd.s32 %v8265, 2
    %vm8455 = vcmp.eq.s32.totalorder %v203, %v8454
    %v8456 = vsel %vm8455, 1.0, 0.0
    %v8457 = vpack.c.bf16 %v8456, %v8456
    %v8459 = vsel %vm8055, %v8457, 0
    %8461 = vmatpush.bf16.msra.mxu0 0
    %8462 = vmatpush.bf16.msra.mxu0 0
    %8463 = vmatpush.bf16.msra.mxu0 0
    %8464 = vmatpush.bf16.msra.mxu0 0
    %8465 = vmatpush.bf16.msra.mxu0 0
    %8466 = vmatpush.bf16.msra.mxu0 0
    %8467 = vmatpush.bf16.msra.mxu0 0
    %8468 = vmatpush.bf16.msra.mxu0 %v8061
    %8469 = vmatmul.bf16.gmra.mxu0 %v8459
    %v8470 = vpop.f32.mrf.mxu0
    %v8471 = vadd.f32 0.0, %v8470
    %v8472 = vpop.f32.mrf.mxu0
    %8473 = vdwg.mxu0
    %v8474 = vpack.c.bf16 %v8471, %v8471
    %s8475 = scalar_lea.vmem %s4, 224
    %v8476 = vld [vmem:[%s8475] sm:$0xf]
    %v8477 = vld [vmem:[%s8475 + $0x4] sm:$0xf]
    %v8478 = vld [vmem:[%s8475 + $0x8] sm:$0xf]
    %v8479 = vld [vmem:[%s8475 + $0xc] sm:$0xf]
    %v8480 = vld [vmem:[%s8475 + $0x10] sm:$0xf]
    %v8481 = vld [vmem:[%s8475 + $0x14] sm:$0xf]
    %v8482 = vld [vmem:[%s8475 + $0x18] sm:$0xf]
    %v8483 = vld [vmem:[%s8475 + $0x1c] sm:$0xf]
    %v8492 = vunpack.c.l.b16 %v8476
    %v8493 = vunpack.c.l.b16 %v8477
    %v8494 = vunpack.c.l.b16 %v8478
    %v8495 = vunpack.c.l.b16 %v8479
    %v8496 = vunpack.c.l.b16 %v8480
    %v8497 = vunpack.c.l.b16 %v8481
    %v8498 = vunpack.c.l.b16 %v8482
    %v8499 = vunpack.c.l.b16 %v8483
    %v8500 = vpack.c.b16 %v8493, %v8492
    %v8501 = vpack.c.b16 %v8495, %v8494
    %v8502 = vpack.c.b16 %v8497, %v8496
    %v8503 = vpack.c.b16 %v8499, %v8498
    %v8509 = vsel %vm8014, %v8474, 0
    %8511 = vmatpush.bf16.msra.mxu0 0
    %8512 = vmatpush.bf16.msra.mxu0 0
    %8513 = vmatpush.bf16.msra.mxu0 0
    %8514 = vmatpush.bf16.msra.mxu0 0
    %8515 = vmatpush.bf16.msra.mxu0 %v8503
    %8516 = vmatpush.bf16.msra.mxu0 %v8502
    %8517 = vmatpush.bf16.msra.mxu0 %v8501
    %8518 = vmatpush.bf16.msra.mxu0 %v8500
    %8519 = vmatmul.bf16.gmra.mxu0 %v8509
    %v8520 = vpop.f32.mrf.mxu0
    %v8521 = vadd.f32 0.0, %v8520
    %v8522 = vpop.f32.mrf.mxu0
    %8523 = vdwg.mxu0
    %v8524 = vadd.f32 %v8453, %v8521
    %v8525 = vadd.s32 %v8454, 1
    %vm8526 = vcmp.eq.s32.totalorder %v203, %v8525
    %v8527 = vsel %vm8526, 1.0, 0.0
    %v8528 = vpack.c.bf16 %v8527, %v8527
    %v8530 = vsel %vm8055, %v8528, 0
    %8532 = vmatpush.bf16.msra.mxu0 0
    %8533 = vmatpush.bf16.msra.mxu0 0
    %8534 = vmatpush.bf16.msra.mxu0 0
    %8535 = vmatpush.bf16.msra.mxu0 0
    %8536 = vmatpush.bf16.msra.mxu0 0
    %8537 = vmatpush.bf16.msra.mxu0 0
    %8538 = vmatpush.bf16.msra.mxu0 0
    %8539 = vmatpush.bf16.msra.mxu0 %v8061
    %8540 = vmatmul.bf16.gmra.mxu0 %v8530
    %v8541 = vpop.f32.mrf.mxu0
    %v8542 = vadd.f32 0.0, %v8541
    %v8543 = vpop.f32.mrf.mxu0
    %8544 = vdwg.mxu0
    %v8545 = vpack.c.bf16 %v8542, %v8542
    %s8546 = scalar_lea.vmem %s4, 256
    %v8547 = vld [vmem:[%s8546] sm:$0xf]
    %v8548 = vld [vmem:[%s8546 + $0x4] sm:$0xf]
    %v8549 = vld [vmem:[%s8546 + $0x8] sm:$0xf]
    %v8550 = vld [vmem:[%s8546 + $0xc] sm:$0xf]
    %v8551 = vld [vmem:[%s8546 + $0x10] sm:$0xf]
    %v8552 = vld [vmem:[%s8546 + $0x14] sm:$0xf]
    %v8553 = vld [vmem:[%s8546 + $0x18] sm:$0xf]
    %v8554 = vld [vmem:[%s8546 + $0x1c] sm:$0xf]
    %v8563 = vunpack.c.l.b16 %v8547
    %v8564 = vunpack.c.l.b16 %v8548
    %v8565 = vunpack.c.l.b16 %v8549
    %v8566 = vunpack.c.l.b16 %v8550
    %v8567 = vunpack.c.l.b16 %v8551
    %v8568 = vunpack.c.l.b16 %v8552
    %v8569 = vunpack.c.l.b16 %v8553
    %v8570 = vunpack.c.l.b16 %v8554
    %v8571 = vpack.c.b16 %v8564, %v8563
    %v8572 = vpack.c.b16 %v8566, %v8565
    %v8573 = vpack.c.b16 %v8568, %v8567
    %v8574 = vpack.c.b16 %v8570, %v8569
    %v8580 = vsel %vm8014, %v8545, 0
    %8582 = vmatpush.bf16.msra.mxu0 0
    %8583 = vmatpush.bf16.msra.mxu0 0
    %8584 = vmatpush.bf16.msra.mxu0 0
    %8585 = vmatpush.bf16.msra.mxu0 0
    %8586 = vmatpush.bf16.msra.mxu0 %v8574
    %8587 = vmatpush.bf16.msra.mxu0 %v8573
    %8588 = vmatpush.bf16.msra.mxu0 %v8572
    %8589 = vmatpush.bf16.msra.mxu0 %v8571
    %8590 = vmatmul.bf16.gmra.mxu0 %v8580
    %v8591 = vpop.f32.mrf.mxu0
    %v8592 = vadd.f32 0.0, %v8591
    %v8593 = vpop.f32.mrf.mxu0
    %8594 = vdwg.mxu0
    %v8595 = vadd.f32 %v8524, %v8592
    %vm8596 = vcmask 517120
    %v8597 = vsel %vm8596, %v8595, 0.0
    %v8598 = vrot.slane %v8597, 4
    %v8599 = vadd.f32 %v8597, %v8598
    %v8600 = vrot.slane %v8599, 2
    %v8601 = vadd.f32 %v8599, %v8600
    %v8602 = vrot.slane %v8601, 1
    %v8603 = vadd.f32 %v8601, %v8602
    %v8604 = vmul.f32 %v8595, %v8595
    %v8605 = vsel %vm8596, %v8604, 0.0
    %v8606 = vrot.slane %v8605, 4
    %v8607 = vadd.f32 %v8605, %v8606
    %v8608 = vrot.slane %v8607, 2
    %v8609 = vadd.f32 %v8607, %v8608
    %v8610 = vrot.slane %v8609, 1
    %v8611 = vadd.f32 %v8609, %v8610
    %v8612 = vmul.f32 %v8603, 0.5
    %v8613 = vmul.f32 %v8611, 0.5
    %v8614 = vmul.f32 %v8612, %v8612
    %v8615 = vsub.f32 %v8613, %v8614
    %v8616 = vadd.f32 %v8615, 1e-05
    %v8617 = vrsqrt.pop %v8616
    %v8618 = vmul.f32 %v8617, %v8616
    %v8619 = vmul.f32 %v8618, %v8617
    %v8620 = vmul.f32 0.5, %v8619
    %v8621 = vsub.f32 1.5, %v8620
    %v8622 = vmul.f32 %v8617, %v8621
    %vm8623 = vweird.f32 %v8616
    %vm8624 = vweird.f32 %v8617
    %vm8625 = vmor %vm8623, %vm8624
    %v8626 = vsel %vm8625, %v8617, %v8622
    %v8627 = vmul.f32 %v8626, %v8053
    %v8628 = vsub.f32 %v8595, %v8612
    %v8629 = vperm.slane %v8627, 0
    %v8630 = vmul.f32 %v8628, %v8629
    %v8631 = vperm.slane %v8054, 0
    %v8632 = vadd.f32 %v8630, %v8631
    %v8633 = vmax.f32 %v8632, 0.0
    %8634 = vst.msk [vmem:[#allocation7] sm:$0x3] %vm8596, %v8633
    // Predicated region
    $region34: #{encoder_forward.1} parent=1 // pred_check
      _
    $region35: #{encoder_forward.1} parent=1 // pred_check_branch
      %8636 = sbr.rel (0) target = $region37
    $region36: #{encoder_forward.1} parent=1 // pred_region
      %8638 = vsyncadd [#allocation4], 0
      %s8640 = sshll.u32 [#allocation7], 4
      %s8641 = int_to_ptr.vmem [resolvable:$true] %s8640
      %s8642 = sshll.u32 %s6, 4
      %s8643 = int_to_ptr.hbm [resolvable:$true] %s8642
      %8645 = dma.vmem_to_hbm [thread:$0]  %s8641, 32, %s8643, [#allocation4]
    $region37: #{encoder_forward.1} parent=1 // pred_fallthru
      _
    // Predicated region
    $region38: #{encoder_forward.1} parent=1 // pred_check
      _
    $region39: #{encoder_forward.1} parent=1 // pred_check_branch
      %8647 = sbr.rel (0) target = $region41
    $region40: #{encoder_forward.1} parent=1 // pred_region
      %8649 = dma.done [#allocation4], 32
    $region41: #{encoder_forward.1} parent=1 // pred_fallthru
      _
    %8650 = vsyncpa [#allocation3], 1
    %8651 = vsyncpa [#allocation6], 1
    %8652 = vsyncpa [#allocation4], 1

</llo_original>
